<compile_context>
chip_gen: v5e
topology: v5e:2x2
jax: 0.10.0
libtpu: 0.0.40
codegen_flags: <defaults>
</compile_context>

<pallas_src>
import functools

import jax
import jax.numpy as jnp
from jax import lax
from jax.experimental import pallas as pl
from jax.experimental.pallas import tpu as pltpu

_BN_EPS = 1e-5
_LANE = 128
_SUBLANE = 8
_K_CONCAT_MAX = 128          # below this per-tap K, use the im2col-concat path


def _round_up(x, m):
    return (x + m - 1) // m * m


@functools.lru_cache(maxsize=1)
def _vmem_limit_bytes():
    # Per-generation VMEM budget: ~3/4 of physical, clamped to [32, 100] MiB
    # (=> ~48 MiB on v7x (64 MiB phys), ~96 MiB on v5e/v6e (128 MiB phys)).
    cap = 64 * 1024 * 1024
    try:
        info = pltpu.get_tpu_info()
        cap = int(getattr(info, "vmem_capacity_bytes", cap)) or cap
    except Exception:
        pass
    return int(min(max(cap * 3 // 4, 32 * 1024 * 1024), 100 * 1024 * 1024))


def _largest_divisor_leq(n, cap):
    cap = max(1, min(n, cap))
    for d in range(cap, 0, -1):
        if n % d == 0:
            return d
    return n


def _pick_row_tile(m, cap):
    """Divisor of m that is <= cap and a multiple of 8; falls back to the full
    extent (always a legal block)."""
    cap = max(1, min(m, cap))
    for d in range(cap, 0, -1):
        if m % d == 0 and d % _SUBLANE == 0:
            return d
    return m


# ---------------------------------------------------------------------------
# Pass A: conv1 (3x3, stride s) + per-tile BN partial stats
# ---------------------------------------------------------------------------
def _conv1_cat_kernel(x_ref, w_ref, o_ref, p_ref, *, stride, tile_h, wout,
                      cin_p):
    # Single MXU dot with K = 9*cin_p (im2col concat of the 9 taps).
    # x_ref : (1, Hq, s*s, Wq, cin_p) stride-factored padded image (resident)
    # w_ref : (9*cin_p, cout_p)
    tile_m = tile_h * wout
    row0 = pl.multiple_of(pl.program_id(1) * tile_h, tile_h)
    taps = []
    for dy in range(3):
        for dx in range(3):
            phase = (dy % stride) * stride + (dx % stride)
            qx = dx // stride
            a = x_ref[0, pl.ds(row0 + dy // stride, tile_h), phase,
                      qx:qx + wout, :]
            taps.append(a.reshape(tile_m, cin_p))
    lhs = jnp.concatenate(taps, axis=-1)                     # (tile_m, 9*cin_p)
    acc = jnp.dot(lhs, w_ref[...], preferred_element_type=jnp.float32)
    o_ref[0, 0] = acc.astype(o_ref.dtype)
    p_ref[0, 0, 0:1, :] = jnp.sum(acc, axis=0, keepdims=True)
    p_ref[0, 0, 1:2, :] = jnp.sum(acc * acc, axis=0, keepdims=True)


def _conv1_tap_kernel(x_ref, w_ref, o_ref, p_ref, acc_ref, *, stride, tile_h,
                      wout, cin_p):
    # Per-tap dots (K = cin_p already fills the MXU); VMEM scratch accumulator.
    # w_ref : (9, cin_p, cout_p)
    tile_m = tile_h * wout
    row0 = pl.multiple_of(pl.program_id(1) * tile_h, tile_h)
    acc_ref[...] = jnp.zeros_like(acc_ref)
    for dy in range(3):
        for dx in range(3):
            phase = (dy % stride) * stride + (dx % stride)
            qx = dx // stride
            a = x_ref[0, pl.ds(row0 + dy // stride, tile_h), phase,
                      qx:qx + wout, :]
            acc_ref[...] += jnp.dot(a.reshape(tile_m, cin_p),
                                    w_ref[dy * 3 + dx],
                                    preferred_element_type=jnp.float32)
    acc = acc_ref[...]
    o_ref[0, 0] = acc.astype(o_ref.dtype)
    p_ref[0, 0, 0:1, :] = jnp.sum(acc, axis=0, keepdims=True)
    p_ref[0, 0, 1:2, :] = jnp.sum(acc * acc, axis=0, keepdims=True)


def _conv3x3_stage1(x_nhwc, w_hwio, stride, cin_p, cout_p):
    """x_nhwc: (N,H,W,cin_p) bf16, w_hwio: (3,3,cin,cout) f32.
    Returns (conv bf16 (N,T,tile_m,cout_p), partials f32 (N,T,2,cout_p))."""
    n, h, w, _ = x_nhwc.shape
    hout = (h - 1) // stride + 1
    wout = (w - 1) // stride + 1
    m = n * hout * wout

    # Stride-factored, spatially padded layout: every conv tap becomes a
    # static slice inside the kernel.
    hq = hout + (2 // stride)
    wq = wout + (2 // stride)
    xp = jnp.pad(x_nhwc, ((0, 0),
                          (1, stride * hq - h - 1),
                          (1, stride * wq - w - 1),
                          (0, 0)))
    xf = xp.reshape(n, hq, stride, wq, stride, cin_p)
    xf = xf.transpose(0, 1, 2, 4, 3, 5).reshape(n, hq, stride * stride, wq,
                                                cin_p)

    tile_h = _largest_divisor_leq(hout, max(1, 512 // wout))
    tile_m = tile_h * wout
    n_tiles = hout // tile_h
    grid = (n, n_tiles)

    kh, kw, ci, co = w_hwio.shape
    wp = jnp.pad(w_hwio, ((0, 0), (0, 0), (0, cin_p - ci), (0, cout_p - co)))
    wp = wp.reshape(9, cin_p, cout_p).astype(jnp.bfloat16)

    use_concat = cin_p < _K_CONCAT_MAX
    if use_concat:
        w_arg = wp.reshape(9 * cin_p, cout_p)
        w_spec = pl.BlockSpec((9 * cin_p, cout_p), lambda i, j: (0, 0))
        scratch = []
        kernel = functools.partial(_conv1_cat_kernel, stride=stride,
                                   tile_h=tile_h, wout=wout, cin_p=cin_p)
    else:
        w_arg = wp
        w_spec = pl.BlockSpec((9, cin_p, cout_p), lambda i, j: (0, 0, 0))
        scratch = [pltpu.VMEM((tile_m, cout_p), jnp.float32)]
        kernel = functools.partial(_conv1_tap_kernel, stride=stride,
                                   tile_h=tile_h, wout=wout, cin_p=cin_p)

    flops = 2 * m * 9 * cin_p * cout_p
    bytes_accessed = int(int(xf.size) * 2 + int(w_arg.size) * 2
                         + m * cout_p * 2 + n * n_tiles * 2 * cout_p * 4)

    conv_raw, partials = pl.pallas_call(
        kernel,
        grid=grid,
        in_specs=[
            pl.BlockSpec((1, hq, stride * stride, wq, cin_p),
                         lambda i, j: (i, 0, 0, 0, 0)),
            w_spec,
        ],
        out_specs=[
            pl.BlockSpec((1, 1, tile_m, cout_p), lambda i, j: (i, j, 0, 0)),
            pl.BlockSpec((1, 1, 2, cout_p), lambda i, j: (i, j, 0, 0)),
        ],
        out_shape=[
            jax.ShapeDtypeStruct((n, n_tiles, tile_m, cout_p), jnp.bfloat16),
            jax.ShapeDtypeStruct((n, n_tiles, 2, cout_p), jnp.float32),
        ],
        scratch_shapes=scratch,
        compiler_params=pltpu.CompilerParams(
            dimension_semantics=("parallel", "parallel"),
            vmem_limit_bytes=_vmem_limit_bytes()),
        cost_estimate=pl.CostEstimate(flops=flops, transcendentals=0,
                                      bytes_accessed=bytes_accessed),
    )(xf, w_arg)
    return conv_raw, partials


# ---------------------------------------------------------------------------
# Pass B: fused BN1+ReLU -> conv2 (3x3, stride 1) + per-tile BN partial stats
# ---------------------------------------------------------------------------
def _conv2_fused_kernel(c1_ref, s1_ref, b1_ref, w_ref, o_ref, p_ref,
                        hbuf_ref, acc_ref, *, tile_h, hout, wout, cout_p):
    # c1_ref : (1, hout*wout, cout_p) raw conv1 output of this batch element
    # s1/b1  : (1, cout_p) folded BN1 scale/shift (f32)
    # w_ref  : (9, cout_p, cout_p)
    # hbuf   : (hout+2, wout+2, cout_p) bf16 scratch = relu(bn1(conv1)), padded
    j = pl.program_id(1)
    tile_m = tile_h * wout

    @pl.when(j == 0)
    def _():
        # Build the zero-padded stage-1 activation once per batch element;
        # h1 never goes to HBM.
        hbuf_ref[...] = jnp.zeros_like(hbuf_ref)
        hval = c1_ref[0].astype(jnp.float32) * s1_ref[...] + b1_ref[...]
        hval = jnp.maximum(hval, 0.0).astype(hbuf_ref.dtype)
        hbuf_ref[1:1 + hout, 1:1 + wout, :] = hval.reshape(hout, wout, cout_p)

    row0 = pl.multiple_of(j * tile_h, tile_h)
    acc_ref[...] = jnp.zeros_like(acc_ref)
    for dy in range(3):
        for dx in range(3):
            a = hbuf_ref[pl.ds(row0 + dy, tile_h), dx:dx + wout, :]
            acc_ref[...] += jnp.dot(a.reshape(tile_m, cout_p),
                                    w_ref[dy * 3 + dx],
                                    preferred_element_type=jnp.float32)
    acc = acc_ref[...]
    o_ref[0, 0] = acc.astype(o_ref.dtype)
    p_ref[0, 0, 0:1, :] = jnp.sum(acc, axis=0, keepdims=True)
    p_ref[0, 0, 1:2, :] = jnp.sum(acc * acc, axis=0, keepdims=True)


def _conv3x3_stage2_fused(conv1_raw, scale1, shift1, w_hwio, n, hout, wout,
                          cout_p):
    m = n * hout * wout
    hq2, wq2 = hout + 2, wout + 2

    tile_h = _largest_divisor_leq(hout, max(1, 512 // wout))
    tile_m = tile_h * wout
    n_tiles = hout // tile_h
    grid = (n, n_tiles)

    kh, kw, ci, co = w_hwio.shape
    wp = jnp.pad(w_hwio, ((0, 0), (0, 0), (0, cout_p - ci), (0, cout_p - co)))
    wp = wp.reshape(9, cout_p, cout_p).astype(jnp.bfloat16)

    kernel = functools.partial(_conv2_fused_kernel, tile_h=tile_h, hout=hout,
                               wout=wout, cout_p=cout_p)

    flops = 2 * m * 9 * cout_p * cout_p + 3 * m * cout_p
    bytes_accessed = int(m * cout_p * 2 * 2 + int(wp.size) * 2
                         + n * n_tiles * 2 * cout_p * 4 + 2 * cout_p * 4)

    conv_raw, partials = pl.pallas_call(
        kernel,
        grid=grid,
        in_specs=[
            pl.BlockSpec((1, hout * wout, cout_p), lambda i, j: (i, 0, 0)),
            pl.BlockSpec((1, cout_p), lambda i, j: (0, 0)),
            pl.BlockSpec((1, cout_p), lambda i, j: (0, 0)),
            pl.BlockSpec((9, cout_p, cout_p), lambda i, j: (0, 0, 0)),
        ],
        out_specs=[
            pl.BlockSpec((1, 1, tile_m, cout_p), lambda i, j: (i, j, 0, 0)),
            pl.BlockSpec((1, 1, 2, cout_p), lambda i, j: (i, j, 0, 0)),
        ],
        out_shape=[
            jax.ShapeDtypeStruct((n, n_tiles, tile_m, cout_p), jnp.bfloat16),
            jax.ShapeDtypeStruct((n, n_tiles, 2, cout_p), jnp.float32),
        ],
        scratch_shapes=[
            pltpu.VMEM((hq2, wq2, cout_p), jnp.bfloat16),
            pltpu.VMEM((tile_m, cout_p), jnp.float32),
        ],
        compiler_params=pltpu.CompilerParams(
            # row-tile axis is "arbitrary": hbuf filled at j==0 is reused.
            dimension_semantics=("parallel", "arbitrary"),
            vmem_limit_bytes=_vmem_limit_bytes()),
        cost_estimate=pl.CostEstimate(flops=flops, transcendentals=0,
                                      bytes_accessed=bytes_accessed),
    )(conv1_raw, scale1, shift1, wp)
    return conv_raw, partials


# ---------------------------------------------------------------------------
# Pass C: BN2 scale/shift + residual + ReLU on lane-dense tiles
# ---------------------------------------------------------------------------
def _bn_res_relu_kernel(c_ref, s_ref, b_ref, r_ref, o_ref):
    y = (c_ref[...].astype(jnp.float32) * s_ref[...] + b_ref[...]
         + r_ref[...].astype(jnp.float32))
    o_ref[...] = jnp.maximum(y, 0.0).astype(o_ref.dtype)


def _bn_res_relu(conv_raw, scale, shift, residual, out_dtype):
    m, cp = conv_raw.shape
    tile_m = _pick_row_tile(m, 1024)
    grid = (m // tile_m,)
    row_spec = pl.BlockSpec((tile_m, cp), lambda i: (i, 0))
    vec_spec = pl.BlockSpec((1, cp), lambda i: (0, 0))
    bytes_accessed = int(m * cp * (2 + 2 + jnp.dtype(out_dtype).itemsize)
                         + 2 * cp * 4)
    return pl.pallas_call(
        _bn_res_relu_kernel,
        grid=grid,
        in_specs=[row_spec, vec_spec, vec_spec, row_spec],
        out_specs=row_spec,
        out_shape=jax.ShapeDtypeStruct((m, cp), out_dtype),
        compiler_params=pltpu.CompilerParams(
            dimension_semantics=("parallel",),
            vmem_limit_bytes=_vmem_limit_bytes()),
        cost_estimate=pl.CostEstimate(flops=4 * m * cp, transcendentals=0,
                                      bytes_accessed=bytes_accessed),
    )(conv_raw, scale, shift, residual)


# ---------------------------------------------------------------------------
# BN batch statistics -> folded per-channel scale/shift
# ---------------------------------------------------------------------------
def _bn_scale_shift(partials, gamma_p, beta_p, count):
    total = jnp.sum(partials, axis=(0, 1))                  # (2, cout_p)
    mean = total[0] / count
    # Single-pass E[x^2]-mean^2 in f32; conv outputs here are O(1) so the
    # cancellation is benign.  TODO(synk): Welford merge for training-scale m.
    var = jnp.maximum(total[1] / count - mean * mean, 0.0)
    inv_std = lax.rsqrt(var + _BN_EPS)
    scale = gamma_p * inv_std
    shift = beta_p - mean * scale
    return (scale.reshape(1, -1).astype(jnp.float32),
            shift.reshape(1, -1).astype(jnp.float32))


# ---------------------------------------------------------------------------
# ResidualBlock forward
# ---------------------------------------------------------------------------
@functools.partial(jax.jit, static_argnames=("stride", "down_sample"))
def residual_block(x_nchw, params, stride=1, down_sample=False):
    # NCHW -> NHWC, straight to bf16 (MXU operand dtype); no extra f32 copy.
    x = jnp.transpose(x_nchw, (0, 2, 3, 1)).astype(jnp.bfloat16)
    n, h, w, cin = x.shape
    cout = params["w1"].shape[-1]
    if not down_sample and (stride != 1 or cin != cout):
        raise ValueError("without down_sample the residual add requires "
                         "stride == 1 and in_channels == out_channels")
    hout = (h - 1) // stride + 1
    wout = (w - 1) // stride + 1
    m = n * hout * wout

    cin_p = _round_up(cin, _SUBLANE)
    cout_p = _round_up(cout, _LANE)       # lane-dense stores / wide MXU N dim

    # --- stage 1: conv1 + batch stats (BN1+ReLU applied fused in pass B) ----
    x1 = jnp.pad(x, ((0, 0), (0, 0), (0, 0), (0, cin_p - cin)))
    conv1_raw, part1 = _conv3x3_stage1(x1, params["w1"], stride, cin_p, cout_p)
    g1 = jnp.pad(params["g1"], (0, cout_p - cout))
    b1 = jnp.pad(params["b1"], (0, cout_p - cout))
    scale1, shift1 = _bn_scale_shift(part1, g1, b1, m)

    # --- stage 2: fused bn1+relu -> conv2 -> batch stats ---------------------
    c1 = conv1_raw.reshape(n, hout * wout, cout_p)           # free reshape
    conv2_raw, part2 = _conv3x3_stage2_fused(c1, scale1, shift1, params["w2"],
                                             n, hout, wout, cout_p)
    g2 = jnp.pad(params["g2"], (0, cout_p - cout))
    b2 = jnp.pad(params["b2"], (0, cout_p - cout))
    scale2, shift2 = _bn_scale_shift(part2, g2, b2, m)

    # --- shortcut (IdentityPadding == zero channel pad + 1x1 maxpool stride s)
    sc = x[:, ::stride, ::stride, :] if down_sample else x
    sc = jnp.pad(sc, ((0, 0), (0, 0), (0, 0), (0, cout_p - cin)))
    sc = sc.reshape(m, cout_p)

    # --- final: bn2 + residual add + relu ------------------------------------
    y = _bn_res_relu(conv2_raw.reshape(m, cout_p), scale2, shift2, sc,
                     jnp.float32)
    y = y.reshape(n, hout, wout, cout_p)[:, :, :, :cout]
    return jnp.transpose(y, (0, 3, 1, 2))                    # NHWC -> NCHW


# ---------------------------------------------------------------------------
# Deterministic parameter init (shapes from the module __init__)
# ---------------------------------------------------------------------------
def init_params(key, cin, cout):
    ks = jax.random.split(key, 6)
    return {
        "w1": jax.random.normal(ks[0], (3, 3, cin, cout), jnp.float32) * 0.1,   # HWIO
        "w2": jax.random.normal(ks[1], (3, 3, cout, cout), jnp.float32) * 0.1,  # HWIO
        "g1": 1.0 + 0.1 * jax.random.normal(ks[2], (cout,), jnp.float32),
        "b1": 0.1 * jax.random.normal(ks[3], (cout,), jnp.float32),
        "g2": 1.0 + 0.1 * jax.random.normal(ks[4], (cout,), jnp.float32),
        "b2": 0.1 * jax.random.normal(ks[5], (cout,), jnp.float32),
    }


# ---------------------------------------------------------------------------
# Pure-JAX f32 reference (correctness check only)
# ---------------------------------------------------------------------------
def _ref_block(x_nchw, params, stride, down_sample):
    x = jnp.transpose(x_nchw, (0, 2, 3, 1)).astype(jnp.float32)

    def conv(a, w, s):
        return lax.conv_general_dilated(
            a, w, (s, s), ((1, 1), (1, 1)),
            dimension_numbers=("NHWC", "HWIO", "NHWC"),
            precision=lax.Precision.HIGHEST)

    def bn(a, g, b):
        mu = jnp.mean(a, axis=(0, 1, 2), keepdims=True)
        va = jnp.mean((a - mu) ** 2, axis=(0, 1, 2), keepdims=True)
        return (a - mu) * lax.rsqrt(va + _BN_EPS) * g + b

    h = jax.nn.relu(bn(conv(x, params["w1"], stride), params["g1"], params["b1"]))
    y = bn(conv(h, params["w2"], 1), params["g2"], params["b2"])
    if down_sample:
        sc = x[:, ::stride, ::stride, :]
        sc = jnp.pad(sc, ((0, 0), (0, 0), (0, 0), (0, y.shape[-1] - x.shape[-1])))
    else:
        sc = x
    return jnp.transpose(jax.nn.relu(y + sc), (0, 3, 1, 2))


if __name__ == "__main__":
    key = jax.random.PRNGKey(0)
    kx, kp1, kp2 = jax.random.split(key, 3)

    N, Cin, H, W = 2, 4, 16, 16
    x = jax.random.normal(kx, (N, Cin, H, W), jnp.float32)   # NCHW, like PyTorch

    # Config A: identity block (in==out, stride=1, no down_sample)
    params_a = init_params(kp1, Cin, Cin)
    out_a = jax.block_until_ready(
        residual_block(x, params_a, stride=1, down_sample=False))
    ref_a = _ref_block(x, params_a, 1, False)
    assert out_a.shape == (N, Cin, H, W)
    # bf16 MXU operands / bf16 inter-stage tensors vs f32 reference -> 3e-2 tol
    assert bool(jnp.allclose(out_a, ref_a, atol=3e-2, rtol=3e-2)), "config A mismatch"

    # Config B: downsampling block (out=2*in, stride=2, IdentityPadding shortcut)
    Cout = 8
    params_b = init_params(kp2, Cin, Cout)
    out_b = jax.block_until_ready(
        residual_block(x, params_b, stride=2, down_sample=True))
    ref_b = _ref_block(x, params_b, 2, True)
    assert out_b.shape == (N, Cout, H // 2, W // 2)
    assert bool(jnp.allclose(out_b, ref_b, atol=3e-2, rtol=3e-2)), "config B mismatch"

    print("KERNEL_OK")
</pallas_src>

<mosaic_0001>
module attributes {stable_mosaic.version = 11 : i64} {
  func.func @_conv1_cat_kernel(%arg0: i32, %arg1: i32, %arg2: memref<1x18x1x18x8xbf16, #tpu.memory_space<vmem>>, %arg3: memref<72x128xbf16, #tpu.memory_space<vmem>>, %arg4: memref<1x1x256x128xbf16, #tpu.memory_space<vmem>>, %arg5: memref<1x1x2x128xf32, #tpu.memory_space<vmem>>) attributes {dimension_semantics = [#tpu.dimension_semantics<parallel>, #tpu.dimension_semantics<parallel>], iteration_bounds = array<i64: 2, 1>, scalar_prefetch = 0 : i64, scratch_operands = 0 : i64, tpu.core_type = #tpu.core_type<tc>, window_params = [{transform_indices = @transform_0, window_bounds = array<i64: 1, 18, 1, 18, 8>}, {pipeline_mode = #tpu.pipeline_mode<synchronous>, transform_indices = @transform_1, window_bounds = array<i64: 72, 128>}, {transform_indices = @transform_2, window_bounds = array<i64: 1, 1, 256, 128>}, {transform_indices = @transform_3, window_bounds = array<i64: 1, 1, 2, 128>}]} {
    %c16_i32 = arith.constant 16 : i32
    %0 = arith.muli %arg1, %c16_i32 : i32
    %1 = tpu.assume_multiple %0, 16 : i32
    %c0_i32 = arith.constant 0 : i32
    %2 = arith.addi %1, %c0_i32 : i32
    %c0 = arith.constant 0 : index
    %3 = arith.index_cast %2 : i32 to index
    %c0_0 = arith.constant 0 : index
    %c0_1 = arith.constant 0 : index
    %c0_2 = arith.constant 0 : index
    %4 = vector.load %arg2[%c0, %3, %c0_0, %c0_1, %c0_2] : memref<1x18x1x18x8xbf16, #tpu.memory_space<vmem>>, vector<1x16x1x16x8xbf16>
    %5 = vector.shape_cast %4 : vector<1x16x1x16x8xbf16> to vector<16x16x8xbf16>
    %6 = vector.shape_cast %5 : vector<16x16x8xbf16> to vector<256x8xbf16>
    %c0_i32_3 = arith.constant 0 : i32
    %7 = arith.addi %1, %c0_i32_3 : i32
    %c0_4 = arith.constant 0 : index
    %8 = arith.index_cast %7 : i32 to index
    %c0_5 = arith.constant 0 : index
    %c1 = arith.constant 1 : index
    %c0_6 = arith.constant 0 : index
    %9 = vector.load %arg2[%c0_4, %8, %c0_5, %c1, %c0_6] : memref<1x18x1x18x8xbf16, #tpu.memory_space<vmem>>, vector<1x16x1x16x8xbf16>
    %10 = vector.shape_cast %9 : vector<1x16x1x16x8xbf16> to vector<16x16x8xbf16>
    %11 = vector.shape_cast %10 : vector<16x16x8xbf16> to vector<256x8xbf16>
    %c0_i32_7 = arith.constant 0 : i32
    %12 = arith.addi %1, %c0_i32_7 : i32
    %c0_8 = arith.constant 0 : index
    %13 = arith.index_cast %12 : i32 to index
    %c0_9 = arith.constant 0 : index
    %c2 = arith.constant 2 : index
    %c0_10 = arith.constant 0 : index
    %14 = vector.load %arg2[%c0_8, %13, %c0_9, %c2, %c0_10] : memref<1x18x1x18x8xbf16, #tpu.memory_space<vmem>>, vector<1x16x1x16x8xbf16>
    %15 = vector.shape_cast %14 : vector<1x16x1x16x8xbf16> to vector<16x16x8xbf16>
    %16 = vector.shape_cast %15 : vector<16x16x8xbf16> to vector<256x8xbf16>
    %c1_i32 = arith.constant 1 : i32
    %17 = arith.addi %1, %c1_i32 : i32
    %c0_11 = arith.constant 0 : index
    %18 = arith.index_cast %17 : i32 to index
    %c0_12 = arith.constant 0 : index
    %c0_13 = arith.constant 0 : index
    %c0_14 = arith.constant 0 : index
    %19 = vector.load %arg2[%c0_11, %18, %c0_12, %c0_13, %c0_14] : memref<1x18x1x18x8xbf16, #tpu.memory_space<vmem>>, vector<1x16x1x16x8xbf16>
    %20 = vector.shape_cast %19 : vector<1x16x1x16x8xbf16> to vector<16x16x8xbf16>
    %21 = vector.shape_cast %20 : vector<16x16x8xbf16> to vector<256x8xbf16>
    %c1_i32_15 = arith.constant 1 : i32
    %22 = arith.addi %1, %c1_i32_15 : i32
    %c0_16 = arith.constant 0 : index
    %23 = arith.index_cast %22 : i32 to index
    %c0_17 = arith.constant 0 : index
    %c1_18 = arith.constant 1 : index
    %c0_19 = arith.constant 0 : index
    %24 = vector.load %arg2[%c0_16, %23, %c0_17, %c1_18, %c0_19] : memref<1x18x1x18x8xbf16, #tpu.memory_space<vmem>>, vector<1x16x1x16x8xbf16>
    %25 = vector.shape_cast %24 : vector<1x16x1x16x8xbf16> to vector<16x16x8xbf16>
    %26 = vector.shape_cast %25 : vector<16x16x8xbf16> to vector<256x8xbf16>
    %c1_i32_20 = arith.constant 1 : i32
    %27 = arith.addi %1, %c1_i32_20 : i32
    %c0_21 = arith.constant 0 : index
    %28 = arith.index_cast %27 : i32 to index
    %c0_22 = arith.constant 0 : index
    %c2_23 = arith.constant 2 : index
    %c0_24 = arith.constant 0 : index
    %29 = vector.load %arg2[%c0_21, %28, %c0_22, %c2_23, %c0_24] : memref<1x18x1x18x8xbf16, #tpu.memory_space<vmem>>, vector<1x16x1x16x8xbf16>
    %30 = vector.shape_cast %29 : vector<1x16x1x16x8xbf16> to vector<16x16x8xbf16>
    %31 = vector.shape_cast %30 : vector<16x16x8xbf16> to vector<256x8xbf16>
    %c2_i32 = arith.constant 2 : i32
    %32 = arith.addi %1, %c2_i32 : i32
    %c0_25 = arith.constant 0 : index
    %33 = arith.index_cast %32 : i32 to index
    %c0_26 = arith.constant 0 : index
    %c0_27 = arith.constant 0 : index
    %c0_28 = arith.constant 0 : index
    %34 = vector.load %arg2[%c0_25, %33, %c0_26, %c0_27, %c0_28] : memref<1x18x1x18x8xbf16, #tpu.memory_space<vmem>>, vector<1x16x1x16x8xbf16>
    %35 = vector.shape_cast %34 : vector<1x16x1x16x8xbf16> to vector<16x16x8xbf16>
    %36 = vector.shape_cast %35 : vector<16x16x8xbf16> to vector<256x8xbf16>
    %c2_i32_29 = arith.constant 2 : i32
    %37 = arith.addi %1, %c2_i32_29 : i32
    %c0_30 = arith.constant 0 : index
    %38 = arith.index_cast %37 : i32 to index
    %c0_31 = arith.constant 0 : index
    %c1_32 = arith.constant 1 : index
    %c0_33 = arith.constant 0 : index
    %39 = vector.load %arg2[%c0_30, %38, %c0_31, %c1_32, %c0_33] : memref<1x18x1x18x8xbf16, #tpu.memory_space<vmem>>, vector<1x16x1x16x8xbf16>
    %40 = vector.shape_cast %39 : vector<1x16x1x16x8xbf16> to vector<16x16x8xbf16>
    %41 = vector.shape_cast %40 : vector<16x16x8xbf16> to vector<256x8xbf16>
    %c2_i32_34 = arith.constant 2 : i32
    %42 = arith.addi %1, %c2_i32_34 : i32
    %c0_35 = arith.constant 0 : index
    %43 = arith.index_cast %42 : i32 to index
    %c0_36 = arith.constant 0 : index
    %c2_37 = arith.constant 2 : index
    %c0_38 = arith.constant 0 : index
    %44 = vector.load %arg2[%c0_35, %43, %c0_36, %c2_37, %c0_38] : memref<1x18x1x18x8xbf16, #tpu.memory_space<vmem>>, vector<1x16x1x16x8xbf16>
    %45 = vector.shape_cast %44 : vector<1x16x1x16x8xbf16> to vector<16x16x8xbf16>
    %46 = vector.shape_cast %45 : vector<16x16x8xbf16> to vector<256x8xbf16>
    %47 = tpu.concatenate %6, %11, %16, %21, %26, %31, %36, %41, %46 in 1 : vector<256x8xbf16>, vector<256x8xbf16>, vector<256x8xbf16>, vector<256x8xbf16>, vector<256x8xbf16>, vector<256x8xbf16>, vector<256x8xbf16>, vector<256x8xbf16>, vector<256x8xbf16> -> vector<256x72xbf16>
    %c0_39 = arith.constant 0 : index
    %c0_40 = arith.constant 0 : index
    %48 = vector.load %arg3[%c0_39, %c0_40] : memref<72x128xbf16, #tpu.memory_space<vmem>>, vector<72x128xbf16>
    %cst = arith.constant dense<0.000000e+00> : vector<256x128xf32>
    %49 = tpu.matmul %47, %48, %cst {dimension_numbers = #tpu.dot_dimension_numbers<[1], [0], [0], [1], [0, 0, 1, 1], [], []>} : vector<256x72xbf16>, vector<72x128xbf16>, vector<256x128xf32> -> vector<256x128xf32>
    %50 = arith.truncf %49 : vector<256x128xf32> to vector<256x128xbf16>
    %c0_41 = arith.constant 0 : index
    %c0_42 = arith.constant 0 : index
    %c0_43 = arith.constant 0 : index
    %c0_44 = arith.constant 0 : index
    %51 = vector.load %arg4[%c0_41, %c0_42, %c0_43, %c0_44] : memref<1x1x256x128xbf16, #tpu.memory_space<vmem>>, vector<1x1x256x128xbf16>
    %52 = vector.shape_cast %51 : vector<1x1x256x128xbf16> to vector<256x128xbf16>
    %53 = vector.shape_cast %50 : vector<256x128xbf16> to vector<1x1x256x128xbf16>
    tpu.vector_store %arg4[%c0_41, %c0_42, %c0_43, %c0_44], %53 {strides = array<i32>} : memref<1x1x256x128xbf16, #tpu.memory_space<vmem>>, vector<1x1x256x128xbf16>,
    %cst_45 = arith.constant dense<0.000000e+00> : vector<128xf32>
    %54 = vector.multi_reduction <add>, %49, %cst_45 [0] : vector<256x128xf32> to vector<128xf32>
    %55 = vector.shape_cast %54 : vector<128xf32> to vector<1x128xf32>
    %c0_46 = arith.constant 0 : index
    %c0_47 = arith.constant 0 : index
    %c0_48 = arith.constant 0 : index
    %c0_49 = arith.constant 0 : index
    %56 = vector.load %arg5[%c0_46, %c0_47, %c0_48, %c0_49] : memref<1x1x2x128xf32, #tpu.memory_space<vmem>>, vector<1x1x1x128xf32>
    %57 = vector.shape_cast %56 : vector<1x1x1x128xf32> to vector<1x128xf32>
    %58 = vector.shape_cast %55 : vector<1x128xf32> to vector<1x1x1x128xf32>
    tpu.vector_store %arg5[%c0_46, %c0_47, %c0_48, %c0_49], %58 {strides = array<i32>} : memref<1x1x2x128xf32, #tpu.memory_space<vmem>>, vector<1x1x1x128xf32>,
    %59 = arith.mulf %49, %49 : vector<256x128xf32>
    %cst_50 = arith.constant dense<0.000000e+00> : vector<128xf32>
    %60 = vector.multi_reduction <add>, %59, %cst_50 [0] : vector<256x128xf32> to vector<128xf32>
    %61 = vector.shape_cast %60 : vector<128xf32> to vector<1x128xf32>
    %c0_51 = arith.constant 0 : index
    %c0_52 = arith.constant 0 : index
    %c1_53 = arith.constant 1 : index
    %c0_54 = arith.constant 0 : index
    %62 = vector.load %arg5[%c0_51, %c0_52, %c1_53, %c0_54] : memref<1x1x2x128xf32, #tpu.memory_space<vmem>>, vector<1x1x1x128xf32>
    %63 = vector.shape_cast %62 : vector<1x1x1x128xf32> to vector<1x128xf32>
    %64 = vector.shape_cast %61 : vector<1x128xf32> to vector<1x1x1x128xf32>
    tpu.vector_store %arg5[%c0_51, %c0_52, %c1_53, %c0_54], %64 {strides = array<i32>} : memref<1x1x2x128xf32, #tpu.memory_space<vmem>>, vector<1x1x1x128xf32>,
    return
  }
  func.func @transform_0(%arg0: i32, %arg1: i32) -> (i32, i32, i32, i32, i32) {
    %c0_i32 = arith.constant 0 : i32
    %c0_i32_0 = arith.constant 0 : i32
    %c0_i32_1 = arith.constant 0 : i32
    %c0_i32_2 = arith.constant 0 : i32
    %c0_i32_3 = arith.constant 0 : i32
    return %arg0, %c0_i32, %c0_i32_0, %c0_i32_1, %c0_i32_2 : i32, i32, i32, i32, i32
  }
  func.func @transform_1(%arg0: i32, %arg1: i32) -> (i32, i32) {
    %c0_i32 = arith.constant 0 : i32
    %c0_i32_0 = arith.constant 0 : i32
    %c0_i32_1 = arith.constant 0 : i32
    return %c0_i32, %c0_i32_0 : i32, i32
  }
  func.func @transform_2(%arg0: i32, %arg1: i32) -> (i32, i32, i32, i32) {
    %c0_i32 = arith.constant 0 : i32
    %c0_i32_0 = arith.constant 0 : i32
    %c0_i32_1 = arith.constant 0 : i32
    return %arg0, %arg1, %c0_i32, %c0_i32_0 : i32, i32, i32, i32
  }
  func.func @transform_3(%arg0: i32, %arg1: i32) -> (i32, i32, i32, i32) {
    %c0_i32 = arith.constant 0 : i32
    %c0_i32_0 = arith.constant 0 : i32
    %c0_i32_1 = arith.constant 0 : i32
    return %arg0, %arg1, %c0_i32, %c0_i32_0 : i32, i32, i32, i32
  }
}

module attributes {stable_mosaic.version = 11 : i64} {
  func.func @_conv2_fused_kernel(%arg0: i32, %arg1: i32, %arg2: memref<1x256x128xbf16, #tpu.memory_space<vmem>>, %arg3: memref<1x128xf32, #tpu.memory_space<vmem>>, %arg4: memref<1x128xf32, #tpu.memory_space<vmem>>, %arg5: memref<9x128x128xbf16, #tpu.memory_space<vmem>>, %arg6: memref<1x1x256x128xbf16, #tpu.memory_space<vmem>>, %arg7: memref<1x1x2x128xf32, #tpu.memory_space<vmem>>, %arg8: memref<18x18x128xbf16, #tpu.memory_space<vmem>>, %arg9: memref<256x128xf32, #tpu.memory_space<vmem>>) attributes {dimension_semantics = [#tpu.dimension_semantics<parallel>, #tpu.dimension_semantics<arbitrary>], iteration_bounds = array<i64: 2, 1>, scalar_prefetch = 0 : i64, scratch_operands = 2 : i64, tpu.core_type = #tpu.core_type<tc>, window_params = [{transform_indices = @transform_0, window_bounds = array<i64: 1, 256, 128>}, {pipeline_mode = #tpu.pipeline_mode<synchronous>, transform_indices = @transform_1, window_bounds = array<i64: 1, 128>}, {pipeline_mode = #tpu.pipeline_mode<synchronous>, transform_indices = @transform_2, window_bounds = array<i64: 1, 128>}, {pipeline_mode = #tpu.pipeline_mode<synchronous>, transform_indices = @transform_3, window_bounds = array<i64: 9, 128, 128>}, {transform_indices = @transform_4, window_bounds = array<i64: 1, 1, 256, 128>}, {transform_indices = @transform_5, window_bounds = array<i64: 1, 1, 2, 128>}]} {
    %c0_i32 = arith.constant 0 : i32
    %0 = arith.cmpi eq, %arg1, %c0_i32 : i32
    %1 = arith.extui %0 : i1 to i32
    %c0_i32_0 = arith.constant 0 : i32
    %2 = arith.cmpi ne, %1, %c0_i32_0 : i32
    scf.if %2 {
      %cst_107 = arith.constant 0.000000e+00 : bf16
      %113 = vector.broadcast %cst_107 : bf16 to vector<18x18x128xbf16>
      %c0_108 = arith.constant 0 : index
      %c0_109 = arith.constant 0 : index
      %c0_110 = arith.constant 0 : index
      %114 = vector.load %arg8[%c0_108, %c0_109, %c0_110] : memref<18x18x128xbf16, #tpu.memory_space<vmem>>, vector<18x18x128xbf16>
      tpu.vector_store %arg8[%c0_108, %c0_109, %c0_110], %113 {strides = array<i32>} : memref<18x18x128xbf16, #tpu.memory_space<vmem>>, vector<18x18x128xbf16>,
      %c0_111 = arith.constant 0 : index
      %c0_112 = arith.constant 0 : index
      %c0_113 = arith.constant 0 : index
      %115 = vector.load %arg2[%c0_111, %c0_112, %c0_113] : memref<1x256x128xbf16, #tpu.memory_space<vmem>>, vector<1x256x128xbf16>
      %116 = vector.shape_cast %115 : vector<1x256x128xbf16> to vector<256x128xbf16>
      %117 = arith.extf %116 : vector<256x128xbf16> to vector<256x128xf32>
      %c0_114 = arith.constant 0 : index
      %c0_115 = arith.constant 0 : index
      %118 = vector.load %arg3[%c0_114, %c0_115] : memref<1x128xf32, #tpu.memory_space<vmem>>, vector<1x128xf32>
      %119 = vector.broadcast %118 : vector<1x128xf32> to vector<256x128xf32>
      %120 = arith.mulf %117, %119 : vector<256x128xf32>
      %c0_116 = arith.constant 0 : index
      %c0_117 = arith.constant 0 : index
      %121 = vector.load %arg4[%c0_116, %c0_117] : memref<1x128xf32, #tpu.memory_space<vmem>>, vector<1x128xf32>
      %122 = vector.broadcast %121 : vector<1x128xf32> to vector<256x128xf32>
      %123 = arith.addf %120, %122 : vector<256x128xf32>
      %cst_118 = arith.constant 0.000000e+00 : f32
      %124 = vector.broadcast %cst_118 : f32 to vector<256x128xf32>
      %125 = arith.maximumf %123, %124 : vector<256x128xf32>
      %126 = arith.truncf %125 : vector<256x128xf32> to vector<256x128xbf16>
      %127 = vector.shape_cast %126 : vector<256x128xbf16> to vector<16x16x128xbf16>
      %c1_119 = arith.constant 1 : index
      %c1_120 = arith.constant 1 : index
      %c0_121 = arith.constant 0 : index
      %128 = vector.load %arg8[%c1_119, %c1_120, %c0_121] : memref<18x18x128xbf16, #tpu.memory_space<vmem>>, vector<16x16x128xbf16>
      tpu.vector_store %arg8[%c1_119, %c1_120, %c0_121], %127 {strides = array<i32>} : memref<18x18x128xbf16, #tpu.memory_space<vmem>>, vector<16x16x128xbf16>,
    } else {
    }
    %c16_i32 = arith.constant 16 : i32
    %3 = arith.muli %arg1, %c16_i32 : i32
    %4 = tpu.assume_multiple %3, 16 : i32
    %cst = arith.constant 0.000000e+00 : f32
    %5 = vector.broadcast %cst : f32 to vector<256x128xf32>
    %c0 = arith.constant 0 : index
    %c0_1 = arith.constant 0 : index
    %6 = vector.load %arg9[%c0, %c0_1] : memref<256x128xf32, #tpu.memory_space<vmem>>, vector<256x128xf32>
    tpu.vector_store %arg9[%c0, %c0_1], %5 {strides = array<i32>} : memref<256x128xf32, #tpu.memory_space<vmem>>, vector<256x128xf32>,
    %c0_i32_2 = arith.constant 0 : i32
    %7 = arith.addi %4, %c0_i32_2 : i32
    %8 = arith.index_cast %7 : i32 to index
    %c0_3 = arith.constant 0 : index
    %c0_4 = arith.constant 0 : index
    %9 = vector.load %arg8[%8, %c0_3, %c0_4] : memref<18x18x128xbf16, #tpu.memory_space<vmem>>, vector<16x16x128xbf16>
    %c0_5 = arith.constant 0 : index
    %c0_6 = arith.constant 0 : index
    %10 = vector.load %arg9[%c0_5, %c0_6] : memref<256x128xf32, #tpu.memory_space<vmem>>, vector<256x128xf32>
    %11 = vector.shape_cast %9 : vector<16x16x128xbf16> to vector<256x128xbf16>
    %c0_7 = arith.constant 0 : index
    %c0_8 = arith.constant 0 : index
    %c0_9 = arith.constant 0 : index
    %12 = vector.load %arg5[%c0_7, %c0_8, %c0_9] : memref<9x128x128xbf16, #tpu.memory_space<vmem>>, vector<1x128x128xbf16>
    %13 = vector.shape_cast %12 : vector<1x128x128xbf16> to vector<128x128xbf16>
    %cst_10 = arith.constant dense<0.000000e+00> : vector<256x128xf32>
    %14 = tpu.matmul %11, %13, %cst_10 {dimension_numbers = #tpu.dot_dimension_numbers<[1], [0], [0], [1], [0, 0, 1, 1], [], []>} : vector<256x128xbf16>, vector<128x128xbf16>, vector<256x128xf32> -> vector<256x128xf32>
    %15 = arith.addf %10, %14 : vector<256x128xf32>
    %c0_11 = arith.constant 0 : index
    %c0_12 = arith.constant 0 : index
    %16 = vector.load %arg9[%c0_11, %c0_12] : memref<256x128xf32, #tpu.memory_space<vmem>>, vector<256x128xf32>
    tpu.vector_store %arg9[%c0_11, %c0_12], %15 {strides = array<i32>} : memref<256x128xf32, #tpu.memory_space<vmem>>, vector<256x128xf32>,
    %c0_i32_13 = arith.constant 0 : i32
    %17 = arith.addi %4, %c0_i32_13 : i32
    %18 = arith.index_cast %17 : i32 to index
    %c1 = arith.constant 1 : index
    %c0_14 = arith.constant 0 : index
    %19 = vector.load %arg8[%18, %c1, %c0_14] : memref<18x18x128xbf16, #tpu.memory_space<vmem>>, vector<16x16x128xbf16>
    %c0_15 = arith.constant 0 : index
    %c0_16 = arith.constant 0 : index
    %20 = vector.load %arg9[%c0_15, %c0_16] : memref<256x128xf32, #tpu.memory_space<vmem>>, vector<256x128xf32>
    %21 = vector.shape_cast %19 : vector<16x16x128xbf16> to vector<256x128xbf16>
    %c1_17 = arith.constant 1 : index
    %c0_18 = arith.constant 0 : index
    %c0_19 = arith.constant 0 : index
    %22 = vector.load %arg5[%c1_17, %c0_18, %c0_19] : memref<9x128x128xbf16, #tpu.memory_space<vmem>>, vector<1x128x128xbf16>
    %23 = vector.shape_cast %22 : vector<1x128x128xbf16> to vector<128x128xbf16>
    %cst_20 = arith.constant dense<0.000000e+00> : vector<256x128xf32>
    %24 = tpu.matmul %21, %23, %cst_20 {dimension_numbers = #tpu.dot_dimension_numbers<[1], [0], [0], [1], [0, 0, 1, 1], [], []>} : vector<256x128xbf16>, vector<128x128xbf16>, vector<256x128xf32> -> vector<256x128xf32>
    %25 = arith.addf %20, %24 : vector<256x128xf32>
    %c0_21 = arith.constant 0 : index
    %c0_22 = arith.constant 0 : index
    %26 = vector.load %arg9[%c0_21, %c0_22] : memref<256x128xf32, #tpu.memory_space<vmem>>, vector<256x128xf32>
    tpu.vector_store %arg9[%c0_21, %c0_22], %25 {strides = array<i32>} : memref<256x128xf32, #tpu.memory_space<vmem>>, vector<256x128xf32>,
    %c0_i32_23 = arith.constant 0 : i32
    %27 = arith.addi %4, %c0_i32_23 : i32
    %28 = arith.index_cast %27 : i32 to index
    %c2 = arith.constant 2 : index
    %c0_24 = arith.constant 0 : index
    %29 = vector.load %arg8[%28, %c2, %c0_24] : memref<18x18x128xbf16, #tpu.memory_space<vmem>>, vector<16x16x128xbf16>
    %c0_25 = arith.constant 0 : index
    %c0_26 = arith.constant 0 : index
    %30 = vector.load %arg9[%c0_25, %c0_26] : memref<256x128xf32, #tpu.memory_space<vmem>>, vector<256x128xf32>
    %31 = vector.shape_cast %29 : vector<16x16x128xbf16> to vector<256x128xbf16>
    %c2_27 = arith.constant 2 : index
    %c0_28 = arith.constant 0 : index
    %c0_29 = arith.constant 0 : index
    %32 = vector.load %arg5[%c2_27, %c0_28, %c0_29] : memref<9x128x128xbf16, #tpu.memory_space<vmem>>, vector<1x128x128xbf16>
    %33 = vector.shape_cast %32 : vector<1x128x128xbf16> to vector<128x128xbf16>
    %cst_30 = arith.constant dense<0.000000e+00> : vector<256x128xf32>
    %34 = tpu.matmul %31, %33, %cst_30 {dimension_numbers = #tpu.dot_dimension_numbers<[1], [0], [0], [1], [0, 0, 1, 1], [], []>} : vector<256x128xbf16>, vector<128x128xbf16>, vector<256x128xf32> -> vector<256x128xf32>
    %35 = arith.addf %30, %34 : vector<256x128xf32>
    %c0_31 = arith.constant 0 : index
    %c0_32 = arith.constant 0 : index
    %36 = vector.load %arg9[%c0_31, %c0_32] : memref<256x128xf32, #tpu.memory_space<vmem>>, vector<256x128xf32>
    tpu.vector_store %arg9[%c0_31, %c0_32], %35 {strides = array<i32>} : memref<256x128xf32, #tpu.memory_space<vmem>>, vector<256x128xf32>,
    %c1_i32 = arith.constant 1 : i32
    %37 = arith.addi %4, %c1_i32 : i32
    %38 = arith.index_cast %37 : i32 to index
    %c0_33 = arith.constant 0 : index
    %c0_34 = arith.constant 0 : index
    %39 = vector.load %arg8[%38, %c0_33, %c0_34] : memref<18x18x128xbf16, #tpu.memory_space<vmem>>, vector<16x16x128xbf16>
    %c0_35 = arith.constant 0 : index
    %c0_36 = arith.constant 0 : index
    %40 = vector.load %arg9[%c0_35, %c0_36] : memref<256x128xf32, #tpu.memory_space<vmem>>, vector<256x128xf32>
    %41 = vector.shape_cast %39 : vector<16x16x128xbf16> to vector<256x128xbf16>
    %c3 = arith.constant 3 : index
    %c0_37 = arith.constant 0 : index
    %c0_38 = arith.constant 0 : index
    %42 = vector.load %arg5[%c3, %c0_37, %c0_38] : memref<9x128x128xbf16, #tpu.memory_space<vmem>>, vector<1x128x128xbf16>
    %43 = vector.shape_cast %42 : vector<1x128x128xbf16> to vector<128x128xbf16>
    %cst_39 = arith.constant dense<0.000000e+00> : vector<256x128xf32>
    %44 = tpu.matmul %41, %43, %cst_39 {dimension_numbers = #tpu.dot_dimension_numbers<[1], [0], [0], [1], [0, 0, 1, 1], [], []>} : vector<256x128xbf16>, vector<128x128xbf16>, vector<256x128xf32> -> vector<256x128xf32>
    %45 = arith.addf %40, %44 : vector<256x128xf32>
    %c0_40 = arith.constant 0 : index
    %c0_41 = arith.constant 0 : index
    %46 = vector.load %arg9[%c0_40, %c0_41] : memref<256x128xf32, #tpu.memory_space<vmem>>, vector<256x128xf32>
    tpu.vector_store %arg9[%c0_40, %c0_41], %45 {strides = array<i32>} : memref<256x128xf32, #tpu.memory_space<vmem>>, vector<256x128xf32>,
    %c1_i32_42 = arith.constant 1 : i32
    %47 = arith.addi %4, %c1_i32_42 : i32
    %48 = arith.index_cast %47 : i32 to index
    %c1_43 = arith.constant 1 : index
    %c0_44 = arith.constant 0 : index
    %49 = vector.load %arg8[%48, %c1_43, %c0_44] : memref<18x18x128xbf16, #tpu.memory_space<vmem>>, vector<16x16x128xbf16>
    %c0_45 = arith.constant 0 : index
    %c0_46 = arith.constant 0 : index
    %50 = vector.load %arg9[%c0_45, %c0_46] : memref<256x128xf32, #tpu.memory_space<vmem>>, vector<256x128xf32>
    %51 = vector.shape_cast %49 : vector<16x16x128xbf16> to vector<256x128xbf16>
    %c4 = arith.constant 4 : index
    %c0_47 = arith.constant 0 : index
    %c0_48 = arith.constant 0 : index
    %52 = vector.load %arg5[%c4, %c0_47, %c0_48] : memref<9x128x128xbf16, #tpu.memory_space<vmem>>, vector<1x128x128xbf16>
    %53 = vector.shape_cast %52 : vector<1x128x128xbf16> to vector<128x128xbf16>
    %cst_49 = arith.constant dense<0.000000e+00> : vector<256x128xf32>
    %54 = tpu.matmul %51, %53, %cst_49 {dimension_numbers = #tpu.dot_dimension_numbers<[1], [0], [0], [1], [0, 0, 1, 1], [], []>} : vector<256x128xbf16>, vector<128x128xbf16>, vector<256x128xf32> -> vector<256x128xf32>
    %55 = arith.addf %50, %54 : vector<256x128xf32>
    %c0_50 = arith.constant 0 : index
    %c0_51 = arith.constant 0 : index
    %56 = vector.load %arg9[%c0_50, %c0_51] : memref<256x128xf32, #tpu.memory_space<vmem>>, vector<256x128xf32>
    tpu.vector_store %arg9[%c0_50, %c0_51], %55 {strides = array<i32>} : memref<256x128xf32, #tpu.memory_space<vmem>>, vector<256x128xf32>,
    %c1_i32_52 = arith.constant 1 : i32
    %57 = arith.addi %4, %c1_i32_52 : i32
    %58 = arith.index_cast %57 : i32 to index
    %c2_53 = arith.constant 2 : index
    %c0_54 = arith.constant 0 : index
    %59 = vector.load %arg8[%58, %c2_53, %c0_54] : memref<18x18x128xbf16, #tpu.memory_space<vmem>>, vector<16x16x128xbf16>
    %c0_55 = arith.constant 0 : index
    %c0_56 = arith.constant 0 : index
    %60 = vector.load %arg9[%c0_55, %c0_56] : memref<256x128xf32, #tpu.memory_space<vmem>>, vector<256x128xf32>
    %61 = vector.shape_cast %59 : vector<16x16x128xbf16> to vector<256x128xbf16>
    %c5 = arith.constant 5 : index
    %c0_57 = arith.constant 0 : index
    %c0_58 = arith.constant 0 : index
    %62 = vector.load %arg5[%c5, %c0_57, %c0_58] : memref<9x128x128xbf16, #tpu.memory_space<vmem>>, vector<1x128x128xbf16>
    %63 = vector.shape_cast %62 : vector<1x128x128xbf16> to vector<128x128xbf16>
    %cst_59 = arith.constant dense<0.000000e+00> : vector<256x128xf32>
    %64 = tpu.matmul %61, %63, %cst_59 {dimension_numbers = #tpu.dot_dimension_numbers<[1], [0], [0], [1], [0, 0, 1, 1], [], []>} : vector<256x128xbf16>, vector<128x128xbf16>, vector<256x128xf32> -> vector<256x128xf32>
    %65 = arith.addf %60, %64 : vector<256x128xf32>
    %c0_60 = arith.constant 0 : index
    %c0_61 = arith.constant 0 : index
    %66 = vector.load %arg9[%c0_60, %c0_61] : memref<256x128xf32, #tpu.memory_space<vmem>>, vector<256x128xf32>
    tpu.vector_store %arg9[%c0_60, %c0_61], %65 {strides = array<i32>} : memref<256x128xf32, #tpu.memory_space<vmem>>, vector<256x128xf32>,
    %c2_i32 = arith.constant 2 : i32
    %67 = arith.addi %4, %c2_i32 : i32
    %68 = arith.index_cast %67 : i32 to index
    %c0_62 = arith.constant 0 : index
    %c0_63 = arith.constant 0 : index
    %69 = vector.load %arg8[%68, %c0_62, %c0_63] : memref<18x18x128xbf16, #tpu.memory_space<vmem>>, vector<16x16x128xbf16>
    %c0_64 = arith.constant 0 : index
    %c0_65 = arith.constant 0 : index
    %70 = vector.load %arg9[%c0_64, %c0_65] : memref<256x128xf32, #tpu.memory_space<vmem>>, vector<256x128xf32>
    %71 = vector.shape_cast %69 : vector<16x16x128xbf16> to vector<256x128xbf16>
    %c6 = arith.constant 6 : index
    %c0_66 = arith.constant 0 : index
    %c0_67 = arith.constant 0 : index
    %72 = vector.load %arg5[%c6, %c0_66, %c0_67] : memref<9x128x128xbf16, #tpu.memory_space<vmem>>, vector<1x128x128xbf16>
    %73 = vector.shape_cast %72 : vector<1x128x128xbf16> to vector<128x128xbf16>
    %cst_68 = arith.constant dense<0.000000e+00> : vector<256x128xf32>
    %74 = tpu.matmul %71, %73, %cst_68 {dimension_numbers = #tpu.dot_dimension_numbers<[1], [0], [0], [1], [0, 0, 1, 1], [], []>} : vector<256x128xbf16>, vector<128x128xbf16>, vector<256x128xf32> -> vector<256x128xf32>
    %75 = arith.addf %70, %74 : vector<256x128xf32>
    %c0_69 = arith.constant 0 : index
    %c0_70 = arith.constant 0 : index
    %76 = vector.load %arg9[%c0_69, %c0_70] : memref<256x128xf32, #tpu.memory_space<vmem>>, vector<256x128xf32>
    tpu.vector_store %arg9[%c0_69, %c0_70], %75 {strides = array<i32>} : memref<256x128xf32, #tpu.memory_space<vmem>>, vector<256x128xf32>,
    %c2_i32_71 = arith.constant 2 : i32
    %77 = arith.addi %4, %c2_i32_71 : i32
    %78 = arith.index_cast %77 : i32 to index
    %c1_72 = arith.constant 1 : index
    %c0_73 = arith.constant 0 : index
    %79 = vector.load %arg8[%78, %c1_72, %c0_73] : memref<18x18x128xbf16, #tpu.memory_space<vmem>>, vector<16x16x128xbf16>
    %c0_74 = arith.constant 0 : index
    %c0_75 = arith.constant 0 : index
    %80 = vector.load %arg9[%c0_74, %c0_75] : memref<256x128xf32, #tpu.memory_space<vmem>>, vector<256x128xf32>
    %81 = vector.shape_cast %79 : vector<16x16x128xbf16> to vector<256x128xbf16>
    %c7 = arith.constant 7 : index
    %c0_76 = arith.constant 0 : index
    %c0_77 = arith.constant 0 : index
    %82 = vector.load %arg5[%c7, %c0_76, %c0_77] : memref<9x128x128xbf16, #tpu.memory_space<vmem>>, vector<1x128x128xbf16>
    %83 = vector.shape_cast %82 : vector<1x128x128xbf16> to vector<128x128xbf16>
    %cst_78 = arith.constant dense<0.000000e+00> : vector<256x128xf32>
    %84 = tpu.matmul %81, %83, %cst_78 {dimension_numbers = #tpu.dot_dimension_numbers<[1], [0], [0], [1], [0, 0, 1, 1], [], []>} : vector<256x128xbf16>, vector<128x128xbf16>, vector<256x128xf32> -> vector<256x128xf32>
    %85 = arith.addf %80, %84 : vector<256x128xf32>
    %c0_79 = arith.constant 0 : index
    %c0_80 = arith.constant 0 : index
    %86 = vector.load %arg9[%c0_79, %c0_80] : memref<256x128xf32, #tpu.memory_space<vmem>>, vector<256x128xf32>
    tpu.vector_store %arg9[%c0_79, %c0_80], %85 {strides = array<i32>} : memref<256x128xf32, #tpu.memory_space<vmem>>, vector<256x128xf32>,
    %c2_i32_81 = arith.constant 2 : i32
    %87 = arith.addi %4, %c2_i32_81 : i32
    %88 = arith.index_cast %87 : i32 to index
    %c2_82 = arith.constant 2 : index
    %c0_83 = arith.constant 0 : index
    %89 = vector.load %arg8[%88, %c2_82, %c0_83] : memref<18x18x128xbf16, #tpu.memory_space<vmem>>, vector<16x16x128xbf16>
    %c0_84 = arith.constant 0 : index
    %c0_85 = arith.constant 0 : index
    %90 = vector.load %arg9[%c0_84, %c0_85] : memref<256x128xf32, #tpu.memory_space<vmem>>, vector<256x128xf32>
    %91 = vector.shape_cast %89 : vector<16x16x128xbf16> to vector<256x128xbf16>
    %c8 = arith.constant 8 : index
    %c0_86 = arith.constant 0 : index
    %c0_87 = arith.constant 0 : index
    %92 = vector.load %arg5[%c8, %c0_86, %c0_87] : memref<9x128x128xbf16, #tpu.memory_space<vmem>>, vector<1x128x128xbf16>
    %93 = vector.shape_cast %92 : vector<1x128x128xbf16> to vector<128x128xbf16>
    %cst_88 = arith.constant dense<0.000000e+00> : vector<256x128xf32>
    %94 = tpu.matmul %91, %93, %cst_88 {dimension_numbers = #tpu.dot_dimension_numbers<[1], [0], [0], [1], [0, 0, 1, 1], [], []>} : vector<256x128xbf16>, vector<128x128xbf16>, vector<256x128xf32> -> vector<256x128xf32>
    %95 = arith.addf %90, %94 : vector<256x128xf32>
    %c0_89 = arith.constant 0 : index
    %c0_90 = arith.constant 0 : index
    %96 = vector.load %arg9[%c0_89, %c0_90] : memref<256x128xf32, #tpu.memory_space<vmem>>, vector<256x128xf32>
    tpu.vector_store %arg9[%c0_89, %c0_90], %95 {strides = array<i32>} : memref<256x128xf32, #tpu.memory_space<vmem>>, vector<256x128xf32>,
    %c0_91 = arith.constant 0 : index
    %c0_92 = arith.constant 0 : index
    %97 = vector.load %arg9[%c0_91, %c0_92] : memref<256x128xf32, #tpu.memory_space<vmem>>, vector<256x128xf32>
    %98 = arith.truncf %97 : vector<256x128xf32> to vector<256x128xbf16>
    %c0_93 = arith.constant 0 : index
    %c0_94 = arith.constant 0 : index
    %c0_95 = arith.constant 0 : index
    %c0_96 = arith.constant 0 : index
    %99 = vector.load %arg6[%c0_93, %c0_94, %c0_95, %c0_96] : memref<1x1x256x128xbf16, #tpu.memory_space<vmem>>, vector<1x1x256x128xbf16>
    %100 = vector.shape_cast %99 : vector<1x1x256x128xbf16> to vector<256x128xbf16>
    %101 = vector.shape_cast %98 : vector<256x128xbf16> to vector<1x1x256x128xbf16>
    tpu.vector_store %arg6[%c0_93, %c0_94, %c0_95, %c0_96], %101 {strides = array<i32>} : memref<1x1x256x128xbf16, #tpu.memory_space<vmem>>, vector<1x1x256x128xbf16>,
    %cst_97 = arith.constant dense<0.000000e+00> : vector<128xf32>
    %102 = vector.multi_reduction <add>, %97, %cst_97 [0] : vector<256x128xf32> to vector<128xf32>
    %103 = vector.shape_cast %102 : vector<128xf32> to vector<1x128xf32>
    %c0_98 = arith.constant 0 : index
    %c0_99 = arith.constant 0 : index
    %c0_100 = arith.constant 0 : index
    %c0_101 = arith.constant 0 : index
    %104 = vector.load %arg7[%c0_98, %c0_99, %c0_100, %c0_101] : memref<1x1x2x128xf32, #tpu.memory_space<vmem>>, vector<1x1x1x128xf32>
    %105 = vector.shape_cast %104 : vector<1x1x1x128xf32> to vector<1x128xf32>
    %106 = vector.shape_cast %103 : vector<1x128xf32> to vector<1x1x1x128xf32>
    tpu.vector_store %arg7[%c0_98, %c0_99, %c0_100, %c0_101], %106 {strides = array<i32>} : memref<1x1x2x128xf32, #tpu.memory_space<vmem>>, vector<1x1x1x128xf32>,
    %107 = arith.mulf %97, %97 : vector<256x128xf32>
    %cst_102 = arith.constant dense<0.000000e+00> : vector<128xf32>
    %108 = vector.multi_reduction <add>, %107, %cst_102 [0] : vector<256x128xf32> to vector<128xf32>
    %109 = vector.shape_cast %108 : vector<128xf32> to vector<1x128xf32>
    %c0_103 = arith.constant 0 : index
    %c0_104 = arith.constant 0 : index
    %c1_105 = arith.constant 1 : index
    %c0_106 = arith.constant 0 : index
    %110 = vector.load %arg7[%c0_103, %c0_104, %c1_105, %c0_106] : memref<1x1x2x128xf32, #tpu.memory_space<vmem>>, vector<1x1x1x128xf32>
    %111 = vector.shape_cast %110 : vector<1x1x1x128xf32> to vector<1x128xf32>
    %112 = vector.shape_cast %109 : vector<1x128xf32> to vector<1x1x1x128xf32>
    tpu.vector_store %arg7[%c0_103, %c0_104, %c1_105, %c0_106], %112 {strides = array<i32>} : memref<1x1x2x128xf32, #tpu.memory_space<vmem>>, vector<1x1x1x128xf32>,
    return
  }
  func.func @transform_0(%arg0: i32, %arg1: i32) -> (i32, i32, i32) {
    %c0_i32 = arith.constant 0 : i32
    %c0_i32_0 = arith.constant 0 : i32
    %c0_i32_1 = arith.constant 0 : i32
    return %arg0, %c0_i32, %c0_i32_0 : i32, i32, i32
  }
  func.func @transform_1(%arg0: i32, %arg1: i32) -> (i32, i32) {
    %c0_i32 = arith.constant 0 : i32
    %c0_i32_0 = arith.constant 0 : i32
    %c0_i32_1 = arith.constant 0 : i32
    return %c0_i32, %c0_i32_0 : i32, i32
  }
  func.func @transform_2(%arg0: i32, %arg1: i32) -> (i32, i32) {
    %c0_i32 = arith.constant 0 : i32
    %c0_i32_0 = arith.constant 0 : i32
    %c0_i32_1 = arith.constant 0 : i32
    return %c0_i32, %c0_i32_0 : i32, i32
  }
  func.func @transform_3(%arg0: i32, %arg1: i32) -> (i32, i32, i32) {
    %c0_i32 = arith.constant 0 : i32
    %c0_i32_0 = arith.constant 0 : i32
    %c0_i32_1 = arith.constant 0 : i32
    %c0_i32_2 = arith.constant 0 : i32
    return %c0_i32, %c0_i32_0, %c0_i32_1 : i32, i32, i32
  }
  func.func @transform_4(%arg0: i32, %arg1: i32) -> (i32, i32, i32, i32) {
    %c0_i32 = arith.constant 0 : i32
    %c0_i32_0 = arith.constant 0 : i32
    %c0_i32_1 = arith.constant 0 : i32
    return %arg0, %arg1, %c0_i32, %c0_i32_0 : i32, i32, i32, i32
  }
  func.func @transform_5(%arg0: i32, %arg1: i32) -> (i32, i32, i32, i32) {
    %c0_i32 = arith.constant 0 : i32
    %c0_i32_0 = arith.constant 0 : i32
    %c0_i32_1 = arith.constant 0 : i32
    return %arg0, %arg1, %c0_i32, %c0_i32_0 : i32, i32, i32, i32
  }
}

module attributes {stable_mosaic.version = 11 : i64} {
  func.func @_bn_res_relu_kernel(%arg0: i32, %arg1: memref<512x128xbf16, #tpu.memory_space<vmem>>, %arg2: memref<1x128xf32, #tpu.memory_space<vmem>>, %arg3: memref<1x128xf32, #tpu.memory_space<vmem>>, %arg4: memref<512x128xbf16, #tpu.memory_space<vmem>>, %arg5: memref<512x128xf32, #tpu.memory_space<vmem>>) attributes {dimension_semantics = [#tpu.dimension_semantics<parallel>], iteration_bounds = array<i64: 1>, scalar_prefetch = 0 : i64, scratch_operands = 0 : i64, tpu.core_type = #tpu.core_type<tc>, window_params = [{transform_indices = @transform_0, window_bounds = array<i64: 512, 128>}, {pipeline_mode = #tpu.pipeline_mode<synchronous>, transform_indices = @transform_1, window_bounds = array<i64: 1, 128>}, {pipeline_mode = #tpu.pipeline_mode<synchronous>, transform_indices = @transform_2, window_bounds = array<i64: 1, 128>}, {transform_indices = @transform_3, window_bounds = array<i64: 512, 128>}, {transform_indices = @transform_4, window_bounds = array<i64: 512, 128>}]} {
    %c0 = arith.constant 0 : index
    %c0_0 = arith.constant 0 : index
    %0 = vector.load %arg1[%c0, %c0_0] : memref<512x128xbf16, #tpu.memory_space<vmem>>, vector<512x128xbf16>
    %1 = arith.extf %0 : vector<512x128xbf16> to vector<512x128xf32>
    %c0_1 = arith.constant 0 : index
    %c0_2 = arith.constant 0 : index
    %2 = vector.load %arg2[%c0_1, %c0_2] : memref<1x128xf32, #tpu.memory_space<vmem>>, vector<1x128xf32>
    %3 = vector.broadcast %2 : vector<1x128xf32> to vector<512x128xf32>
    %4 = arith.mulf %1, %3 : vector<512x128xf32>
    %c0_3 = arith.constant 0 : index
    %c0_4 = arith.constant 0 : index
    %5 = vector.load %arg3[%c0_3, %c0_4] : memref<1x128xf32, #tpu.memory_space<vmem>>, vector<1x128xf32>
    %6 = vector.broadcast %5 : vector<1x128xf32> to vector<512x128xf32>
    %7 = arith.addf %4, %6 : vector<512x128xf32>
    %c0_5 = arith.constant 0 : index
    %c0_6 = arith.constant 0 : index
    %8 = vector.load %arg4[%c0_5, %c0_6] : memref<512x128xbf16, #tpu.memory_space<vmem>>, vector<512x128xbf16>
    %9 = arith.extf %8 : vector<512x128xbf16> to vector<512x128xf32>
    %10 = arith.addf %7, %9 : vector<512x128xf32>
    %cst = arith.constant 0.000000e+00 : f32
    %11 = vector.broadcast %cst : f32 to vector<512x128xf32>
    %12 = arith.maximumf %10, %11 : vector<512x128xf32>
    %c0_7 = arith.constant 0 : index
    %c0_8 = arith.constant 0 : index
    %13 = vector.load %arg5[%c0_7, %c0_8] : memref<512x128xf32, #tpu.memory_space<vmem>>, vector<512x128xf32>
    tpu.vector_store %arg5[%c0_7, %c0_8], %12 {strides = array<i32>} : memref<512x128xf32, #tpu.memory_space<vmem>>, vector<512x128xf32>,
    return
  }
  func.func @transform_0(%arg0: i32) -> (i32, i32) {
    %c0_i32 = arith.constant 0 : i32
    %c0_i32_0 = arith.constant 0 : i32
    return %arg0, %c0_i32 : i32, i32
  }
  func.func @transform_1(%arg0: i32) -> (i32, i32) {
    %c0_i32 = arith.constant 0 : i32
    %c0_i32_0 = arith.constant 0 : i32
    %c0_i32_1 = arith.constant 0 : i32
    return %c0_i32, %c0_i32_0 : i32, i32
  }
  func.func @transform_2(%arg0: i32) -> (i32, i32) {
    %c0_i32 = arith.constant 0 : i32
    %c0_i32_0 = arith.constant 0 : i32
    %c0_i32_1 = arith.constant 0 : i32
    return %c0_i32, %c0_i32_0 : i32, i32
  }
  func.func @transform_3(%arg0: i32) -> (i32, i32) {
    %c0_i32 = arith.constant 0 : i32
    %c0_i32_0 = arith.constant 0 : i32
    return %arg0, %c0_i32 : i32, i32
  }
  func.func @transform_4(%arg0: i32) -> (i32, i32) {
    %c0_i32 = arith.constant 0 : i32
    %c0_i32_0 = arith.constant 0 : i32
    return %arg0, %c0_i32 : i32, i32
  }
}

</mosaic_0001>

<llo_original>
// kernel: residual_block.5
$region0: #{residual_block.5}
  #allocation0 [shape = 'u32[]', space=smem, size = 0x4, offset = 0x4, fixed_abs, tag = 'smem constant byte address 0x4 - core index']
  #allocation1 [shape = 'u32[72,128]{1,0:T(1,128)}', space=vmem, size = 0x9000, scoped, tag = 'internal scratch']
  %s0 = inlined_call_operand.vmem [shape: bf16[512,128], index: 0, kind: input, shape index: {}]
  %s1 = inlined_call_operand.vmem [shape: f32[1,128], index: 1, kind: input, shape index: {}]
  %s2 = inlined_call_operand.vmem [shape: f32[1,128], index: 2, kind: input, shape index: {}]
  %s3 = inlined_call_operand.vmem [shape: bf16[512,128], index: 3, kind: input, shape index: {}]
  %s4 = inlined_call_operand.vmem [shape: f32[512,128], index: 4, kind: output, shape index: {}]
  %s5 = sld [smem:[#allocation0]]
  $region26: #{residual_block.5} parent=0
    _
  %s7 = ssub.s32 1, %s5
  %s8 = scalar_select 0, %s7, %s5
  // Predicated region
  $region2: #{residual_block.5} parent=0 // pred_check
    _
  $region3: #{residual_block.5} parent=0 // pred_check_branch
    %10 = sbr.rel (0) target = $region5
  $region4: #{residual_block.5} parent=0 // pred_region
    _
  $region5: #{residual_block.5} parent=0 // pred_fallthru
    _
  // Predicated region
  $region6: #{residual_block.5} parent=0 // pred_check
    _
  $region7: #{residual_block.5} parent=0 // pred_check_branch
    %12 = sbr.rel (0) target = $region9
  $region8: #{residual_block.5} parent=0 // pred_region
    _
  $region9: #{residual_block.5} parent=0 // pred_fallthru
    _
  // Predicated region
  $region10: #{residual_block.5} parent=0 // pred_check
    _
  $region11: #{residual_block.5} parent=0 // pred_check_branch
    %14 = sbr.rel (0) target = $region13
  $region12: #{residual_block.5} parent=0 // pred_region
    _
  $region13: #{residual_block.5} parent=0 // pred_fallthru
    _
  // Predicated region
  $region14: #{residual_block.5} parent=0 // pred_check
    _
  $region15: #{residual_block.5} parent=0 // pred_check_branch
    %16 = sbr.rel (0) target = $region17
  $region16: #{residual_block.5} parent=0 // pred_region
    _
  $region17: #{residual_block.5} parent=0 // pred_fallthru
    _
  %v17 = vld [vmem:[%s0] sm:$0xf]
  %v18 = vld [vmem:[%s0 + $0x4] sm:$0xf]
  %v19 = vld [vmem:[%s0 + $0x8] sm:$0xf]
  %v20 = vld [vmem:[%s0 + $0xc] sm:$0xf]
  %v21 = vld [vmem:[%s0 + $0x10] sm:$0xf]
  %v22 = vld [vmem:[%s0 + $0x14] sm:$0xf]
  %v23 = vld [vmem:[%s0 + $0x18] sm:$0xf]
  %v24 = vld [vmem:[%s0 + $0x1c] sm:$0xf]
  %v25 = vld [vmem:[%s0 + $0x20] sm:$0xf]
  %v26 = vld [vmem:[%s0 + $0x24] sm:$0xf]
  %v27 = vld [vmem:[%s0 + $0x28] sm:$0xf]
  %v28 = vld [vmem:[%s0 + $0x2c] sm:$0xf]
  %v29 = vld [vmem:[%s0 + $0x30] sm:$0xf]
  %v30 = vld [vmem:[%s0 + $0x34] sm:$0xf]
  %v31 = vld [vmem:[%s0 + $0x38] sm:$0xf]
  %v32 = vld [vmem:[%s0 + $0x3c] sm:$0xf]
  %v33 = vld [vmem:[%s0 + $0x40] sm:$0xf]
  %v34 = vld [vmem:[%s0 + $0x44] sm:$0xf]
  %v35 = vld [vmem:[%s0 + $0x48] sm:$0xf]
  %v36 = vld [vmem:[%s0 + $0x4c] sm:$0xf]
  %v37 = vld [vmem:[%s0 + $0x50] sm:$0xf]
  %v38 = vld [vmem:[%s0 + $0x54] sm:$0xf]
  %v39 = vld [vmem:[%s0 + $0x58] sm:$0xf]
  %v40 = vld [vmem:[%s0 + $0x5c] sm:$0xf]
  %v41 = vld [vmem:[%s0 + $0x60] sm:$0xf]
  %v42 = vld [vmem:[%s0 + $0x64] sm:$0xf]
  %v43 = vld [vmem:[%s0 + $0x68] sm:$0xf]
  %v44 = vld [vmem:[%s0 + $0x6c] sm:$0xf]
  %v45 = vld [vmem:[%s0 + $0x70] sm:$0xf]
  %v46 = vld [vmem:[%s0 + $0x74] sm:$0xf]
  %v47 = vld [vmem:[%s0 + $0x78] sm:$0xf]
  %v48 = vld [vmem:[%s0 + $0x7c] sm:$0xf]
  %v49 = vld [vmem:[%s0 + $0x80] sm:$0xf]
  %v50 = vld [vmem:[%s0 + $0x84] sm:$0xf]
  %v51 = vld [vmem:[%s0 + $0x88] sm:$0xf]
  %v52 = vld [vmem:[%s0 + $0x8c] sm:$0xf]
  %v53 = vld [vmem:[%s0 + $0x90] sm:$0xf]
  %v54 = vld [vmem:[%s0 + $0x94] sm:$0xf]
  %v55 = vld [vmem:[%s0 + $0x98] sm:$0xf]
  %v56 = vld [vmem:[%s0 + $0x9c] sm:$0xf]
  %v57 = vld [vmem:[%s0 + $0xa0] sm:$0xf]
  %v58 = vld [vmem:[%s0 + $0xa4] sm:$0xf]
  %v59 = vld [vmem:[%s0 + $0xa8] sm:$0xf]
  %v60 = vld [vmem:[%s0 + $0xac] sm:$0xf]
  %v61 = vld [vmem:[%s0 + $0xb0] sm:$0xf]
  %v62 = vld [vmem:[%s0 + $0xb4] sm:$0xf]
  %v63 = vld [vmem:[%s0 + $0xb8] sm:$0xf]
  %v64 = vld [vmem:[%s0 + $0xbc] sm:$0xf]
  %v65 = vld [vmem:[%s0 + $0xc0] sm:$0xf]
  %v66 = vld [vmem:[%s0 + $0xc4] sm:$0xf]
  %v67 = vld [vmem:[%s0 + $0xc8] sm:$0xf]
  %v68 = vld [vmem:[%s0 + $0xcc] sm:$0xf]
  %v69 = vld [vmem:[%s0 + $0xd0] sm:$0xf]
  %v70 = vld [vmem:[%s0 + $0xd4] sm:$0xf]
  %v71 = vld [vmem:[%s0 + $0xd8] sm:$0xf]
  %v72 = vld [vmem:[%s0 + $0xdc] sm:$0xf]
  %v73 = vld [vmem:[%s0 + $0xe0] sm:$0xf]
  %v74 = vld [vmem:[%s0 + $0xe4] sm:$0xf]
  %v75 = vld [vmem:[%s0 + $0xe8] sm:$0xf]
  %v76 = vld [vmem:[%s0 + $0xec] sm:$0xf]
  %v77 = vld [vmem:[%s0 + $0xf0] sm:$0xf]
  %v78 = vld [vmem:[%s0 + $0xf4] sm:$0xf]
  %v79 = vld [vmem:[%s0 + $0xf8] sm:$0xf]
  %v80 = vld [vmem:[%s0 + $0xfc] sm:$0xf]
  %v81 = vunpack.c.l.bf16 %v17
  %v82 = vunpack.c.l.bf16 %v18
  %v83 = vunpack.c.l.bf16 %v19
  %v84 = vunpack.c.l.bf16 %v20
  %v85 = vunpack.c.l.bf16 %v21
  %v86 = vunpack.c.l.bf16 %v22
  %v87 = vunpack.c.l.bf16 %v23
  %v88 = vunpack.c.l.bf16 %v24
  %v89 = vunpack.c.l.bf16 %v25
  %v90 = vunpack.c.l.bf16 %v26
  %v91 = vunpack.c.l.bf16 %v27
  %v92 = vunpack.c.l.bf16 %v28
  %v93 = vunpack.c.l.bf16 %v29
  %v94 = vunpack.c.l.bf16 %v30
  %v95 = vunpack.c.l.bf16 %v31
  %v96 = vunpack.c.l.bf16 %v32
  %v97 = vunpack.c.l.bf16 %v33
  %v98 = vunpack.c.l.bf16 %v34
  %v99 = vunpack.c.l.bf16 %v35
  %v100 = vunpack.c.l.bf16 %v36
  %v101 = vunpack.c.l.bf16 %v37
  %v102 = vunpack.c.l.bf16 %v38
  %v103 = vunpack.c.l.bf16 %v39
  %v104 = vunpack.c.l.bf16 %v40
  %v105 = vunpack.c.l.bf16 %v41
  %v106 = vunpack.c.l.bf16 %v42
  %v107 = vunpack.c.l.bf16 %v43
  %v108 = vunpack.c.l.bf16 %v44
  %v109 = vunpack.c.l.bf16 %v45
  %v110 = vunpack.c.l.bf16 %v46
  %v111 = vunpack.c.l.bf16 %v47
  %v112 = vunpack.c.l.bf16 %v48
  %v113 = vunpack.c.l.bf16 %v49
  %v114 = vunpack.c.l.bf16 %v50
  %v115 = vunpack.c.l.bf16 %v51
  %v116 = vunpack.c.l.bf16 %v52
  %v117 = vunpack.c.l.bf16 %v53
  %v118 = vunpack.c.l.bf16 %v54
  %v119 = vunpack.c.l.bf16 %v55
  %v120 = vunpack.c.l.bf16 %v56
  %v121 = vunpack.c.l.bf16 %v57
  %v122 = vunpack.c.l.bf16 %v58
  %v123 = vunpack.c.l.bf16 %v59
  %v124 = vunpack.c.l.bf16 %v60
  %v125 = vunpack.c.l.bf16 %v61
  %v126 = vunpack.c.l.bf16 %v62
  %v127 = vunpack.c.l.bf16 %v63
  %v128 = vunpack.c.l.bf16 %v64
  %v129 = vunpack.c.l.bf16 %v65
  %v130 = vunpack.c.l.bf16 %v66
  %v131 = vunpack.c.l.bf16 %v67
  %v132 = vunpack.c.l.bf16 %v68
  %v133 = vunpack.c.l.bf16 %v69
  %v134 = vunpack.c.l.bf16 %v70
  %v135 = vunpack.c.l.bf16 %v71
  %v136 = vunpack.c.l.bf16 %v72
  %v137 = vunpack.c.l.bf16 %v73
  %v138 = vunpack.c.l.bf16 %v74
  %v139 = vunpack.c.l.bf16 %v75
  %v140 = vunpack.c.l.bf16 %v76
  %v141 = vunpack.c.l.bf16 %v77
  %v142 = vunpack.c.l.bf16 %v78
  %v143 = vunpack.c.l.bf16 %v79
  %v144 = vunpack.c.l.bf16 %v80
  %v145 = vld [vmem:[%s1] sm:$0x1]
  %v147 = vperm.slane %v145, 0
  %v149 = vmul.f32 %v81, %v147
  %v150 = vmul.f32 %v82, %v147
  %v151 = vmul.f32 %v83, %v147
  %v152 = vmul.f32 %v84, %v147
  %v153 = vmul.f32 %v85, %v147
  %v154 = vmul.f32 %v86, %v147
  %v155 = vmul.f32 %v87, %v147
  %v156 = vmul.f32 %v88, %v147
  %v157 = vmul.f32 %v89, %v147
  %v158 = vmul.f32 %v90, %v147
  %v159 = vmul.f32 %v91, %v147
  %v160 = vmul.f32 %v92, %v147
  %v161 = vmul.f32 %v93, %v147
  %v162 = vmul.f32 %v94, %v147
  %v163 = vmul.f32 %v95, %v147
  %v164 = vmul.f32 %v96, %v147
  %v165 = vmul.f32 %v97, %v147
  %v166 = vmul.f32 %v98, %v147
  %v167 = vmul.f32 %v99, %v147
  %v168 = vmul.f32 %v100, %v147
  %v169 = vmul.f32 %v101, %v147
  %v170 = vmul.f32 %v102, %v147
  %v171 = vmul.f32 %v103, %v147
  %v172 = vmul.f32 %v104, %v147
  %v173 = vmul.f32 %v105, %v147
  %v174 = vmul.f32 %v106, %v147
  %v175 = vmul.f32 %v107, %v147
  %v176 = vmul.f32 %v108, %v147
  %v177 = vmul.f32 %v109, %v147
  %v178 = vmul.f32 %v110, %v147
  %v179 = vmul.f32 %v111, %v147
  %v180 = vmul.f32 %v112, %v147
  %v181 = vmul.f32 %v113, %v147
  %v182 = vmul.f32 %v114, %v147
  %v183 = vmul.f32 %v115, %v147
  %v184 = vmul.f32 %v116, %v147
  %v185 = vmul.f32 %v117, %v147
  %v186 = vmul.f32 %v118, %v147
  %v187 = vmul.f32 %v119, %v147
  %v188 = vmul.f32 %v120, %v147
  %v189 = vmul.f32 %v121, %v147
  %v190 = vmul.f32 %v122, %v147
  %v191 = vmul.f32 %v123, %v147
  %v192 = vmul.f32 %v124, %v147
  %v193 = vmul.f32 %v125, %v147
  %v194 = vmul.f32 %v126, %v147
  %v195 = vmul.f32 %v127, %v147
  %v196 = vmul.f32 %v128, %v147
  %v197 = vmul.f32 %v129, %v147
  %v198 = vmul.f32 %v130, %v147
  %v199 = vmul.f32 %v131, %v147
  %v200 = vmul.f32 %v132, %v147
  %v201 = vmul.f32 %v133, %v147
  %v202 = vmul.f32 %v134, %v147
  %v203 = vmul.f32 %v135, %v147
  %v204 = vmul.f32 %v136, %v147
  %v205 = vmul.f32 %v137, %v147
  %v206 = vmul.f32 %v138, %v147
  %v207 = vmul.f32 %v139, %v147
  %v208 = vmul.f32 %v140, %v147
  %v209 = vmul.f32 %v141, %v147
  %v210 = vmul.f32 %v142, %v147
  %v211 = vmul.f32 %v143, %v147
  %v212 = vmul.f32 %v144, %v147
  %v213 = vld [vmem:[%s2] sm:$0x1]
  %v215 = vperm.slane %v213, 0
  %v217 = vadd.f32 %v149, %v215
  %v218 = vadd.f32 %v150, %v215
  %v219 = vadd.f32 %v151, %v215
  %v220 = vadd.f32 %v152, %v215
  %v221 = vadd.f32 %v153, %v215
  %v222 = vadd.f32 %v154, %v215
  %v223 = vadd.f32 %v155, %v215
  %v224 = vadd.f32 %v156, %v215
  %v225 = vadd.f32 %v157, %v215
  %v226 = vadd.f32 %v158, %v215
  %v227 = vadd.f32 %v159, %v215
  %v228 = vadd.f32 %v160, %v215
  %v229 = vadd.f32 %v161, %v215
  %v230 = vadd.f32 %v162, %v215
  %v231 = vadd.f32 %v163, %v215
  %v232 = vadd.f32 %v164, %v215
  %v233 = vadd.f32 %v165, %v215
  %v234 = vadd.f32 %v166, %v215
  %v235 = vadd.f32 %v167, %v215
  %v236 = vadd.f32 %v168, %v215
  %v237 = vadd.f32 %v169, %v215
  %v238 = vadd.f32 %v170, %v215
  %v239 = vadd.f32 %v171, %v215
  %v240 = vadd.f32 %v172, %v215
  %v241 = vadd.f32 %v173, %v215
  %v242 = vadd.f32 %v174, %v215
  %v243 = vadd.f32 %v175, %v215
  %v244 = vadd.f32 %v176, %v215
  %v245 = vadd.f32 %v177, %v215
  %v246 = vadd.f32 %v178, %v215
  %v247 = vadd.f32 %v179, %v215
  %v248 = vadd.f32 %v180, %v215
  %v249 = vadd.f32 %v181, %v215
  %v250 = vadd.f32 %v182, %v215
  %v251 = vadd.f32 %v183, %v215
  %v252 = vadd.f32 %v184, %v215
  %v253 = vadd.f32 %v185, %v215
  %v254 = vadd.f32 %v186, %v215
  %v255 = vadd.f32 %v187, %v215
  %v256 = vadd.f32 %v188, %v215
  %v257 = vadd.f32 %v189, %v215
  %v258 = vadd.f32 %v190, %v215
  %v259 = vadd.f32 %v191, %v215
  %v260 = vadd.f32 %v192, %v215
  %v261 = vadd.f32 %v193, %v215
  %v262 = vadd.f32 %v194, %v215
  %v263 = vadd.f32 %v195, %v215
  %v264 = vadd.f32 %v196, %v215
  %v265 = vadd.f32 %v197, %v215
  %v266 = vadd.f32 %v198, %v215
  %v267 = vadd.f32 %v199, %v215
  %v268 = vadd.f32 %v200, %v215
  %v269 = vadd.f32 %v201, %v215
  %v270 = vadd.f32 %v202, %v215
  %v271 = vadd.f32 %v203, %v215
  %v272 = vadd.f32 %v204, %v215
  %v273 = vadd.f32 %v205, %v215
  %v274 = vadd.f32 %v206, %v215
  %v275 = vadd.f32 %v207, %v215
  %v276 = vadd.f32 %v208, %v215
  %v277 = vadd.f32 %v209, %v215
  %v278 = vadd.f32 %v210, %v215
  %v279 = vadd.f32 %v211, %v215
  %v280 = vadd.f32 %v212, %v215
  %v281 = vld [vmem:[%s3] sm:$0xf]
  %v282 = vld [vmem:[%s3 + $0x4] sm:$0xf]
  %v283 = vld [vmem:[%s3 + $0x8] sm:$0xf]
  %v284 = vld [vmem:[%s3 + $0xc] sm:$0xf]
  %v285 = vld [vmem:[%s3 + $0x10] sm:$0xf]
  %v286 = vld [vmem:[%s3 + $0x14] sm:$0xf]
  %v287 = vld [vmem:[%s3 + $0x18] sm:$0xf]
  %v288 = vld [vmem:[%s3 + $0x1c] sm:$0xf]
  %v289 = vld [vmem:[%s3 + $0x20] sm:$0xf]
  %v290 = vld [vmem:[%s3 + $0x24] sm:$0xf]
  %v291 = vld [vmem:[%s3 + $0x28] sm:$0xf]
  %v292 = vld [vmem:[%s3 + $0x2c] sm:$0xf]
  %v293 = vld [vmem:[%s3 + $0x30] sm:$0xf]
  %v294 = vld [vmem:[%s3 + $0x34] sm:$0xf]
  %v295 = vld [vmem:[%s3 + $0x38] sm:$0xf]
  %v296 = vld [vmem:[%s3 + $0x3c] sm:$0xf]
  %v297 = vld [vmem:[%s3 + $0x40] sm:$0xf]
  %v298 = vld [vmem:[%s3 + $0x44] sm:$0xf]
  %v299 = vld [vmem:[%s3 + $0x48] sm:$0xf]
  %v300 = vld [vmem:[%s3 + $0x4c] sm:$0xf]
  %v301 = vld [vmem:[%s3 + $0x50] sm:$0xf]
  %v302 = vld [vmem:[%s3 + $0x54] sm:$0xf]
  %v303 = vld [vmem:[%s3 + $0x58] sm:$0xf]
  %v304 = vld [vmem:[%s3 + $0x5c] sm:$0xf]
  %v305 = vld [vmem:[%s3 + $0x60] sm:$0xf]
  %v306 = vld [vmem:[%s3 + $0x64] sm:$0xf]
  %v307 = vld [vmem:[%s3 + $0x68] sm:$0xf]
  %v308 = vld [vmem:[%s3 + $0x6c] sm:$0xf]
  %v309 = vld [vmem:[%s3 + $0x70] sm:$0xf]
  %v310 = vld [vmem:[%s3 + $0x74] sm:$0xf]
  %v311 = vld [vmem:[%s3 + $0x78] sm:$0xf]
  %v312 = vld [vmem:[%s3 + $0x7c] sm:$0xf]
  %v313 = vld [vmem:[%s3 + $0x80] sm:$0xf]
  %v314 = vld [vmem:[%s3 + $0x84] sm:$0xf]
  %v315 = vld [vmem:[%s3 + $0x88] sm:$0xf]
  %v316 = vld [vmem:[%s3 + $0x8c] sm:$0xf]
  %v317 = vld [vmem:[%s3 + $0x90] sm:$0xf]
  %v318 = vld [vmem:[%s3 + $0x94] sm:$0xf]
  %v319 = vld [vmem:[%s3 + $0x98] sm:$0xf]
  %v320 = vld [vmem:[%s3 + $0x9c] sm:$0xf]
  %v321 = vld [vmem:[%s3 + $0xa0] sm:$0xf]
  %v322 = vld [vmem:[%s3 + $0xa4] sm:$0xf]
  %v323 = vld [vmem:[%s3 + $0xa8] sm:$0xf]
  %v324 = vld [vmem:[%s3 + $0xac] sm:$0xf]
  %v325 = vld [vmem:[%s3 + $0xb0] sm:$0xf]
  %v326 = vld [vmem:[%s3 + $0xb4] sm:$0xf]
  %v327 = vld [vmem:[%s3 + $0xb8] sm:$0xf]
  %v328 = vld [vmem:[%s3 + $0xbc] sm:$0xf]
  %v329 = vld [vmem:[%s3 + $0xc0] sm:$0xf]
  %v330 = vld [vmem:[%s3 + $0xc4] sm:$0xf]
  %v331 = vld [vmem:[%s3 + $0xc8] sm:$0xf]
  %v332 = vld [vmem:[%s3 + $0xcc] sm:$0xf]
  %v333 = vld [vmem:[%s3 + $0xd0] sm:$0xf]
  %v334 = vld [vmem:[%s3 + $0xd4] sm:$0xf]
  %v335 = vld [vmem:[%s3 + $0xd8] sm:$0xf]
  %v336 = vld [vmem:[%s3 + $0xdc] sm:$0xf]
  %v337 = vld [vmem:[%s3 + $0xe0] sm:$0xf]
  %v338 = vld [vmem:[%s3 + $0xe4] sm:$0xf]
  %v339 = vld [vmem:[%s3 + $0xe8] sm:$0xf]
  %v340 = vld [vmem:[%s3 + $0xec] sm:$0xf]
  %v341 = vld [vmem:[%s3 + $0xf0] sm:$0xf]
  %v342 = vld [vmem:[%s3 + $0xf4] sm:$0xf]
  %v343 = vld [vmem:[%s3 + $0xf8] sm:$0xf]
  %v344 = vld [vmem:[%s3 + $0xfc] sm:$0xf]
  %v345 = vunpack.c.l.bf16 %v281
  %v346 = vunpack.c.l.bf16 %v282
  %v347 = vunpack.c.l.bf16 %v283
  %v348 = vunpack.c.l.bf16 %v284
  %v349 = vunpack.c.l.bf16 %v285
  %v350 = vunpack.c.l.bf16 %v286
  %v351 = vunpack.c.l.bf16 %v287
  %v352 = vunpack.c.l.bf16 %v288
  %v353 = vunpack.c.l.bf16 %v289
  %v354 = vunpack.c.l.bf16 %v290
  %v355 = vunpack.c.l.bf16 %v291
  %v356 = vunpack.c.l.bf16 %v292
  %v357 = vunpack.c.l.bf16 %v293
  %v358 = vunpack.c.l.bf16 %v294
  %v359 = vunpack.c.l.bf16 %v295
  %v360 = vunpack.c.l.bf16 %v296
  %v361 = vunpack.c.l.bf16 %v297
  %v362 = vunpack.c.l.bf16 %v298
  %v363 = vunpack.c.l.bf16 %v299
  %v364 = vunpack.c.l.bf16 %v300
  %v365 = vunpack.c.l.bf16 %v301
  %v366 = vunpack.c.l.bf16 %v302
  %v367 = vunpack.c.l.bf16 %v303
  %v368 = vunpack.c.l.bf16 %v304
  %v369 = vunpack.c.l.bf16 %v305
  %v370 = vunpack.c.l.bf16 %v306
  %v371 = vunpack.c.l.bf16 %v307
  %v372 = vunpack.c.l.bf16 %v308
  %v373 = vunpack.c.l.bf16 %v309
  %v374 = vunpack.c.l.bf16 %v310
  %v375 = vunpack.c.l.bf16 %v311
  %v376 = vunpack.c.l.bf16 %v312
  %v377 = vunpack.c.l.bf16 %v313
  %v378 = vunpack.c.l.bf16 %v314
  %v379 = vunpack.c.l.bf16 %v315
  %v380 = vunpack.c.l.bf16 %v316
  %v381 = vunpack.c.l.bf16 %v317
  %v382 = vunpack.c.l.bf16 %v318
  %v383 = vunpack.c.l.bf16 %v319
  %v384 = vunpack.c.l.bf16 %v320
  %v385 = vunpack.c.l.bf16 %v321
  %v386 = vunpack.c.l.bf16 %v322
  %v387 = vunpack.c.l.bf16 %v323
  %v388 = vunpack.c.l.bf16 %v324
  %v389 = vunpack.c.l.bf16 %v325
  %v390 = vunpack.c.l.bf16 %v326
  %v391 = vunpack.c.l.bf16 %v327
  %v392 = vunpack.c.l.bf16 %v328
  %v393 = vunpack.c.l.bf16 %v329
  %v394 = vunpack.c.l.bf16 %v330
  %v395 = vunpack.c.l.bf16 %v331
  %v396 = vunpack.c.l.bf16 %v332
  %v397 = vunpack.c.l.bf16 %v333
  %v398 = vunpack.c.l.bf16 %v334
  %v399 = vunpack.c.l.bf16 %v335
  %v400 = vunpack.c.l.bf16 %v336
  %v401 = vunpack.c.l.bf16 %v337
  %v402 = vunpack.c.l.bf16 %v338
  %v403 = vunpack.c.l.bf16 %v339
  %v404 = vunpack.c.l.bf16 %v340
  %v405 = vunpack.c.l.bf16 %v341
  %v406 = vunpack.c.l.bf16 %v342
  %v407 = vunpack.c.l.bf16 %v343
  %v408 = vunpack.c.l.bf16 %v344
  %v409 = vadd.f32 %v217, %v345
  %v410 = vadd.f32 %v218, %v346
  %v411 = vadd.f32 %v219, %v347
  %v412 = vadd.f32 %v220, %v348
  %v413 = vadd.f32 %v221, %v349
  %v414 = vadd.f32 %v222, %v350
  %v415 = vadd.f32 %v223, %v351
  %v416 = vadd.f32 %v224, %v352
  %v417 = vadd.f32 %v225, %v353
  %v418 = vadd.f32 %v226, %v354
  %v419 = vadd.f32 %v227, %v355
  %v420 = vadd.f32 %v228, %v356
  %v421 = vadd.f32 %v229, %v357
  %v422 = vadd.f32 %v230, %v358
  %v423 = vadd.f32 %v231, %v359
  %v424 = vadd.f32 %v232, %v360
  %v425 = vadd.f32 %v233, %v361
  %v426 = vadd.f32 %v234, %v362
  %v427 = vadd.f32 %v235, %v363
  %v428 = vadd.f32 %v236, %v364
  %v429 = vadd.f32 %v237, %v365
  %v430 = vadd.f32 %v238, %v366
  %v431 = vadd.f32 %v239, %v367
  %v432 = vadd.f32 %v240, %v368
  %v433 = vadd.f32 %v241, %v369
  %v434 = vadd.f32 %v242, %v370
  %v435 = vadd.f32 %v243, %v371
  %v436 = vadd.f32 %v244, %v372
  %v437 = vadd.f32 %v245, %v373
  %v438 = vadd.f32 %v246, %v374
  %v439 = vadd.f32 %v247, %v375
  %v440 = vadd.f32 %v248, %v376
  %v441 = vadd.f32 %v249, %v377
  %v442 = vadd.f32 %v250, %v378
  %v443 = vadd.f32 %v251, %v379
  %v444 = vadd.f32 %v252, %v380
  %v445 = vadd.f32 %v253, %v381
  %v446 = vadd.f32 %v254, %v382
  %v447 = vadd.f32 %v255, %v383
  %v448 = vadd.f32 %v256, %v384
  %v449 = vadd.f32 %v257, %v385
  %v450 = vadd.f32 %v258, %v386
  %v451 = vadd.f32 %v259, %v387
  %v452 = vadd.f32 %v260, %v388
  %v453 = vadd.f32 %v261, %v389
  %v454 = vadd.f32 %v262, %v390
  %v455 = vadd.f32 %v263, %v391
  %v456 = vadd.f32 %v264, %v392
  %v457 = vadd.f32 %v265, %v393
  %v458 = vadd.f32 %v266, %v394
  %v459 = vadd.f32 %v267, %v395
  %v460 = vadd.f32 %v268, %v396
  %v461 = vadd.f32 %v269, %v397
  %v462 = vadd.f32 %v270, %v398
  %v463 = vadd.f32 %v271, %v399
  %v464 = vadd.f32 %v272, %v400
  %v465 = vadd.f32 %v273, %v401
  %v466 = vadd.f32 %v274, %v402
  %v467 = vadd.f32 %v275, %v403
  %v468 = vadd.f32 %v276, %v404
  %v469 = vadd.f32 %v277, %v405
  %v470 = vadd.f32 %v278, %v406
  %v471 = vadd.f32 %v279, %v407
  %v472 = vadd.f32 %v280, %v408
  %v473 = vmax.f32 %v409, 0.0
  %v474 = vmax.f32 %v410, 0.0
  %v475 = vmax.f32 %v411, 0.0
  %v476 = vmax.f32 %v412, 0.0
  %v477 = vmax.f32 %v413, 0.0
  %v478 = vmax.f32 %v414, 0.0
  %v479 = vmax.f32 %v415, 0.0
  %v480 = vmax.f32 %v416, 0.0
  %v481 = vmax.f32 %v417, 0.0
  %v482 = vmax.f32 %v418, 0.0
  %v483 = vmax.f32 %v419, 0.0
  %v484 = vmax.f32 %v420, 0.0
  %v485 = vmax.f32 %v421, 0.0
  %v486 = vmax.f32 %v422, 0.0
  %v487 = vmax.f32 %v423, 0.0
  %v488 = vmax.f32 %v424, 0.0
  %v489 = vmax.f32 %v425, 0.0
  %v490 = vmax.f32 %v426, 0.0
  %v491 = vmax.f32 %v427, 0.0
  %v492 = vmax.f32 %v428, 0.0
  %v493 = vmax.f32 %v429, 0.0
  %v494 = vmax.f32 %v430, 0.0
  %v495 = vmax.f32 %v431, 0.0
  %v496 = vmax.f32 %v432, 0.0
  %v497 = vmax.f32 %v433, 0.0
  %v498 = vmax.f32 %v434, 0.0
  %v499 = vmax.f32 %v435, 0.0
  %v500 = vmax.f32 %v436, 0.0
  %v501 = vmax.f32 %v437, 0.0
  %v502 = vmax.f32 %v438, 0.0
  %v503 = vmax.f32 %v439, 0.0
  %v504 = vmax.f32 %v440, 0.0
  %v505 = vmax.f32 %v441, 0.0
  %v506 = vmax.f32 %v442, 0.0
  %v507 = vmax.f32 %v443, 0.0
  %v508 = vmax.f32 %v444, 0.0
  %v509 = vmax.f32 %v445, 0.0
  %v510 = vmax.f32 %v446, 0.0
  %v511 = vmax.f32 %v447, 0.0
  %v512 = vmax.f32 %v448, 0.0
  %v513 = vmax.f32 %v449, 0.0
  %v514 = vmax.f32 %v450, 0.0
  %v515 = vmax.f32 %v451, 0.0
  %v516 = vmax.f32 %v452, 0.0
  %v517 = vmax.f32 %v453, 0.0
  %v518 = vmax.f32 %v454, 0.0
  %v519 = vmax.f32 %v455, 0.0
  %v520 = vmax.f32 %v456, 0.0
  %v521 = vmax.f32 %v457, 0.0
  %v522 = vmax.f32 %v458, 0.0
  %v523 = vmax.f32 %v459, 0.0
  %v524 = vmax.f32 %v460, 0.0
  %v525 = vmax.f32 %v461, 0.0
  %v526 = vmax.f32 %v462, 0.0
  %v527 = vmax.f32 %v463, 0.0
  %v528 = vmax.f32 %v464, 0.0
  %v529 = vmax.f32 %v465, 0.0
  %v530 = vmax.f32 %v466, 0.0
  %v531 = vmax.f32 %v467, 0.0
  %v532 = vmax.f32 %v468, 0.0
  %v533 = vmax.f32 %v469, 0.0
  %v534 = vmax.f32 %v470, 0.0
  %v535 = vmax.f32 %v471, 0.0
  %v536 = vmax.f32 %v472, 0.0
  %537 = vst [vmem:[%s4] sm:$0xff] %v473
  %538 = vst [vmem:[%s4 + $0x8] sm:$0xff] %v474
  %539 = vst [vmem:[%s4 + $0x10] sm:$0xff] %v475
  %540 = vst [vmem:[%s4 + $0x18] sm:$0xff] %v476
  %541 = vst [vmem:[%s4 + $0x20] sm:$0xff] %v477
  %542 = vst [vmem:[%s4 + $0x28] sm:$0xff] %v478
  %543 = vst [vmem:[%s4 + $0x30] sm:$0xff] %v479
  %544 = vst [vmem:[%s4 + $0x38] sm:$0xff] %v480
  %545 = vst [vmem:[%s4 + $0x40] sm:$0xff] %v481
  %546 = vst [vmem:[%s4 + $0x48] sm:$0xff] %v482
  %547 = vst [vmem:[%s4 + $0x50] sm:$0xff] %v483
  %548 = vst [vmem:[%s4 + $0x58] sm:$0xff] %v484
  %549 = vst [vmem:[%s4 + $0x60] sm:$0xff] %v485
  %550 = vst [vmem:[%s4 + $0x68] sm:$0xff] %v486
  %551 = vst [vmem:[%s4 + $0x70] sm:$0xff] %v487
  %552 = vst [vmem:[%s4 + $0x78] sm:$0xff] %v488
  %553 = vst [vmem:[%s4 + $0x80] sm:$0xff] %v489
  %554 = vst [vmem:[%s4 + $0x88] sm:$0xff] %v490
  %555 = vst [vmem:[%s4 + $0x90] sm:$0xff] %v491
  %556 = vst [vmem:[%s4 + $0x98] sm:$0xff] %v492
  %557 = vst [vmem:[%s4 + $0xa0] sm:$0xff] %v493
  %558 = vst [vmem:[%s4 + $0xa8] sm:$0xff] %v494
  %559 = vst [vmem:[%s4 + $0xb0] sm:$0xff] %v495
  %560 = vst [vmem:[%s4 + $0xb8] sm:$0xff] %v496
  %561 = vst [vmem:[%s4 + $0xc0] sm:$0xff] %v497
  %562 = vst [vmem:[%s4 + $0xc8] sm:$0xff] %v498
  %563 = vst [vmem:[%s4 + $0xd0] sm:$0xff] %v499
  %564 = vst [vmem:[%s4 + $0xd8] sm:$0xff] %v500
  %565 = vst [vmem:[%s4 + $0xe0] sm:$0xff] %v501
  %566 = vst [vmem:[%s4 + $0xe8] sm:$0xff] %v502
  %567 = vst [vmem:[%s4 + $0xf0] sm:$0xff] %v503
  %568 = vst [vmem:[%s4 + $0xf8] sm:$0xff] %v504
  %569 = vst [vmem:[%s4 + $0x100] sm:$0xff] %v505
  %570 = vst [vmem:[%s4 + $0x108] sm:$0xff] %v506
  %571 = vst [vmem:[%s4 + $0x110] sm:$0xff] %v507
  %572 = vst [vmem:[%s4 + $0x118] sm:$0xff] %v508
  %573 = vst [vmem:[%s4 + $0x120] sm:$0xff] %v509
  %574 = vst [vmem:[%s4 + $0x128] sm:$0xff] %v510
  %575 = vst [vmem:[%s4 + $0x130] sm:$0xff] %v511
  %576 = vst [vmem:[%s4 + $0x138] sm:$0xff] %v512
  %577 = vst [vmem:[%s4 + $0x140] sm:$0xff] %v513
  %578 = vst [vmem:[%s4 + $0x148] sm:$0xff] %v514
  %579 = vst [vmem:[%s4 + $0x150] sm:$0xff] %v515
  %580 = vst [vmem:[%s4 + $0x158] sm:$0xff] %v516
  %581 = vst [vmem:[%s4 + $0x160] sm:$0xff] %v517
  %582 = vst [vmem:[%s4 + $0x168] sm:$0xff] %v518
  %583 = vst [vmem:[%s4 + $0x170] sm:$0xff] %v519
  %584 = vst [vmem:[%s4 + $0x178] sm:$0xff] %v520
  %585 = vst [vmem:[%s4 + $0x180] sm:$0xff] %v521
  %586 = vst [vmem:[%s4 + $0x188] sm:$0xff] %v522
  %587 = vst [vmem:[%s4 + $0x190] sm:$0xff] %v523
  %588 = vst [vmem:[%s4 + $0x198] sm:$0xff] %v524
  %589 = vst [vmem:[%s4 + $0x1a0] sm:$0xff] %v525
  %590 = vst [vmem:[%s4 + $0x1a8] sm:$0xff] %v526
  %591 = vst [vmem:[%s4 + $0x1b0] sm:$0xff] %v527
  %592 = vst [vmem:[%s4 + $0x1b8] sm:$0xff] %v528
  %593 = vst [vmem:[%s4 + $0x1c0] sm:$0xff] %v529
  %594 = vst [vmem:[%s4 + $0x1c8] sm:$0xff] %v530
  %595 = vst [vmem:[%s4 + $0x1d0] sm:$0xff] %v531
  %596 = vst [vmem:[%s4 + $0x1d8] sm:$0xff] %v532
  %597 = vst [vmem:[%s4 + $0x1e0] sm:$0xff] %v533
  %598 = vst [vmem:[%s4 + $0x1e8] sm:$0xff] %v534
  %599 = vst [vmem:[%s4 + $0x1f0] sm:$0xff] %v535
  %600 = vst [vmem:[%s4 + $0x1f8] sm:$0xff] %v536
  // Predicated region
  $region18: #{residual_block.5} parent=0 // pred_check
    _
  $region19: #{residual_block.5} parent=0 // pred_check_branch
    %602 = sbr.rel (0) target = $region21
  $region20: #{residual_block.5} parent=0 // pred_region
    _
  $region21: #{residual_block.5} parent=0 // pred_fallthru
    _
  // Predicated region
  $region22: #{residual_block.5} parent=0 // pred_check
    _
  $region23: #{residual_block.5} parent=0 // pred_check_branch
    %604 = sbr.rel (0) target = $region25
  $region24: #{residual_block.5} parent=0 // pred_region
    _
  $region25: #{residual_block.5} parent=0 // pred_fallthru
    _

// kernel: residual_block.3
$region0: #{residual_block.3}
  #allocation0 [shape = 'u32[]', space=smem, size = 0x4, offset = 0x4, fixed_abs, tag = 'smem constant byte address 0x4 - core index']
  #allocation1 [shape = 'u32[72,128]{1,0:T(1,128)}', space=vmem, size = 0x9000, scoped, tag = 'internal scratch']
  %s0 = inlined_call_operand.vmem [shape: bf16[2,18,1,18,8], index: 0, kind: input, shape index: {}]
  %s1 = inlined_call_operand.vmem [shape: bf16[72,128], index: 1, kind: input, shape index: {}]
  %s2 = inlined_call_operand.vmem [shape: bf16[2,1,256,128], index: 2, kind: output, shape index: {0}]
  %s3 = inlined_call_operand.vmem [shape: f32[2,1,2,128], index: 3, kind: output, shape index: {1}]
  %4 = xla_tuple %s2, %s3
  %s5 = sld [smem:[#allocation0]]
  $region49: #{residual_block.3} parent=0
    _
  %s7 = ssub.s32 1, %s5
  %s8 = scalar_select 0, %s7, %s5
  loop: start=0, step=1, limit=4
  $region2: #{residual_block.3} parent=0 // loop_pre_header
    _
  $region3: #{residual_block.3} parent=0 // loop_header
    %s10 = sphi 0, %s14
    %p11 = scmp.ge.s32.totalorder %s10, 4
    %s17 = sphi 0, %s29
    %s18 = sphi 0, %s25
    %s19 = sphi 0, %s17
    %s20 = sphi 0, %s18
    %s21 = sphi 0, %s19
    %s22 = sphi 0, %s20
    %s32 = sphi 0, %s34
    %s35 = sphi 0, %s32
    %s36 = sphi 0, %s35
    %s52 = sphi 0, %s36
    %s56 = sphi 0, %s56
    %s58 = sphi 0, %s56
    %s59 = sphi 0, %s58
    %s73 = sphi 0, %s59
    %s81 = sphi 0, %s83
    %s84 = sphi 0, %s81
    %s85 = sphi 0, %s84
    %s101 = sphi 0, %s85
    %s109 = sphi 0, %s111
    %s112 = sphi 0, %s109
    %s113 = sphi 0, %s112
    %s129 = sphi 0, %s113
  $region4: #{residual_block.3} parent=0 // loop_header_branch
    %13 = sbr.rel (%p11) target = $region8
  $region5: #{residual_block.3} parent=0 // loop_body
    %s15 = ssub.s32 %s10, 1
    %s16 = ssub.s32 %s10, 2
    %s23 = sadd.s32 1, %s18
    %p24 = scmp.ge.s32.totalorder %s23, 1
    %s25 = scalar_select %p24, 0, %s23
    %s26 = sadd.s32 1, %s17
    %s27 = scalar_select %p24, %s26, %s17
    %p28 = scmp.ge.s32.totalorder %s27, 2
    %s29 = scalar_select %p28, 0, %s27
    %s30 = ssub.s32 %s17, %s29
    %p31 = scmp.eq.s32.totalorder %s30, 0
    %s33 = sadd.s32 %s32, 1
    %s34 = scalar_select %p31, %s32, %s33
    %p37 = pneg %p31
    %p38 = scmp.eq.s32.totalorder %s10, 1
    %p39 = por %p37, %p38
    %p40 = scmp.ne.s32.totalorder %s32, %s35
    %p41 = scmp.eq.s32.totalorder %s10, 0
    %p42 = por %p40, %p41
    %p43 = scmp.ne.s32.totalorder %s32, %s35
    %p44 = scmp.eq.s32.totalorder %s15, 1
    %p45 = por %p43, %p44
    %p46 = scmp.ne.s32.totalorder %s35, %s36
    %p47 = scmp.eq.s32.totalorder %s15, 0
    %p48 = por %p46, %p47
    %p49 = scmp.ne.s32.totalorder %s35, %s36
    %p50 = scmp.eq.s32.totalorder %s16, 1
    %p51 = por %p49, %p50
    %p53 = scmp.ne.s32.totalorder %s36, %s52
    %p54 = scmp.eq.s32.totalorder %s16, 0
    %p55 = por %p53, %p54
    %s57 = sadd.s32 %s56, 1
    %p60 = scmp.eq.s32.totalorder %s10, 1
    %p61 = scmp.ne.s32.totalorder %s56, %s58
    %p62 = scmp.eq.s32.totalorder %s10, 0
    %p63 = por %p61, %p62
    %p64 = scmp.ne.s32.totalorder %s56, %s58
    %p65 = scmp.eq.s32.totalorder %s15, 1
    %p66 = por %p64, %p65
    %p67 = scmp.ne.s32.totalorder %s58, %s59
    %p68 = scmp.eq.s32.totalorder %s15, 0
    %p69 = por %p67, %p68
    %p70 = scmp.ne.s32.totalorder %s58, %s59
    %p71 = scmp.eq.s32.totalorder %s16, 1
    %p72 = por %p70, %p71
    %p74 = scmp.ne.s32.totalorder %s59, %s73
    %p75 = scmp.eq.s32.totalorder %s16, 0
    %p76 = por %p74, %p75
    %s77 = ssub.s32 %s17, %s29
    %s78 = ssub.s32 %s18, %s25
    %s79 = sor.u32 %s77, %s78
    %p80 = scmp.eq.s32.totalorder %s79, 0
    %s82 = sadd.s32 %s81, 1
    %s83 = scalar_select %p80, %s81, %s82
    %p86 = pneg %p80
    %p87 = scmp.eq.s32.totalorder %s10, 1
    %p88 = por %p86, %p87
    %p89 = scmp.ne.s32.totalorder %s81, %s84
    %p90 = scmp.eq.s32.totalorder %s10, 0
    %p91 = por %p89, %p90
    %p92 = scmp.ne.s32.totalorder %s81, %s84
    %p93 = scmp.eq.s32.totalorder %s15, 1
    %p94 = por %p92, %p93
    %p95 = scmp.ne.s32.totalorder %s84, %s85
    %p96 = scmp.eq.s32.totalorder %s15, 0
    %p97 = por %p95, %p96
    %p98 = scmp.ne.s32.totalorder %s84, %s85
    %p99 = scmp.eq.s32.totalorder %s16, 1
    %p100 = por %p98, %p99
    %p102 = scmp.ne.s32.totalorder %s85, %s101
    %p103 = scmp.eq.s32.totalorder %s16, 0
    %p104 = por %p102, %p103
    %s105 = ssub.s32 %s17, %s29
    %s106 = ssub.s32 %s18, %s25
    %s107 = sor.u32 %s105, %s106
    %p108 = scmp.eq.s32.totalorder %s107, 0
    %s110 = sadd.s32 %s109, 1
    %s111 = scalar_select %p108, %s109, %s110
    %p114 = pneg %p108
    %p115 = scmp.eq.s32.totalorder %s10, 1
    %p116 = por %p114, %p115
    %p117 = scmp.ne.s32.totalorder %s109, %s112
    %p118 = scmp.eq.s32.totalorder %s10, 0
    %p119 = por %p117, %p118
    %p120 = scmp.ne.s32.totalorder %s109, %s112
    %p121 = scmp.eq.s32.totalorder %s15, 1
    %p122 = por %p120, %p121
    %p123 = scmp.ne.s32.totalorder %s112, %s113
    %p124 = scmp.eq.s32.totalorder %s15, 0
    %p125 = por %p123, %p124
    %p126 = scmp.ne.s32.totalorder %s112, %s113
    %p127 = scmp.eq.s32.totalorder %s16, 1
    %p128 = por %p126, %p127
    %p130 = scmp.ne.s32.totalorder %s113, %s129
    %p131 = scmp.eq.s32.totalorder %s16, 0
    %p132 = por %p130, %p131
    %p133 = scmp.le.s32.totalorder 1, %s10
    %p134 = scmp.lt.s32.totalorder %s10, 3
    %p135 = pnand %p133, %p134
    %p136 = pneg %p135
    // Predicated region
    $region9: #{residual_block.3} parent=5 // pred_check
      _
    $region10: #{residual_block.3} parent=5 // pred_check_branch
      %138 = sbr.rel (%p135) target = $region12
    $region11: #{residual_block.3} parent=5 // pred_region
      %s139 = ssub.s32 %s10, 1
      // Predicated region
      $region13: #{residual_block.3} parent=11 // pred_check
        %p140 = pneg %p69
      $region14: #{residual_block.3} parent=11 // pred_check_branch
        %142 = sbr.rel (%p140) target = $region16
      $region15: #{residual_block.3} parent=11 // pred_region
        _
      $region16: #{residual_block.3} parent=11 // pred_fallthru
        _
    $region12: #{residual_block.3} parent=5 // pred_fallthru
      _
    %p143 = scmp.lt.s32.totalorder %s10, 2
    // Predicated region
    $region17: #{residual_block.3} parent=5 // pred_check
      %p144 = pneg %p143
    $region18: #{residual_block.3} parent=5 // pred_check_branch
      %146 = sbr.rel (%p144) target = $region20
    $region19: #{residual_block.3} parent=5 // pred_region
      // Predicated region
      $region21: #{residual_block.3} parent=19 // pred_check
        %p147 = pneg %p42
      $region22: #{residual_block.3} parent=19 // pred_check_branch
        %149 = sbr.rel (%p147) target = $region24
      $region23: #{residual_block.3} parent=19 // pred_region
        %p150 = scmp.lt.s32.totalorder %s17, 1
        %s151 = scalar_select %p150, %s17, 1
        %s152 = smul.addr %s151, 54
        %s153 = smul.addr %s152, 4
        %s154 = scalar_lea.vmem %s0, %s153
      $region24: #{residual_block.3} parent=19 // pred_fallthru
        _
    $region20: #{residual_block.3} parent=5 // pred_fallthru
      _
    %p155 = scmp.le.s32.totalorder 1, %s10
    %p156 = scmp.lt.s32.totalorder %s10, 3
    %p157 = pnand %p155, %p156
    %p158 = pneg %p157
    // Predicated region
    $region25: #{residual_block.3} parent=5 // pred_check
      _
    $region26: #{residual_block.3} parent=5 // pred_check_branch
      %160 = sbr.rel (%p157) target = $region28
    $region27: #{residual_block.3} parent=5 // pred_region
      %s161 = ssub.s32 %s10, 1
      %p162 = scmp.lt.s32.totalorder %s19, 1
      %s163 = scalar_select %p162, %s19, 1
      %s164 = smul.addr %s163, 54
      %s165 = smul.addr %s164, 4
      %s166 = scalar_lea.vmem %s0, %s165
      %p167 = pneg %p48
      %p168 = pneg %p45
      %p169 = pneg %p69
      %p170 = pneg %p66
      %p171 = pneg %p97
      %p172 = pneg %p94
      %p173 = scmp.lt.s32.totalorder %s19, 1
      %s174 = scalar_select %p173, %s19, 1
      %p175 = scmp.lt.s32.totalorder %s20, 0
      %s176 = scalar_select %p175, %s20, 0
      %s177 = smul.addr %s176, 32
      %s178 = smul.addr %s174, 32
      %s179 = sadd.s32 %s177, %s178
      %s180 = smul.addr %s179, 4
      %s181 = scalar_lea.vmem %s2, %s180
      %p182 = pneg %p125
      %p183 = pneg %p122
      %p184 = scmp.lt.s32.totalorder %s19, 1
      %s185 = scalar_select %p184, %s19, 1
      %p186 = scmp.lt.s32.totalorder %s20, 0
      %s187 = scalar_select %p186, %s20, 0
      %s188 = sadd.s32 %s187, %s185
      %s189 = smul.addr %s188, 2
      %s190 = scalar_lea.vmem %s3, %s189
      %p191 = scmp.lt.s32.totalorder %s19, 1
      %s192 = scalar_select %p191, %s19, 1
      %s193 = smul.addr %s192, 54
      %s194 = smul.addr %s193, 4
      %s195 = scalar_lea.vmem %s0, %s194
      %p196 = scmp.lt.s32.totalorder %s19, 1
      %s197 = scalar_select %p196, %s19, 1
      %p198 = scmp.lt.s32.totalorder %s20, 0
      %s199 = scalar_select %p198, %s20, 0
      %s200 = smul.addr %s199, 32
      %s201 = smul.addr %s197, 32
      %s202 = sadd.s32 %s200, %s201
      %s203 = smul.addr %s202, 4
      %s204 = scalar_lea.vmem %s2, %s203
      %p205 = scmp.lt.s32.totalorder %s19, 1
      %s206 = scalar_select %p205, %s19, 1
      %p207 = scmp.lt.s32.totalorder %s20, 0
      %s208 = scalar_select %p207, %s20, 0
      %s209 = sadd.s32 %s208, %s206
      %s210 = smul.addr %s209, 2
      %s211 = scalar_lea.vmem %s3, %s210
      %s213 = smul.u32 %s20, 16
      %s214 = smul.u32 %s213, 3
      %s215 = smul.addr %s214, 4
      %s216 = scalar_lea.vmem %s195, %s215
      %v217 = vld [vmem:[%s216] sm:$0xf]
      %v218 = vld [vmem:[%s216 + $0x4] sm:$0xf]
      %v219 = vld [vmem:[%s216 + $0xc] sm:$0xf]
      %v220 = vld [vmem:[%s216 + $0x10] sm:$0xf]
      %v221 = vld [vmem:[%s216 + $0x18] sm:$0xf]
      %v222 = vld [vmem:[%s216 + $0x1c] sm:$0xf]
      %v223 = vld [vmem:[%s216 + $0x24] sm:$0xf]
      %v224 = vld [vmem:[%s216 + $0x28] sm:$0xf]
      %v225 = vld [vmem:[%s216 + $0x30] sm:$0xf]
      %v226 = vld [vmem:[%s216 + $0x34] sm:$0xf]
      %v227 = vld [vmem:[%s216 + $0x3c] sm:$0xf]
      %v228 = vld [vmem:[%s216 + $0x40] sm:$0xf]
      %v229 = vld [vmem:[%s216 + $0x48] sm:$0xf]
      %v230 = vld [vmem:[%s216 + $0x4c] sm:$0xf]
      %v231 = vld [vmem:[%s216 + $0x54] sm:$0xf]
      %v232 = vld [vmem:[%s216 + $0x58] sm:$0xf]
      %v233 = vld [vmem:[%s216 + $0x60] sm:$0xf]
      %v234 = vld [vmem:[%s216 + $0x64] sm:$0xf]
      %v235 = vld [vmem:[%s216 + $0x6c] sm:$0xf]
      %v236 = vld [vmem:[%s216 + $0x70] sm:$0xf]
      %v237 = vld [vmem:[%s216 + $0x78] sm:$0xf]
      %v238 = vld [vmem:[%s216 + $0x7c] sm:$0xf]
      %v239 = vld [vmem:[%s216 + $0x84] sm:$0xf]
      %v240 = vld [vmem:[%s216 + $0x88] sm:$0xf]
      %v241 = vld [vmem:[%s216 + $0x90] sm:$0xf]
      %v242 = vld [vmem:[%s216 + $0x94] sm:$0xf]
      %v243 = vld [vmem:[%s216 + $0x9c] sm:$0xf]
      %v244 = vld [vmem:[%s216 + $0xa0] sm:$0xf]
      %v245 = vld [vmem:[%s216 + $0xa8] sm:$0xf]
      %v246 = vld [vmem:[%s216 + $0xac] sm:$0xf]
      %v247 = vld [vmem:[%s216 + $0xb4] sm:$0xf]
      %v248 = vld [vmem:[%s216 + $0xb8] sm:$0xf]
      %v249 = vld [vmem:[%s216 + $0x8] sm:$0x1]
      %v250 = vld [vmem:[%s216 + $0x14] sm:$0x1]
      %v251 = vld [vmem:[%s216 + $0x20] sm:$0x1]
      %v252 = vld [vmem:[%s216 + $0x2c] sm:$0x1]
      %v253 = vld [vmem:[%s216 + $0x38] sm:$0x1]
      %v254 = vld [vmem:[%s216 + $0x44] sm:$0x1]
      %v255 = vld [vmem:[%s216 + $0x50] sm:$0x1]
      %v256 = vld [vmem:[%s216 + $0x5c] sm:$0x1]
      %v257 = vld [vmem:[%s216 + $0x68] sm:$0x1]
      %v258 = vld [vmem:[%s216 + $0x74] sm:$0x1]
      %v259 = vld [vmem:[%s216 + $0x80] sm:$0x1]
      %v260 = vld [vmem:[%s216 + $0x8c] sm:$0x1]
      %v261 = vld [vmem:[%s216 + $0x98] sm:$0x1]
      %v262 = vld [vmem:[%s216 + $0xa4] sm:$0x1]
      %v263 = vld [vmem:[%s216 + $0xb0] sm:$0x1]
      %v264 = vld [vmem:[%s216 + $0xbc] sm:$0x1]
      %vm265 = vsmask.f32 3328
      %vm266 = vsmask.f32 7440
      %vm267 = vmor %vm265, %vm266
      %v269 = vshrl.u32 %v217, 16
      %v271 = vrot.slane %v269, 4
      %v272 = vshll.u32 %v217, 16
      %v274 = vrot.slane %v272, 5
      %v275 = vor.u32 %v271, %v274
      %v276 = vrot.slane %v275, 4
      %v278 = vshll.u32 %v218, 16
      %v280 = vrot.slane %v278, 5
      %v281 = vsel %vm267, %v276, %v280
      %v282 = vshrl.u32 %v218, 16
      %v284 = vrot.slane %v282, 4
      %v285 = vor.u32 %v284, %v280
      %v286 = vrot.slane %v285, 4
      %v288 = vshll.u32 %v249, 16
      %v290 = vrot.slane %v288, 5
      %v291 = vsel %vm267, %v286, %v290
      %v293 = vshrl.u32 %v219, 16
      %v295 = vrot.slane %v293, 4
      %v296 = vshll.u32 %v219, 16
      %v298 = vrot.slane %v296, 5
      %v299 = vor.u32 %v295, %v298
      %v300 = vrot.slane %v299, 4
      %v302 = vshll.u32 %v220, 16
      %v304 = vrot.slane %v302, 5
      %v305 = vsel %vm267, %v300, %v304
      %v306 = vshrl.u32 %v220, 16
      %v308 = vrot.slane %v306, 4
      %v309 = vor.u32 %v308, %v304
      %v310 = vrot.slane %v309, 4
      %v312 = vshll.u32 %v250, 16
      %v314 = vrot.slane %v312, 5
      %v315 = vsel %vm267, %v310, %v314
      %v317 = vshrl.u32 %v221, 16
      %v319 = vrot.slane %v317, 4
      %v320 = vshll.u32 %v221, 16
      %v322 = vrot.slane %v320, 5
      %v323 = vor.u32 %v319, %v322
      %v324 = vrot.slane %v323, 4
      %v326 = vshll.u32 %v222, 16
      %v328 = vrot.slane %v326, 5
      %v329 = vsel %vm267, %v324, %v328
      %v330 = vshrl.u32 %v222, 16
      %v332 = vrot.slane %v330, 4
      %v333 = vor.u32 %v332, %v328
      %v334 = vrot.slane %v333, 4
      %v336 = vshll.u32 %v251, 16
      %v338 = vrot.slane %v336, 5
      %v339 = vsel %vm267, %v334, %v338
      %v341 = vshrl.u32 %v223, 16
      %v343 = vrot.slane %v341, 4
      %v344 = vshll.u32 %v223, 16
      %v346 = vrot.slane %v344, 5
      %v347 = vor.u32 %v343, %v346
      %v348 = vrot.slane %v347, 4
      %v350 = vshll.u32 %v224, 16
      %v352 = vrot.slane %v350, 5
      %v353 = vsel %vm267, %v348, %v352
      %v354 = vshrl.u32 %v224, 16
      %v356 = vrot.slane %v354, 4
      %v357 = vor.u32 %v356, %v352
      %v358 = vrot.slane %v357, 4
      %v360 = vshll.u32 %v252, 16
      %v362 = vrot.slane %v360, 5
      %v363 = vsel %vm267, %v358, %v362
      %v365 = vshrl.u32 %v225, 16
      %v367 = vrot.slane %v365, 4
      %v368 = vshll.u32 %v225, 16
      %v370 = vrot.slane %v368, 5
      %v371 = vor.u32 %v367, %v370
      %v372 = vrot.slane %v371, 4
      %v374 = vshll.u32 %v226, 16
      %v376 = vrot.slane %v374, 5
      %v377 = vsel %vm267, %v372, %v376
      %v378 = vshrl.u32 %v226, 16
      %v380 = vrot.slane %v378, 4
      %v381 = vor.u32 %v380, %v376
      %v382 = vrot.slane %v381, 4
      %v384 = vshll.u32 %v253, 16
      %v386 = vrot.slane %v384, 5
      %v387 = vsel %vm267, %v382, %v386
      %v389 = vshrl.u32 %v227, 16
      %v391 = vrot.slane %v389, 4
      %v392 = vshll.u32 %v227, 16
      %v394 = vrot.slane %v392, 5
      %v395 = vor.u32 %v391, %v394
      %v396 = vrot.slane %v395, 4
      %v398 = vshll.u32 %v228, 16
      %v400 = vrot.slane %v398, 5
      %v401 = vsel %vm267, %v396, %v400
      %v402 = vshrl.u32 %v228, 16
      %v404 = vrot.slane %v402, 4
      %v405 = vor.u32 %v404, %v400
      %v406 = vrot.slane %v405, 4
      %v408 = vshll.u32 %v254, 16
      %v410 = vrot.slane %v408, 5
      %v411 = vsel %vm267, %v406, %v410
      %v413 = vshrl.u32 %v229, 16
      %v415 = vrot.slane %v413, 4
      %v416 = vshll.u32 %v229, 16
      %v418 = vrot.slane %v416, 5
      %v419 = vor.u32 %v415, %v418
      %v420 = vrot.slane %v419, 4
      %v422 = vshll.u32 %v230, 16
      %v424 = vrot.slane %v422, 5
      %v425 = vsel %vm267, %v420, %v424
      %v426 = vshrl.u32 %v230, 16
      %v428 = vrot.slane %v426, 4
      %v429 = vor.u32 %v428, %v424
      %v430 = vrot.slane %v429, 4
      %v432 = vshll.u32 %v255, 16
      %v434 = vrot.slane %v432, 5
      %v435 = vsel %vm267, %v430, %v434
      %v437 = vshrl.u32 %v231, 16
      %v439 = vrot.slane %v437, 4
      %v440 = vshll.u32 %v231, 16
      %v442 = vrot.slane %v440, 5
      %v443 = vor.u32 %v439, %v442
      %v444 = vrot.slane %v443, 4
      %v446 = vshll.u32 %v232, 16
      %v448 = vrot.slane %v446, 5
      %v449 = vsel %vm267, %v444, %v448
      %v450 = vshrl.u32 %v232, 16
      %v452 = vrot.slane %v450, 4
      %v453 = vor.u32 %v452, %v448
      %v454 = vrot.slane %v453, 4
      %v456 = vshll.u32 %v256, 16
      %v458 = vrot.slane %v456, 5
      %v459 = vsel %vm267, %v454, %v458
      %v461 = vshrl.u32 %v233, 16
      %v463 = vrot.slane %v461, 4
      %v464 = vshll.u32 %v233, 16
      %v466 = vrot.slane %v464, 5
      %v467 = vor.u32 %v463, %v466
      %v468 = vrot.slane %v467, 4
      %v470 = vshll.u32 %v234, 16
      %v472 = vrot.slane %v470, 5
      %v473 = vsel %vm267, %v468, %v472
      %v474 = vshrl.u32 %v234, 16
      %v476 = vrot.slane %v474, 4
      %v477 = vor.u32 %v476, %v472
      %v478 = vrot.slane %v477, 4
      %v480 = vshll.u32 %v257, 16
      %v482 = vrot.slane %v480, 5
      %v483 = vsel %vm267, %v478, %v482
      %v485 = vshrl.u32 %v235, 16
      %v487 = vrot.slane %v485, 4
      %v488 = vshll.u32 %v235, 16
      %v490 = vrot.slane %v488, 5
      %v491 = vor.u32 %v487, %v490
      %v492 = vrot.slane %v491, 4
      %v494 = vshll.u32 %v236, 16
      %v496 = vrot.slane %v494, 5
      %v497 = vsel %vm267, %v492, %v496
      %v498 = vshrl.u32 %v236, 16
      %v500 = vrot.slane %v498, 4
      %v501 = vor.u32 %v500, %v496
      %v502 = vrot.slane %v501, 4
      %v504 = vshll.u32 %v258, 16
      %v506 = vrot.slane %v504, 5
      %v507 = vsel %vm267, %v502, %v506
      %v509 = vshrl.u32 %v237, 16
      %v511 = vrot.slane %v509, 4
      %v512 = vshll.u32 %v237, 16
      %v514 = vrot.slane %v512, 5
      %v515 = vor.u32 %v511, %v514
      %v516 = vrot.slane %v515, 4
      %v518 = vshll.u32 %v238, 16
      %v520 = vrot.slane %v518, 5
      %v521 = vsel %vm267, %v516, %v520
      %v522 = vshrl.u32 %v238, 16
      %v524 = vrot.slane %v522, 4
      %v525 = vor.u32 %v524, %v520
      %v526 = vrot.slane %v525, 4
      %v528 = vshll.u32 %v259, 16
      %v530 = vrot.slane %v528, 5
      %v531 = vsel %vm267, %v526, %v530
      %v533 = vshrl.u32 %v239, 16
      %v535 = vrot.slane %v533, 4
      %v536 = vshll.u32 %v239, 16
      %v538 = vrot.slane %v536, 5
      %v539 = vor.u32 %v535, %v538
      %v540 = vrot.slane %v539, 4
      %v542 = vshll.u32 %v240, 16
      %v544 = vrot.slane %v542, 5
      %v545 = vsel %vm267, %v540, %v544
      %v546 = vshrl.u32 %v240, 16
      %v548 = vrot.slane %v546, 4
      %v549 = vor.u32 %v548, %v544
      %v550 = vrot.slane %v549, 4
      %v552 = vshll.u32 %v260, 16
      %v554 = vrot.slane %v552, 5
      %v555 = vsel %vm267, %v550, %v554
      %v557 = vshrl.u32 %v241, 16
      %v559 = vrot.slane %v557, 4
      %v560 = vshll.u32 %v241, 16
      %v562 = vrot.slane %v560, 5
      %v563 = vor.u32 %v559, %v562
      %v564 = vrot.slane %v563, 4
      %v566 = vshll.u32 %v242, 16
      %v568 = vrot.slane %v566, 5
      %v569 = vsel %vm267, %v564, %v568
      %v570 = vshrl.u32 %v242, 16
      %v572 = vrot.slane %v570, 4
      %v573 = vor.u32 %v572, %v568
      %v574 = vrot.slane %v573, 4
      %v576 = vshll.u32 %v261, 16
      %v578 = vrot.slane %v576, 5
      %v579 = vsel %vm267, %v574, %v578
      %v581 = vshrl.u32 %v243, 16
      %v583 = vrot.slane %v581, 4
      %v584 = vshll.u32 %v243, 16
      %v586 = vrot.slane %v584, 5
      %v587 = vor.u32 %v583, %v586
      %v588 = vrot.slane %v587, 4
      %v590 = vshll.u32 %v244, 16
      %v592 = vrot.slane %v590, 5
      %v593 = vsel %vm267, %v588, %v592
      %v594 = vshrl.u32 %v244, 16
      %v596 = vrot.slane %v594, 4
      %v597 = vor.u32 %v596, %v592
      %v598 = vrot.slane %v597, 4
      %v600 = vshll.u32 %v262, 16
      %v602 = vrot.slane %v600, 5
      %v603 = vsel %vm267, %v598, %v602
      %v605 = vshrl.u32 %v245, 16
      %v607 = vrot.slane %v605, 4
      %v608 = vshll.u32 %v245, 16
      %v610 = vrot.slane %v608, 5
      %v611 = vor.u32 %v607, %v610
      %v612 = vrot.slane %v611, 4
      %v614 = vshll.u32 %v246, 16
      %v616 = vrot.slane %v614, 5
      %v617 = vsel %vm267, %v612, %v616
      %v618 = vshrl.u32 %v246, 16
      %v620 = vrot.slane %v618, 4
      %v621 = vor.u32 %v620, %v616
      %v622 = vrot.slane %v621, 4
      %v624 = vshll.u32 %v263, 16
      %v626 = vrot.slane %v624, 5
      %v627 = vsel %vm267, %v622, %v626
      %v629 = vshrl.u32 %v247, 16
      %v631 = vrot.slane %v629, 4
      %v632 = vshll.u32 %v247, 16
      %v634 = vrot.slane %v632, 5
      %v635 = vor.u32 %v631, %v634
      %v636 = vrot.slane %v635, 4
      %v638 = vshll.u32 %v248, 16
      %v640 = vrot.slane %v638, 5
      %v641 = vsel %vm267, %v636, %v640
      %v642 = vshrl.u32 %v248, 16
      %v644 = vrot.slane %v642, 4
      %v645 = vor.u32 %v644, %v640
      %v646 = vrot.slane %v645, 4
      %v648 = vshll.u32 %v264, 16
      %v650 = vrot.slane %v648, 5
      %v651 = vsel %vm267, %v646, %v650
      %v652 = vld [vmem:[%s216] sm:$0xe]
      %v653 = vld [vmem:[%s216 + $0xc] sm:$0xe]
      %v654 = vld [vmem:[%s216 + $0x18] sm:$0xe]
      %v655 = vld [vmem:[%s216 + $0x24] sm:$0xe]
      %v656 = vld [vmem:[%s216 + $0x30] sm:$0xe]
      %v657 = vld [vmem:[%s216 + $0x3c] sm:$0xe]
      %v658 = vld [vmem:[%s216 + $0x48] sm:$0xe]
      %v659 = vld [vmem:[%s216 + $0x54] sm:$0xe]
      %v660 = vld [vmem:[%s216 + $0x60] sm:$0xe]
      %v661 = vld [vmem:[%s216 + $0x6c] sm:$0xe]
      %v662 = vld [vmem:[%s216 + $0x78] sm:$0xe]
      %v663 = vld [vmem:[%s216 + $0x84] sm:$0xe]
      %v664 = vld [vmem:[%s216 + $0x90] sm:$0xe]
      %v665 = vld [vmem:[%s216 + $0x9c] sm:$0xe]
      %v666 = vld [vmem:[%s216 + $0xa8] sm:$0xe]
      %v667 = vld [vmem:[%s216 + $0xb4] sm:$0xe]
      %vm716 = vcmask 1042432
      %vm717 = vcmask 1046532
      %vm718 = vmor %vm716, %vm717
      %v719 = vrot.slane %v652, 5
      %v720 = vrot.slane %v719, 4
      %v721 = vrot.slane %v218, 5
      %v722 = vsel %vm718, %v720, %v721
      %v723 = vrot.slane %v721, 4
      %v724 = vrot.slane %v249, 5
      %v725 = vsel %vm718, %v723, %v724
      %v726 = vrot.slane %v653, 5
      %v727 = vrot.slane %v726, 4
      %v728 = vrot.slane %v220, 5
      %v729 = vsel %vm718, %v727, %v728
      %v730 = vrot.slane %v728, 4
      %v731 = vrot.slane %v250, 5
      %v732 = vsel %vm718, %v730, %v731
      %v733 = vrot.slane %v654, 5
      %v734 = vrot.slane %v733, 4
      %v735 = vrot.slane %v222, 5
      %v736 = vsel %vm718, %v734, %v735
      %v737 = vrot.slane %v735, 4
      %v738 = vrot.slane %v251, 5
      %v739 = vsel %vm718, %v737, %v738
      %v740 = vrot.slane %v655, 5
      %v741 = vrot.slane %v740, 4
      %v742 = vrot.slane %v224, 5
      %v743 = vsel %vm718, %v741, %v742
      %v744 = vrot.slane %v742, 4
      %v745 = vrot.slane %v252, 5
      %v746 = vsel %vm718, %v744, %v745
      %v747 = vrot.slane %v656, 5
      %v748 = vrot.slane %v747, 4
      %v749 = vrot.slane %v226, 5
      %v750 = vsel %vm718, %v748, %v749
      %v751 = vrot.slane %v749, 4
      %v752 = vrot.slane %v253, 5
      %v753 = vsel %vm718, %v751, %v752
      %v754 = vrot.slane %v657, 5
      %v755 = vrot.slane %v754, 4
      %v756 = vrot.slane %v228, 5
      %v757 = vsel %vm718, %v755, %v756
      %v758 = vrot.slane %v756, 4
      %v759 = vrot.slane %v254, 5
      %v760 = vsel %vm718, %v758, %v759
      %v761 = vrot.slane %v658, 5
      %v762 = vrot.slane %v761, 4
      %v763 = vrot.slane %v230, 5
      %v764 = vsel %vm718, %v762, %v763
      %v765 = vrot.slane %v763, 4
      %v766 = vrot.slane %v255, 5
      %v767 = vsel %vm718, %v765, %v766
      %v768 = vrot.slane %v659, 5
      %v769 = vrot.slane %v768, 4
      %v770 = vrot.slane %v232, 5
      %v771 = vsel %vm718, %v769, %v770
      %v772 = vrot.slane %v770, 4
      %v773 = vrot.slane %v256, 5
      %v774 = vsel %vm718, %v772, %v773
      %v775 = vrot.slane %v660, 5
      %v776 = vrot.slane %v775, 4
      %v777 = vrot.slane %v234, 5
      %v778 = vsel %vm718, %v776, %v777
      %v779 = vrot.slane %v777, 4
      %v780 = vrot.slane %v257, 5
      %v781 = vsel %vm718, %v779, %v780
      %v782 = vrot.slane %v661, 5
      %v783 = vrot.slane %v782, 4
      %v784 = vrot.slane %v236, 5
      %v785 = vsel %vm718, %v783, %v784
      %v786 = vrot.slane %v784, 4
      %v787 = vrot.slane %v258, 5
      %v788 = vsel %vm718, %v786, %v787
      %v789 = vrot.slane %v662, 5
      %v790 = vrot.slane %v789, 4
      %v791 = vrot.slane %v238, 5
      %v792 = vsel %vm718, %v790, %v791
      %v793 = vrot.slane %v791, 4
      %v794 = vrot.slane %v259, 5
      %v795 = vsel %vm718, %v793, %v794
      %v796 = vrot.slane %v663, 5
      %v797 = vrot.slane %v796, 4
      %v798 = vrot.slane %v240, 5
      %v799 = vsel %vm718, %v797, %v798
      %v800 = vrot.slane %v798, 4
      %v801 = vrot.slane %v260, 5
      %v802 = vsel %vm718, %v800, %v801
      %v803 = vrot.slane %v664, 5
      %v804 = vrot.slane %v803, 4
      %v805 = vrot.slane %v242, 5
      %v806 = vsel %vm718, %v804, %v805
      %v807 = vrot.slane %v805, 4
      %v808 = vrot.slane %v261, 5
      %v809 = vsel %vm718, %v807, %v808
      %v810 = vrot.slane %v665, 5
      %v811 = vrot.slane %v810, 4
      %v812 = vrot.slane %v244, 5
      %v813 = vsel %vm718, %v811, %v812
      %v814 = vrot.slane %v812, 4
      %v815 = vrot.slane %v262, 5
      %v816 = vsel %vm718, %v814, %v815
      %v817 = vrot.slane %v666, 5
      %v818 = vrot.slane %v817, 4
      %v819 = vrot.slane %v246, 5
      %v820 = vsel %vm718, %v818, %v819
      %v821 = vrot.slane %v819, 4
      %v822 = vrot.slane %v263, 5
      %v823 = vsel %vm718, %v821, %v822
      %v824 = vrot.slane %v667, 5
      %v825 = vrot.slane %v824, 4
      %v826 = vrot.slane %v248, 5
      %v827 = vsel %vm718, %v825, %v826
      %v828 = vrot.slane %v826, 4
      %v829 = vrot.slane %v264, 5
      %v830 = vsel %vm718, %v828, %v829
      %s831 = sadd.s32 %s213, 1
      %s832 = smul.u32 %s831, 3
      %s833 = smul.addr %s832, 4
      %s834 = scalar_lea.vmem %s195, %s833
      %v835 = vld [vmem:[%s834] sm:$0xf]
      %v836 = vld [vmem:[%s834 + $0x4] sm:$0xf]
      %v837 = vld [vmem:[%s834 + $0xc] sm:$0xf]
      %v838 = vld [vmem:[%s834 + $0x10] sm:$0xf]
      %v839 = vld [vmem:[%s834 + $0x18] sm:$0xf]
      %v840 = vld [vmem:[%s834 + $0x1c] sm:$0xf]
      %v841 = vld [vmem:[%s834 + $0x24] sm:$0xf]
      %v842 = vld [vmem:[%s834 + $0x28] sm:$0xf]
      %v843 = vld [vmem:[%s834 + $0x30] sm:$0xf]
      %v844 = vld [vmem:[%s834 + $0x34] sm:$0xf]
      %v845 = vld [vmem:[%s834 + $0x3c] sm:$0xf]
      %v846 = vld [vmem:[%s834 + $0x40] sm:$0xf]
      %v847 = vld [vmem:[%s834 + $0x48] sm:$0xf]
      %v848 = vld [vmem:[%s834 + $0x4c] sm:$0xf]
      %v849 = vld [vmem:[%s834 + $0x54] sm:$0xf]
      %v850 = vld [vmem:[%s834 + $0x58] sm:$0xf]
      %v851 = vld [vmem:[%s834 + $0x60] sm:$0xf]
      %v852 = vld [vmem:[%s834 + $0x64] sm:$0xf]
      %v853 = vld [vmem:[%s834 + $0x6c] sm:$0xf]
      %v854 = vld [vmem:[%s834 + $0x70] sm:$0xf]
      %v855 = vld [vmem:[%s834 + $0x78] sm:$0xf]
      %v856 = vld [vmem:[%s834 + $0x7c] sm:$0xf]
      %v857 = vld [vmem:[%s834 + $0x84] sm:$0xf]
      %v858 = vld [vmem:[%s834 + $0x88] sm:$0xf]
      %v859 = vld [vmem:[%s834 + $0x90] sm:$0xf]
      %v860 = vld [vmem:[%s834 + $0x94] sm:$0xf]
      %v861 = vld [vmem:[%s834 + $0x9c] sm:$0xf]
      %v862 = vld [vmem:[%s834 + $0xa0] sm:$0xf]
      %v863 = vld [vmem:[%s834 + $0xa8] sm:$0xf]
      %v864 = vld [vmem:[%s834 + $0xac] sm:$0xf]
      %v865 = vld [vmem:[%s834 + $0xb4] sm:$0xf]
      %v866 = vld [vmem:[%s834 + $0xb8] sm:$0xf]
      %v867 = vld [vmem:[%s834 + $0x8] sm:$0x1]
      %v868 = vld [vmem:[%s834 + $0x14] sm:$0x1]
      %v869 = vld [vmem:[%s834 + $0x20] sm:$0x1]
      %v870 = vld [vmem:[%s834 + $0x2c] sm:$0x1]
      %v871 = vld [vmem:[%s834 + $0x38] sm:$0x1]
      %v872 = vld [vmem:[%s834 + $0x44] sm:$0x1]
      %v873 = vld [vmem:[%s834 + $0x50] sm:$0x1]
      %v874 = vld [vmem:[%s834 + $0x5c] sm:$0x1]
      %v875 = vld [vmem:[%s834 + $0x68] sm:$0x1]
      %v876 = vld [vmem:[%s834 + $0x74] sm:$0x1]
      %v877 = vld [vmem:[%s834 + $0x80] sm:$0x1]
      %v878 = vld [vmem:[%s834 + $0x8c] sm:$0x1]
      %v879 = vld [vmem:[%s834 + $0x98] sm:$0x1]
      %v880 = vld [vmem:[%s834 + $0xa4] sm:$0x1]
      %v881 = vld [vmem:[%s834 + $0xb0] sm:$0x1]
      %v882 = vld [vmem:[%s834 + $0xbc] sm:$0x1]
      %v884 = vshrl.u32 %v835, 16
      %v886 = vrot.slane %v884, 4
      %v887 = vshll.u32 %v835, 16
      %v889 = vrot.slane %v887, 5
      %v890 = vor.u32 %v886, %v889
      %v891 = vrot.slane %v890, 4
      %v893 = vshll.u32 %v836, 16
      %v895 = vrot.slane %v893, 5
      %v896 = vsel %vm267, %v891, %v895
      %v897 = vshrl.u32 %v836, 16
      %v899 = vrot.slane %v897, 4
      %v900 = vor.u32 %v899, %v895
      %v901 = vrot.slane %v900, 4
      %v903 = vshll.u32 %v867, 16
      %v905 = vrot.slane %v903, 5
      %v906 = vsel %vm267, %v901, %v905
      %v908 = vshrl.u32 %v837, 16
      %v910 = vrot.slane %v908, 4
      %v911 = vshll.u32 %v837, 16
      %v913 = vrot.slane %v911, 5
      %v914 = vor.u32 %v910, %v913
      %v915 = vrot.slane %v914, 4
      %v917 = vshll.u32 %v838, 16
      %v919 = vrot.slane %v917, 5
      %v920 = vsel %vm267, %v915, %v919
      %v921 = vshrl.u32 %v838, 16
      %v923 = vrot.slane %v921, 4
      %v924 = vor.u32 %v923, %v919
      %v925 = vrot.slane %v924, 4
      %v927 = vshll.u32 %v868, 16
      %v929 = vrot.slane %v927, 5
      %v930 = vsel %vm267, %v925, %v929
      %v932 = vshrl.u32 %v839, 16
      %v934 = vrot.slane %v932, 4
      %v935 = vshll.u32 %v839, 16
      %v937 = vrot.slane %v935, 5
      %v938 = vor.u32 %v934, %v937
      %v939 = vrot.slane %v938, 4
      %v941 = vshll.u32 %v840, 16
      %v943 = vrot.slane %v941, 5
      %v944 = vsel %vm267, %v939, %v943
      %v945 = vshrl.u32 %v840, 16
      %v947 = vrot.slane %v945, 4
      %v948 = vor.u32 %v947, %v943
      %v949 = vrot.slane %v948, 4
      %v951 = vshll.u32 %v869, 16
      %v953 = vrot.slane %v951, 5
      %v954 = vsel %vm267, %v949, %v953
      %v956 = vshrl.u32 %v841, 16
      %v958 = vrot.slane %v956, 4
      %v959 = vshll.u32 %v841, 16
      %v961 = vrot.slane %v959, 5
      %v962 = vor.u32 %v958, %v961
      %v963 = vrot.slane %v962, 4
      %v965 = vshll.u32 %v842, 16
      %v967 = vrot.slane %v965, 5
      %v968 = vsel %vm267, %v963, %v967
      %v969 = vshrl.u32 %v842, 16
      %v971 = vrot.slane %v969, 4
      %v972 = vor.u32 %v971, %v967
      %v973 = vrot.slane %v972, 4
      %v975 = vshll.u32 %v870, 16
      %v977 = vrot.slane %v975, 5
      %v978 = vsel %vm267, %v973, %v977
      %v980 = vshrl.u32 %v843, 16
      %v982 = vrot.slane %v980, 4
      %v983 = vshll.u32 %v843, 16
      %v985 = vrot.slane %v983, 5
      %v986 = vor.u32 %v982, %v985
      %v987 = vrot.slane %v986, 4
      %v989 = vshll.u32 %v844, 16
      %v991 = vrot.slane %v989, 5
      %v992 = vsel %vm267, %v987, %v991
      %v993 = vshrl.u32 %v844, 16
      %v995 = vrot.slane %v993, 4
      %v996 = vor.u32 %v995, %v991
      %v997 = vrot.slane %v996, 4
      %v999 = vshll.u32 %v871, 16
      %v1001 = vrot.slane %v999, 5
      %v1002 = vsel %vm267, %v997, %v1001
      %v1004 = vshrl.u32 %v845, 16
      %v1006 = vrot.slane %v1004, 4
      %v1007 = vshll.u32 %v845, 16
      %v1009 = vrot.slane %v1007, 5
      %v1010 = vor.u32 %v1006, %v1009
      %v1011 = vrot.slane %v1010, 4
      %v1013 = vshll.u32 %v846, 16
      %v1015 = vrot.slane %v1013, 5
      %v1016 = vsel %vm267, %v1011, %v1015
      %v1017 = vshrl.u32 %v846, 16
      %v1019 = vrot.slane %v1017, 4
      %v1020 = vor.u32 %v1019, %v1015
      %v1021 = vrot.slane %v1020, 4
      %v1023 = vshll.u32 %v872, 16
      %v1025 = vrot.slane %v1023, 5
      %v1026 = vsel %vm267, %v1021, %v1025
      %v1028 = vshrl.u32 %v847, 16
      %v1030 = vrot.slane %v1028, 4
      %v1031 = vshll.u32 %v847, 16
      %v1033 = vrot.slane %v1031, 5
      %v1034 = vor.u32 %v1030, %v1033
      %v1035 = vrot.slane %v1034, 4
      %v1037 = vshll.u32 %v848, 16
      %v1039 = vrot.slane %v1037, 5
      %v1040 = vsel %vm267, %v1035, %v1039
      %v1041 = vshrl.u32 %v848, 16
      %v1043 = vrot.slane %v1041, 4
      %v1044 = vor.u32 %v1043, %v1039
      %v1045 = vrot.slane %v1044, 4
      %v1047 = vshll.u32 %v873, 16
      %v1049 = vrot.slane %v1047, 5
      %v1050 = vsel %vm267, %v1045, %v1049
      %v1052 = vshrl.u32 %v849, 16
      %v1054 = vrot.slane %v1052, 4
      %v1055 = vshll.u32 %v849, 16
      %v1057 = vrot.slane %v1055, 5
      %v1058 = vor.u32 %v1054, %v1057
      %v1059 = vrot.slane %v1058, 4
      %v1061 = vshll.u32 %v850, 16
      %v1063 = vrot.slane %v1061, 5
      %v1064 = vsel %vm267, %v1059, %v1063
      %v1065 = vshrl.u32 %v850, 16
      %v1067 = vrot.slane %v1065, 4
      %v1068 = vor.u32 %v1067, %v1063
      %v1069 = vrot.slane %v1068, 4
      %v1071 = vshll.u32 %v874, 16
      %v1073 = vrot.slane %v1071, 5
      %v1074 = vsel %vm267, %v1069, %v1073
      %v1076 = vshrl.u32 %v851, 16
      %v1078 = vrot.slane %v1076, 4
      %v1079 = vshll.u32 %v851, 16
      %v1081 = vrot.slane %v1079, 5
      %v1082 = vor.u32 %v1078, %v1081
      %v1083 = vrot.slane %v1082, 4
      %v1085 = vshll.u32 %v852, 16
      %v1087 = vrot.slane %v1085, 5
      %v1088 = vsel %vm267, %v1083, %v1087
      %v1089 = vshrl.u32 %v852, 16
      %v1091 = vrot.slane %v1089, 4
      %v1092 = vor.u32 %v1091, %v1087
      %v1093 = vrot.slane %v1092, 4
      %v1095 = vshll.u32 %v875, 16
      %v1097 = vrot.slane %v1095, 5
      %v1098 = vsel %vm267, %v1093, %v1097
      %v1100 = vshrl.u32 %v853, 16
      %v1102 = vrot.slane %v1100, 4
      %v1103 = vshll.u32 %v853, 16
      %v1105 = vrot.slane %v1103, 5
      %v1106 = vor.u32 %v1102, %v1105
      %v1107 = vrot.slane %v1106, 4
      %v1109 = vshll.u32 %v854, 16
      %v1111 = vrot.slane %v1109, 5
      %v1112 = vsel %vm267, %v1107, %v1111
      %v1113 = vshrl.u32 %v854, 16
      %v1115 = vrot.slane %v1113, 4
      %v1116 = vor.u32 %v1115, %v1111
      %v1117 = vrot.slane %v1116, 4
      %v1119 = vshll.u32 %v876, 16
      %v1121 = vrot.slane %v1119, 5
      %v1122 = vsel %vm267, %v1117, %v1121
      %v1124 = vshrl.u32 %v855, 16
      %v1126 = vrot.slane %v1124, 4
      %v1127 = vshll.u32 %v855, 16
      %v1129 = vrot.slane %v1127, 5
      %v1130 = vor.u32 %v1126, %v1129
      %v1131 = vrot.slane %v1130, 4
      %v1133 = vshll.u32 %v856, 16
      %v1135 = vrot.slane %v1133, 5
      %v1136 = vsel %vm267, %v1131, %v1135
      %v1137 = vshrl.u32 %v856, 16
      %v1139 = vrot.slane %v1137, 4
      %v1140 = vor.u32 %v1139, %v1135
      %v1141 = vrot.slane %v1140, 4
      %v1143 = vshll.u32 %v877, 16
      %v1145 = vrot.slane %v1143, 5
      %v1146 = vsel %vm267, %v1141, %v1145
      %v1148 = vshrl.u32 %v857, 16
      %v1150 = vrot.slane %v1148, 4
      %v1151 = vshll.u32 %v857, 16
      %v1153 = vrot.slane %v1151, 5
      %v1154 = vor.u32 %v1150, %v1153
      %v1155 = vrot.slane %v1154, 4
      %v1157 = vshll.u32 %v858, 16
      %v1159 = vrot.slane %v1157, 5
      %v1160 = vsel %vm267, %v1155, %v1159
      %v1161 = vshrl.u32 %v858, 16
      %v1163 = vrot.slane %v1161, 4
      %v1164 = vor.u32 %v1163, %v1159
      %v1165 = vrot.slane %v1164, 4
      %v1167 = vshll.u32 %v878, 16
      %v1169 = vrot.slane %v1167, 5
      %v1170 = vsel %vm267, %v1165, %v1169
      %v1172 = vshrl.u32 %v859, 16
      %v1174 = vrot.slane %v1172, 4
      %v1175 = vshll.u32 %v859, 16
      %v1177 = vrot.slane %v1175, 5
      %v1178 = vor.u32 %v1174, %v1177
      %v1179 = vrot.slane %v1178, 4
      %v1181 = vshll.u32 %v860, 16
      %v1183 = vrot.slane %v1181, 5
      %v1184 = vsel %vm267, %v1179, %v1183
      %v1185 = vshrl.u32 %v860, 16
      %v1187 = vrot.slane %v1185, 4
      %v1188 = vor.u32 %v1187, %v1183
      %v1189 = vrot.slane %v1188, 4
      %v1191 = vshll.u32 %v879, 16
      %v1193 = vrot.slane %v1191, 5
      %v1194 = vsel %vm267, %v1189, %v1193
      %v1196 = vshrl.u32 %v861, 16
      %v1198 = vrot.slane %v1196, 4
      %v1199 = vshll.u32 %v861, 16
      %v1201 = vrot.slane %v1199, 5
      %v1202 = vor.u32 %v1198, %v1201
      %v1203 = vrot.slane %v1202, 4
      %v1205 = vshll.u32 %v862, 16
      %v1207 = vrot.slane %v1205, 5
      %v1208 = vsel %vm267, %v1203, %v1207
      %v1209 = vshrl.u32 %v862, 16
      %v1211 = vrot.slane %v1209, 4
      %v1212 = vor.u32 %v1211, %v1207
      %v1213 = vrot.slane %v1212, 4
      %v1215 = vshll.u32 %v880, 16
      %v1217 = vrot.slane %v1215, 5
      %v1218 = vsel %vm267, %v1213, %v1217
      %v1220 = vshrl.u32 %v863, 16
      %v1222 = vrot.slane %v1220, 4
      %v1223 = vshll.u32 %v863, 16
      %v1225 = vrot.slane %v1223, 5
      %v1226 = vor.u32 %v1222, %v1225
      %v1227 = vrot.slane %v1226, 4
      %v1229 = vshll.u32 %v864, 16
      %v1231 = vrot.slane %v1229, 5
      %v1232 = vsel %vm267, %v1227, %v1231
      %v1233 = vshrl.u32 %v864, 16
      %v1235 = vrot.slane %v1233, 4
      %v1236 = vor.u32 %v1235, %v1231
      %v1237 = vrot.slane %v1236, 4
      %v1239 = vshll.u32 %v881, 16
      %v1241 = vrot.slane %v1239, 5
      %v1242 = vsel %vm267, %v1237, %v1241
      %v1244 = vshrl.u32 %v865, 16
      %v1246 = vrot.slane %v1244, 4
      %v1247 = vshll.u32 %v865, 16
      %v1249 = vrot.slane %v1247, 5
      %v1250 = vor.u32 %v1246, %v1249
      %v1251 = vrot.slane %v1250, 4
      %v1253 = vshll.u32 %v866, 16
      %v1255 = vrot.slane %v1253, 5
      %v1256 = vsel %vm267, %v1251, %v1255
      %v1257 = vshrl.u32 %v866, 16
      %v1259 = vrot.slane %v1257, 4
      %v1260 = vor.u32 %v1259, %v1255
      %v1261 = vrot.slane %v1260, 4
      %v1263 = vshll.u32 %v882, 16
      %v1265 = vrot.slane %v1263, 5
      %v1266 = vsel %vm267, %v1261, %v1265
      %v1267 = vld [vmem:[%s834] sm:$0xe]
      %v1268 = vld [vmem:[%s834 + $0xc] sm:$0xe]
      %v1269 = vld [vmem:[%s834 + $0x18] sm:$0xe]
      %v1270 = vld [vmem:[%s834 + $0x24] sm:$0xe]
      %v1271 = vld [vmem:[%s834 + $0x30] sm:$0xe]
      %v1272 = vld [vmem:[%s834 + $0x3c] sm:$0xe]
      %v1273 = vld [vmem:[%s834 + $0x48] sm:$0xe]
      %v1274 = vld [vmem:[%s834 + $0x54] sm:$0xe]
      %v1275 = vld [vmem:[%s834 + $0x60] sm:$0xe]
      %v1276 = vld [vmem:[%s834 + $0x6c] sm:$0xe]
      %v1277 = vld [vmem:[%s834 + $0x78] sm:$0xe]
      %v1278 = vld [vmem:[%s834 + $0x84] sm:$0xe]
      %v1279 = vld [vmem:[%s834 + $0x90] sm:$0xe]
      %v1280 = vld [vmem:[%s834 + $0x9c] sm:$0xe]
      %v1281 = vld [vmem:[%s834 + $0xa8] sm:$0xe]
      %v1282 = vld [vmem:[%s834 + $0xb4] sm:$0xe]
      %v1331 = vrot.slane %v1267, 5
      %v1332 = vrot.slane %v1331, 4
      %v1333 = vrot.slane %v836, 5
      %v1334 = vsel %vm718, %v1332, %v1333
      %v1335 = vrot.slane %v1333, 4
      %v1336 = vrot.slane %v867, 5
      %v1337 = vsel %vm718, %v1335, %v1336
      %v1338 = vrot.slane %v1268, 5
      %v1339 = vrot.slane %v1338, 4
      %v1340 = vrot.slane %v838, 5
      %v1341 = vsel %vm718, %v1339, %v1340
      %v1342 = vrot.slane %v1340, 4
      %v1343 = vrot.slane %v868, 5
      %v1344 = vsel %vm718, %v1342, %v1343
      %v1345 = vrot.slane %v1269, 5
      %v1346 = vrot.slane %v1345, 4
      %v1347 = vrot.slane %v840, 5
      %v1348 = vsel %vm718, %v1346, %v1347
      %v1349 = vrot.slane %v1347, 4
      %v1350 = vrot.slane %v869, 5
      %v1351 = vsel %vm718, %v1349, %v1350
      %v1352 = vrot.slane %v1270, 5
      %v1353 = vrot.slane %v1352, 4
      %v1354 = vrot.slane %v842, 5
      %v1355 = vsel %vm718, %v1353, %v1354
      %v1356 = vrot.slane %v1354, 4
      %v1357 = vrot.slane %v870, 5
      %v1358 = vsel %vm718, %v1356, %v1357
      %v1359 = vrot.slane %v1271, 5
      %v1360 = vrot.slane %v1359, 4
      %v1361 = vrot.slane %v844, 5
      %v1362 = vsel %vm718, %v1360, %v1361
      %v1363 = vrot.slane %v1361, 4
      %v1364 = vrot.slane %v871, 5
      %v1365 = vsel %vm718, %v1363, %v1364
      %v1366 = vrot.slane %v1272, 5
      %v1367 = vrot.slane %v1366, 4
      %v1368 = vrot.slane %v846, 5
      %v1369 = vsel %vm718, %v1367, %v1368
      %v1370 = vrot.slane %v1368, 4
      %v1371 = vrot.slane %v872, 5
      %v1372 = vsel %vm718, %v1370, %v1371
      %v1373 = vrot.slane %v1273, 5
      %v1374 = vrot.slane %v1373, 4
      %v1375 = vrot.slane %v848, 5
      %v1376 = vsel %vm718, %v1374, %v1375
      %v1377 = vrot.slane %v1375, 4
      %v1378 = vrot.slane %v873, 5
      %v1379 = vsel %vm718, %v1377, %v1378
      %v1380 = vrot.slane %v1274, 5
      %v1381 = vrot.slane %v1380, 4
      %v1382 = vrot.slane %v850, 5
      %v1383 = vsel %vm718, %v1381, %v1382
      %v1384 = vrot.slane %v1382, 4
      %v1385 = vrot.slane %v874, 5
      %v1386 = vsel %vm718, %v1384, %v1385
      %v1387 = vrot.slane %v1275, 5
      %v1388 = vrot.slane %v1387, 4
      %v1389 = vrot.slane %v852, 5
      %v1390 = vsel %vm718, %v1388, %v1389
      %v1391 = vrot.slane %v1389, 4
      %v1392 = vrot.slane %v875, 5
      %v1393 = vsel %vm718, %v1391, %v1392
      %v1394 = vrot.slane %v1276, 5
      %v1395 = vrot.slane %v1394, 4
      %v1396 = vrot.slane %v854, 5
      %v1397 = vsel %vm718, %v1395, %v1396
      %v1398 = vrot.slane %v1396, 4
      %v1399 = vrot.slane %v876, 5
      %v1400 = vsel %vm718, %v1398, %v1399
      %v1401 = vrot.slane %v1277, 5
      %v1402 = vrot.slane %v1401, 4
      %v1403 = vrot.slane %v856, 5
      %v1404 = vsel %vm718, %v1402, %v1403
      %v1405 = vrot.slane %v1403, 4
      %v1406 = vrot.slane %v877, 5
      %v1407 = vsel %vm718, %v1405, %v1406
      %v1408 = vrot.slane %v1278, 5
      %v1409 = vrot.slane %v1408, 4
      %v1410 = vrot.slane %v858, 5
      %v1411 = vsel %vm718, %v1409, %v1410
      %v1412 = vrot.slane %v1410, 4
      %v1413 = vrot.slane %v878, 5
      %v1414 = vsel %vm718, %v1412, %v1413
      %v1415 = vrot.slane %v1279, 5
      %v1416 = vrot.slane %v1415, 4
      %v1417 = vrot.slane %v860, 5
      %v1418 = vsel %vm718, %v1416, %v1417
      %v1419 = vrot.slane %v1417, 4
      %v1420 = vrot.slane %v879, 5
      %v1421 = vsel %vm718, %v1419, %v1420
      %v1422 = vrot.slane %v1280, 5
      %v1423 = vrot.slane %v1422, 4
      %v1424 = vrot.slane %v862, 5
      %v1425 = vsel %vm718, %v1423, %v1424
      %v1426 = vrot.slane %v1424, 4
      %v1427 = vrot.slane %v880, 5
      %v1428 = vsel %vm718, %v1426, %v1427
      %v1429 = vrot.slane %v1281, 5
      %v1430 = vrot.slane %v1429, 4
      %v1431 = vrot.slane %v864, 5
      %v1432 = vsel %vm718, %v1430, %v1431
      %v1433 = vrot.slane %v1431, 4
      %v1434 = vrot.slane %v881, 5
      %v1435 = vsel %vm718, %v1433, %v1434
      %v1436 = vrot.slane %v1282, 5
      %v1437 = vrot.slane %v1436, 4
      %v1438 = vrot.slane %v866, 5
      %v1439 = vsel %vm718, %v1437, %v1438
      %v1440 = vrot.slane %v1438, 4
      %v1441 = vrot.slane %v882, 5
      %v1442 = vsel %vm718, %v1440, %v1441
      %s1443 = sadd.s32 %s213, 2
      %s1444 = smul.u32 %s1443, 3
      %s1445 = smul.addr %s1444, 4
      %s1446 = scalar_lea.vmem %s195, %s1445
      %v1447 = vld [vmem:[%s1446] sm:$0xf]
      %v1448 = vld [vmem:[%s1446 + $0x4] sm:$0xf]
      %v1449 = vld [vmem:[%s1446 + $0xc] sm:$0xf]
      %v1450 = vld [vmem:[%s1446 + $0x10] sm:$0xf]
      %v1451 = vld [vmem:[%s1446 + $0x18] sm:$0xf]
      %v1452 = vld [vmem:[%s1446 + $0x1c] sm:$0xf]
      %v1453 = vld [vmem:[%s1446 + $0x24] sm:$0xf]
      %v1454 = vld [vmem:[%s1446 + $0x28] sm:$0xf]
      %v1455 = vld [vmem:[%s1446 + $0x30] sm:$0xf]
      %v1456 = vld [vmem:[%s1446 + $0x34] sm:$0xf]
      %v1457 = vld [vmem:[%s1446 + $0x3c] sm:$0xf]
      %v1458 = vld [vmem:[%s1446 + $0x40] sm:$0xf]
      %v1459 = vld [vmem:[%s1446 + $0x48] sm:$0xf]
      %v1460 = vld [vmem:[%s1446 + $0x4c] sm:$0xf]
      %v1461 = vld [vmem:[%s1446 + $0x54] sm:$0xf]
      %v1462 = vld [vmem:[%s1446 + $0x58] sm:$0xf]
      %v1463 = vld [vmem:[%s1446 + $0x60] sm:$0xf]
      %v1464 = vld [vmem:[%s1446 + $0x64] sm:$0xf]
      %v1465 = vld [vmem:[%s1446 + $0x6c] sm:$0xf]
      %v1466 = vld [vmem:[%s1446 + $0x70] sm:$0xf]
      %v1467 = vld [vmem:[%s1446 + $0x78] sm:$0xf]
      %v1468 = vld [vmem:[%s1446 + $0x7c] sm:$0xf]
      %v1469 = vld [vmem:[%s1446 + $0x84] sm:$0xf]
      %v1470 = vld [vmem:[%s1446 + $0x88] sm:$0xf]
      %v1471 = vld [vmem:[%s1446 + $0x90] sm:$0xf]
      %v1472 = vld [vmem:[%s1446 + $0x94] sm:$0xf]
      %v1473 = vld [vmem:[%s1446 + $0x9c] sm:$0xf]
      %v1474 = vld [vmem:[%s1446 + $0xa0] sm:$0xf]
      %v1475 = vld [vmem:[%s1446 + $0xa8] sm:$0xf]
      %v1476 = vld [vmem:[%s1446 + $0xac] sm:$0xf]
      %v1477 = vld [vmem:[%s1446 + $0xb4] sm:$0xf]
      %v1478 = vld [vmem:[%s1446 + $0xb8] sm:$0xf]
      %v1479 = vld [vmem:[%s1446 + $0x8] sm:$0x1]
      %v1480 = vld [vmem:[%s1446 + $0x14] sm:$0x1]
      %v1481 = vld [vmem:[%s1446 + $0x20] sm:$0x1]
      %v1482 = vld [vmem:[%s1446 + $0x2c] sm:$0x1]
      %v1483 = vld [vmem:[%s1446 + $0x38] sm:$0x1]
      %v1484 = vld [vmem:[%s1446 + $0x44] sm:$0x1]
      %v1485 = vld [vmem:[%s1446 + $0x50] sm:$0x1]
      %v1486 = vld [vmem:[%s1446 + $0x5c] sm:$0x1]
      %v1487 = vld [vmem:[%s1446 + $0x68] sm:$0x1]
      %v1488 = vld [vmem:[%s1446 + $0x74] sm:$0x1]
      %v1489 = vld [vmem:[%s1446 + $0x80] sm:$0x1]
      %v1490 = vld [vmem:[%s1446 + $0x8c] sm:$0x1]
      %v1491 = vld [vmem:[%s1446 + $0x98] sm:$0x1]
      %v1492 = vld [vmem:[%s1446 + $0xa4] sm:$0x1]
      %v1493 = vld [vmem:[%s1446 + $0xb0] sm:$0x1]
      %v1494 = vld [vmem:[%s1446 + $0xbc] sm:$0x1]
      %v1496 = vshrl.u32 %v1447, 16
      %v1498 = vrot.slane %v1496, 4
      %v1499 = vshll.u32 %v1447, 16
      %v1501 = vrot.slane %v1499, 5
      %v1502 = vor.u32 %v1498, %v1501
      %v1503 = vrot.slane %v1502, 4
      %v1505 = vshll.u32 %v1448, 16
      %v1507 = vrot.slane %v1505, 5
      %v1508 = vsel %vm267, %v1503, %v1507
      %v1509 = vshrl.u32 %v1448, 16
      %v1511 = vrot.slane %v1509, 4
      %v1512 = vor.u32 %v1511, %v1507
      %v1513 = vrot.slane %v1512, 4
      %v1515 = vshll.u32 %v1479, 16
      %v1517 = vrot.slane %v1515, 5
      %v1518 = vsel %vm267, %v1513, %v1517
      %v1520 = vshrl.u32 %v1449, 16
      %v1522 = vrot.slane %v1520, 4
      %v1523 = vshll.u32 %v1449, 16
      %v1525 = vrot.slane %v1523, 5
      %v1526 = vor.u32 %v1522, %v1525
      %v1527 = vrot.slane %v1526, 4
      %v1529 = vshll.u32 %v1450, 16
      %v1531 = vrot.slane %v1529, 5
      %v1532 = vsel %vm267, %v1527, %v1531
      %v1533 = vshrl.u32 %v1450, 16
      %v1535 = vrot.slane %v1533, 4
      %v1536 = vor.u32 %v1535, %v1531
      %v1537 = vrot.slane %v1536, 4
      %v1539 = vshll.u32 %v1480, 16
      %v1541 = vrot.slane %v1539, 5
      %v1542 = vsel %vm267, %v1537, %v1541
      %v1544 = vshrl.u32 %v1451, 16
      %v1546 = vrot.slane %v1544, 4
      %v1547 = vshll.u32 %v1451, 16
      %v1549 = vrot.slane %v1547, 5
      %v1550 = vor.u32 %v1546, %v1549
      %v1551 = vrot.slane %v1550, 4
      %v1553 = vshll.u32 %v1452, 16
      %v1555 = vrot.slane %v1553, 5
      %v1556 = vsel %vm267, %v1551, %v1555
      %v1557 = vshrl.u32 %v1452, 16
      %v1559 = vrot.slane %v1557, 4
      %v1560 = vor.u32 %v1559, %v1555
      %v1561 = vrot.slane %v1560, 4
      %v1563 = vshll.u32 %v1481, 16
      %v1565 = vrot.slane %v1563, 5
      %v1566 = vsel %vm267, %v1561, %v1565
      %v1568 = vshrl.u32 %v1453, 16
      %v1570 = vrot.slane %v1568, 4
      %v1571 = vshll.u32 %v1453, 16
      %v1573 = vrot.slane %v1571, 5
      %v1574 = vor.u32 %v1570, %v1573
      %v1575 = vrot.slane %v1574, 4
      %v1577 = vshll.u32 %v1454, 16
      %v1579 = vrot.slane %v1577, 5
      %v1580 = vsel %vm267, %v1575, %v1579
      %v1581 = vshrl.u32 %v1454, 16
      %v1583 = vrot.slane %v1581, 4
      %v1584 = vor.u32 %v1583, %v1579
      %v1585 = vrot.slane %v1584, 4
      %v1587 = vshll.u32 %v1482, 16
      %v1589 = vrot.slane %v1587, 5
      %v1590 = vsel %vm267, %v1585, %v1589
      %v1592 = vshrl.u32 %v1455, 16
      %v1594 = vrot.slane %v1592, 4
      %v1595 = vshll.u32 %v1455, 16
      %v1597 = vrot.slane %v1595, 5
      %v1598 = vor.u32 %v1594, %v1597
      %v1599 = vrot.slane %v1598, 4
      %v1601 = vshll.u32 %v1456, 16
      %v1603 = vrot.slane %v1601, 5
      %v1604 = vsel %vm267, %v1599, %v1603
      %v1605 = vshrl.u32 %v1456, 16
      %v1607 = vrot.slane %v1605, 4
      %v1608 = vor.u32 %v1607, %v1603
      %v1609 = vrot.slane %v1608, 4
      %v1611 = vshll.u32 %v1483, 16
      %v1613 = vrot.slane %v1611, 5
      %v1614 = vsel %vm267, %v1609, %v1613
      %v1616 = vshrl.u32 %v1457, 16
      %v1618 = vrot.slane %v1616, 4
      %v1619 = vshll.u32 %v1457, 16
      %v1621 = vrot.slane %v1619, 5
      %v1622 = vor.u32 %v1618, %v1621
      %v1623 = vrot.slane %v1622, 4
      %v1625 = vshll.u32 %v1458, 16
      %v1627 = vrot.slane %v1625, 5
      %v1628 = vsel %vm267, %v1623, %v1627
      %v1629 = vshrl.u32 %v1458, 16
      %v1631 = vrot.slane %v1629, 4
      %v1632 = vor.u32 %v1631, %v1627
      %v1633 = vrot.slane %v1632, 4
      %v1635 = vshll.u32 %v1484, 16
      %v1637 = vrot.slane %v1635, 5
      %v1638 = vsel %vm267, %v1633, %v1637
      %v1640 = vshrl.u32 %v1459, 16
      %v1642 = vrot.slane %v1640, 4
      %v1643 = vshll.u32 %v1459, 16
      %v1645 = vrot.slane %v1643, 5
      %v1646 = vor.u32 %v1642, %v1645
      %v1647 = vrot.slane %v1646, 4
      %v1649 = vshll.u32 %v1460, 16
      %v1651 = vrot.slane %v1649, 5
      %v1652 = vsel %vm267, %v1647, %v1651
      %v1653 = vshrl.u32 %v1460, 16
      %v1655 = vrot.slane %v1653, 4
      %v1656 = vor.u32 %v1655, %v1651
      %v1657 = vrot.slane %v1656, 4
      %v1659 = vshll.u32 %v1485, 16
      %v1661 = vrot.slane %v1659, 5
      %v1662 = vsel %vm267, %v1657, %v1661
      %v1664 = vshrl.u32 %v1461, 16
      %v1666 = vrot.slane %v1664, 4
      %v1667 = vshll.u32 %v1461, 16
      %v1669 = vrot.slane %v1667, 5
      %v1670 = vor.u32 %v1666, %v1669
      %v1671 = vrot.slane %v1670, 4
      %v1673 = vshll.u32 %v1462, 16
      %v1675 = vrot.slane %v1673, 5
      %v1676 = vsel %vm267, %v1671, %v1675
      %v1677 = vshrl.u32 %v1462, 16
      %v1679 = vrot.slane %v1677, 4
      %v1680 = vor.u32 %v1679, %v1675
      %v1681 = vrot.slane %v1680, 4
      %v1683 = vshll.u32 %v1486, 16
      %v1685 = vrot.slane %v1683, 5
      %v1686 = vsel %vm267, %v1681, %v1685
      %v1688 = vshrl.u32 %v1463, 16
      %v1690 = vrot.slane %v1688, 4
      %v1691 = vshll.u32 %v1463, 16
      %v1693 = vrot.slane %v1691, 5
      %v1694 = vor.u32 %v1690, %v1693
      %v1695 = vrot.slane %v1694, 4
      %v1697 = vshll.u32 %v1464, 16
      %v1699 = vrot.slane %v1697, 5
      %v1700 = vsel %vm267, %v1695, %v1699
      %v1701 = vshrl.u32 %v1464, 16
      %v1703 = vrot.slane %v1701, 4
      %v1704 = vor.u32 %v1703, %v1699
      %v1705 = vrot.slane %v1704, 4
      %v1707 = vshll.u32 %v1487, 16
      %v1709 = vrot.slane %v1707, 5
      %v1710 = vsel %vm267, %v1705, %v1709
      %v1712 = vshrl.u32 %v1465, 16
      %v1714 = vrot.slane %v1712, 4
      %v1715 = vshll.u32 %v1465, 16
      %v1717 = vrot.slane %v1715, 5
      %v1718 = vor.u32 %v1714, %v1717
      %v1719 = vrot.slane %v1718, 4
      %v1721 = vshll.u32 %v1466, 16
      %v1723 = vrot.slane %v1721, 5
      %v1724 = vsel %vm267, %v1719, %v1723
      %v1725 = vshrl.u32 %v1466, 16
      %v1727 = vrot.slane %v1725, 4
      %v1728 = vor.u32 %v1727, %v1723
      %v1729 = vrot.slane %v1728, 4
      %v1731 = vshll.u32 %v1488, 16
      %v1733 = vrot.slane %v1731, 5
      %v1734 = vsel %vm267, %v1729, %v1733
      %v1736 = vshrl.u32 %v1467, 16
      %v1738 = vrot.slane %v1736, 4
      %v1739 = vshll.u32 %v1467, 16
      %v1741 = vrot.slane %v1739, 5
      %v1742 = vor.u32 %v1738, %v1741
      %v1743 = vrot.slane %v1742, 4
      %v1745 = vshll.u32 %v1468, 16
      %v1747 = vrot.slane %v1745, 5
      %v1748 = vsel %vm267, %v1743, %v1747
      %v1749 = vshrl.u32 %v1468, 16
      %v1751 = vrot.slane %v1749, 4
      %v1752 = vor.u32 %v1751, %v1747
      %v1753 = vrot.slane %v1752, 4
      %v1755 = vshll.u32 %v1489, 16
      %v1757 = vrot.slane %v1755, 5
      %v1758 = vsel %vm267, %v1753, %v1757
      %v1760 = vshrl.u32 %v1469, 16
      %v1762 = vrot.slane %v1760, 4
      %v1763 = vshll.u32 %v1469, 16
      %v1765 = vrot.slane %v1763, 5
      %v1766 = vor.u32 %v1762, %v1765
      %v1767 = vrot.slane %v1766, 4
      %v1769 = vshll.u32 %v1470, 16
      %v1771 = vrot.slane %v1769, 5
      %v1772 = vsel %vm267, %v1767, %v1771
      %v1773 = vshrl.u32 %v1470, 16
      %v1775 = vrot.slane %v1773, 4
      %v1776 = vor.u32 %v1775, %v1771
      %v1777 = vrot.slane %v1776, 4
      %v1779 = vshll.u32 %v1490, 16
      %v1781 = vrot.slane %v1779, 5
      %v1782 = vsel %vm267, %v1777, %v1781
      %v1784 = vshrl.u32 %v1471, 16
      %v1786 = vrot.slane %v1784, 4
      %v1787 = vshll.u32 %v1471, 16
      %v1789 = vrot.slane %v1787, 5
      %v1790 = vor.u32 %v1786, %v1789
      %v1791 = vrot.slane %v1790, 4
      %v1793 = vshll.u32 %v1472, 16
      %v1795 = vrot.slane %v1793, 5
      %v1796 = vsel %vm267, %v1791, %v1795
      %v1797 = vshrl.u32 %v1472, 16
      %v1799 = vrot.slane %v1797, 4
      %v1800 = vor.u32 %v1799, %v1795
      %v1801 = vrot.slane %v1800, 4
      %v1803 = vshll.u32 %v1491, 16
      %v1805 = vrot.slane %v1803, 5
      %v1806 = vsel %vm267, %v1801, %v1805
      %v1808 = vshrl.u32 %v1473, 16
      %v1810 = vrot.slane %v1808, 4
      %v1811 = vshll.u32 %v1473, 16
      %v1813 = vrot.slane %v1811, 5
      %v1814 = vor.u32 %v1810, %v1813
      %v1815 = vrot.slane %v1814, 4
      %v1817 = vshll.u32 %v1474, 16
      %v1819 = vrot.slane %v1817, 5
      %v1820 = vsel %vm267, %v1815, %v1819
      %v1821 = vshrl.u32 %v1474, 16
      %v1823 = vrot.slane %v1821, 4
      %v1824 = vor.u32 %v1823, %v1819
      %v1825 = vrot.slane %v1824, 4
      %v1827 = vshll.u32 %v1492, 16
      %v1829 = vrot.slane %v1827, 5
      %v1830 = vsel %vm267, %v1825, %v1829
      %v1832 = vshrl.u32 %v1475, 16
      %v1834 = vrot.slane %v1832, 4
      %v1835 = vshll.u32 %v1475, 16
      %v1837 = vrot.slane %v1835, 5
      %v1838 = vor.u32 %v1834, %v1837
      %v1839 = vrot.slane %v1838, 4
      %v1841 = vshll.u32 %v1476, 16
      %v1843 = vrot.slane %v1841, 5
      %v1844 = vsel %vm267, %v1839, %v1843
      %v1845 = vshrl.u32 %v1476, 16
      %v1847 = vrot.slane %v1845, 4
      %v1848 = vor.u32 %v1847, %v1843
      %v1849 = vrot.slane %v1848, 4
      %v1851 = vshll.u32 %v1493, 16
      %v1853 = vrot.slane %v1851, 5
      %v1854 = vsel %vm267, %v1849, %v1853
      %v1856 = vshrl.u32 %v1477, 16
      %v1858 = vrot.slane %v1856, 4
      %v1859 = vshll.u32 %v1477, 16
      %v1861 = vrot.slane %v1859, 5
      %v1862 = vor.u32 %v1858, %v1861
      %v1863 = vrot.slane %v1862, 4
      %v1865 = vshll.u32 %v1478, 16
      %v1867 = vrot.slane %v1865, 5
      %v1868 = vsel %vm267, %v1863, %v1867
      %v1869 = vshrl.u32 %v1478, 16
      %v1871 = vrot.slane %v1869, 4
      %v1872 = vor.u32 %v1871, %v1867
      %v1873 = vrot.slane %v1872, 4
      %v1875 = vshll.u32 %v1494, 16
      %v1877 = vrot.slane %v1875, 5
      %v1878 = vsel %vm267, %v1873, %v1877
      %v1879 = vld [vmem:[%s1446] sm:$0xe]
      %v1880 = vld [vmem:[%s1446 + $0xc] sm:$0xe]
      %v1881 = vld [vmem:[%s1446 + $0x18] sm:$0xe]
      %v1882 = vld [vmem:[%s1446 + $0x24] sm:$0xe]
      %v1883 = vld [vmem:[%s1446 + $0x30] sm:$0xe]
      %v1884 = vld [vmem:[%s1446 + $0x3c] sm:$0xe]
      %v1885 = vld [vmem:[%s1446 + $0x48] sm:$0xe]
      %v1886 = vld [vmem:[%s1446 + $0x54] sm:$0xe]
      %v1887 = vld [vmem:[%s1446 + $0x60] sm:$0xe]
      %v1888 = vld [vmem:[%s1446 + $0x6c] sm:$0xe]
      %v1889 = vld [vmem:[%s1446 + $0x78] sm:$0xe]
      %v1890 = vld [vmem:[%s1446 + $0x84] sm:$0xe]
      %v1891 = vld [vmem:[%s1446 + $0x90] sm:$0xe]
      %v1892 = vld [vmem:[%s1446 + $0x9c] sm:$0xe]
      %v1893 = vld [vmem:[%s1446 + $0xa8] sm:$0xe]
      %v1894 = vld [vmem:[%s1446 + $0xb4] sm:$0xe]
      %v1943 = vrot.slane %v1879, 5
      %v1944 = vrot.slane %v1943, 4
      %v1945 = vrot.slane %v1448, 5
      %v1946 = vsel %vm718, %v1944, %v1945
      %v1947 = vrot.slane %v1945, 4
      %v1948 = vrot.slane %v1479, 5
      %v1949 = vsel %vm718, %v1947, %v1948
      %v1950 = vrot.slane %v1880, 5
      %v1951 = vrot.slane %v1950, 4
      %v1952 = vrot.slane %v1450, 5
      %v1953 = vsel %vm718, %v1951, %v1952
      %v1954 = vrot.slane %v1952, 4
      %v1955 = vrot.slane %v1480, 5
      %v1956 = vsel %vm718, %v1954, %v1955
      %v1957 = vrot.slane %v1881, 5
      %v1958 = vrot.slane %v1957, 4
      %v1959 = vrot.slane %v1452, 5
      %v1960 = vsel %vm718, %v1958, %v1959
      %v1961 = vrot.slane %v1959, 4
      %v1962 = vrot.slane %v1481, 5
      %v1963 = vsel %vm718, %v1961, %v1962
      %v1964 = vrot.slane %v1882, 5
      %v1965 = vrot.slane %v1964, 4
      %v1966 = vrot.slane %v1454, 5
      %v1967 = vsel %vm718, %v1965, %v1966
      %v1968 = vrot.slane %v1966, 4
      %v1969 = vrot.slane %v1482, 5
      %v1970 = vsel %vm718, %v1968, %v1969
      %v1971 = vrot.slane %v1883, 5
      %v1972 = vrot.slane %v1971, 4
      %v1973 = vrot.slane %v1456, 5
      %v1974 = vsel %vm718, %v1972, %v1973
      %v1975 = vrot.slane %v1973, 4
      %v1976 = vrot.slane %v1483, 5
      %v1977 = vsel %vm718, %v1975, %v1976
      %v1978 = vrot.slane %v1884, 5
      %v1979 = vrot.slane %v1978, 4
      %v1980 = vrot.slane %v1458, 5
      %v1981 = vsel %vm718, %v1979, %v1980
      %v1982 = vrot.slane %v1980, 4
      %v1983 = vrot.slane %v1484, 5
      %v1984 = vsel %vm718, %v1982, %v1983
      %v1985 = vrot.slane %v1885, 5
      %v1986 = vrot.slane %v1985, 4
      %v1987 = vrot.slane %v1460, 5
      %v1988 = vsel %vm718, %v1986, %v1987
      %v1989 = vrot.slane %v1987, 4
      %v1990 = vrot.slane %v1485, 5
      %v1991 = vsel %vm718, %v1989, %v1990
      %v1992 = vrot.slane %v1886, 5
      %v1993 = vrot.slane %v1992, 4
      %v1994 = vrot.slane %v1462, 5
      %v1995 = vsel %vm718, %v1993, %v1994
      %v1996 = vrot.slane %v1994, 4
      %v1997 = vrot.slane %v1486, 5
      %v1998 = vsel %vm718, %v1996, %v1997
      %v1999 = vrot.slane %v1887, 5
      %v2000 = vrot.slane %v1999, 4
      %v2001 = vrot.slane %v1464, 5
      %v2002 = vsel %vm718, %v2000, %v2001
      %v2003 = vrot.slane %v2001, 4
      %v2004 = vrot.slane %v1487, 5
      %v2005 = vsel %vm718, %v2003, %v2004
      %v2006 = vrot.slane %v1888, 5
      %v2007 = vrot.slane %v2006, 4
      %v2008 = vrot.slane %v1466, 5
      %v2009 = vsel %vm718, %v2007, %v2008
      %v2010 = vrot.slane %v2008, 4
      %v2011 = vrot.slane %v1488, 5
      %v2012 = vsel %vm718, %v2010, %v2011
      %v2013 = vrot.slane %v1889, 5
      %v2014 = vrot.slane %v2013, 4
      %v2015 = vrot.slane %v1468, 5
      %v2016 = vsel %vm718, %v2014, %v2015
      %v2017 = vrot.slane %v2015, 4
      %v2018 = vrot.slane %v1489, 5
      %v2019 = vsel %vm718, %v2017, %v2018
      %v2020 = vrot.slane %v1890, 5
      %v2021 = vrot.slane %v2020, 4
      %v2022 = vrot.slane %v1470, 5
      %v2023 = vsel %vm718, %v2021, %v2022
      %v2024 = vrot.slane %v2022, 4
      %v2025 = vrot.slane %v1490, 5
      %v2026 = vsel %vm718, %v2024, %v2025
      %v2027 = vrot.slane %v1891, 5
      %v2028 = vrot.slane %v2027, 4
      %v2029 = vrot.slane %v1472, 5
      %v2030 = vsel %vm718, %v2028, %v2029
      %v2031 = vrot.slane %v2029, 4
      %v2032 = vrot.slane %v1491, 5
      %v2033 = vsel %vm718, %v2031, %v2032
      %v2034 = vrot.slane %v1892, 5
      %v2035 = vrot.slane %v2034, 4
      %v2036 = vrot.slane %v1474, 5
      %v2037 = vsel %vm718, %v2035, %v2036
      %v2038 = vrot.slane %v2036, 4
      %v2039 = vrot.slane %v1492, 5
      %v2040 = vsel %vm718, %v2038, %v2039
      %v2041 = vrot.slane %v1893, 5
      %v2042 = vrot.slane %v2041, 4
      %v2043 = vrot.slane %v1476, 5
      %v2044 = vsel %vm718, %v2042, %v2043
      %v2045 = vrot.slane %v2043, 4
      %v2046 = vrot.slane %v1493, 5
      %v2047 = vsel %vm718, %v2045, %v2046
      %v2048 = vrot.slane %v1894, 5
      %v2049 = vrot.slane %v2048, 4
      %v2050 = vrot.slane %v1478, 5
      %v2051 = vsel %vm718, %v2049, %v2050
      %v2052 = vrot.slane %v2050, 4
      %v2053 = vrot.slane %v1494, 5
      %v2054 = vsel %vm718, %v2052, %v2053
      %v2071 = vunpack.c.l.b16 %v217
      %v2072 = vunpack.c.l.b16 %v218
      %v2073 = vunpack.c.l.b16 %v219
      %v2074 = vunpack.c.l.b16 %v220
      %v2075 = vunpack.c.l.b16 %v221
      %v2076 = vunpack.c.l.b16 %v222
      %v2077 = vunpack.c.l.b16 %v223
      %v2078 = vunpack.c.l.b16 %v224
      %v2079 = vunpack.c.l.b16 %v225
      %v2080 = vunpack.c.l.b16 %v226
      %v2081 = vunpack.c.l.b16 %v227
      %v2082 = vunpack.c.l.b16 %v228
      %v2083 = vunpack.c.l.b16 %v229
      %v2084 = vunpack.c.l.b16 %v230
      %v2085 = vunpack.c.l.b16 %v231
      %v2086 = vunpack.c.l.b16 %v232
      %v2087 = vunpack.c.l.b16 %v233
      %v2088 = vunpack.c.l.b16 %v234
      %v2089 = vunpack.c.l.b16 %v235
      %v2090 = vunpack.c.l.b16 %v236
      %v2091 = vunpack.c.l.b16 %v237
      %v2092 = vunpack.c.l.b16 %v238
      %v2093 = vunpack.c.l.b16 %v239
      %v2094 = vunpack.c.l.b16 %v240
      %v2095 = vunpack.c.l.b16 %v241
      %v2096 = vunpack.c.l.b16 %v242
      %v2097 = vunpack.c.l.b16 %v243
      %v2098 = vunpack.c.l.b16 %v244
      %v2099 = vunpack.c.l.b16 %v245
      %v2100 = vunpack.c.l.b16 %v246
      %v2101 = vunpack.c.l.b16 %v247
      %v2102 = vunpack.c.l.b16 %v248
      %v2103 = vpack.c.b16 %v2072, %v2071
      %v2104 = vpack.c.b16 %v2074, %v2073
      %v2105 = vpack.c.b16 %v2076, %v2075
      %v2106 = vpack.c.b16 %v2078, %v2077
      %v2107 = vpack.c.b16 %v2080, %v2079
      %v2108 = vpack.c.b16 %v2082, %v2081
      %v2109 = vpack.c.b16 %v2084, %v2083
      %v2110 = vpack.c.b16 %v2086, %v2085
      %v2111 = vpack.c.b16 %v2088, %v2087
      %v2112 = vpack.c.b16 %v2090, %v2089
      %v2113 = vpack.c.b16 %v2092, %v2091
      %v2114 = vpack.c.b16 %v2094, %v2093
      %v2115 = vpack.c.b16 %v2096, %v2095
      %v2116 = vpack.c.b16 %v2098, %v2097
      %v2117 = vpack.c.b16 %v2100, %v2099
      %v2118 = vpack.c.b16 %v2102, %v2101
      %v2119 = vunpack.c.l.b16 %v281
      %v2120 = vunpack.c.l.b16 %v291
      %v2121 = vunpack.c.l.b16 %v305
      %v2122 = vunpack.c.l.b16 %v315
      %v2123 = vunpack.c.l.b16 %v329
      %v2124 = vunpack.c.l.b16 %v339
      %v2125 = vunpack.c.l.b16 %v353
      %v2126 = vunpack.c.l.b16 %v363
      %v2127 = vunpack.c.l.b16 %v377
      %v2128 = vunpack.c.l.b16 %v387
      %v2129 = vunpack.c.l.b16 %v401
      %v2130 = vunpack.c.l.b16 %v411
      %v2131 = vunpack.c.l.b16 %v425
      %v2132 = vunpack.c.l.b16 %v435
      %v2133 = vunpack.c.l.b16 %v449
      %v2134 = vunpack.c.l.b16 %v459
      %v2135 = vunpack.c.l.b16 %v473
      %v2136 = vunpack.c.l.b16 %v483
      %v2137 = vunpack.c.l.b16 %v497
      %v2138 = vunpack.c.l.b16 %v507
      %v2139 = vunpack.c.l.b16 %v521
      %v2140 = vunpack.c.l.b16 %v531
      %v2141 = vunpack.c.l.b16 %v545
      %v2142 = vunpack.c.l.b16 %v555
      %v2143 = vunpack.c.l.b16 %v569
      %v2144 = vunpack.c.l.b16 %v579
      %v2145 = vunpack.c.l.b16 %v593
      %v2146 = vunpack.c.l.b16 %v603
      %v2147 = vunpack.c.l.b16 %v617
      %v2148 = vunpack.c.l.b16 %v627
      %v2149 = vunpack.c.l.b16 %v641
      %v2150 = vunpack.c.l.b16 %v651
      %v2151 = vpack.c.b16 %v2120, %v2119
      %v2152 = vpack.c.b16 %v2122, %v2121
      %v2153 = vpack.c.b16 %v2124, %v2123
      %v2154 = vpack.c.b16 %v2126, %v2125
      %v2155 = vpack.c.b16 %v2128, %v2127
      %v2156 = vpack.c.b16 %v2130, %v2129
      %v2157 = vpack.c.b16 %v2132, %v2131
      %v2158 = vpack.c.b16 %v2134, %v2133
      %v2159 = vpack.c.b16 %v2136, %v2135
      %v2160 = vpack.c.b16 %v2138, %v2137
      %v2161 = vpack.c.b16 %v2140, %v2139
      %v2162 = vpack.c.b16 %v2142, %v2141
      %v2163 = vpack.c.b16 %v2144, %v2143
      %v2164 = vpack.c.b16 %v2146, %v2145
      %v2165 = vpack.c.b16 %v2148, %v2147
      %v2166 = vpack.c.b16 %v2150, %v2149
      %2167 = vrot.lane.b32.xlu0 %v2151, 8
      %v2168 = vpop.permute.xlu0 %2167
      %2169 = vrot.lane.b32.xlu0 %v2152, 8
      %v2170 = vpop.permute.xlu0 %2169
      %2171 = vrot.lane.b32.xlu0 %v2153, 8
      %v2172 = vpop.permute.xlu0 %2171
      %2173 = vrot.lane.b32.xlu0 %v2154, 8
      %v2174 = vpop.permute.xlu0 %2173
      %2175 = vrot.lane.b32.xlu0 %v2155, 8
      %v2176 = vpop.permute.xlu0 %2175
      %2177 = vrot.lane.b32.xlu0 %v2156, 8
      %v2178 = vpop.permute.xlu0 %2177
      %2179 = vrot.lane.b32.xlu0 %v2157, 8
      %v2180 = vpop.permute.xlu0 %2179
      %2181 = vrot.lane.b32.xlu0 %v2158, 8
      %v2182 = vpop.permute.xlu0 %2181
      %2183 = vrot.lane.b32.xlu0 %v2159, 8
      %v2184 = vpop.permute.xlu0 %2183
      %2185 = vrot.lane.b32.xlu0 %v2160, 8
      %v2186 = vpop.permute.xlu0 %2185
      %2187 = vrot.lane.b32.xlu0 %v2161, 8
      %v2188 = vpop.permute.xlu0 %2187
      %2189 = vrot.lane.b32.xlu0 %v2162, 8
      %v2190 = vpop.permute.xlu0 %2189
      %2191 = vrot.lane.b32.xlu0 %v2163, 8
      %v2192 = vpop.permute.xlu0 %2191
      %2193 = vrot.lane.b32.xlu0 %v2164, 8
      %v2194 = vpop.permute.xlu0 %2193
      %2195 = vrot.lane.b32.xlu0 %v2165, 8
      %v2196 = vpop.permute.xlu0 %2195
      %2197 = vrot.lane.b32.xlu0 %v2166, 8
      %v2198 = vpop.permute.xlu0 %2197
      %v2199 = vunpack.c.l.b16 %v722
      %v2200 = vunpack.c.l.b16 %v725
      %v2201 = vunpack.c.l.b16 %v729
      %v2202 = vunpack.c.l.b16 %v732
      %v2203 = vunpack.c.l.b16 %v736
      %v2204 = vunpack.c.l.b16 %v739
      %v2205 = vunpack.c.l.b16 %v743
      %v2206 = vunpack.c.l.b16 %v746
      %v2207 = vunpack.c.l.b16 %v750
      %v2208 = vunpack.c.l.b16 %v753
      %v2209 = vunpack.c.l.b16 %v757
      %v2210 = vunpack.c.l.b16 %v760
      %v2211 = vunpack.c.l.b16 %v764
      %v2212 = vunpack.c.l.b16 %v767
      %v2213 = vunpack.c.l.b16 %v771
      %v2214 = vunpack.c.l.b16 %v774
      %v2215 = vunpack.c.l.b16 %v778
      %v2216 = vunpack.c.l.b16 %v781
      %v2217 = vunpack.c.l.b16 %v785
      %v2218 = vunpack.c.l.b16 %v788
      %v2219 = vunpack.c.l.b16 %v792
      %v2220 = vunpack.c.l.b16 %v795
      %v2221 = vunpack.c.l.b16 %v799
      %v2222 = vunpack.c.l.b16 %v802
      %v2223 = vunpack.c.l.b16 %v806
      %v2224 = vunpack.c.l.b16 %v809
      %v2225 = vunpack.c.l.b16 %v813
      %v2226 = vunpack.c.l.b16 %v816
      %v2227 = vunpack.c.l.b16 %v820
      %v2228 = vunpack.c.l.b16 %v823
      %v2229 = vunpack.c.l.b16 %v827
      %v2230 = vunpack.c.l.b16 %v830
      %v2231 = vpack.c.b16 %v2200, %v2199
      %v2232 = vpack.c.b16 %v2202, %v2201
      %v2233 = vpack.c.b16 %v2204, %v2203
      %v2234 = vpack.c.b16 %v2206, %v2205
      %v2235 = vpack.c.b16 %v2208, %v2207
      %v2236 = vpack.c.b16 %v2210, %v2209
      %v2237 = vpack.c.b16 %v2212, %v2211
      %v2238 = vpack.c.b16 %v2214, %v2213
      %v2239 = vpack.c.b16 %v2216, %v2215
      %v2240 = vpack.c.b16 %v2218, %v2217
      %v2241 = vpack.c.b16 %v2220, %v2219
      %v2242 = vpack.c.b16 %v2222, %v2221
      %v2243 = vpack.c.b16 %v2224, %v2223
      %v2244 = vpack.c.b16 %v2226, %v2225
      %v2245 = vpack.c.b16 %v2228, %v2227
      %v2246 = vpack.c.b16 %v2230, %v2229
      %2247 = vrot.lane.b32.xlu0 %v2231, 16
      %v2248 = vpop.permute.xlu0 %2247
      %2249 = vrot.lane.b32.xlu0 %v2232, 16
      %v2250 = vpop.permute.xlu0 %2249
      %2251 = vrot.lane.b32.xlu0 %v2233, 16
      %v2252 = vpop.permute.xlu0 %2251
      %2253 = vrot.lane.b32.xlu0 %v2234, 16
      %v2254 = vpop.permute.xlu0 %2253
      %2255 = vrot.lane.b32.xlu0 %v2235, 16
      %v2256 = vpop.permute.xlu0 %2255
      %2257 = vrot.lane.b32.xlu0 %v2236, 16
      %v2258 = vpop.permute.xlu0 %2257
      %2259 = vrot.lane.b32.xlu0 %v2237, 16
      %v2260 = vpop.permute.xlu0 %2259
      %2261 = vrot.lane.b32.xlu0 %v2238, 16
      %v2262 = vpop.permute.xlu0 %2261
      %2263 = vrot.lane.b32.xlu0 %v2239, 16
      %v2264 = vpop.permute.xlu0 %2263
      %2265 = vrot.lane.b32.xlu0 %v2240, 16
      %v2266 = vpop.permute.xlu0 %2265
      %2267 = vrot.lane.b32.xlu0 %v2241, 16
      %v2268 = vpop.permute.xlu0 %2267
      %2269 = vrot.lane.b32.xlu0 %v2242, 16
      %v2270 = vpop.permute.xlu0 %2269
      %2271 = vrot.lane.b32.xlu0 %v2243, 16
      %v2272 = vpop.permute.xlu0 %2271
      %2273 = vrot.lane.b32.xlu0 %v2244, 16
      %v2274 = vpop.permute.xlu0 %2273
      %2275 = vrot.lane.b32.xlu0 %v2245, 16
      %v2276 = vpop.permute.xlu0 %2275
      %2277 = vrot.lane.b32.xlu0 %v2246, 16
      %v2278 = vpop.permute.xlu0 %2277
      %v2295 = vunpack.c.l.b16 %v835
      %v2296 = vunpack.c.l.b16 %v836
      %v2297 = vunpack.c.l.b16 %v837
      %v2298 = vunpack.c.l.b16 %v838
      %v2299 = vunpack.c.l.b16 %v839
      %v2300 = vunpack.c.l.b16 %v840
      %v2301 = vunpack.c.l.b16 %v841
      %v2302 = vunpack.c.l.b16 %v842
      %v2303 = vunpack.c.l.b16 %v843
      %v2304 = vunpack.c.l.b16 %v844
      %v2305 = vunpack.c.l.b16 %v845
      %v2306 = vunpack.c.l.b16 %v846
      %v2307 = vunpack.c.l.b16 %v847
      %v2308 = vunpack.c.l.b16 %v848
      %v2309 = vunpack.c.l.b16 %v849
      %v2310 = vunpack.c.l.b16 %v850
      %v2311 = vunpack.c.l.b16 %v851
      %v2312 = vunpack.c.l.b16 %v852
      %v2313 = vunpack.c.l.b16 %v853
      %v2314 = vunpack.c.l.b16 %v854
      %v2315 = vunpack.c.l.b16 %v855
      %v2316 = vunpack.c.l.b16 %v856
      %v2317 = vunpack.c.l.b16 %v857
      %v2318 = vunpack.c.l.b16 %v858
      %v2319 = vunpack.c.l.b16 %v859
      %v2320 = vunpack.c.l.b16 %v860
      %v2321 = vunpack.c.l.b16 %v861
      %v2322 = vunpack.c.l.b16 %v862
      %v2323 = vunpack.c.l.b16 %v863
      %v2324 = vunpack.c.l.b16 %v864
      %v2325 = vunpack.c.l.b16 %v865
      %v2326 = vunpack.c.l.b16 %v866
      %v2327 = vpack.c.b16 %v2296, %v2295
      %v2328 = vpack.c.b16 %v2298, %v2297
      %v2329 = vpack.c.b16 %v2300, %v2299
      %v2330 = vpack.c.b16 %v2302, %v2301
      %v2331 = vpack.c.b16 %v2304, %v2303
      %v2332 = vpack.c.b16 %v2306, %v2305
      %v2333 = vpack.c.b16 %v2308, %v2307
      %v2334 = vpack.c.b16 %v2310, %v2309
      %v2335 = vpack.c.b16 %v2312, %v2311
      %v2336 = vpack.c.b16 %v2314, %v2313
      %v2337 = vpack.c.b16 %v2316, %v2315
      %v2338 = vpack.c.b16 %v2318, %v2317
      %v2339 = vpack.c.b16 %v2320, %v2319
      %v2340 = vpack.c.b16 %v2322, %v2321
      %v2341 = vpack.c.b16 %v2324, %v2323
      %v2342 = vpack.c.b16 %v2326, %v2325
      %2343 = vrot.lane.b32.xlu0 %v2327, 24
      %v2344 = vpop.permute.xlu0 %2343
      %2345 = vrot.lane.b32.xlu0 %v2328, 24
      %v2346 = vpop.permute.xlu0 %2345
      %2347 = vrot.lane.b32.xlu0 %v2329, 24
      %v2348 = vpop.permute.xlu0 %2347
      %2349 = vrot.lane.b32.xlu0 %v2330, 24
      %v2350 = vpop.permute.xlu0 %2349
      %2351 = vrot.lane.b32.xlu0 %v2331, 24
      %v2352 = vpop.permute.xlu0 %2351
      %2353 = vrot.lane.b32.xlu0 %v2332, 24
      %v2354 = vpop.permute.xlu0 %2353
      %2355 = vrot.lane.b32.xlu0 %v2333, 24
      %v2356 = vpop.permute.xlu0 %2355
      %2357 = vrot.lane.b32.xlu0 %v2334, 24
      %v2358 = vpop.permute.xlu0 %2357
      %2359 = vrot.lane.b32.xlu0 %v2335, 24
      %v2360 = vpop.permute.xlu0 %2359
      %2361 = vrot.lane.b32.xlu0 %v2336, 24
      %v2362 = vpop.permute.xlu0 %2361
      %2363 = vrot.lane.b32.xlu0 %v2337, 24
      %v2364 = vpop.permute.xlu0 %2363
      %2365 = vrot.lane.b32.xlu0 %v2338, 24
      %v2366 = vpop.permute.xlu0 %2365
      %2367 = vrot.lane.b32.xlu0 %v2339, 24
      %v2368 = vpop.permute.xlu0 %2367
      %2369 = vrot.lane.b32.xlu0 %v2340, 24
      %v2370 = vpop.permute.xlu0 %2369
      %2371 = vrot.lane.b32.xlu0 %v2341, 24
      %v2372 = vpop.permute.xlu0 %2371
      %2373 = vrot.lane.b32.xlu0 %v2342, 24
      %v2374 = vpop.permute.xlu0 %2373
      %v2375 = vunpack.c.l.b16 %v896
      %v2376 = vunpack.c.l.b16 %v906
      %v2377 = vunpack.c.l.b16 %v920
      %v2378 = vunpack.c.l.b16 %v930
      %v2379 = vunpack.c.l.b16 %v944
      %v2380 = vunpack.c.l.b16 %v954
      %v2381 = vunpack.c.l.b16 %v968
      %v2382 = vunpack.c.l.b16 %v978
      %v2383 = vunpack.c.l.b16 %v992
      %v2384 = vunpack.c.l.b16 %v1002
      %v2385 = vunpack.c.l.b16 %v1016
      %v2386 = vunpack.c.l.b16 %v1026
      %v2387 = vunpack.c.l.b16 %v1040
      %v2388 = vunpack.c.l.b16 %v1050
      %v2389 = vunpack.c.l.b16 %v1064
      %v2390 = vunpack.c.l.b16 %v1074
      %v2391 = vunpack.c.l.b16 %v1088
      %v2392 = vunpack.c.l.b16 %v1098
      %v2393 = vunpack.c.l.b16 %v1112
      %v2394 = vunpack.c.l.b16 %v1122
      %v2395 = vunpack.c.l.b16 %v1136
      %v2396 = vunpack.c.l.b16 %v1146
      %v2397 = vunpack.c.l.b16 %v1160
      %v2398 = vunpack.c.l.b16 %v1170
      %v2399 = vunpack.c.l.b16 %v1184
      %v2400 = vunpack.c.l.b16 %v1194
      %v2401 = vunpack.c.l.b16 %v1208
      %v2402 = vunpack.c.l.b16 %v1218
      %v2403 = vunpack.c.l.b16 %v1232
      %v2404 = vunpack.c.l.b16 %v1242
      %v2405 = vunpack.c.l.b16 %v1256
      %v2406 = vunpack.c.l.b16 %v1266
      %v2407 = vpack.c.b16 %v2376, %v2375
      %v2408 = vpack.c.b16 %v2378, %v2377
      %v2409 = vpack.c.b16 %v2380, %v2379
      %v2410 = vpack.c.b16 %v2382, %v2381
      %v2411 = vpack.c.b16 %v2384, %v2383
      %v2412 = vpack.c.b16 %v2386, %v2385
      %v2413 = vpack.c.b16 %v2388, %v2387
      %v2414 = vpack.c.b16 %v2390, %v2389
      %v2415 = vpack.c.b16 %v2392, %v2391
      %v2416 = vpack.c.b16 %v2394, %v2393
      %v2417 = vpack.c.b16 %v2396, %v2395
      %v2418 = vpack.c.b16 %v2398, %v2397
      %v2419 = vpack.c.b16 %v2400, %v2399
      %v2420 = vpack.c.b16 %v2402, %v2401
      %v2421 = vpack.c.b16 %v2404, %v2403
      %v2422 = vpack.c.b16 %v2406, %v2405
      %2423 = vrot.lane.b32.xlu0 %v2407, 32
      %v2424 = vpop.permute.xlu0 %2423
      %2425 = vrot.lane.b32.xlu0 %v2408, 32
      %v2426 = vpop.permute.xlu0 %2425
      %2427 = vrot.lane.b32.xlu0 %v2409, 32
      %v2428 = vpop.permute.xlu0 %2427
      %2429 = vrot.lane.b32.xlu0 %v2410, 32
      %v2430 = vpop.permute.xlu0 %2429
      %2431 = vrot.lane.b32.xlu0 %v2411, 32
      %v2432 = vpop.permute.xlu0 %2431
      %2433 = vrot.lane.b32.xlu0 %v2412, 32
      %v2434 = vpop.permute.xlu0 %2433
      %2435 = vrot.lane.b32.xlu0 %v2413, 32
      %v2436 = vpop.permute.xlu0 %2435
      %2437 = vrot.lane.b32.xlu0 %v2414, 32
      %v2438 = vpop.permute.xlu0 %2437
      %2439 = vrot.lane.b32.xlu0 %v2415, 32
      %v2440 = vpop.permute.xlu0 %2439
      %2441 = vrot.lane.b32.xlu0 %v2416, 32
      %v2442 = vpop.permute.xlu0 %2441
      %2443 = vrot.lane.b32.xlu0 %v2417, 32
      %v2444 = vpop.permute.xlu0 %2443
      %2445 = vrot.lane.b32.xlu0 %v2418, 32
      %v2446 = vpop.permute.xlu0 %2445
      %2447 = vrot.lane.b32.xlu0 %v2419, 32
      %v2448 = vpop.permute.xlu0 %2447
      %2449 = vrot.lane.b32.xlu0 %v2420, 32
      %v2450 = vpop.permute.xlu0 %2449
      %2451 = vrot.lane.b32.xlu0 %v2421, 32
      %v2452 = vpop.permute.xlu0 %2451
      %2453 = vrot.lane.b32.xlu0 %v2422, 32
      %v2454 = vpop.permute.xlu0 %2453
      %v2455 = vunpack.c.l.b16 %v1334
      %v2456 = vunpack.c.l.b16 %v1337
      %v2457 = vunpack.c.l.b16 %v1341
      %v2458 = vunpack.c.l.b16 %v1344
      %v2459 = vunpack.c.l.b16 %v1348
      %v2460 = vunpack.c.l.b16 %v1351
      %v2461 = vunpack.c.l.b16 %v1355
      %v2462 = vunpack.c.l.b16 %v1358
      %v2463 = vunpack.c.l.b16 %v1362
      %v2464 = vunpack.c.l.b16 %v1365
      %v2465 = vunpack.c.l.b16 %v1369
      %v2466 = vunpack.c.l.b16 %v1372
      %v2467 = vunpack.c.l.b16 %v1376
      %v2468 = vunpack.c.l.b16 %v1379
      %v2469 = vunpack.c.l.b16 %v1383
      %v2470 = vunpack.c.l.b16 %v1386
      %v2471 = vunpack.c.l.b16 %v1390
      %v2472 = vunpack.c.l.b16 %v1393
      %v2473 = vunpack.c.l.b16 %v1397
      %v2474 = vunpack.c.l.b16 %v1400
      %v2475 = vunpack.c.l.b16 %v1404
      %v2476 = vunpack.c.l.b16 %v1407
      %v2477 = vunpack.c.l.b16 %v1411
      %v2478 = vunpack.c.l.b16 %v1414
      %v2479 = vunpack.c.l.b16 %v1418
      %v2480 = vunpack.c.l.b16 %v1421
      %v2481 = vunpack.c.l.b16 %v1425
      %v2482 = vunpack.c.l.b16 %v1428
      %v2483 = vunpack.c.l.b16 %v1432
      %v2484 = vunpack.c.l.b16 %v1435
      %v2485 = vunpack.c.l.b16 %v1439
      %v2486 = vunpack.c.l.b16 %v1442
      %v2487 = vpack.c.b16 %v2456, %v2455
      %v2488 = vpack.c.b16 %v2458, %v2457
      %v2489 = vpack.c.b16 %v2460, %v2459
      %v2490 = vpack.c.b16 %v2462, %v2461
      %v2491 = vpack.c.b16 %v2464, %v2463
      %v2492 = vpack.c.b16 %v2466, %v2465
      %v2493 = vpack.c.b16 %v2468, %v2467
      %v2494 = vpack.c.b16 %v2470, %v2469
      %v2495 = vpack.c.b16 %v2472, %v2471
      %v2496 = vpack.c.b16 %v2474, %v2473
      %v2497 = vpack.c.b16 %v2476, %v2475
      %v2498 = vpack.c.b16 %v2478, %v2477
      %v2499 = vpack.c.b16 %v2480, %v2479
      %v2500 = vpack.c.b16 %v2482, %v2481
      %v2501 = vpack.c.b16 %v2484, %v2483
      %v2502 = vpack.c.b16 %v2486, %v2485
      %2503 = vrot.lane.b32.xlu0 %v2487, 40
      %v2504 = vpop.permute.xlu0 %2503
      %2505 = vrot.lane.b32.xlu0 %v2488, 40
      %v2506 = vpop.permute.xlu0 %2505
      %2507 = vrot.lane.b32.xlu0 %v2489, 40
      %v2508 = vpop.permute.xlu0 %2507
      %2509 = vrot.lane.b32.xlu0 %v2490, 40
      %v2510 = vpop.permute.xlu0 %2509
      %2511 = vrot.lane.b32.xlu0 %v2491, 40
      %v2512 = vpop.permute.xlu0 %2511
      %2513 = vrot.lane.b32.xlu0 %v2492, 40
      %v2514 = vpop.permute.xlu0 %2513
      %2515 = vrot.lane.b32.xlu0 %v2493, 40
      %v2516 = vpop.permute.xlu0 %2515
      %2517 = vrot.lane.b32.xlu0 %v2494, 40
      %v2518 = vpop.permute.xlu0 %2517
      %2519 = vrot.lane.b32.xlu0 %v2495, 40
      %v2520 = vpop.permute.xlu0 %2519
      %2521 = vrot.lane.b32.xlu0 %v2496, 40
      %v2522 = vpop.permute.xlu0 %2521
      %2523 = vrot.lane.b32.xlu0 %v2497, 40
      %v2524 = vpop.permute.xlu0 %2523
      %2525 = vrot.lane.b32.xlu0 %v2498, 40
      %v2526 = vpop.permute.xlu0 %2525
      %2527 = vrot.lane.b32.xlu0 %v2499, 40
      %v2528 = vpop.permute.xlu0 %2527
      %2529 = vrot.lane.b32.xlu0 %v2500, 40
      %v2530 = vpop.permute.xlu0 %2529
      %2531 = vrot.lane.b32.xlu0 %v2501, 40
      %v2532 = vpop.permute.xlu0 %2531
      %2533 = vrot.lane.b32.xlu0 %v2502, 40
      %v2534 = vpop.permute.xlu0 %2533
      %v2551 = vunpack.c.l.b16 %v1447
      %v2552 = vunpack.c.l.b16 %v1448
      %v2553 = vunpack.c.l.b16 %v1449
      %v2554 = vunpack.c.l.b16 %v1450
      %v2555 = vunpack.c.l.b16 %v1451
      %v2556 = vunpack.c.l.b16 %v1452
      %v2557 = vunpack.c.l.b16 %v1453
      %v2558 = vunpack.c.l.b16 %v1454
      %v2559 = vunpack.c.l.b16 %v1455
      %v2560 = vunpack.c.l.b16 %v1456
      %v2561 = vunpack.c.l.b16 %v1457
      %v2562 = vunpack.c.l.b16 %v1458
      %v2563 = vunpack.c.l.b16 %v1459
      %v2564 = vunpack.c.l.b16 %v1460
      %v2565 = vunpack.c.l.b16 %v1461
      %v2566 = vunpack.c.l.b16 %v1462
      %v2567 = vunpack.c.l.b16 %v1463
      %v2568 = vunpack.c.l.b16 %v1464
      %v2569 = vunpack.c.l.b16 %v1465
      %v2570 = vunpack.c.l.b16 %v1466
      %v2571 = vunpack.c.l.b16 %v1467
      %v2572 = vunpack.c.l.b16 %v1468
      %v2573 = vunpack.c.l.b16 %v1469
      %v2574 = vunpack.c.l.b16 %v1470
      %v2575 = vunpack.c.l.b16 %v1471
      %v2576 = vunpack.c.l.b16 %v1472
      %v2577 = vunpack.c.l.b16 %v1473
      %v2578 = vunpack.c.l.b16 %v1474
      %v2579 = vunpack.c.l.b16 %v1475
      %v2580 = vunpack.c.l.b16 %v1476
      %v2581 = vunpack.c.l.b16 %v1477
      %v2582 = vunpack.c.l.b16 %v1478
      %v2583 = vpack.c.b16 %v2552, %v2551
      %v2584 = vpack.c.b16 %v2554, %v2553
      %v2585 = vpack.c.b16 %v2556, %v2555
      %v2586 = vpack.c.b16 %v2558, %v2557
      %v2587 = vpack.c.b16 %v2560, %v2559
      %v2588 = vpack.c.b16 %v2562, %v2561
      %v2589 = vpack.c.b16 %v2564, %v2563
      %v2590 = vpack.c.b16 %v2566, %v2565
      %v2591 = vpack.c.b16 %v2568, %v2567
      %v2592 = vpack.c.b16 %v2570, %v2569
      %v2593 = vpack.c.b16 %v2572, %v2571
      %v2594 = vpack.c.b16 %v2574, %v2573
      %v2595 = vpack.c.b16 %v2576, %v2575
      %v2596 = vpack.c.b16 %v2578, %v2577
      %v2597 = vpack.c.b16 %v2580, %v2579
      %v2598 = vpack.c.b16 %v2582, %v2581
      %2599 = vrot.lane.b32.xlu0 %v2583, 48
      %v2600 = vpop.permute.xlu0 %2599
      %2601 = vrot.lane.b32.xlu0 %v2584, 48
      %v2602 = vpop.permute.xlu0 %2601
      %2603 = vrot.lane.b32.xlu0 %v2585, 48
      %v2604 = vpop.permute.xlu0 %2603
      %2605 = vrot.lane.b32.xlu0 %v2586, 48
      %v2606 = vpop.permute.xlu0 %2605
      %2607 = vrot.lane.b32.xlu0 %v2587, 48
      %v2608 = vpop.permute.xlu0 %2607
      %2609 = vrot.lane.b32.xlu0 %v2588, 48
      %v2610 = vpop.permute.xlu0 %2609
      %2611 = vrot.lane.b32.xlu0 %v2589, 48
      %v2612 = vpop.permute.xlu0 %2611
      %2613 = vrot.lane.b32.xlu0 %v2590, 48
      %v2614 = vpop.permute.xlu0 %2613
      %2615 = vrot.lane.b32.xlu0 %v2591, 48
      %v2616 = vpop.permute.xlu0 %2615
      %2617 = vrot.lane.b32.xlu0 %v2592, 48
      %v2618 = vpop.permute.xlu0 %2617
      %2619 = vrot.lane.b32.xlu0 %v2593, 48
      %v2620 = vpop.permute.xlu0 %2619
      %2621 = vrot.lane.b32.xlu0 %v2594, 48
      %v2622 = vpop.permute.xlu0 %2621
      %2623 = vrot.lane.b32.xlu0 %v2595, 48
      %v2624 = vpop.permute.xlu0 %2623
      %2625 = vrot.lane.b32.xlu0 %v2596, 48
      %v2626 = vpop.permute.xlu0 %2625
      %2627 = vrot.lane.b32.xlu0 %v2597, 48
      %v2628 = vpop.permute.xlu0 %2627
      %2629 = vrot.lane.b32.xlu0 %v2598, 48
      %v2630 = vpop.permute.xlu0 %2629
      %v2631 = vunpack.c.l.b16 %v1508
      %v2632 = vunpack.c.l.b16 %v1518
      %v2633 = vunpack.c.l.b16 %v1532
      %v2634 = vunpack.c.l.b16 %v1542
      %v2635 = vunpack.c.l.b16 %v1556
      %v2636 = vunpack.c.l.b16 %v1566
      %v2637 = vunpack.c.l.b16 %v1580
      %v2638 = vunpack.c.l.b16 %v1590
      %v2639 = vunpack.c.l.b16 %v1604
      %v2640 = vunpack.c.l.b16 %v1614
      %v2641 = vunpack.c.l.b16 %v1628
      %v2642 = vunpack.c.l.b16 %v1638
      %v2643 = vunpack.c.l.b16 %v1652
      %v2644 = vunpack.c.l.b16 %v1662
      %v2645 = vunpack.c.l.b16 %v1676
      %v2646 = vunpack.c.l.b16 %v1686
      %v2647 = vunpack.c.l.b16 %v1700
      %v2648 = vunpack.c.l.b16 %v1710
      %v2649 = vunpack.c.l.b16 %v1724
      %v2650 = vunpack.c.l.b16 %v1734
      %v2651 = vunpack.c.l.b16 %v1748
      %v2652 = vunpack.c.l.b16 %v1758
      %v2653 = vunpack.c.l.b16 %v1772
      %v2654 = vunpack.c.l.b16 %v1782
      %v2655 = vunpack.c.l.b16 %v1796
      %v2656 = vunpack.c.l.b16 %v1806
      %v2657 = vunpack.c.l.b16 %v1820
      %v2658 = vunpack.c.l.b16 %v1830
      %v2659 = vunpack.c.l.b16 %v1844
      %v2660 = vunpack.c.l.b16 %v1854
      %v2661 = vunpack.c.l.b16 %v1868
      %v2662 = vunpack.c.l.b16 %v1878
      %v2663 = vpack.c.b16 %v2632, %v2631
      %v2664 = vpack.c.b16 %v2634, %v2633
      %v2665 = vpack.c.b16 %v2636, %v2635
      %v2666 = vpack.c.b16 %v2638, %v2637
      %v2667 = vpack.c.b16 %v2640, %v2639
      %v2668 = vpack.c.b16 %v2642, %v2641
      %v2669 = vpack.c.b16 %v2644, %v2643
      %v2670 = vpack.c.b16 %v2646, %v2645
      %v2671 = vpack.c.b16 %v2648, %v2647
      %v2672 = vpack.c.b16 %v2650, %v2649
      %v2673 = vpack.c.b16 %v2652, %v2651
      %v2674 = vpack.c.b16 %v2654, %v2653
      %v2675 = vpack.c.b16 %v2656, %v2655
      %v2676 = vpack.c.b16 %v2658, %v2657
      %v2677 = vpack.c.b16 %v2660, %v2659
      %v2678 = vpack.c.b16 %v2662, %v2661
      %2679 = vrot.lane.b32.xlu0 %v2663, 56
      %v2680 = vpop.permute.xlu0 %2679
      %2681 = vrot.lane.b32.xlu0 %v2664, 56
      %v2682 = vpop.permute.xlu0 %2681
      %2683 = vrot.lane.b32.xlu0 %v2665, 56
      %v2684 = vpop.permute.xlu0 %2683
      %2685 = vrot.lane.b32.xlu0 %v2666, 56
      %v2686 = vpop.permute.xlu0 %2685
      %2687 = vrot.lane.b32.xlu0 %v2667, 56
      %v2688 = vpop.permute.xlu0 %2687
      %2689 = vrot.lane.b32.xlu0 %v2668, 56
      %v2690 = vpop.permute.xlu0 %2689
      %2691 = vrot.lane.b32.xlu0 %v2669, 56
      %v2692 = vpop.permute.xlu0 %2691
      %2693 = vrot.lane.b32.xlu0 %v2670, 56
      %v2694 = vpop.permute.xlu0 %2693
      %2695 = vrot.lane.b32.xlu0 %v2671, 56
      %v2696 = vpop.permute.xlu0 %2695
      %2697 = vrot.lane.b32.xlu0 %v2672, 56
      %v2698 = vpop.permute.xlu0 %2697
      %2699 = vrot.lane.b32.xlu0 %v2673, 56
      %v2700 = vpop.permute.xlu0 %2699
      %2701 = vrot.lane.b32.xlu0 %v2674, 56
      %v2702 = vpop.permute.xlu0 %2701
      %2703 = vrot.lane.b32.xlu0 %v2675, 56
      %v2704 = vpop.permute.xlu0 %2703
      %2705 = vrot.lane.b32.xlu0 %v2676, 56
      %v2706 = vpop.permute.xlu0 %2705
      %2707 = vrot.lane.b32.xlu0 %v2677, 56
      %v2708 = vpop.permute.xlu0 %2707
      %2709 = vrot.lane.b32.xlu0 %v2678, 56
      %v2710 = vpop.permute.xlu0 %2709
      %v2711 = vunpack.c.l.b16 %v1946
      %v2712 = vunpack.c.l.b16 %v1949
      %v2713 = vunpack.c.l.b16 %v1953
      %v2714 = vunpack.c.l.b16 %v1956
      %v2715 = vunpack.c.l.b16 %v1960
      %v2716 = vunpack.c.l.b16 %v1963
      %v2717 = vunpack.c.l.b16 %v1967
      %v2718 = vunpack.c.l.b16 %v1970
      %v2719 = vunpack.c.l.b16 %v1974
      %v2720 = vunpack.c.l.b16 %v1977
      %v2721 = vunpack.c.l.b16 %v1981
      %v2722 = vunpack.c.l.b16 %v1984
      %v2723 = vunpack.c.l.b16 %v1988
      %v2724 = vunpack.c.l.b16 %v1991
      %v2725 = vunpack.c.l.b16 %v1995
      %v2726 = vunpack.c.l.b16 %v1998
      %v2727 = vunpack.c.l.b16 %v2002
      %v2728 = vunpack.c.l.b16 %v2005
      %v2729 = vunpack.c.l.b16 %v2009
      %v2730 = vunpack.c.l.b16 %v2012
      %v2731 = vunpack.c.l.b16 %v2016
      %v2732 = vunpack.c.l.b16 %v2019
      %v2733 = vunpack.c.l.b16 %v2023
      %v2734 = vunpack.c.l.b16 %v2026
      %v2735 = vunpack.c.l.b16 %v2030
      %v2736 = vunpack.c.l.b16 %v2033
      %v2737 = vunpack.c.l.b16 %v2037
      %v2738 = vunpack.c.l.b16 %v2040
      %v2739 = vunpack.c.l.b16 %v2044
      %v2740 = vunpack.c.l.b16 %v2047
      %v2741 = vunpack.c.l.b16 %v2051
      %v2742 = vunpack.c.l.b16 %v2054
      %v2743 = vpack.c.b16 %v2712, %v2711
      %v2744 = vpack.c.b16 %v2714, %v2713
      %v2745 = vpack.c.b16 %v2716, %v2715
      %v2746 = vpack.c.b16 %v2718, %v2717
      %v2747 = vpack.c.b16 %v2720, %v2719
      %v2748 = vpack.c.b16 %v2722, %v2721
      %v2749 = vpack.c.b16 %v2724, %v2723
      %v2750 = vpack.c.b16 %v2726, %v2725
      %v2751 = vpack.c.b16 %v2728, %v2727
      %v2752 = vpack.c.b16 %v2730, %v2729
      %v2753 = vpack.c.b16 %v2732, %v2731
      %v2754 = vpack.c.b16 %v2734, %v2733
      %v2755 = vpack.c.b16 %v2736, %v2735
      %v2756 = vpack.c.b16 %v2738, %v2737
      %v2757 = vpack.c.b16 %v2740, %v2739
      %v2758 = vpack.c.b16 %v2742, %v2741
      %2759 = vrot.lane.b32.xlu0 %v2743, 64
      %v2760 = vpop.permute.xlu0 %2759
      %2761 = vrot.lane.b32.xlu0 %v2744, 64
      %v2762 = vpop.permute.xlu0 %2761
      %2763 = vrot.lane.b32.xlu0 %v2745, 64
      %v2764 = vpop.permute.xlu0 %2763
      %2765 = vrot.lane.b32.xlu0 %v2746, 64
      %v2766 = vpop.permute.xlu0 %2765
      %2767 = vrot.lane.b32.xlu0 %v2747, 64
      %v2768 = vpop.permute.xlu0 %2767
      %2769 = vrot.lane.b32.xlu0 %v2748, 64
      %v2770 = vpop.permute.xlu0 %2769
      %2771 = vrot.lane.b32.xlu0 %v2749, 64
      %v2772 = vpop.permute.xlu0 %2771
      %2773 = vrot.lane.b32.xlu0 %v2750, 64
      %v2774 = vpop.permute.xlu0 %2773
      %2775 = vrot.lane.b32.xlu0 %v2751, 64
      %v2776 = vpop.permute.xlu0 %2775
      %2777 = vrot.lane.b32.xlu0 %v2752, 64
      %v2778 = vpop.permute.xlu0 %2777
      %2779 = vrot.lane.b32.xlu0 %v2753, 64
      %v2780 = vpop.permute.xlu0 %2779
      %2781 = vrot.lane.b32.xlu0 %v2754, 64
      %v2782 = vpop.permute.xlu0 %2781
      %2783 = vrot.lane.b32.xlu0 %v2755, 64
      %v2784 = vpop.permute.xlu0 %2783
      %2785 = vrot.lane.b32.xlu0 %v2756, 64
      %v2786 = vpop.permute.xlu0 %2785
      %2787 = vrot.lane.b32.xlu0 %v2757, 64
      %v2788 = vpop.permute.xlu0 %2787
      %2789 = vrot.lane.b32.xlu0 %v2758, 64
      %v2790 = vpop.permute.xlu0 %2789
      %vm2791 = vcmask 64512
      %v2794 = vsel %vm2791, %v2103, %v2168
      %v2797 = vsel %vm2791, %v2104, %v2170
      %v2800 = vsel %vm2791, %v2105, %v2172
      %v2803 = vsel %vm2791, %v2106, %v2174
      %v2806 = vsel %vm2791, %v2107, %v2176
      %v2809 = vsel %vm2791, %v2108, %v2178
      %v2812 = vsel %vm2791, %v2109, %v2180
      %v2815 = vsel %vm2791, %v2110, %v2182
      %v2818 = vsel %vm2791, %v2111, %v2184
      %v2821 = vsel %vm2791, %v2112, %v2186
      %v2824 = vsel %vm2791, %v2113, %v2188
      %v2827 = vsel %vm2791, %v2114, %v2190
      %v2830 = vsel %vm2791, %v2115, %v2192
      %v2833 = vsel %vm2791, %v2116, %v2194
      %v2836 = vsel %vm2791, %v2117, %v2196
      %v2839 = vsel %vm2791, %v2118, %v2198
      %vm2840 = vcmask 130048
      %v2842 = vsel %vm2840, %v2794, %v2248
      %v2844 = vsel %vm2840, %v2797, %v2250
      %v2846 = vsel %vm2840, %v2800, %v2252
      %v2848 = vsel %vm2840, %v2803, %v2254
      %v2850 = vsel %vm2840, %v2806, %v2256
      %v2852 = vsel %vm2840, %v2809, %v2258
      %v2854 = vsel %vm2840, %v2812, %v2260
      %v2856 = vsel %vm2840, %v2815, %v2262
      %v2858 = vsel %vm2840, %v2818, %v2264
      %v2860 = vsel %vm2840, %v2821, %v2266
      %v2862 = vsel %vm2840, %v2824, %v2268
      %v2864 = vsel %vm2840, %v2827, %v2270
      %v2866 = vsel %vm2840, %v2830, %v2272
      %v2868 = vsel %vm2840, %v2833, %v2274
      %v2870 = vsel %vm2840, %v2836, %v2276
      %v2872 = vsel %vm2840, %v2839, %v2278
      %vm2873 = vcmask 195584
      %v2875 = vsel %vm2873, %v2842, %v2344
      %v2877 = vsel %vm2873, %v2844, %v2346
      %v2879 = vsel %vm2873, %v2846, %v2348
      %v2881 = vsel %vm2873, %v2848, %v2350
      %v2883 = vsel %vm2873, %v2850, %v2352
      %v2885 = vsel %vm2873, %v2852, %v2354
      %v2887 = vsel %vm2873, %v2854, %v2356
      %v2889 = vsel %vm2873, %v2856, %v2358
      %v2891 = vsel %vm2873, %v2858, %v2360
      %v2893 = vsel %vm2873, %v2860, %v2362
      %v2895 = vsel %vm2873, %v2862, %v2364
      %v2897 = vsel %vm2873, %v2864, %v2366
      %v2899 = vsel %vm2873, %v2866, %v2368
      %v2901 = vsel %vm2873, %v2868, %v2370
      %v2903 = vsel %vm2873, %v2870, %v2372
      %v2905 = vsel %vm2873, %v2872, %v2374
      %vm2906 = vcmask 261120
      %v2908 = vsel %vm2906, %v2875, %v2424
      %v2910 = vsel %vm2906, %v2877, %v2426
      %v2912 = vsel %vm2906, %v2879, %v2428
      %v2914 = vsel %vm2906, %v2881, %v2430
      %v2916 = vsel %vm2906, %v2883, %v2432
      %v2918 = vsel %vm2906, %v2885, %v2434
      %v2920 = vsel %vm2906, %v2887, %v2436
      %v2922 = vsel %vm2906, %v2889, %v2438
      %v2924 = vsel %vm2906, %v2891, %v2440
      %v2926 = vsel %vm2906, %v2893, %v2442
      %v2928 = vsel %vm2906, %v2895, %v2444
      %v2930 = vsel %vm2906, %v2897, %v2446
      %v2932 = vsel %vm2906, %v2899, %v2448
      %v2934 = vsel %vm2906, %v2901, %v2450
      %v2936 = vsel %vm2906, %v2903, %v2452
      %v2938 = vsel %vm2906, %v2905, %v2454
      %vm2939 = vcmask 326656
      %v2941 = vsel %vm2939, %v2908, %v2504
      %v2943 = vsel %vm2939, %v2910, %v2506
      %v2945 = vsel %vm2939, %v2912, %v2508
      %v2947 = vsel %vm2939, %v2914, %v2510
      %v2949 = vsel %vm2939, %v2916, %v2512
      %v2951 = vsel %vm2939, %v2918, %v2514
      %v2953 = vsel %vm2939, %v2920, %v2516
      %v2955 = vsel %vm2939, %v2922, %v2518
      %v2957 = vsel %vm2939, %v2924, %v2520
      %v2959 = vsel %vm2939, %v2926, %v2522
      %v2961 = vsel %vm2939, %v2928, %v2524
      %v2963 = vsel %vm2939, %v2930, %v2526
      %v2965 = vsel %vm2939, %v2932, %v2528
      %v2967 = vsel %vm2939, %v2934, %v2530
      %v2969 = vsel %vm2939, %v2936, %v2532
      %v2971 = vsel %vm2939, %v2938, %v2534
      %vm2972 = vcmask 392192
      %v2974 = vsel %vm2972, %v2941, %v2600
      %v2976 = vsel %vm2972, %v2943, %v2602
      %v2978 = vsel %vm2972, %v2945, %v2604
      %v2980 = vsel %vm2972, %v2947, %v2606
      %v2982 = vsel %vm2972, %v2949, %v2608
      %v2984 = vsel %vm2972, %v2951, %v2610
      %v2986 = vsel %vm2972, %v2953, %v2612
      %v2988 = vsel %vm2972, %v2955, %v2614
      %v2990 = vsel %vm2972, %v2957, %v2616
      %v2992 = vsel %vm2972, %v2959, %v2618
      %v2994 = vsel %vm2972, %v2961, %v2620
      %v2996 = vsel %vm2972, %v2963, %v2622
      %v2998 = vsel %vm2972, %v2965, %v2624
      %v3000 = vsel %vm2972, %v2967, %v2626
      %v3002 = vsel %vm2972, %v2969, %v2628
      %v3004 = vsel %vm2972, %v2971, %v2630
      %vm3005 = vcmask 457728
      %v3007 = vsel %vm3005, %v2974, %v2680
      %v3009 = vsel %vm3005, %v2976, %v2682
      %v3011 = vsel %vm3005, %v2978, %v2684
      %v3013 = vsel %vm3005, %v2980, %v2686
      %v3015 = vsel %vm3005, %v2982, %v2688
      %v3017 = vsel %vm3005, %v2984, %v2690
      %v3019 = vsel %vm3005, %v2986, %v2692
      %v3021 = vsel %vm3005, %v2988, %v2694
      %v3023 = vsel %vm3005, %v2990, %v2696
      %v3025 = vsel %vm3005, %v2992, %v2698
      %v3027 = vsel %vm3005, %v2994, %v2700
      %v3029 = vsel %vm3005, %v2996, %v2702
      %v3031 = vsel %vm3005, %v2998, %v2704
      %v3033 = vsel %vm3005, %v3000, %v2706
      %v3035 = vsel %vm3005, %v3002, %v2708
      %v3037 = vsel %vm3005, %v3004, %v2710
      %vm3038 = vcmask 523264
      %v3040 = vsel %vm3038, %v3007, %v2760
      %v3042 = vsel %vm3038, %v3009, %v2762
      %v3044 = vsel %vm3038, %v3011, %v2764
      %v3046 = vsel %vm3038, %v3013, %v2766
      %v3048 = vsel %vm3038, %v3015, %v2768
      %v3050 = vsel %vm3038, %v3017, %v2770
      %v3052 = vsel %vm3038, %v3019, %v2772
      %v3054 = vsel %vm3038, %v3021, %v2774
      %v3056 = vsel %vm3038, %v3023, %v2776
      %v3058 = vsel %vm3038, %v3025, %v2778
      %v3060 = vsel %vm3038, %v3027, %v2780
      %v3062 = vsel %vm3038, %v3029, %v2782
      %v3064 = vsel %vm3038, %v3031, %v2784
      %v3066 = vsel %vm3038, %v3033, %v2786
      %v3068 = vsel %vm3038, %v3035, %v2788
      %v3070 = vsel %vm3038, %v3037, %v2790
      %v3071 = vld [vmem:[%s1] sm:$0xf]
      %v3072 = vld [vmem:[%s1 + $0x4] sm:$0xf]
      %v3073 = vld [vmem:[%s1 + $0x8] sm:$0xf]
      %v3074 = vld [vmem:[%s1 + $0xc] sm:$0xf]
      %v3075 = vld [vmem:[%s1 + $0x10] sm:$0xf]
      %v3076 = vld [vmem:[%s1 + $0x14] sm:$0xf]
      %v3077 = vld [vmem:[%s1 + $0x18] sm:$0xf]
      %v3078 = vld [vmem:[%s1 + $0x1c] sm:$0xf]
      %v3079 = vld [vmem:[%s1 + $0x20] sm:$0xf]
      %v3089 = vunpack.c.l.b16 %v3071
      %v3090 = vunpack.c.l.b16 %v3072
      %v3091 = vunpack.c.l.b16 %v3073
      %v3092 = vunpack.c.l.b16 %v3074
      %v3093 = vunpack.c.l.b16 %v3075
      %v3094 = vunpack.c.l.b16 %v3076
      %v3095 = vunpack.c.l.b16 %v3077
      %v3096 = vunpack.c.l.b16 %v3078
      %v3097 = vunpack.c.l.b16 %v3079
      %v3098 = vpack.c.b16 %v3090, %v3089
      %v3099 = vpack.c.b16 %v3092, %v3091
      %v3100 = vpack.c.b16 %v3094, %v3093
      %v3101 = vpack.c.b16 %v3096, %v3095
      %v3102 = vpack.c.b16 %v3097, %v3097
      %vm3107 = vcmask 588800
      %v3108 = vsel %vm3107, %v3040, 0
      %v3110 = vsel %vm3107, %v3042, 0
      %v3112 = vsel %vm3107, %v3044, 0
      %v3114 = vsel %vm3107, %v3046, 0
      %v3116 = vsel %vm3107, %v3048, 0
      %v3118 = vsel %vm3107, %v3050, 0
      %v3120 = vsel %vm3107, %v3052, 0
      %v3122 = vsel %vm3107, %v3054, 0
      %v3124 = vsel %vm3107, %v3056, 0
      %v3126 = vsel %vm3107, %v3058, 0
      %v3128 = vsel %vm3107, %v3060, 0
      %v3130 = vsel %vm3107, %v3062, 0
      %v3132 = vsel %vm3107, %v3064, 0
      %v3134 = vsel %vm3107, %v3066, 0
      %v3136 = vsel %vm3107, %v3068, 0
      %v3138 = vsel %vm3107, %v3070, 0
      %vm3140 = vcmask 1043456
      %v3142 = vsel %vm3140, %v3102, 0
      %3144 = vmatpush.bf16.msra.mxu0 0
      %3145 = vmatpush.bf16.msra.mxu0 0
      %3146 = vmatpush.bf16.msra.mxu0 0
      %3147 = vmatpush.bf16.msra.mxu0 %v3142
      %3148 = vmatpush.bf16.msra.mxu0 %v3101
      %3149 = vmatpush.bf16.msra.mxu0 %v3100
      %3150 = vmatpush.bf16.msra.mxu0 %v3099
      %3151 = vmatpush.bf16.msra.mxu0 %v3098
      %3152 = vmatmul.bf16.gmra.mxu0 %v3108
      %v3153 = vpop.f32.mrf.mxu0
      %v3154 = vadd.f32 0.0, %v3153
      %v3155 = vpop.f32.mrf.mxu0
      %v3156 = vadd.f32 0.0, %v3155
      %3157 = vmatmul.bf16.gmra.mxu0 %v3110
      %v3158 = vpop.f32.mrf.mxu0
      %v3159 = vadd.f32 0.0, %v3158
      %v3160 = vpop.f32.mrf.mxu0
      %v3161 = vadd.f32 0.0, %v3160
      %3162 = vmatmul.bf16.gmra.mxu0 %v3112
      %v3163 = vpop.f32.mrf.mxu0
      %v3164 = vadd.f32 0.0, %v3163
      %v3165 = vpop.f32.mrf.mxu0
      %v3166 = vadd.f32 0.0, %v3165
      %3167 = vmatmul.bf16.gmra.mxu0 %v3114
      %v3168 = vpop.f32.mrf.mxu0
      %v3169 = vadd.f32 0.0, %v3168
      %v3170 = vpop.f32.mrf.mxu0
      %v3171 = vadd.f32 0.0, %v3170
      %3172 = vmatmul.bf16.gmra.mxu0 %v3116
      %v3173 = vpop.f32.mrf.mxu0
      %v3174 = vadd.f32 0.0, %v3173
      %v3175 = vpop.f32.mrf.mxu0
      %v3176 = vadd.f32 0.0, %v3175
      %3177 = vmatmul.bf16.gmra.mxu0 %v3118
      %v3178 = vpop.f32.mrf.mxu0
      %v3179 = vadd.f32 0.0, %v3178
      %v3180 = vpop.f32.mrf.mxu0
      %v3181 = vadd.f32 0.0, %v3180
      %3182 = vmatmul.bf16.gmra.mxu0 %v3120
      %v3183 = vpop.f32.mrf.mxu0
      %v3184 = vadd.f32 0.0, %v3183
      %v3185 = vpop.f32.mrf.mxu0
      %v3186 = vadd.f32 0.0, %v3185
      %3187 = vmatmul.bf16.gmra.mxu0 %v3122
      %v3188 = vpop.f32.mrf.mxu0
      %v3189 = vadd.f32 0.0, %v3188
      %v3190 = vpop.f32.mrf.mxu0
      %v3191 = vadd.f32 0.0, %v3190
      %3192 = vmatmul.bf16.gmra.mxu0 %v3124
      %v3193 = vpop.f32.mrf.mxu0
      %v3194 = vadd.f32 0.0, %v3193
      %v3195 = vpop.f32.mrf.mxu0
      %v3196 = vadd.f32 0.0, %v3195
      %3197 = vmatmul.bf16.gmra.mxu0 %v3126
      %v3198 = vpop.f32.mrf.mxu0
      %v3199 = vadd.f32 0.0, %v3198
      %v3200 = vpop.f32.mrf.mxu0
      %v3201 = vadd.f32 0.0, %v3200
      %3202 = vmatmul.bf16.gmra.mxu0 %v3128
      %v3203 = vpop.f32.mrf.mxu0
      %v3204 = vadd.f32 0.0, %v3203
      %v3205 = vpop.f32.mrf.mxu0
      %v3206 = vadd.f32 0.0, %v3205
      %3207 = vmatmul.bf16.gmra.mxu0 %v3130
      %v3208 = vpop.f32.mrf.mxu0
      %v3209 = vadd.f32 0.0, %v3208
      %v3210 = vpop.f32.mrf.mxu0
      %v3211 = vadd.f32 0.0, %v3210
      %3212 = vmatmul.bf16.gmra.mxu0 %v3132
      %v3213 = vpop.f32.mrf.mxu0
      %v3214 = vadd.f32 0.0, %v3213
      %v3215 = vpop.f32.mrf.mxu0
      %v3216 = vadd.f32 0.0, %v3215
      %3217 = vmatmul.bf16.gmra.mxu0 %v3134
      %v3218 = vpop.f32.mrf.mxu0
      %v3219 = vadd.f32 0.0, %v3218
      %v3220 = vpop.f32.mrf.mxu0
      %v3221 = vadd.f32 0.0, %v3220
      %3222 = vmatmul.bf16.gmra.mxu0 %v3136
      %v3223 = vpop.f32.mrf.mxu0
      %v3224 = vadd.f32 0.0, %v3223
      %v3225 = vpop.f32.mrf.mxu0
      %v3226 = vadd.f32 0.0, %v3225
      %3227 = vmatmul.bf16.gmra.mxu0 %v3138
      %v3228 = vpop.f32.mrf.mxu0
      %v3229 = vadd.f32 0.0, %v3228
      %v3230 = vpop.f32.mrf.mxu0
      %v3231 = vadd.f32 0.0, %v3230
      %3232 = vdwg.mxu0
      %v3233 = vpack.c.bf16 %v3154, %v3154
      %v3234 = vpack.c.bf16 %v3156, %v3156
      %v3235 = vpack.c.bf16 %v3159, %v3159
      %v3236 = vpack.c.bf16 %v3161, %v3161
      %v3237 = vpack.c.bf16 %v3164, %v3164
      %v3238 = vpack.c.bf16 %v3166, %v3166
      %v3239 = vpack.c.bf16 %v3169, %v3169
      %v3240 = vpack.c.bf16 %v3171, %v3171
      %v3241 = vpack.c.bf16 %v3174, %v3174
      %v3242 = vpack.c.bf16 %v3176, %v3176
      %v3243 = vpack.c.bf16 %v3179, %v3179
      %v3244 = vpack.c.bf16 %v3181, %v3181
      %v3245 = vpack.c.bf16 %v3184, %v3184
      %v3246 = vpack.c.bf16 %v3186, %v3186
      %v3247 = vpack.c.bf16 %v3189, %v3189
      %v3248 = vpack.c.bf16 %v3191, %v3191
      %v3249 = vpack.c.bf16 %v3194, %v3194
      %v3250 = vpack.c.bf16 %v3196, %v3196
      %v3251 = vpack.c.bf16 %v3199, %v3199
      %v3252 = vpack.c.bf16 %v3201, %v3201
      %v3253 = vpack.c.bf16 %v3204, %v3204
      %v3254 = vpack.c.bf16 %v3206, %v3206
      %v3255 = vpack.c.bf16 %v3209, %v3209
      %v3256 = vpack.c.bf16 %v3211, %v3211
      %v3257 = vpack.c.bf16 %v3214, %v3214
      %v3258 = vpack.c.bf16 %v3216, %v3216
      %v3259 = vpack.c.bf16 %v3219, %v3219
      %v3260 = vpack.c.bf16 %v3221, %v3221
      %v3261 = vpack.c.bf16 %v3224, %v3224
      %v3262 = vpack.c.bf16 %v3226, %v3226
      %v3263 = vpack.c.bf16 %v3229, %v3229
      %v3264 = vpack.c.bf16 %v3231, %v3231
      %3265 = vst [vmem:[%s204] sm:$0xf] %v3233
      %3266 = vst [vmem:[%s204 + $0x4] sm:$0xf] %v3234
      %3267 = vst [vmem:[%s204 + $0x8] sm:$0xf] %v3235
      %3268 = vst [vmem:[%s204 + $0xc] sm:$0xf] %v3236
      %3269 = vst [vmem:[%s204 + $0x10] sm:$0xf] %v3237
      %3270 = vst [vmem:[%s204 + $0x14] sm:$0xf] %v3238
      %3271 = vst [vmem:[%s204 + $0x18] sm:$0xf] %v3239
      %3272 = vst [vmem:[%s204 + $0x1c] sm:$0xf] %v3240
      %3273 = vst [vmem:[%s204 + $0x20] sm:$0xf] %v3241
      %3274 = vst [vmem:[%s204 + $0x24] sm:$0xf] %v3242
      %3275 = vst [vmem:[%s204 + $0x28] sm:$0xf] %v3243
      %3276 = vst [vmem:[%s204 + $0x2c] sm:$0xf] %v3244
      %3277 = vst [vmem:[%s204 + $0x30] sm:$0xf] %v3245
      %3278 = vst [vmem:[%s204 + $0x34] sm:$0xf] %v3246
      %3279 = vst [vmem:[%s204 + $0x38] sm:$0xf] %v3247
      %3280 = vst [vmem:[%s204 + $0x3c] sm:$0xf] %v3248
      %3281 = vst [vmem:[%s204 + $0x40] sm:$0xf] %v3249
      %3282 = vst [vmem:[%s204 + $0x44] sm:$0xf] %v3250
      %3283 = vst [vmem:[%s204 + $0x48] sm:$0xf] %v3251
      %3284 = vst [vmem:[%s204 + $0x4c] sm:$0xf] %v3252
      %3285 = vst [vmem:[%s204 + $0x50] sm:$0xf] %v3253
      %3286 = vst [vmem:[%s204 + $0x54] sm:$0xf] %v3254
      %3287 = vst [vmem:[%s204 + $0x58] sm:$0xf] %v3255
      %3288 = vst [vmem:[%s204 + $0x5c] sm:$0xf] %v3256
      %3289 = vst [vmem:[%s204 + $0x60] sm:$0xf] %v3257
      %3290 = vst [vmem:[%s204 + $0x64] sm:$0xf] %v3258
      %3291 = vst [vmem:[%s204 + $0x68] sm:$0xf] %v3259
      %3292 = vst [vmem:[%s204 + $0x6c] sm:$0xf] %v3260
      %3293 = vst [vmem:[%s204 + $0x70] sm:$0xf] %v3261
      %3294 = vst [vmem:[%s204 + $0x74] sm:$0xf] %v3262
      %3295 = vst [vmem:[%s204 + $0x78] sm:$0xf] %v3263
      %3296 = vst [vmem:[%s204 + $0x7c] sm:$0xf] %v3264
      %v3297 = vadd.f32 %v3154, %v3156
      %v3298 = vadd.f32 %v3297, %v3159
      %v3299 = vadd.f32 %v3298, %v3161
      %v3300 = vadd.f32 %v3299, %v3164
      %v3301 = vadd.f32 %v3300, %v3166
      %v3302 = vadd.f32 %v3301, %v3169
      %v3303 = vadd.f32 %v3302, %v3171
      %v3304 = vadd.f32 %v3303, %v3174
      %v3305 = vadd.f32 %v3304, %v3176
      %v3306 = vadd.f32 %v3305, %v3179
      %v3307 = vadd.f32 %v3306, %v3181
      %v3308 = vadd.f32 %v3307, %v3184
      %v3309 = vadd.f32 %v3308, %v3186
      %v3310 = vadd.f32 %v3309, %v3189
      %v3311 = vadd.f32 %v3310, %v3191
      %v3312 = vadd.f32 %v3311, %v3194
      %v3313 = vadd.f32 %v3312, %v3196
      %v3314 = vadd.f32 %v3313, %v3199
      %v3315 = vadd.f32 %v3314, %v3201
      %v3316 = vadd.f32 %v3315, %v3204
      %v3317 = vadd.f32 %v3316, %v3206
      %v3318 = vadd.f32 %v3317, %v3209
      %v3319 = vadd.f32 %v3318, %v3211
      %v3320 = vadd.f32 %v3319, %v3214
      %v3321 = vadd.f32 %v3320, %v3216
      %v3322 = vadd.f32 %v3321, %v3219
      %v3323 = vadd.f32 %v3322, %v3221
      %v3324 = vadd.f32 %v3323, %v3224
      %v3325 = vadd.f32 %v3324, %v3226
      %v3326 = vadd.f32 %v3325, %v3229
      %v3327 = vadd.f32 %v3326, %v3231
      %v3328 = vrot.slane %v3327, 4
      %v3329 = vadd.f32 %v3327, %v3328
      %v3330 = vrot.slane %v3329, 2
      %v3331 = vadd.f32 %v3329, %v3330
      %v3332 = vrot.slane %v3331, 1
      %v3333 = vadd.f32 %v3331, %v3332
      %3334 = vst [vmem:[%s211] sm:$0x1] %v3333
      %v3335 = vmul.f32 %v3154, %v3154
      %v3336 = vmul.f32 %v3156, %v3156
      %v3337 = vmul.f32 %v3159, %v3159
      %v3338 = vmul.f32 %v3161, %v3161
      %v3339 = vmul.f32 %v3164, %v3164
      %v3340 = vmul.f32 %v3166, %v3166
      %v3341 = vmul.f32 %v3169, %v3169
      %v3342 = vmul.f32 %v3171, %v3171
      %v3343 = vmul.f32 %v3174, %v3174
      %v3344 = vmul.f32 %v3176, %v3176
      %v3345 = vmul.f32 %v3179, %v3179
      %v3346 = vmul.f32 %v3181, %v3181
      %v3347 = vmul.f32 %v3184, %v3184
      %v3348 = vmul.f32 %v3186, %v3186
      %v3349 = vmul.f32 %v3189, %v3189
      %v3350 = vmul.f32 %v3191, %v3191
      %v3351 = vmul.f32 %v3194, %v3194
      %v3352 = vmul.f32 %v3196, %v3196
      %v3353 = vmul.f32 %v3199, %v3199
      %v3354 = vmul.f32 %v3201, %v3201
      %v3355 = vmul.f32 %v3204, %v3204
      %v3356 = vmul.f32 %v3206, %v3206
      %v3357 = vmul.f32 %v3209, %v3209
      %v3358 = vmul.f32 %v3211, %v3211
      %v3359 = vmul.f32 %v3214, %v3214
      %v3360 = vmul.f32 %v3216, %v3216
      %v3361 = vmul.f32 %v3219, %v3219
      %v3362 = vmul.f32 %v3221, %v3221
      %v3363 = vmul.f32 %v3224, %v3224
      %v3364 = vmul.f32 %v3226, %v3226
      %v3365 = vmul.f32 %v3229, %v3229
      %v3366 = vmul.f32 %v3231, %v3231
      %v3367 = vadd.f32 %v3335, %v3336
      %v3368 = vadd.f32 %v3367, %v3337
      %v3369 = vadd.f32 %v3368, %v3338
      %v3370 = vadd.f32 %v3369, %v3339
      %v3371 = vadd.f32 %v3370, %v3340
      %v3372 = vadd.f32 %v3371, %v3341
      %v3373 = vadd.f32 %v3372, %v3342
      %v3374 = vadd.f32 %v3373, %v3343
      %v3375 = vadd.f32 %v3374, %v3344
      %v3376 = vadd.f32 %v3375, %v3345
      %v3377 = vadd.f32 %v3376, %v3346
      %v3378 = vadd.f32 %v3377, %v3347
      %v3379 = vadd.f32 %v3378, %v3348
      %v3380 = vadd.f32 %v3379, %v3349
      %v3381 = vadd.f32 %v3380, %v3350
      %v3382 = vadd.f32 %v3381, %v3351
      %v3383 = vadd.f32 %v3382, %v3352
      %v3384 = vadd.f32 %v3383, %v3353
      %v3385 = vadd.f32 %v3384, %v3354
      %v3386 = vadd.f32 %v3385, %v3355
      %v3387 = vadd.f32 %v3386, %v3356
      %v3388 = vadd.f32 %v3387, %v3357
      %v3389 = vadd.f32 %v3388, %v3358
      %v3390 = vadd.f32 %v3389, %v3359
      %v3391 = vadd.f32 %v3390, %v3360
      %v3392 = vadd.f32 %v3391, %v3361
      %v3393 = vadd.f32 %v3392, %v3362
      %v3394 = vadd.f32 %v3393, %v3363
      %v3395 = vadd.f32 %v3394, %v3364
      %v3396 = vadd.f32 %v3395, %v3365
      %v3397 = vadd.f32 %v3396, %v3366
      %v3398 = vrot.slane %v3397, 4
      %v3399 = vadd.f32 %v3397, %v3398
      %v3400 = vrot.slane %v3399, 2
      %v3401 = vadd.f32 %v3399, %v3400
      %v3402 = vrot.slane %v3401, 1
      %v3403 = vadd.f32 %v3401, %v3402
      %3404 = vst [vmem:[%s211 + $0x1] sm:$0x1] %v3403
      %p3405 = scmp.lt.s32.totalorder %s19, 1
      %s3406 = scalar_select %p3405, %s19, 1
      %p3407 = scmp.lt.s32.totalorder %s20, 0
      %s3408 = scalar_select %p3407, %s20, 0
      %s3409 = smul.addr %s3408, 32
      %s3410 = smul.addr %s3406, 32
      %s3411 = sadd.s32 %s3409, %s3410
      %s3412 = smul.addr %s3411, 4
      %s3413 = scalar_lea.vmem %s2, %s3412
      %p3414 = scmp.lt.s32.totalorder %s19, 1
      %s3415 = scalar_select %p3414, %s19, 1
      %p3416 = scmp.lt.s32.totalorder %s20, 0
      %s3417 = scalar_select %p3416, %s20, 0
      %s3418 = sadd.s32 %s3417, %s3415
      %s3419 = smul.addr %s3418, 2
      %s3420 = scalar_lea.vmem %s3, %s3419
      // Predicated region
      $region29: #{residual_block.3} parent=27 // pred_check
        %p3421 = pneg %p94
      $region30: #{residual_block.3} parent=27 // pred_check_branch
        %3423 = sbr.rel (%p3421) target = $region32
      $region31: #{residual_block.3} parent=27 // pred_region
        _
      $region32: #{residual_block.3} parent=27 // pred_fallthru
        _
      // Predicated region
      $region33: #{residual_block.3} parent=27 // pred_check
        %p3424 = pneg %p122
      $region34: #{residual_block.3} parent=27 // pred_check_branch
        %3426 = sbr.rel (%p3424) target = $region36
      $region35: #{residual_block.3} parent=27 // pred_region
        _
      $region36: #{residual_block.3} parent=27 // pred_fallthru
        _
    $region28: #{residual_block.3} parent=5 // pred_fallthru
      _
    %p3427 = scmp.le.s32.totalorder 2, %s10
    // Predicated region
    $region37: #{residual_block.3} parent=5 // pred_check
      %p3428 = pneg %p3427
    $region38: #{residual_block.3} parent=5 // pred_check_branch
      %3430 = sbr.rel (%p3428) target = $region40
    $region39: #{residual_block.3} parent=5 // pred_region
      %s3431 = ssub.s32 %s10, 2
      // Predicated region
      $region41: #{residual_block.3} parent=39 // pred_check
        %p3432 = pneg %p100
      $region42: #{residual_block.3} parent=39 // pred_check_branch
        %3434 = sbr.rel (%p3432) target = $region44
      $region43: #{residual_block.3} parent=39 // pred_region
        %p3435 = scmp.lt.s32.totalorder %s21, 1
        %s3436 = scalar_select %p3435, %s21, 1
        %p3437 = scmp.lt.s32.totalorder %s22, 0
        %s3438 = scalar_select %p3437, %s22, 0
        %s3439 = smul.addr %s3438, 32
        %s3440 = smul.addr %s3436, 32
        %s3441 = sadd.s32 %s3439, %s3440
        %s3442 = smul.addr %s3441, 4
        %s3443 = scalar_lea.vmem %s2, %s3442
      $region44: #{residual_block.3} parent=39 // pred_fallthru
        _
      // Predicated region
      $region45: #{residual_block.3} parent=39 // pred_check
        %p3444 = pneg %p128
      $region46: #{residual_block.3} parent=39 // pred_check_branch
        %3446 = sbr.rel (%p3444) target = $region48
      $region47: #{residual_block.3} parent=39 // pred_region
        %p3447 = scmp.lt.s32.totalorder %s21, 1
        %s3448 = scalar_select %p3447, %s21, 1
        %p3449 = scmp.lt.s32.totalorder %s22, 0
        %s3450 = scalar_select %p3449, %s22, 0
        %s3451 = sadd.s32 %s3450, %s3448
        %s3452 = smul.addr %s3451, 2
        %s3453 = scalar_lea.vmem %s3, %s3452
      $region48: #{residual_block.3} parent=39 // pred_fallthru
        _
    $region40: #{residual_block.3} parent=5 // pred_fallthru
      _
  $region6: #{residual_block.3} parent=0 // loop_footer
    %s14 = sadd.s32 1, %s10
  $region7: #{residual_block.3} parent=0 // loop_footer_branch
    %9 = sbr.rel target = $region3
  $region8: #{residual_block.3} parent=0 // loop_exit
    _

// kernel: residual_block.4
$region0: #{residual_block.4}
  #allocation0 [shape = 'u32[]', space=smem, size = 0x4, offset = 0x4, fixed_abs, tag = 'smem constant byte address 0x4 - core index']
  #allocation1 [shape = 'u32[72,128]{1,0:T(1,128)}', space=vmem, size = 0x9000, scoped, tag = 'internal scratch']
  #allocation2 [shape = 'bf16[18,18,128]{2,1,0:T(8,128)(2,1)}', space=vmem, size = 0x1b000, scoped, tag = 'scratch operand']
  #allocation3 [shape = 'f32[256,128]{1,0:T(8,128)}', space=vmem, size = 0x20000, scoped, tag = 'scratch operand']
  %s0 = inlined_call_operand.vmem [shape: bf16[2,256,128], index: 0, kind: input, shape index: {}]
  %s1 = inlined_call_operand.vmem [shape: f32[1,128], index: 1, kind: input, shape index: {}]
  %s2 = inlined_call_operand.vmem [shape: f32[1,128], index: 2, kind: input, shape index: {}]
  %s3 = inlined_call_operand.vmem [shape: bf16[9,128,128], index: 3, kind: input, shape index: {}]
  %s4 = inlined_call_operand.vmem [shape: bf16[2,1,256,128], index: 4, kind: output, shape index: {0}]
  %s5 = inlined_call_operand.vmem [shape: f32[2,1,2,128], index: 5, kind: output, shape index: {1}]
  %6 = xla_tuple %s4, %s5
  %s7 = sld [smem:[#allocation0]]
  $region61: #{residual_block.4} parent=0
    _
  %s9 = ssub.s32 1, %s7
  %s10 = scalar_select 0, %s9, %s7
  loop: start=0, step=1, limit=4
  $region2: #{residual_block.4} parent=0 // loop_pre_header
    _
  $region3: #{residual_block.4} parent=0 // loop_header
    %s12 = sphi 0, %s16
    %p13 = scmp.ge.s32.totalorder %s12, 4
    %s19 = sphi 0, %s31
    %s20 = sphi 0, %s27
    %s21 = sphi 0, %s19
    %s22 = sphi 0, %s20
    %s23 = sphi 0, %s21
    %s24 = sphi 0, %s22
    %s34 = sphi 0, %s36
    %s37 = sphi 0, %s34
    %s38 = sphi 0, %s37
    %s54 = sphi 0, %s38
    %s58 = sphi 0, %s58
    %s60 = sphi 0, %s58
    %s61 = sphi 0, %s60
    %s75 = sphi 0, %s61
    %s79 = sphi 0, %s79
    %s81 = sphi 0, %s79
    %s82 = sphi 0, %s81
    %s96 = sphi 0, %s82
    %s100 = sphi 0, %s100
    %s102 = sphi 0, %s100
    %s103 = sphi 0, %s102
    %s117 = sphi 0, %s103
    %s125 = sphi 0, %s127
    %s128 = sphi 0, %s125
    %s129 = sphi 0, %s128
    %s145 = sphi 0, %s129
    %s153 = sphi 0, %s155
    %s156 = sphi 0, %s153
    %s157 = sphi 0, %s156
    %s173 = sphi 0, %s157
  $region4: #{residual_block.4} parent=0 // loop_header_branch
    %15 = sbr.rel (%p13) target = $region8
  $region5: #{residual_block.4} parent=0 // loop_body
    %s17 = ssub.s32 %s12, 1
    %s18 = ssub.s32 %s12, 2
    %s25 = sadd.s32 1, %s20
    %p26 = scmp.ge.s32.totalorder %s25, 1
    %s27 = scalar_select %p26, 0, %s25
    %s28 = sadd.s32 1, %s19
    %s29 = scalar_select %p26, %s28, %s19
    %p30 = scmp.ge.s32.totalorder %s29, 2
    %s31 = scalar_select %p30, 0, %s29
    %s32 = ssub.s32 %s19, %s31
    %p33 = scmp.eq.s32.totalorder %s32, 0
    %s35 = sadd.s32 %s34, 1
    %s36 = scalar_select %p33, %s34, %s35
    %p39 = pneg %p33
    %p40 = scmp.eq.s32.totalorder %s12, 1
    %p41 = por %p39, %p40
    %p42 = scmp.ne.s32.totalorder %s34, %s37
    %p43 = scmp.eq.s32.totalorder %s12, 0
    %p44 = por %p42, %p43
    %p45 = scmp.ne.s32.totalorder %s34, %s37
    %p46 = scmp.eq.s32.totalorder %s17, 1
    %p47 = por %p45, %p46
    %p48 = scmp.ne.s32.totalorder %s37, %s38
    %p49 = scmp.eq.s32.totalorder %s17, 0
    %p50 = por %p48, %p49
    %p51 = scmp.ne.s32.totalorder %s37, %s38
    %p52 = scmp.eq.s32.totalorder %s18, 1
    %p53 = por %p51, %p52
    %p55 = scmp.ne.s32.totalorder %s38, %s54
    %p56 = scmp.eq.s32.totalorder %s18, 0
    %p57 = por %p55, %p56
    %s59 = sadd.s32 %s58, 1
    %p62 = scmp.eq.s32.totalorder %s12, 1
    %p63 = scmp.ne.s32.totalorder %s58, %s60
    %p64 = scmp.eq.s32.totalorder %s12, 0
    %p65 = por %p63, %p64
    %p66 = scmp.ne.s32.totalorder %s58, %s60
    %p67 = scmp.eq.s32.totalorder %s17, 1
    %p68 = por %p66, %p67
    %p69 = scmp.ne.s32.totalorder %s60, %s61
    %p70 = scmp.eq.s32.totalorder %s17, 0
    %p71 = por %p69, %p70
    %p72 = scmp.ne.s32.totalorder %s60, %s61
    %p73 = scmp.eq.s32.totalorder %s18, 1
    %p74 = por %p72, %p73
    %p76 = scmp.ne.s32.totalorder %s61, %s75
    %p77 = scmp.eq.s32.totalorder %s18, 0
    %p78 = por %p76, %p77
    %s80 = sadd.s32 %s79, 1
    %p83 = scmp.eq.s32.totalorder %s12, 1
    %p84 = scmp.ne.s32.totalorder %s79, %s81
    %p85 = scmp.eq.s32.totalorder %s12, 0
    %p86 = por %p84, %p85
    %p87 = scmp.ne.s32.totalorder %s79, %s81
    %p88 = scmp.eq.s32.totalorder %s17, 1
    %p89 = por %p87, %p88
    %p90 = scmp.ne.s32.totalorder %s81, %s82
    %p91 = scmp.eq.s32.totalorder %s17, 0
    %p92 = por %p90, %p91
    %p93 = scmp.ne.s32.totalorder %s81, %s82
    %p94 = scmp.eq.s32.totalorder %s18, 1
    %p95 = por %p93, %p94
    %p97 = scmp.ne.s32.totalorder %s82, %s96
    %p98 = scmp.eq.s32.totalorder %s18, 0
    %p99 = por %p97, %p98
    %s101 = sadd.s32 %s100, 1
    %p104 = scmp.eq.s32.totalorder %s12, 1
    %p105 = scmp.ne.s32.totalorder %s100, %s102
    %p106 = scmp.eq.s32.totalorder %s12, 0
    %p107 = por %p105, %p106
    %p108 = scmp.ne.s32.totalorder %s100, %s102
    %p109 = scmp.eq.s32.totalorder %s17, 1
    %p110 = por %p108, %p109
    %p111 = scmp.ne.s32.totalorder %s102, %s103
    %p112 = scmp.eq.s32.totalorder %s17, 0
    %p113 = por %p111, %p112
    %p114 = scmp.ne.s32.totalorder %s102, %s103
    %p115 = scmp.eq.s32.totalorder %s18, 1
    %p116 = por %p114, %p115
    %p118 = scmp.ne.s32.totalorder %s103, %s117
    %p119 = scmp.eq.s32.totalorder %s18, 0
    %p120 = por %p118, %p119
    %s121 = ssub.s32 %s19, %s31
    %s122 = ssub.s32 %s20, %s27
    %s123 = sor.u32 %s121, %s122
    %p124 = scmp.eq.s32.totalorder %s123, 0
    %s126 = sadd.s32 %s125, 1
    %s127 = scalar_select %p124, %s125, %s126
    %p130 = pneg %p124
    %p131 = scmp.eq.s32.totalorder %s12, 1
    %p132 = por %p130, %p131
    %p133 = scmp.ne.s32.totalorder %s125, %s128
    %p134 = scmp.eq.s32.totalorder %s12, 0
    %p135 = por %p133, %p134
    %p136 = scmp.ne.s32.totalorder %s125, %s128
    %p137 = scmp.eq.s32.totalorder %s17, 1
    %p138 = por %p136, %p137
    %p139 = scmp.ne.s32.totalorder %s128, %s129
    %p140 = scmp.eq.s32.totalorder %s17, 0
    %p141 = por %p139, %p140
    %p142 = scmp.ne.s32.totalorder %s128, %s129
    %p143 = scmp.eq.s32.totalorder %s18, 1
    %p144 = por %p142, %p143
    %p146 = scmp.ne.s32.totalorder %s129, %s145
    %p147 = scmp.eq.s32.totalorder %s18, 0
    %p148 = por %p146, %p147
    %s149 = ssub.s32 %s19, %s31
    %s150 = ssub.s32 %s20, %s27
    %s151 = sor.u32 %s149, %s150
    %p152 = scmp.eq.s32.totalorder %s151, 0
    %s154 = sadd.s32 %s153, 1
    %s155 = scalar_select %p152, %s153, %s154
    %p158 = pneg %p152
    %p159 = scmp.eq.s32.totalorder %s12, 1
    %p160 = por %p158, %p159
    %p161 = scmp.ne.s32.totalorder %s153, %s156
    %p162 = scmp.eq.s32.totalorder %s12, 0
    %p163 = por %p161, %p162
    %p164 = scmp.ne.s32.totalorder %s153, %s156
    %p165 = scmp.eq.s32.totalorder %s17, 1
    %p166 = por %p164, %p165
    %p167 = scmp.ne.s32.totalorder %s156, %s157
    %p168 = scmp.eq.s32.totalorder %s17, 0
    %p169 = por %p167, %p168
    %p170 = scmp.ne.s32.totalorder %s156, %s157
    %p171 = scmp.eq.s32.totalorder %s18, 1
    %p172 = por %p170, %p171
    %p174 = scmp.ne.s32.totalorder %s157, %s173
    %p175 = scmp.eq.s32.totalorder %s18, 0
    %p176 = por %p174, %p175
    %p177 = scmp.le.s32.totalorder 1, %s12
    %p178 = scmp.lt.s32.totalorder %s12, 3
    %p179 = pnand %p177, %p178
    %p180 = pneg %p179
    // Predicated region
    $region9: #{residual_block.4} parent=5 // pred_check
      _
    $region10: #{residual_block.4} parent=5 // pred_check_branch
      %182 = sbr.rel (%p179) target = $region12
    $region11: #{residual_block.4} parent=5 // pred_region
      %s183 = ssub.s32 %s12, 1
      // Predicated region
      $region13: #{residual_block.4} parent=11 // pred_check
        %p184 = pneg %p71
      $region14: #{residual_block.4} parent=11 // pred_check_branch
        %186 = sbr.rel (%p184) target = $region16
      $region15: #{residual_block.4} parent=11 // pred_region
        _
      $region16: #{residual_block.4} parent=11 // pred_fallthru
        _
      // Predicated region
      $region17: #{residual_block.4} parent=11 // pred_check
        %p187 = pneg %p92
      $region18: #{residual_block.4} parent=11 // pred_check_branch
        %189 = sbr.rel (%p187) target = $region20
      $region19: #{residual_block.4} parent=11 // pred_region
        _
      $region20: #{residual_block.4} parent=11 // pred_fallthru
        _
      // Predicated region
      $region21: #{residual_block.4} parent=11 // pred_check
        %p190 = pneg %p113
      $region22: #{residual_block.4} parent=11 // pred_check_branch
        %192 = sbr.rel (%p190) target = $region24
      $region23: #{residual_block.4} parent=11 // pred_region
        _
      $region24: #{residual_block.4} parent=11 // pred_fallthru
        _
    $region12: #{residual_block.4} parent=5 // pred_fallthru
      _
    %p193 = scmp.lt.s32.totalorder %s12, 2
    // Predicated region
    $region25: #{residual_block.4} parent=5 // pred_check
      %p194 = pneg %p193
    $region26: #{residual_block.4} parent=5 // pred_check_branch
      %196 = sbr.rel (%p194) target = $region28
    $region27: #{residual_block.4} parent=5 // pred_region
      // Predicated region
      $region29: #{residual_block.4} parent=27 // pred_check
        %p197 = pneg %p44
      $region30: #{residual_block.4} parent=27 // pred_check_branch
        %199 = sbr.rel (%p197) target = $region32
      $region31: #{residual_block.4} parent=27 // pred_region
        %p200 = scmp.lt.s32.totalorder %s19, 1
        %s201 = scalar_select %p200, %s19, 1
        %s202 = smul.addr %s201, 32
        %s203 = smul.addr %s202, 4
        %s204 = scalar_lea.vmem %s0, %s203
      $region32: #{residual_block.4} parent=27 // pred_fallthru
        _
    $region28: #{residual_block.4} parent=5 // pred_fallthru
      _
    %p205 = scmp.le.s32.totalorder 1, %s12
    %p206 = scmp.lt.s32.totalorder %s12, 3
    %p207 = pnand %p205, %p206
    %p208 = pneg %p207
    // Predicated region
    $region33: #{residual_block.4} parent=5 // pred_check
      _
    $region34: #{residual_block.4} parent=5 // pred_check_branch
      %210 = sbr.rel (%p207) target = $region36
    $region35: #{residual_block.4} parent=5 // pred_region
      %s211 = ssub.s32 %s12, 1
      %p212 = scmp.lt.s32.totalorder %s21, 1
      %s213 = scalar_select %p212, %s21, 1
      %s214 = smul.addr %s213, 32
      %s215 = smul.addr %s214, 4
      %s216 = scalar_lea.vmem %s0, %s215
      %p217 = pneg %p50
      %p218 = pneg %p47
      %p219 = pneg %p71
      %p220 = pneg %p68
      %p221 = pneg %p92
      %p222 = pneg %p89
      %p223 = pneg %p113
      %p224 = pneg %p110
      %p225 = pneg %p141
      %p226 = pneg %p138
      %p227 = scmp.lt.s32.totalorder %s21, 1
      %s228 = scalar_select %p227, %s21, 1
      %p229 = scmp.lt.s32.totalorder %s22, 0
      %s230 = scalar_select %p229, %s22, 0
      %s231 = smul.addr %s230, 32
      %s232 = smul.addr %s228, 32
      %s233 = sadd.s32 %s231, %s232
      %s234 = smul.addr %s233, 4
      %s235 = scalar_lea.vmem %s4, %s234
      %p236 = pneg %p169
      %p237 = pneg %p166
      %p238 = scmp.lt.s32.totalorder %s21, 1
      %s239 = scalar_select %p238, %s21, 1
      %p240 = scmp.lt.s32.totalorder %s22, 0
      %s241 = scalar_select %p240, %s22, 0
      %s242 = sadd.s32 %s241, %s239
      %s243 = smul.addr %s242, 2
      %s244 = scalar_lea.vmem %s5, %s243
      %p245 = scmp.lt.s32.totalorder %s21, 1
      %s246 = scalar_select %p245, %s21, 1
      %s247 = smul.addr %s246, 32
      %s248 = smul.addr %s247, 4
      %s249 = scalar_lea.vmem %s0, %s248
      %p250 = scmp.lt.s32.totalorder %s21, 1
      %s251 = scalar_select %p250, %s21, 1
      %p252 = scmp.lt.s32.totalorder %s22, 0
      %s253 = scalar_select %p252, %s22, 0
      %s254 = smul.addr %s253, 32
      %s255 = smul.addr %s251, 32
      %s256 = sadd.s32 %s254, %s255
      %s257 = smul.addr %s256, 4
      %s258 = scalar_lea.vmem %s4, %s257
      %p259 = scmp.lt.s32.totalorder %s21, 1
      %s260 = scalar_select %p259, %s21, 1
      %p261 = scmp.lt.s32.totalorder %s22, 0
      %s262 = scalar_select %p261, %s22, 0
      %s263 = sadd.s32 %s262, %s260
      %s264 = smul.addr %s263, 2
      %s265 = scalar_lea.vmem %s5, %s264
      %p267 = scmp.eq.s32.totalorder %s22, 0
      // Predicated region
      $region37: #{residual_block.4} parent=35 // pred_check
        %p268 = pneg %p267
      $region38: #{residual_block.4} parent=35 // pred_check_branch
        %270 = sbr.rel (%p268) target = $region40
      $region39: #{residual_block.4} parent=35 // pred_region
        %271 = vst [vmem:[#allocation2] sm:$0xf] 0
        %272 = vst [vmem:[#allocation2 + $0x4] sm:$0xf] 0
        %273 = vst [vmem:[#allocation2 + $0x8] sm:$0x1] 0
        %274 = vst [vmem:[#allocation2 + $0xc] sm:$0xf] 0
        %275 = vst [vmem:[#allocation2 + $0x10] sm:$0xf] 0
        %276 = vst [vmem:[#allocation2 + $0x14] sm:$0x1] 0
        %277 = vst [vmem:[#allocation2 + $0x18] sm:$0xf] 0
        %278 = vst [vmem:[#allocation2 + $0x1c] sm:$0xf] 0
        %279 = vst [vmem:[#allocation2 + $0x20] sm:$0x1] 0
        %280 = vst [vmem:[#allocation2 + $0x24] sm:$0xf] 0
        %281 = vst [vmem:[#allocation2 + $0x28] sm:$0xf] 0
        %282 = vst [vmem:[#allocation2 + $0x2c] sm:$0x1] 0
        %283 = vst [vmem:[#allocation2 + $0x30] sm:$0xf] 0
        %284 = vst [vmem:[#allocation2 + $0x34] sm:$0xf] 0
        %285 = vst [vmem:[#allocation2 + $0x38] sm:$0x1] 0
        %286 = vst [vmem:[#allocation2 + $0x3c] sm:$0xf] 0
        %287 = vst [vmem:[#allocation2 + $0x40] sm:$0xf] 0
        %288 = vst [vmem:[#allocation2 + $0x44] sm:$0x1] 0
        %289 = vst [vmem:[#allocation2 + $0x48] sm:$0xf] 0
        %290 = vst [vmem:[#allocation2 + $0x4c] sm:$0xf] 0
        %291 = vst [vmem:[#allocation2 + $0x50] sm:$0x1] 0
        %292 = vst [vmem:[#allocation2 + $0x54] sm:$0xf] 0
        %293 = vst [vmem:[#allocation2 + $0x58] sm:$0xf] 0
        %294 = vst [vmem:[#allocation2 + $0x5c] sm:$0x1] 0
        %295 = vst [vmem:[#allocation2 + $0x60] sm:$0xf] 0
        %296 = vst [vmem:[#allocation2 + $0x64] sm:$0xf] 0
        %297 = vst [vmem:[#allocation2 + $0x68] sm:$0x1] 0
        %298 = vst [vmem:[#allocation2 + $0x6c] sm:$0xf] 0
        %299 = vst [vmem:[#allocation2 + $0x70] sm:$0xf] 0
        %300 = vst [vmem:[#allocation2 + $0x74] sm:$0x1] 0
        %301 = vst [vmem:[#allocation2 + $0x78] sm:$0xf] 0
        %302 = vst [vmem:[#allocation2 + $0x7c] sm:$0xf] 0
        %303 = vst [vmem:[#allocation2 + $0x80] sm:$0x1] 0
        %304 = vst [vmem:[#allocation2 + $0x84] sm:$0xf] 0
        %305 = vst [vmem:[#allocation2 + $0x88] sm:$0xf] 0
        %306 = vst [vmem:[#allocation2 + $0x8c] sm:$0x1] 0
        %307 = vst [vmem:[#allocation2 + $0x90] sm:$0xf] 0
        %308 = vst [vmem:[#allocation2 + $0x94] sm:$0xf] 0
        %309 = vst [vmem:[#allocation2 + $0x98] sm:$0x1] 0
        %310 = vst [vmem:[#allocation2 + $0x9c] sm:$0xf] 0
        %311 = vst [vmem:[#allocation2 + $0xa0] sm:$0xf] 0
        %312 = vst [vmem:[#allocation2 + $0xa4] sm:$0x1] 0
        %313 = vst [vmem:[#allocation2 + $0xa8] sm:$0xf] 0
        %314 = vst [vmem:[#allocation2 + $0xac] sm:$0xf] 0
        %315 = vst [vmem:[#allocation2 + $0xb0] sm:$0x1] 0
        %316 = vst [vmem:[#allocation2 + $0xb4] sm:$0xf] 0
        %317 = vst [vmem:[#allocation2 + $0xb8] sm:$0xf] 0
        %318 = vst [vmem:[#allocation2 + $0xbc] sm:$0x1] 0
        %319 = vst [vmem:[#allocation2 + $0xc0] sm:$0xf] 0
        %320 = vst [vmem:[#allocation2 + $0xc4] sm:$0xf] 0
        %321 = vst [vmem:[#allocation2 + $0xc8] sm:$0x1] 0
        %322 = vst [vmem:[#allocation2 + $0xcc] sm:$0xf] 0
        %323 = vst [vmem:[#allocation2 + $0xd0] sm:$0xf] 0
        %324 = vst [vmem:[#allocation2 + $0xd4] sm:$0x1] 0
        %v325 = vld [vmem:[%s249] sm:$0xf]
        %v326 = vld [vmem:[%s249 + $0x4] sm:$0xf]
        %v327 = vld [vmem:[%s249 + $0x8] sm:$0xf]
        %v328 = vld [vmem:[%s249 + $0xc] sm:$0xf]
        %v329 = vld [vmem:[%s249 + $0x10] sm:$0xf]
        %v330 = vld [vmem:[%s249 + $0x14] sm:$0xf]
        %v331 = vld [vmem:[%s249 + $0x18] sm:$0xf]
        %v332 = vld [vmem:[%s249 + $0x1c] sm:$0xf]
        %v333 = vld [vmem:[%s249 + $0x20] sm:$0xf]
        %v334 = vld [vmem:[%s249 + $0x24] sm:$0xf]
        %v335 = vld [vmem:[%s249 + $0x28] sm:$0xf]
        %v336 = vld [vmem:[%s249 + $0x2c] sm:$0xf]
        %v337 = vld [vmem:[%s249 + $0x30] sm:$0xf]
        %v338 = vld [vmem:[%s249 + $0x34] sm:$0xf]
        %v339 = vld [vmem:[%s249 + $0x38] sm:$0xf]
        %v340 = vld [vmem:[%s249 + $0x3c] sm:$0xf]
        %v341 = vld [vmem:[%s249 + $0x40] sm:$0xf]
        %v342 = vld [vmem:[%s249 + $0x44] sm:$0xf]
        %v343 = vld [vmem:[%s249 + $0x48] sm:$0xf]
        %v344 = vld [vmem:[%s249 + $0x4c] sm:$0xf]
        %v345 = vld [vmem:[%s249 + $0x50] sm:$0xf]
        %v346 = vld [vmem:[%s249 + $0x54] sm:$0xf]
        %v347 = vld [vmem:[%s249 + $0x58] sm:$0xf]
        %v348 = vld [vmem:[%s249 + $0x5c] sm:$0xf]
        %v349 = vld [vmem:[%s249 + $0x60] sm:$0xf]
        %v350 = vld [vmem:[%s249 + $0x64] sm:$0xf]
        %v351 = vld [vmem:[%s249 + $0x68] sm:$0xf]
        %v352 = vld [vmem:[%s249 + $0x6c] sm:$0xf]
        %v353 = vld [vmem:[%s249 + $0x70] sm:$0xf]
        %v354 = vld [vmem:[%s249 + $0x74] sm:$0xf]
        %v355 = vld [vmem:[%s249 + $0x78] sm:$0xf]
        %v356 = vld [vmem:[%s249 + $0x7c] sm:$0xf]
        %v357 = vunpack.c.l.bf16 %v325
        %v358 = vunpack.c.l.bf16 %v326
        %v359 = vunpack.c.l.bf16 %v327
        %v360 = vunpack.c.l.bf16 %v328
        %v361 = vunpack.c.l.bf16 %v329
        %v362 = vunpack.c.l.bf16 %v330
        %v363 = vunpack.c.l.bf16 %v331
        %v364 = vunpack.c.l.bf16 %v332
        %v365 = vunpack.c.l.bf16 %v333
        %v366 = vunpack.c.l.bf16 %v334
        %v367 = vunpack.c.l.bf16 %v335
        %v368 = vunpack.c.l.bf16 %v336
        %v369 = vunpack.c.l.bf16 %v337
        %v370 = vunpack.c.l.bf16 %v338
        %v371 = vunpack.c.l.bf16 %v339
        %v372 = vunpack.c.l.bf16 %v340
        %v373 = vunpack.c.l.bf16 %v341
        %v374 = vunpack.c.l.bf16 %v342
        %v375 = vunpack.c.l.bf16 %v343
        %v376 = vunpack.c.l.bf16 %v344
        %v377 = vunpack.c.l.bf16 %v345
        %v378 = vunpack.c.l.bf16 %v346
        %v379 = vunpack.c.l.bf16 %v347
        %v380 = vunpack.c.l.bf16 %v348
        %v381 = vunpack.c.l.bf16 %v349
        %v382 = vunpack.c.l.bf16 %v350
        %v383 = vunpack.c.l.bf16 %v351
        %v384 = vunpack.c.l.bf16 %v352
        %v385 = vunpack.c.l.bf16 %v353
        %v386 = vunpack.c.l.bf16 %v354
        %v387 = vunpack.c.l.bf16 %v355
        %v388 = vunpack.c.l.bf16 %v356
        %v389 = vld [vmem:[%s1] sm:$0x1]
        %v391 = vperm.slane %v389, 0
        %v393 = vmul.f32 %v357, %v391
        %v394 = vmul.f32 %v358, %v391
        %v395 = vmul.f32 %v359, %v391
        %v396 = vmul.f32 %v360, %v391
        %v397 = vmul.f32 %v361, %v391
        %v398 = vmul.f32 %v362, %v391
        %v399 = vmul.f32 %v363, %v391
        %v400 = vmul.f32 %v364, %v391
        %v401 = vmul.f32 %v365, %v391
        %v402 = vmul.f32 %v366, %v391
        %v403 = vmul.f32 %v367, %v391
        %v404 = vmul.f32 %v368, %v391
        %v405 = vmul.f32 %v369, %v391
        %v406 = vmul.f32 %v370, %v391
        %v407 = vmul.f32 %v371, %v391
        %v408 = vmul.f32 %v372, %v391
        %v409 = vmul.f32 %v373, %v391
        %v410 = vmul.f32 %v374, %v391
        %v411 = vmul.f32 %v375, %v391
        %v412 = vmul.f32 %v376, %v391
        %v413 = vmul.f32 %v377, %v391
        %v414 = vmul.f32 %v378, %v391
        %v415 = vmul.f32 %v379, %v391
        %v416 = vmul.f32 %v380, %v391
        %v417 = vmul.f32 %v381, %v391
        %v418 = vmul.f32 %v382, %v391
        %v419 = vmul.f32 %v383, %v391
        %v420 = vmul.f32 %v384, %v391
        %v421 = vmul.f32 %v385, %v391
        %v422 = vmul.f32 %v386, %v391
        %v423 = vmul.f32 %v387, %v391
        %v424 = vmul.f32 %v388, %v391
        %v425 = vld [vmem:[%s2] sm:$0x1]
        %v427 = vperm.slane %v425, 0
        %v429 = vadd.f32 %v393, %v427
        %v430 = vadd.f32 %v394, %v427
        %v431 = vadd.f32 %v395, %v427
        %v432 = vadd.f32 %v396, %v427
        %v433 = vadd.f32 %v397, %v427
        %v434 = vadd.f32 %v398, %v427
        %v435 = vadd.f32 %v399, %v427
        %v436 = vadd.f32 %v400, %v427
        %v437 = vadd.f32 %v401, %v427
        %v438 = vadd.f32 %v402, %v427
        %v439 = vadd.f32 %v403, %v427
        %v440 = vadd.f32 %v404, %v427
        %v441 = vadd.f32 %v405, %v427
        %v442 = vadd.f32 %v406, %v427
        %v443 = vadd.f32 %v407, %v427
        %v444 = vadd.f32 %v408, %v427
        %v445 = vadd.f32 %v409, %v427
        %v446 = vadd.f32 %v410, %v427
        %v447 = vadd.f32 %v411, %v427
        %v448 = vadd.f32 %v412, %v427
        %v449 = vadd.f32 %v413, %v427
        %v450 = vadd.f32 %v414, %v427
        %v451 = vadd.f32 %v415, %v427
        %v452 = vadd.f32 %v416, %v427
        %v453 = vadd.f32 %v417, %v427
        %v454 = vadd.f32 %v418, %v427
        %v455 = vadd.f32 %v419, %v427
        %v456 = vadd.f32 %v420, %v427
        %v457 = vadd.f32 %v421, %v427
        %v458 = vadd.f32 %v422, %v427
        %v459 = vadd.f32 %v423, %v427
        %v460 = vadd.f32 %v424, %v427
        %v461 = vmax.f32 %v429, 0.0
        %v462 = vmax.f32 %v430, 0.0
        %v463 = vmax.f32 %v431, 0.0
        %v464 = vmax.f32 %v432, 0.0
        %v465 = vmax.f32 %v433, 0.0
        %v466 = vmax.f32 %v434, 0.0
        %v467 = vmax.f32 %v435, 0.0
        %v468 = vmax.f32 %v436, 0.0
        %v469 = vmax.f32 %v437, 0.0
        %v470 = vmax.f32 %v438, 0.0
        %v471 = vmax.f32 %v439, 0.0
        %v472 = vmax.f32 %v440, 0.0
        %v473 = vmax.f32 %v441, 0.0
        %v474 = vmax.f32 %v442, 0.0
        %v475 = vmax.f32 %v443, 0.0
        %v476 = vmax.f32 %v444, 0.0
        %v477 = vmax.f32 %v445, 0.0
        %v478 = vmax.f32 %v446, 0.0
        %v479 = vmax.f32 %v447, 0.0
        %v480 = vmax.f32 %v448, 0.0
        %v481 = vmax.f32 %v449, 0.0
        %v482 = vmax.f32 %v450, 0.0
        %v483 = vmax.f32 %v451, 0.0
        %v484 = vmax.f32 %v452, 0.0
        %v485 = vmax.f32 %v453, 0.0
        %v486 = vmax.f32 %v454, 0.0
        %v487 = vmax.f32 %v455, 0.0
        %v488 = vmax.f32 %v456, 0.0
        %v489 = vmax.f32 %v457, 0.0
        %v490 = vmax.f32 %v458, 0.0
        %v491 = vmax.f32 %v459, 0.0
        %v492 = vmax.f32 %v460, 0.0
        %v493 = vpack.c.bf16 %v461, %v461
        %v494 = vpack.c.bf16 %v462, %v462
        %v495 = vpack.c.bf16 %v463, %v463
        %v496 = vpack.c.bf16 %v464, %v464
        %v497 = vpack.c.bf16 %v465, %v465
        %v498 = vpack.c.bf16 %v466, %v466
        %v499 = vpack.c.bf16 %v467, %v467
        %v500 = vpack.c.bf16 %v468, %v468
        %v501 = vpack.c.bf16 %v469, %v469
        %v502 = vpack.c.bf16 %v470, %v470
        %v503 = vpack.c.bf16 %v471, %v471
        %v504 = vpack.c.bf16 %v472, %v472
        %v505 = vpack.c.bf16 %v473, %v473
        %v506 = vpack.c.bf16 %v474, %v474
        %v507 = vpack.c.bf16 %v475, %v475
        %v508 = vpack.c.bf16 %v476, %v476
        %v509 = vpack.c.bf16 %v477, %v477
        %v510 = vpack.c.bf16 %v478, %v478
        %v511 = vpack.c.bf16 %v479, %v479
        %v512 = vpack.c.bf16 %v480, %v480
        %v513 = vpack.c.bf16 %v481, %v481
        %v514 = vpack.c.bf16 %v482, %v482
        %v515 = vpack.c.bf16 %v483, %v483
        %v516 = vpack.c.bf16 %v484, %v484
        %v517 = vpack.c.bf16 %v485, %v485
        %v518 = vpack.c.bf16 %v486, %v486
        %v519 = vpack.c.bf16 %v487, %v487
        %v520 = vpack.c.bf16 %v488, %v488
        %v521 = vpack.c.bf16 %v489, %v489
        %v522 = vpack.c.bf16 %v490, %v490
        %v523 = vpack.c.bf16 %v491, %v491
        %v524 = vpack.c.bf16 %v492, %v492
        %vm525 = vsmask.f32 256
        %vm526 = vsmask.f32 4368
        %vm527 = vmor %vm525, %vm526
        %v529 = vshrl.u32 %v493, 16
        %v531 = vrot.slane %v529, 7
        %v532 = vshll.u32 %v493, 16
        %v534 = vor.u32 %v531, %v532
        %v535 = vrot.slane %v531, 4
        %v537 = vshrl.u32 %v494, 16
        %v539 = vrot.slane %v537, 7
        %v540 = vshll.u32 %v494, 16
        %v542 = vor.u32 %v539, %v540
        %v543 = vsel %vm527, %v535, %v542
        %v544 = vrot.slane %v539, 4
        %v546 = vshrl.u32 %v495, 16
        %v548 = vrot.slane %v546, 7
        %v549 = vshll.u32 %v495, 16
        %v551 = vor.u32 %v548, %v549
        %v552 = vrot.slane %v548, 4
        %v554 = vshrl.u32 %v496, 16
        %v556 = vrot.slane %v554, 7
        %v557 = vshll.u32 %v496, 16
        %v559 = vor.u32 %v556, %v557
        %v560 = vsel %vm527, %v552, %v559
        %v561 = vrot.slane %v556, 4
        %v563 = vshrl.u32 %v497, 16
        %v565 = vrot.slane %v563, 7
        %v566 = vshll.u32 %v497, 16
        %v568 = vor.u32 %v565, %v566
        %v569 = vrot.slane %v565, 4
        %v571 = vshrl.u32 %v498, 16
        %v573 = vrot.slane %v571, 7
        %v574 = vshll.u32 %v498, 16
        %v576 = vor.u32 %v573, %v574
        %v577 = vsel %vm527, %v569, %v576
        %v578 = vrot.slane %v573, 4
        %v580 = vshrl.u32 %v499, 16
        %v582 = vrot.slane %v580, 7
        %v583 = vshll.u32 %v499, 16
        %v585 = vor.u32 %v582, %v583
        %v586 = vrot.slane %v582, 4
        %v588 = vshrl.u32 %v500, 16
        %v590 = vrot.slane %v588, 7
        %v591 = vshll.u32 %v500, 16
        %v593 = vor.u32 %v590, %v591
        %v594 = vsel %vm527, %v586, %v593
        %v595 = vrot.slane %v590, 4
        %v597 = vshrl.u32 %v501, 16
        %v599 = vrot.slane %v597, 7
        %v600 = vshll.u32 %v501, 16
        %v602 = vor.u32 %v599, %v600
        %v603 = vrot.slane %v599, 4
        %v605 = vshrl.u32 %v502, 16
        %v607 = vrot.slane %v605, 7
        %v608 = vshll.u32 %v502, 16
        %v610 = vor.u32 %v607, %v608
        %v611 = vsel %vm527, %v603, %v610
        %v612 = vrot.slane %v607, 4
        %v614 = vshrl.u32 %v503, 16
        %v616 = vrot.slane %v614, 7
        %v617 = vshll.u32 %v503, 16
        %v619 = vor.u32 %v616, %v617
        %v620 = vrot.slane %v616, 4
        %v622 = vshrl.u32 %v504, 16
        %v624 = vrot.slane %v622, 7
        %v625 = vshll.u32 %v504, 16
        %v627 = vor.u32 %v624, %v625
        %v628 = vsel %vm527, %v620, %v627
        %v629 = vrot.slane %v624, 4
        %v631 = vshrl.u32 %v505, 16
        %v633 = vrot.slane %v631, 7
        %v634 = vshll.u32 %v505, 16
        %v636 = vor.u32 %v633, %v634
        %v637 = vrot.slane %v633, 4
        %v639 = vshrl.u32 %v506, 16
        %v641 = vrot.slane %v639, 7
        %v642 = vshll.u32 %v506, 16
        %v644 = vor.u32 %v641, %v642
        %v645 = vsel %vm527, %v637, %v644
        %v646 = vrot.slane %v641, 4
        %v648 = vshrl.u32 %v507, 16
        %v650 = vrot.slane %v648, 7
        %v651 = vshll.u32 %v507, 16
        %v653 = vor.u32 %v650, %v651
        %v654 = vrot.slane %v650, 4
        %v656 = vshrl.u32 %v508, 16
        %v658 = vrot.slane %v656, 7
        %v659 = vshll.u32 %v508, 16
        %v661 = vor.u32 %v658, %v659
        %v662 = vsel %vm527, %v654, %v661
        %v663 = vrot.slane %v658, 4
        %v665 = vshrl.u32 %v509, 16
        %v667 = vrot.slane %v665, 7
        %v668 = vshll.u32 %v509, 16
        %v670 = vor.u32 %v667, %v668
        %v671 = vrot.slane %v667, 4
        %v673 = vshrl.u32 %v510, 16
        %v675 = vrot.slane %v673, 7
        %v676 = vshll.u32 %v510, 16
        %v678 = vor.u32 %v675, %v676
        %v679 = vsel %vm527, %v671, %v678
        %v680 = vrot.slane %v675, 4
        %v682 = vshrl.u32 %v511, 16
        %v684 = vrot.slane %v682, 7
        %v685 = vshll.u32 %v511, 16
        %v687 = vor.u32 %v684, %v685
        %v688 = vrot.slane %v684, 4
        %v690 = vshrl.u32 %v512, 16
        %v692 = vrot.slane %v690, 7
        %v693 = vshll.u32 %v512, 16
        %v695 = vor.u32 %v692, %v693
        %v696 = vsel %vm527, %v688, %v695
        %v697 = vrot.slane %v692, 4
        %v699 = vshrl.u32 %v513, 16
        %v701 = vrot.slane %v699, 7
        %v702 = vshll.u32 %v513, 16
        %v704 = vor.u32 %v701, %v702
        %v705 = vrot.slane %v701, 4
        %v707 = vshrl.u32 %v514, 16
        %v709 = vrot.slane %v707, 7
        %v710 = vshll.u32 %v514, 16
        %v712 = vor.u32 %v709, %v710
        %v713 = vsel %vm527, %v705, %v712
        %v714 = vrot.slane %v709, 4
        %v716 = vshrl.u32 %v515, 16
        %v718 = vrot.slane %v716, 7
        %v719 = vshll.u32 %v515, 16
        %v721 = vor.u32 %v718, %v719
        %v722 = vrot.slane %v718, 4
        %v724 = vshrl.u32 %v516, 16
        %v726 = vrot.slane %v724, 7
        %v727 = vshll.u32 %v516, 16
        %v729 = vor.u32 %v726, %v727
        %v730 = vsel %vm527, %v722, %v729
        %v731 = vrot.slane %v726, 4
        %v733 = vshrl.u32 %v517, 16
        %v735 = vrot.slane %v733, 7
        %v736 = vshll.u32 %v517, 16
        %v738 = vor.u32 %v735, %v736
        %v739 = vrot.slane %v735, 4
        %v741 = vshrl.u32 %v518, 16
        %v743 = vrot.slane %v741, 7
        %v744 = vshll.u32 %v518, 16
        %v746 = vor.u32 %v743, %v744
        %v747 = vsel %vm527, %v739, %v746
        %v748 = vrot.slane %v743, 4
        %v750 = vshrl.u32 %v519, 16
        %v752 = vrot.slane %v750, 7
        %v753 = vshll.u32 %v519, 16
        %v755 = vor.u32 %v752, %v753
        %v756 = vrot.slane %v752, 4
        %v758 = vshrl.u32 %v520, 16
        %v760 = vrot.slane %v758, 7
        %v761 = vshll.u32 %v520, 16
        %v763 = vor.u32 %v760, %v761
        %v764 = vsel %vm527, %v756, %v763
        %v765 = vrot.slane %v760, 4
        %v767 = vshrl.u32 %v521, 16
        %v769 = vrot.slane %v767, 7
        %v770 = vshll.u32 %v521, 16
        %v772 = vor.u32 %v769, %v770
        %v773 = vrot.slane %v769, 4
        %v775 = vshrl.u32 %v522, 16
        %v777 = vrot.slane %v775, 7
        %v778 = vshll.u32 %v522, 16
        %v780 = vor.u32 %v777, %v778
        %v781 = vsel %vm527, %v773, %v780
        %v782 = vrot.slane %v777, 4
        %v784 = vshrl.u32 %v523, 16
        %v786 = vrot.slane %v784, 7
        %v787 = vshll.u32 %v523, 16
        %v789 = vor.u32 %v786, %v787
        %v790 = vrot.slane %v786, 4
        %v792 = vshrl.u32 %v524, 16
        %v794 = vrot.slane %v792, 7
        %v795 = vshll.u32 %v524, 16
        %v797 = vor.u32 %v794, %v795
        %v798 = vsel %vm527, %v790, %v797
        %v799 = vrot.slane %v794, 4
        %s848 = scalar_lea.vmem [#allocation2], 12
        %vm849 = vcmask 1043456
        %vm850 = vsmask.f32 7938
        %vm851 = vmand %vm849, %vm850
        %v852 = vld [vmem:[%s848] sm:$0xf]
        %v853 = vsel %vm851, %v534, %v852
        %854 = vst [vmem:[%s848] sm:$0xf] %v853
        %855 = vst [vmem:[%s848 + $0x4] sm:$0xf] %v543
        %vm856 = vcmask 1040384
        %vm857 = vmand %vm856, %vm525
        %v858 = vld [vmem:[%s848 + $0x8] sm:$0x1]
        %v859 = vsel %vm857, %v544, %v858
        %860 = vst [vmem:[%s848 + $0x8] sm:$0x1] %v859
        %v861 = vld [vmem:[%s848 + $0xc] sm:$0xf]
        %v862 = vsel %vm851, %v551, %v861
        %863 = vst [vmem:[%s848 + $0xc] sm:$0xf] %v862
        %864 = vst [vmem:[%s848 + $0x10] sm:$0xf] %v560
        %v865 = vld [vmem:[%s848 + $0x14] sm:$0x1]
        %v866 = vsel %vm857, %v561, %v865
        %867 = vst [vmem:[%s848 + $0x14] sm:$0x1] %v866
        %v868 = vld [vmem:[%s848 + $0x18] sm:$0xf]
        %v869 = vsel %vm851, %v568, %v868
        %870 = vst [vmem:[%s848 + $0x18] sm:$0xf] %v869
        %871 = vst [vmem:[%s848 + $0x1c] sm:$0xf] %v577
        %v872 = vld [vmem:[%s848 + $0x20] sm:$0x1]
        %v873 = vsel %vm857, %v578, %v872
        %874 = vst [vmem:[%s848 + $0x20] sm:$0x1] %v873
        %v875 = vld [vmem:[%s848 + $0x24] sm:$0xf]
        %v876 = vsel %vm851, %v585, %v875
        %877 = vst [vmem:[%s848 + $0x24] sm:$0xf] %v876
        %878 = vst [vmem:[%s848 + $0x28] sm:$0xf] %v594
        %v879 = vld [vmem:[%s848 + $0x2c] sm:$0x1]
        %v880 = vsel %vm857, %v595, %v879
        %881 = vst [vmem:[%s848 + $0x2c] sm:$0x1] %v880
        %v882 = vld [vmem:[%s848 + $0x30] sm:$0xf]
        %v883 = vsel %vm851, %v602, %v882
        %884 = vst [vmem:[%s848 + $0x30] sm:$0xf] %v883
        %885 = vst [vmem:[%s848 + $0x34] sm:$0xf] %v611
        %v886 = vld [vmem:[%s848 + $0x38] sm:$0x1]
        %v887 = vsel %vm857, %v612, %v886
        %888 = vst [vmem:[%s848 + $0x38] sm:$0x1] %v887
        %v889 = vld [vmem:[%s848 + $0x3c] sm:$0xf]
        %v890 = vsel %vm851, %v619, %v889
        %891 = vst [vmem:[%s848 + $0x3c] sm:$0xf] %v890
        %892 = vst [vmem:[%s848 + $0x40] sm:$0xf] %v628
        %v893 = vld [vmem:[%s848 + $0x44] sm:$0x1]
        %v894 = vsel %vm857, %v629, %v893
        %895 = vst [vmem:[%s848 + $0x44] sm:$0x1] %v894
        %v896 = vld [vmem:[%s848 + $0x48] sm:$0xf]
        %v897 = vsel %vm851, %v636, %v896
        %898 = vst [vmem:[%s848 + $0x48] sm:$0xf] %v897
        %899 = vst [vmem:[%s848 + $0x4c] sm:$0xf] %v645
        %v900 = vld [vmem:[%s848 + $0x50] sm:$0x1]
        %v901 = vsel %vm857, %v646, %v900
        %902 = vst [vmem:[%s848 + $0x50] sm:$0x1] %v901
        %v903 = vld [vmem:[%s848 + $0x54] sm:$0xf]
        %v904 = vsel %vm851, %v653, %v903
        %905 = vst [vmem:[%s848 + $0x54] sm:$0xf] %v904
        %906 = vst [vmem:[%s848 + $0x58] sm:$0xf] %v662
        %v907 = vld [vmem:[%s848 + $0x5c] sm:$0x1]
        %v908 = vsel %vm857, %v663, %v907
        %909 = vst [vmem:[%s848 + $0x5c] sm:$0x1] %v908
        %v910 = vld [vmem:[%s848 + $0x60] sm:$0xf]
        %v911 = vsel %vm851, %v670, %v910
        %912 = vst [vmem:[%s848 + $0x60] sm:$0xf] %v911
        %913 = vst [vmem:[%s848 + $0x64] sm:$0xf] %v679
        %v914 = vld [vmem:[%s848 + $0x68] sm:$0x1]
        %v915 = vsel %vm857, %v680, %v914
        %916 = vst [vmem:[%s848 + $0x68] sm:$0x1] %v915
        %v917 = vld [vmem:[%s848 + $0x6c] sm:$0xf]
        %v918 = vsel %vm851, %v687, %v917
        %919 = vst [vmem:[%s848 + $0x6c] sm:$0xf] %v918
        %920 = vst [vmem:[%s848 + $0x70] sm:$0xf] %v696
        %v921 = vld [vmem:[%s848 + $0x74] sm:$0x1]
        %v922 = vsel %vm857, %v697, %v921
        %923 = vst [vmem:[%s848 + $0x74] sm:$0x1] %v922
        %v924 = vld [vmem:[%s848 + $0x78] sm:$0xf]
        %v925 = vsel %vm851, %v704, %v924
        %926 = vst [vmem:[%s848 + $0x78] sm:$0xf] %v925
        %927 = vst [vmem:[%s848 + $0x7c] sm:$0xf] %v713
        %v928 = vld [vmem:[%s848 + $0x80] sm:$0x1]
        %v929 = vsel %vm857, %v714, %v928
        %930 = vst [vmem:[%s848 + $0x80] sm:$0x1] %v929
        %v931 = vld [vmem:[%s848 + $0x84] sm:$0xf]
        %v932 = vsel %vm851, %v721, %v931
        %933 = vst [vmem:[%s848 + $0x84] sm:$0xf] %v932
        %934 = vst [vmem:[%s848 + $0x88] sm:$0xf] %v730
        %v935 = vld [vmem:[%s848 + $0x8c] sm:$0x1]
        %v936 = vsel %vm857, %v731, %v935
        %937 = vst [vmem:[%s848 + $0x8c] sm:$0x1] %v936
        %v938 = vld [vmem:[%s848 + $0x90] sm:$0xf]
        %v939 = vsel %vm851, %v738, %v938
        %940 = vst [vmem:[%s848 + $0x90] sm:$0xf] %v939
        %941 = vst [vmem:[%s848 + $0x94] sm:$0xf] %v747
        %v942 = vld [vmem:[%s848 + $0x98] sm:$0x1]
        %v943 = vsel %vm857, %v748, %v942
        %944 = vst [vmem:[%s848 + $0x98] sm:$0x1] %v943
        %v945 = vld [vmem:[%s848 + $0x9c] sm:$0xf]
        %v946 = vsel %vm851, %v755, %v945
        %947 = vst [vmem:[%s848 + $0x9c] sm:$0xf] %v946
        %948 = vst [vmem:[%s848 + $0xa0] sm:$0xf] %v764
        %v949 = vld [vmem:[%s848 + $0xa4] sm:$0x1]
        %v950 = vsel %vm857, %v765, %v949
        %951 = vst [vmem:[%s848 + $0xa4] sm:$0x1] %v950
        %v952 = vld [vmem:[%s848 + $0xa8] sm:$0xf]
        %v953 = vsel %vm851, %v772, %v952
        %954 = vst [vmem:[%s848 + $0xa8] sm:$0xf] %v953
        %955 = vst [vmem:[%s848 + $0xac] sm:$0xf] %v781
        %v956 = vld [vmem:[%s848 + $0xb0] sm:$0x1]
        %v957 = vsel %vm857, %v782, %v956
        %958 = vst [vmem:[%s848 + $0xb0] sm:$0x1] %v957
        %v959 = vld [vmem:[%s848 + $0xb4] sm:$0xf]
        %v960 = vsel %vm851, %v789, %v959
        %961 = vst [vmem:[%s848 + $0xb4] sm:$0xf] %v960
        %962 = vst [vmem:[%s848 + $0xb8] sm:$0xf] %v798
        %v963 = vld [vmem:[%s848 + $0xbc] sm:$0x1]
        %v964 = vsel %vm857, %v799, %v963
        %965 = vst [vmem:[%s848 + $0xbc] sm:$0x1] %v964
      $region40: #{residual_block.4} parent=35 // pred_fallthru
        _
      %s966 = smul.u32 %s22, 16
      %967 = vst [vmem:[#allocation3] sm:$0xff] 0.0
      %968 = vst [vmem:[#allocation3 + $0x8] sm:$0xff] 0.0
      %969 = vst [vmem:[#allocation3 + $0x10] sm:$0xff] 0.0
      %970 = vst [vmem:[#allocation3 + $0x18] sm:$0xff] 0.0
      %971 = vst [vmem:[#allocation3 + $0x20] sm:$0xff] 0.0
      %972 = vst [vmem:[#allocation3 + $0x28] sm:$0xff] 0.0
      %973 = vst [vmem:[#allocation3 + $0x30] sm:$0xff] 0.0
      %974 = vst [vmem:[#allocation3 + $0x38] sm:$0xff] 0.0
      %975 = vst [vmem:[#allocation3 + $0x40] sm:$0xff] 0.0
      %976 = vst [vmem:[#allocation3 + $0x48] sm:$0xff] 0.0
      %977 = vst [vmem:[#allocation3 + $0x50] sm:$0xff] 0.0
      %978 = vst [vmem:[#allocation3 + $0x58] sm:$0xff] 0.0
      %979 = vst [vmem:[#allocation3 + $0x60] sm:$0xff] 0.0
      %980 = vst [vmem:[#allocation3 + $0x68] sm:$0xff] 0.0
      %981 = vst [vmem:[#allocation3 + $0x70] sm:$0xff] 0.0
      %982 = vst [vmem:[#allocation3 + $0x78] sm:$0xff] 0.0
      %983 = vst [vmem:[#allocation3 + $0x80] sm:$0xff] 0.0
      %984 = vst [vmem:[#allocation3 + $0x88] sm:$0xff] 0.0
      %985 = vst [vmem:[#allocation3 + $0x90] sm:$0xff] 0.0
      %986 = vst [vmem:[#allocation3 + $0x98] sm:$0xff] 0.0
      %987 = vst [vmem:[#allocation3 + $0xa0] sm:$0xff] 0.0
      %988 = vst [vmem:[#allocation3 + $0xa8] sm:$0xff] 0.0
      %989 = vst [vmem:[#allocation3 + $0xb0] sm:$0xff] 0.0
      %990 = vst [vmem:[#allocation3 + $0xb8] sm:$0xff] 0.0
      %991 = vst [vmem:[#allocation3 + $0xc0] sm:$0xff] 0.0
      %992 = vst [vmem:[#allocation3 + $0xc8] sm:$0xff] 0.0
      %993 = vst [vmem:[#allocation3 + $0xd0] sm:$0xff] 0.0
      %994 = vst [vmem:[#allocation3 + $0xd8] sm:$0xff] 0.0
      %995 = vst [vmem:[#allocation3 + $0xe0] sm:$0xff] 0.0
      %996 = vst [vmem:[#allocation3 + $0xe8] sm:$0xff] 0.0
      %997 = vst [vmem:[#allocation3 + $0xf0] sm:$0xff] 0.0
      %998 = vst [vmem:[#allocation3 + $0xf8] sm:$0xff] 0.0
      %s999 = smul.u32 %s966, 3
      %s1000 = smul.addr %s999, 4
      %s1001 = scalar_lea.vmem [#allocation2], %s1000
      %v1002 = vld [vmem:[%s1001] sm:$0xf]
      %v1003 = vld [vmem:[%s1001 + $0x4] sm:$0xf]
      %v1004 = vld [vmem:[%s1001 + $0xc] sm:$0xf]
      %v1005 = vld [vmem:[%s1001 + $0x10] sm:$0xf]
      %v1006 = vld [vmem:[%s1001 + $0x18] sm:$0xf]
      %v1007 = vld [vmem:[%s1001 + $0x1c] sm:$0xf]
      %v1008 = vld [vmem:[%s1001 + $0x24] sm:$0xf]
      %v1009 = vld [vmem:[%s1001 + $0x28] sm:$0xf]
      %v1010 = vld [vmem:[%s1001 + $0x30] sm:$0xf]
      %v1011 = vld [vmem:[%s1001 + $0x34] sm:$0xf]
      %v1012 = vld [vmem:[%s1001 + $0x3c] sm:$0xf]
      %v1013 = vld [vmem:[%s1001 + $0x40] sm:$0xf]
      %v1014 = vld [vmem:[%s1001 + $0x48] sm:$0xf]
      %v1015 = vld [vmem:[%s1001 + $0x4c] sm:$0xf]
      %v1016 = vld [vmem:[%s1001 + $0x54] sm:$0xf]
      %v1017 = vld [vmem:[%s1001 + $0x58] sm:$0xf]
      %v1018 = vld [vmem:[%s1001 + $0x60] sm:$0xf]
      %v1019 = vld [vmem:[%s1001 + $0x64] sm:$0xf]
      %v1020 = vld [vmem:[%s1001 + $0x6c] sm:$0xf]
      %v1021 = vld [vmem:[%s1001 + $0x70] sm:$0xf]
      %v1022 = vld [vmem:[%s1001 + $0x78] sm:$0xf]
      %v1023 = vld [vmem:[%s1001 + $0x7c] sm:$0xf]
      %v1024 = vld [vmem:[%s1001 + $0x84] sm:$0xf]
      %v1025 = vld [vmem:[%s1001 + $0x88] sm:$0xf]
      %v1026 = vld [vmem:[%s1001 + $0x90] sm:$0xf]
      %v1027 = vld [vmem:[%s1001 + $0x94] sm:$0xf]
      %v1028 = vld [vmem:[%s1001 + $0x9c] sm:$0xf]
      %v1029 = vld [vmem:[%s1001 + $0xa0] sm:$0xf]
      %v1030 = vld [vmem:[%s1001 + $0xa8] sm:$0xf]
      %v1031 = vld [vmem:[%s1001 + $0xac] sm:$0xf]
      %v1032 = vld [vmem:[%s1001 + $0xb4] sm:$0xf]
      %v1033 = vld [vmem:[%s1001 + $0xb8] sm:$0xf]
      %v1034 = vld [vmem:[#allocation3] sm:$0xff]
      %v1035 = vld [vmem:[#allocation3 + $0x8] sm:$0xff]
      %v1036 = vld [vmem:[#allocation3 + $0x10] sm:$0xff]
      %v1037 = vld [vmem:[#allocation3 + $0x18] sm:$0xff]
      %v1038 = vld [vmem:[#allocation3 + $0x20] sm:$0xff]
      %v1039 = vld [vmem:[#allocation3 + $0x28] sm:$0xff]
      %v1040 = vld [vmem:[#allocation3 + $0x30] sm:$0xff]
      %v1041 = vld [vmem:[#allocation3 + $0x38] sm:$0xff]
      %v1042 = vld [vmem:[#allocation3 + $0x40] sm:$0xff]
      %v1043 = vld [vmem:[#allocation3 + $0x48] sm:$0xff]
      %v1044 = vld [vmem:[#allocation3 + $0x50] sm:$0xff]
      %v1045 = vld [vmem:[#allocation3 + $0x58] sm:$0xff]
      %v1046 = vld [vmem:[#allocation3 + $0x60] sm:$0xff]
      %v1047 = vld [vmem:[#allocation3 + $0x68] sm:$0xff]
      %v1048 = vld [vmem:[#allocation3 + $0x70] sm:$0xff]
      %v1049 = vld [vmem:[#allocation3 + $0x78] sm:$0xff]
      %v1050 = vld [vmem:[#allocation3 + $0x80] sm:$0xff]
      %v1051 = vld [vmem:[#allocation3 + $0x88] sm:$0xff]
      %v1052 = vld [vmem:[#allocation3 + $0x90] sm:$0xff]
      %v1053 = vld [vmem:[#allocation3 + $0x98] sm:$0xff]
      %v1054 = vld [vmem:[#allocation3 + $0xa0] sm:$0xff]
      %v1055 = vld [vmem:[#allocation3 + $0xa8] sm:$0xff]
      %v1056 = vld [vmem:[#allocation3 + $0xb0] sm:$0xff]
      %v1057 = vld [vmem:[#allocation3 + $0xb8] sm:$0xff]
      %v1058 = vld [vmem:[#allocation3 + $0xc0] sm:$0xff]
      %v1059 = vld [vmem:[#allocation3 + $0xc8] sm:$0xff]
      %v1060 = vld [vmem:[#allocation3 + $0xd0] sm:$0xff]
      %v1061 = vld [vmem:[#allocation3 + $0xd8] sm:$0xff]
      %v1062 = vld [vmem:[#allocation3 + $0xe0] sm:$0xff]
      %v1063 = vld [vmem:[#allocation3 + $0xe8] sm:$0xff]
      %v1064 = vld [vmem:[#allocation3 + $0xf0] sm:$0xff]
      %v1065 = vld [vmem:[#allocation3 + $0xf8] sm:$0xff]
      %v1066 = vld [vmem:[%s3] sm:$0xf]
      %v1067 = vld [vmem:[%s3 + $0x4] sm:$0xf]
      %v1068 = vld [vmem:[%s3 + $0x8] sm:$0xf]
      %v1069 = vld [vmem:[%s3 + $0xc] sm:$0xf]
      %v1070 = vld [vmem:[%s3 + $0x10] sm:$0xf]
      %v1071 = vld [vmem:[%s3 + $0x14] sm:$0xf]
      %v1072 = vld [vmem:[%s3 + $0x18] sm:$0xf]
      %v1073 = vld [vmem:[%s3 + $0x1c] sm:$0xf]
      %v1074 = vld [vmem:[%s3 + $0x20] sm:$0xf]
      %v1075 = vld [vmem:[%s3 + $0x24] sm:$0xf]
      %v1076 = vld [vmem:[%s3 + $0x28] sm:$0xf]
      %v1077 = vld [vmem:[%s3 + $0x2c] sm:$0xf]
      %v1078 = vld [vmem:[%s3 + $0x30] sm:$0xf]
      %v1079 = vld [vmem:[%s3 + $0x34] sm:$0xf]
      %v1080 = vld [vmem:[%s3 + $0x38] sm:$0xf]
      %v1081 = vld [vmem:[%s3 + $0x3c] sm:$0xf]
      %v1114 = vunpack.c.l.b16 %v1002
      %v1115 = vunpack.c.l.b16 %v1003
      %v1116 = vunpack.c.l.b16 %v1004
      %v1117 = vunpack.c.l.b16 %v1005
      %v1118 = vunpack.c.l.b16 %v1006
      %v1119 = vunpack.c.l.b16 %v1007
      %v1120 = vunpack.c.l.b16 %v1008
      %v1121 = vunpack.c.l.b16 %v1009
      %v1122 = vunpack.c.l.b16 %v1010
      %v1123 = vunpack.c.l.b16 %v1011
      %v1124 = vunpack.c.l.b16 %v1012
      %v1125 = vunpack.c.l.b16 %v1013
      %v1126 = vunpack.c.l.b16 %v1014
      %v1127 = vunpack.c.l.b16 %v1015
      %v1128 = vunpack.c.l.b16 %v1016
      %v1129 = vunpack.c.l.b16 %v1017
      %v1130 = vunpack.c.l.b16 %v1018
      %v1131 = vunpack.c.l.b16 %v1019
      %v1132 = vunpack.c.l.b16 %v1020
      %v1133 = vunpack.c.l.b16 %v1021
      %v1134 = vunpack.c.l.b16 %v1022
      %v1135 = vunpack.c.l.b16 %v1023
      %v1136 = vunpack.c.l.b16 %v1024
      %v1137 = vunpack.c.l.b16 %v1025
      %v1138 = vunpack.c.l.b16 %v1026
      %v1139 = vunpack.c.l.b16 %v1027
      %v1140 = vunpack.c.l.b16 %v1028
      %v1141 = vunpack.c.l.b16 %v1029
      %v1142 = vunpack.c.l.b16 %v1030
      %v1143 = vunpack.c.l.b16 %v1031
      %v1144 = vunpack.c.l.b16 %v1032
      %v1145 = vunpack.c.l.b16 %v1033
      %v1146 = vpack.c.b16 %v1115, %v1114
      %v1147 = vpack.c.b16 %v1117, %v1116
      %v1148 = vpack.c.b16 %v1119, %v1118
      %v1149 = vpack.c.b16 %v1121, %v1120
      %v1150 = vpack.c.b16 %v1123, %v1122
      %v1151 = vpack.c.b16 %v1125, %v1124
      %v1152 = vpack.c.b16 %v1127, %v1126
      %v1153 = vpack.c.b16 %v1129, %v1128
      %v1154 = vpack.c.b16 %v1131, %v1130
      %v1155 = vpack.c.b16 %v1133, %v1132
      %v1156 = vpack.c.b16 %v1135, %v1134
      %v1157 = vpack.c.b16 %v1137, %v1136
      %v1158 = vpack.c.b16 %v1139, %v1138
      %v1159 = vpack.c.b16 %v1141, %v1140
      %v1160 = vpack.c.b16 %v1143, %v1142
      %v1161 = vpack.c.b16 %v1145, %v1144
      %v1194 = vunpack.c.l.b16 %v1066
      %v1195 = vunpack.c.l.b16 %v1067
      %v1196 = vunpack.c.l.b16 %v1068
      %v1197 = vunpack.c.l.b16 %v1069
      %v1198 = vunpack.c.l.b16 %v1070
      %v1199 = vunpack.c.l.b16 %v1071
      %v1200 = vunpack.c.l.b16 %v1072
      %v1201 = vunpack.c.l.b16 %v1073
      %v1202 = vunpack.c.l.b16 %v1074
      %v1203 = vunpack.c.l.b16 %v1075
      %v1204 = vunpack.c.l.b16 %v1076
      %v1205 = vunpack.c.l.b16 %v1077
      %v1206 = vunpack.c.l.b16 %v1078
      %v1207 = vunpack.c.l.b16 %v1079
      %v1208 = vunpack.c.l.b16 %v1080
      %v1209 = vunpack.c.l.b16 %v1081
      %v1210 = vpack.c.b16 %v1195, %v1194
      %v1211 = vpack.c.b16 %v1197, %v1196
      %v1212 = vpack.c.b16 %v1199, %v1198
      %v1213 = vpack.c.b16 %v1201, %v1200
      %v1214 = vpack.c.b16 %v1203, %v1202
      %v1215 = vpack.c.b16 %v1205, %v1204
      %v1216 = vpack.c.b16 %v1207, %v1206
      %v1217 = vpack.c.b16 %v1209, %v1208
      %1226 = vmatpush.bf16.msra.mxu0 %v1217
      %1227 = vmatpush.bf16.msra.mxu0 %v1216
      %1228 = vmatpush.bf16.msra.mxu0 %v1215
      %1229 = vmatpush.bf16.msra.mxu0 %v1214
      %1230 = vmatpush.bf16.msra.mxu0 %v1213
      %1231 = vmatpush.bf16.msra.mxu0 %v1212
      %1232 = vmatpush.bf16.msra.mxu0 %v1211
      %1233 = vmatpush.bf16.msra.mxu0 %v1210
      %1234 = vmatmul.bf16.gmra.mxu0 %v1146
      %v1235 = vpop.f32.mrf.mxu0
      %v1236 = vadd.f32 0.0, %v1235
      %v1237 = vpop.f32.mrf.mxu0
      %v1238 = vadd.f32 0.0, %v1237
      %1239 = vmatmul.bf16.gmra.mxu0 %v1147
      %v1240 = vpop.f32.mrf.mxu0
      %v1241 = vadd.f32 0.0, %v1240
      %v1242 = vpop.f32.mrf.mxu0
      %v1243 = vadd.f32 0.0, %v1242
      %1244 = vmatmul.bf16.gmra.mxu0 %v1148
      %v1245 = vpop.f32.mrf.mxu0
      %v1246 = vadd.f32 0.0, %v1245
      %v1247 = vpop.f32.mrf.mxu0
      %v1248 = vadd.f32 0.0, %v1247
      %1249 = vmatmul.bf16.gmra.mxu0 %v1149
      %v1250 = vpop.f32.mrf.mxu0
      %v1251 = vadd.f32 0.0, %v1250
      %v1252 = vpop.f32.mrf.mxu0
      %v1253 = vadd.f32 0.0, %v1252
      %1254 = vmatmul.bf16.gmra.mxu0 %v1150
      %v1255 = vpop.f32.mrf.mxu0
      %v1256 = vadd.f32 0.0, %v1255
      %v1257 = vpop.f32.mrf.mxu0
      %v1258 = vadd.f32 0.0, %v1257
      %1259 = vmatmul.bf16.gmra.mxu0 %v1151
      %v1260 = vpop.f32.mrf.mxu0
      %v1261 = vadd.f32 0.0, %v1260
      %v1262 = vpop.f32.mrf.mxu0
      %v1263 = vadd.f32 0.0, %v1262
      %1264 = vmatmul.bf16.gmra.mxu0 %v1152
      %v1265 = vpop.f32.mrf.mxu0
      %v1266 = vadd.f32 0.0, %v1265
      %v1267 = vpop.f32.mrf.mxu0
      %v1268 = vadd.f32 0.0, %v1267
      %1269 = vmatmul.bf16.gmra.mxu0 %v1153
      %v1270 = vpop.f32.mrf.mxu0
      %v1271 = vadd.f32 0.0, %v1270
      %v1272 = vpop.f32.mrf.mxu0
      %v1273 = vadd.f32 0.0, %v1272
      %1274 = vmatmul.bf16.gmra.mxu0 %v1154
      %v1275 = vpop.f32.mrf.mxu0
      %v1276 = vadd.f32 0.0, %v1275
      %v1277 = vpop.f32.mrf.mxu0
      %v1278 = vadd.f32 0.0, %v1277
      %1279 = vmatmul.bf16.gmra.mxu0 %v1155
      %v1280 = vpop.f32.mrf.mxu0
      %v1281 = vadd.f32 0.0, %v1280
      %v1282 = vpop.f32.mrf.mxu0
      %v1283 = vadd.f32 0.0, %v1282
      %1284 = vmatmul.bf16.gmra.mxu0 %v1156
      %v1285 = vpop.f32.mrf.mxu0
      %v1286 = vadd.f32 0.0, %v1285
      %v1287 = vpop.f32.mrf.mxu0
      %v1288 = vadd.f32 0.0, %v1287
      %1289 = vmatmul.bf16.gmra.mxu0 %v1157
      %v1290 = vpop.f32.mrf.mxu0
      %v1291 = vadd.f32 0.0, %v1290
      %v1292 = vpop.f32.mrf.mxu0
      %v1293 = vadd.f32 0.0, %v1292
      %1294 = vmatmul.bf16.gmra.mxu0 %v1158
      %v1295 = vpop.f32.mrf.mxu0
      %v1296 = vadd.f32 0.0, %v1295
      %v1297 = vpop.f32.mrf.mxu0
      %v1298 = vadd.f32 0.0, %v1297
      %1299 = vmatmul.bf16.gmra.mxu0 %v1159
      %v1300 = vpop.f32.mrf.mxu0
      %v1301 = vadd.f32 0.0, %v1300
      %v1302 = vpop.f32.mrf.mxu0
      %v1303 = vadd.f32 0.0, %v1302
      %1304 = vmatmul.bf16.gmra.mxu0 %v1160
      %v1305 = vpop.f32.mrf.mxu0
      %v1306 = vadd.f32 0.0, %v1305
      %v1307 = vpop.f32.mrf.mxu0
      %v1308 = vadd.f32 0.0, %v1307
      %1309 = vmatmul.bf16.gmra.mxu0 %v1161
      %v1310 = vpop.f32.mrf.mxu0
      %v1311 = vadd.f32 0.0, %v1310
      %v1312 = vpop.f32.mrf.mxu0
      %v1313 = vadd.f32 0.0, %v1312
      %1314 = vdwg.mxu0
      %v1315 = vadd.f32 %v1034, %v1236
      %v1316 = vadd.f32 %v1035, %v1238
      %v1317 = vadd.f32 %v1036, %v1241
      %v1318 = vadd.f32 %v1037, %v1243
      %v1319 = vadd.f32 %v1038, %v1246
      %v1320 = vadd.f32 %v1039, %v1248
      %v1321 = vadd.f32 %v1040, %v1251
      %v1322 = vadd.f32 %v1041, %v1253
      %v1323 = vadd.f32 %v1042, %v1256
      %v1324 = vadd.f32 %v1043, %v1258
      %v1325 = vadd.f32 %v1044, %v1261
      %v1326 = vadd.f32 %v1045, %v1263
      %v1327 = vadd.f32 %v1046, %v1266
      %v1328 = vadd.f32 %v1047, %v1268
      %v1329 = vadd.f32 %v1048, %v1271
      %v1330 = vadd.f32 %v1049, %v1273
      %v1331 = vadd.f32 %v1050, %v1276
      %v1332 = vadd.f32 %v1051, %v1278
      %v1333 = vadd.f32 %v1052, %v1281
      %v1334 = vadd.f32 %v1053, %v1283
      %v1335 = vadd.f32 %v1054, %v1286
      %v1336 = vadd.f32 %v1055, %v1288
      %v1337 = vadd.f32 %v1056, %v1291
      %v1338 = vadd.f32 %v1057, %v1293
      %v1339 = vadd.f32 %v1058, %v1296
      %v1340 = vadd.f32 %v1059, %v1298
      %v1341 = vadd.f32 %v1060, %v1301
      %v1342 = vadd.f32 %v1061, %v1303
      %v1343 = vadd.f32 %v1062, %v1306
      %v1344 = vadd.f32 %v1063, %v1308
      %v1345 = vadd.f32 %v1064, %v1311
      %v1346 = vadd.f32 %v1065, %v1313
      %1347 = vst [vmem:[#allocation3] sm:$0xff] %v1315
      %1348 = vst [vmem:[#allocation3 + $0x8] sm:$0xff] %v1316
      %1349 = vst [vmem:[#allocation3 + $0x10] sm:$0xff] %v1317
      %1350 = vst [vmem:[#allocation3 + $0x18] sm:$0xff] %v1318
      %1351 = vst [vmem:[#allocation3 + $0x20] sm:$0xff] %v1319
      %1352 = vst [vmem:[#allocation3 + $0x28] sm:$0xff] %v1320
      %1353 = vst [vmem:[#allocation3 + $0x30] sm:$0xff] %v1321
      %1354 = vst [vmem:[#allocation3 + $0x38] sm:$0xff] %v1322
      %1355 = vst [vmem:[#allocation3 + $0x40] sm:$0xff] %v1323
      %1356 = vst [vmem:[#allocation3 + $0x48] sm:$0xff] %v1324
      %1357 = vst [vmem:[#allocation3 + $0x50] sm:$0xff] %v1325
      %1358 = vst [vmem:[#allocation3 + $0x58] sm:$0xff] %v1326
      %1359 = vst [vmem:[#allocation3 + $0x60] sm:$0xff] %v1327
      %1360 = vst [vmem:[#allocation3 + $0x68] sm:$0xff] %v1328
      %1361 = vst [vmem:[#allocation3 + $0x70] sm:$0xff] %v1329
      %1362 = vst [vmem:[#allocation3 + $0x78] sm:$0xff] %v1330
      %1363 = vst [vmem:[#allocation3 + $0x80] sm:$0xff] %v1331
      %1364 = vst [vmem:[#allocation3 + $0x88] sm:$0xff] %v1332
      %1365 = vst [vmem:[#allocation3 + $0x90] sm:$0xff] %v1333
      %1366 = vst [vmem:[#allocation3 + $0x98] sm:$0xff] %v1334
      %1367 = vst [vmem:[#allocation3 + $0xa0] sm:$0xff] %v1335
      %1368 = vst [vmem:[#allocation3 + $0xa8] sm:$0xff] %v1336
      %1369 = vst [vmem:[#allocation3 + $0xb0] sm:$0xff] %v1337
      %1370 = vst [vmem:[#allocation3 + $0xb8] sm:$0xff] %v1338
      %1371 = vst [vmem:[#allocation3 + $0xc0] sm:$0xff] %v1339
      %1372 = vst [vmem:[#allocation3 + $0xc8] sm:$0xff] %v1340
      %1373 = vst [vmem:[#allocation3 + $0xd0] sm:$0xff] %v1341
      %1374 = vst [vmem:[#allocation3 + $0xd8] sm:$0xff] %v1342
      %1375 = vst [vmem:[#allocation3 + $0xe0] sm:$0xff] %v1343
      %1376 = vst [vmem:[#allocation3 + $0xe8] sm:$0xff] %v1344
      %1377 = vst [vmem:[#allocation3 + $0xf0] sm:$0xff] %v1345
      %1378 = vst [vmem:[#allocation3 + $0xf8] sm:$0xff] %v1346
      %v1379 = vld [vmem:[%s1001] sm:$0xf]
      %v1380 = vld [vmem:[%s1001 + $0x4] sm:$0xf]
      %v1381 = vld [vmem:[%s1001 + $0x8] sm:$0x1]
      %v1382 = vld [vmem:[%s1001 + $0xc] sm:$0xf]
      %v1383 = vld [vmem:[%s1001 + $0x10] sm:$0xf]
      %v1384 = vld [vmem:[%s1001 + $0x14] sm:$0x1]
      %v1385 = vld [vmem:[%s1001 + $0x18] sm:$0xf]
      %v1386 = vld [vmem:[%s1001 + $0x1c] sm:$0xf]
      %v1387 = vld [vmem:[%s1001 + $0x20] sm:$0x1]
      %v1388 = vld [vmem:[%s1001 + $0x24] sm:$0xf]
      %v1389 = vld [vmem:[%s1001 + $0x28] sm:$0xf]
      %v1390 = vld [vmem:[%s1001 + $0x2c] sm:$0x1]
      %v1391 = vld [vmem:[%s1001 + $0x30] sm:$0xf]
      %v1392 = vld [vmem:[%s1001 + $0x34] sm:$0xf]
      %v1393 = vld [vmem:[%s1001 + $0x38] sm:$0x1]
      %v1394 = vld [vmem:[%s1001 + $0x3c] sm:$0xf]
      %v1395 = vld [vmem:[%s1001 + $0x40] sm:$0xf]
      %v1396 = vld [vmem:[%s1001 + $0x44] sm:$0x1]
      %v1397 = vld [vmem:[%s1001 + $0x48] sm:$0xf]
      %v1398 = vld [vmem:[%s1001 + $0x4c] sm:$0xf]
      %v1399 = vld [vmem:[%s1001 + $0x50] sm:$0x1]
      %v1400 = vld [vmem:[%s1001 + $0x54] sm:$0xf]
      %v1401 = vld [vmem:[%s1001 + $0x58] sm:$0xf]
      %v1402 = vld [vmem:[%s1001 + $0x5c] sm:$0x1]
      %v1403 = vld [vmem:[%s1001 + $0x60] sm:$0xf]
      %v1404 = vld [vmem:[%s1001 + $0x64] sm:$0xf]
      %v1405 = vld [vmem:[%s1001 + $0x68] sm:$0x1]
      %v1406 = vld [vmem:[%s1001 + $0x6c] sm:$0xf]
      %v1407 = vld [vmem:[%s1001 + $0x70] sm:$0xf]
      %v1408 = vld [vmem:[%s1001 + $0x74] sm:$0x1]
      %v1409 = vld [vmem:[%s1001 + $0x78] sm:$0xf]
      %v1410 = vld [vmem:[%s1001 + $0x7c] sm:$0xf]
      %v1411 = vld [vmem:[%s1001 + $0x80] sm:$0x1]
      %v1412 = vld [vmem:[%s1001 + $0x84] sm:$0xf]
      %v1413 = vld [vmem:[%s1001 + $0x88] sm:$0xf]
      %v1414 = vld [vmem:[%s1001 + $0x8c] sm:$0x1]
      %v1415 = vld [vmem:[%s1001 + $0x90] sm:$0xf]
      %v1416 = vld [vmem:[%s1001 + $0x94] sm:$0xf]
      %v1417 = vld [vmem:[%s1001 + $0x98] sm:$0x1]
      %v1418 = vld [vmem:[%s1001 + $0x9c] sm:$0xf]
      %v1419 = vld [vmem:[%s1001 + $0xa0] sm:$0xf]
      %v1420 = vld [vmem:[%s1001 + $0xa4] sm:$0x1]
      %v1421 = vld [vmem:[%s1001 + $0xa8] sm:$0xf]
      %v1422 = vld [vmem:[%s1001 + $0xac] sm:$0xf]
      %v1423 = vld [vmem:[%s1001 + $0xb0] sm:$0x1]
      %v1424 = vld [vmem:[%s1001 + $0xb4] sm:$0xf]
      %v1425 = vld [vmem:[%s1001 + $0xb8] sm:$0xf]
      %v1426 = vld [vmem:[%s1001 + $0xbc] sm:$0x1]
      %v1427 = vld [vmem:[#allocation3] sm:$0xff]
      %v1428 = vld [vmem:[#allocation3 + $0x8] sm:$0xff]
      %v1429 = vld [vmem:[#allocation3 + $0x10] sm:$0xff]
      %v1430 = vld [vmem:[#allocation3 + $0x18] sm:$0xff]
      %v1431 = vld [vmem:[#allocation3 + $0x20] sm:$0xff]
      %v1432 = vld [vmem:[#allocation3 + $0x28] sm:$0xff]
      %v1433 = vld [vmem:[#allocation3 + $0x30] sm:$0xff]
      %v1434 = vld [vmem:[#allocation3 + $0x38] sm:$0xff]
      %v1435 = vld [vmem:[#allocation3 + $0x40] sm:$0xff]
      %v1436 = vld [vmem:[#allocation3 + $0x48] sm:$0xff]
      %v1437 = vld [vmem:[#allocation3 + $0x50] sm:$0xff]
      %v1438 = vld [vmem:[#allocation3 + $0x58] sm:$0xff]
      %v1439 = vld [vmem:[#allocation3 + $0x60] sm:$0xff]
      %v1440 = vld [vmem:[#allocation3 + $0x68] sm:$0xff]
      %v1441 = vld [vmem:[#allocation3 + $0x70] sm:$0xff]
      %v1442 = vld [vmem:[#allocation3 + $0x78] sm:$0xff]
      %v1443 = vld [vmem:[#allocation3 + $0x80] sm:$0xff]
      %v1444 = vld [vmem:[#allocation3 + $0x88] sm:$0xff]
      %v1445 = vld [vmem:[#allocation3 + $0x90] sm:$0xff]
      %v1446 = vld [vmem:[#allocation3 + $0x98] sm:$0xff]
      %v1447 = vld [vmem:[#allocation3 + $0xa0] sm:$0xff]
      %v1448 = vld [vmem:[#allocation3 + $0xa8] sm:$0xff]
      %v1449 = vld [vmem:[#allocation3 + $0xb0] sm:$0xff]
      %v1450 = vld [vmem:[#allocation3 + $0xb8] sm:$0xff]
      %v1451 = vld [vmem:[#allocation3 + $0xc0] sm:$0xff]
      %v1452 = vld [vmem:[#allocation3 + $0xc8] sm:$0xff]
      %v1453 = vld [vmem:[#allocation3 + $0xd0] sm:$0xff]
      %v1454 = vld [vmem:[#allocation3 + $0xd8] sm:$0xff]
      %v1455 = vld [vmem:[#allocation3 + $0xe0] sm:$0xff]
      %v1456 = vld [vmem:[#allocation3 + $0xe8] sm:$0xff]
      %v1457 = vld [vmem:[#allocation3 + $0xf0] sm:$0xff]
      %v1458 = vld [vmem:[#allocation3 + $0xf8] sm:$0xff]
      %vm1459 = vsmask.f32 3328
      %vm1460 = vsmask.f32 7440
      %vm1461 = vmor %vm1459, %vm1460
      %v1463 = vshrl.u32 %v1379, 16
      %v1465 = vrot.slane %v1463, 4
      %v1466 = vshll.u32 %v1379, 16
      %v1468 = vrot.slane %v1466, 5
      %v1469 = vor.u32 %v1465, %v1468
      %v1470 = vrot.slane %v1469, 4
      %v1472 = vshll.u32 %v1380, 16
      %v1474 = vrot.slane %v1472, 5
      %v1475 = vsel %vm1461, %v1470, %v1474
      %v1476 = vshrl.u32 %v1380, 16
      %v1478 = vrot.slane %v1476, 4
      %v1479 = vor.u32 %v1478, %v1474
      %v1480 = vrot.slane %v1479, 4
      %v1482 = vshll.u32 %v1381, 16
      %v1484 = vrot.slane %v1482, 5
      %v1485 = vsel %vm1461, %v1480, %v1484
      %v1487 = vshrl.u32 %v1382, 16
      %v1489 = vrot.slane %v1487, 4
      %v1490 = vshll.u32 %v1382, 16
      %v1492 = vrot.slane %v1490, 5
      %v1493 = vor.u32 %v1489, %v1492
      %v1494 = vrot.slane %v1493, 4
      %v1496 = vshll.u32 %v1383, 16
      %v1498 = vrot.slane %v1496, 5
      %v1499 = vsel %vm1461, %v1494, %v1498
      %v1500 = vshrl.u32 %v1383, 16
      %v1502 = vrot.slane %v1500, 4
      %v1503 = vor.u32 %v1502, %v1498
      %v1504 = vrot.slane %v1503, 4
      %v1506 = vshll.u32 %v1384, 16
      %v1508 = vrot.slane %v1506, 5
      %v1509 = vsel %vm1461, %v1504, %v1508
      %v1511 = vshrl.u32 %v1385, 16
      %v1513 = vrot.slane %v1511, 4
      %v1514 = vshll.u32 %v1385, 16
      %v1516 = vrot.slane %v1514, 5
      %v1517 = vor.u32 %v1513, %v1516
      %v1518 = vrot.slane %v1517, 4
      %v1520 = vshll.u32 %v1386, 16
      %v1522 = vrot.slane %v1520, 5
      %v1523 = vsel %vm1461, %v1518, %v1522
      %v1524 = vshrl.u32 %v1386, 16
      %v1526 = vrot.slane %v1524, 4
      %v1527 = vor.u32 %v1526, %v1522
      %v1528 = vrot.slane %v1527, 4
      %v1530 = vshll.u32 %v1387, 16
      %v1532 = vrot.slane %v1530, 5
      %v1533 = vsel %vm1461, %v1528, %v1532
      %v1535 = vshrl.u32 %v1388, 16
      %v1537 = vrot.slane %v1535, 4
      %v1538 = vshll.u32 %v1388, 16
      %v1540 = vrot.slane %v1538, 5
      %v1541 = vor.u32 %v1537, %v1540
      %v1542 = vrot.slane %v1541, 4
      %v1544 = vshll.u32 %v1389, 16
      %v1546 = vrot.slane %v1544, 5
      %v1547 = vsel %vm1461, %v1542, %v1546
      %v1548 = vshrl.u32 %v1389, 16
      %v1550 = vrot.slane %v1548, 4
      %v1551 = vor.u32 %v1550, %v1546
      %v1552 = vrot.slane %v1551, 4
      %v1554 = vshll.u32 %v1390, 16
      %v1556 = vrot.slane %v1554, 5
      %v1557 = vsel %vm1461, %v1552, %v1556
      %v1559 = vshrl.u32 %v1391, 16
      %v1561 = vrot.slane %v1559, 4
      %v1562 = vshll.u32 %v1391, 16
      %v1564 = vrot.slane %v1562, 5
      %v1565 = vor.u32 %v1561, %v1564
      %v1566 = vrot.slane %v1565, 4
      %v1568 = vshll.u32 %v1392, 16
      %v1570 = vrot.slane %v1568, 5
      %v1571 = vsel %vm1461, %v1566, %v1570
      %v1572 = vshrl.u32 %v1392, 16
      %v1574 = vrot.slane %v1572, 4
      %v1575 = vor.u32 %v1574, %v1570
      %v1576 = vrot.slane %v1575, 4
      %v1578 = vshll.u32 %v1393, 16
      %v1580 = vrot.slane %v1578, 5
      %v1581 = vsel %vm1461, %v1576, %v1580
      %v1583 = vshrl.u32 %v1394, 16
      %v1585 = vrot.slane %v1583, 4
      %v1586 = vshll.u32 %v1394, 16
      %v1588 = vrot.slane %v1586, 5
      %v1589 = vor.u32 %v1585, %v1588
      %v1590 = vrot.slane %v1589, 4
      %v1592 = vshll.u32 %v1395, 16
      %v1594 = vrot.slane %v1592, 5
      %v1595 = vsel %vm1461, %v1590, %v1594
      %v1596 = vshrl.u32 %v1395, 16
      %v1598 = vrot.slane %v1596, 4
      %v1599 = vor.u32 %v1598, %v1594
      %v1600 = vrot.slane %v1599, 4
      %v1602 = vshll.u32 %v1396, 16
      %v1604 = vrot.slane %v1602, 5
      %v1605 = vsel %vm1461, %v1600, %v1604
      %v1607 = vshrl.u32 %v1397, 16
      %v1609 = vrot.slane %v1607, 4
      %v1610 = vshll.u32 %v1397, 16
      %v1612 = vrot.slane %v1610, 5
      %v1613 = vor.u32 %v1609, %v1612
      %v1614 = vrot.slane %v1613, 4
      %v1616 = vshll.u32 %v1398, 16
      %v1618 = vrot.slane %v1616, 5
      %v1619 = vsel %vm1461, %v1614, %v1618
      %v1620 = vshrl.u32 %v1398, 16
      %v1622 = vrot.slane %v1620, 4
      %v1623 = vor.u32 %v1622, %v1618
      %v1624 = vrot.slane %v1623, 4
      %v1626 = vshll.u32 %v1399, 16
      %v1628 = vrot.slane %v1626, 5
      %v1629 = vsel %vm1461, %v1624, %v1628
      %v1631 = vshrl.u32 %v1400, 16
      %v1633 = vrot.slane %v1631, 4
      %v1634 = vshll.u32 %v1400, 16
      %v1636 = vrot.slane %v1634, 5
      %v1637 = vor.u32 %v1633, %v1636
      %v1638 = vrot.slane %v1637, 4
      %v1640 = vshll.u32 %v1401, 16
      %v1642 = vrot.slane %v1640, 5
      %v1643 = vsel %vm1461, %v1638, %v1642
      %v1644 = vshrl.u32 %v1401, 16
      %v1646 = vrot.slane %v1644, 4
      %v1647 = vor.u32 %v1646, %v1642
      %v1648 = vrot.slane %v1647, 4
      %v1650 = vshll.u32 %v1402, 16
      %v1652 = vrot.slane %v1650, 5
      %v1653 = vsel %vm1461, %v1648, %v1652
      %v1655 = vshrl.u32 %v1403, 16
      %v1657 = vrot.slane %v1655, 4
      %v1658 = vshll.u32 %v1403, 16
      %v1660 = vrot.slane %v1658, 5
      %v1661 = vor.u32 %v1657, %v1660
      %v1662 = vrot.slane %v1661, 4
      %v1664 = vshll.u32 %v1404, 16
      %v1666 = vrot.slane %v1664, 5
      %v1667 = vsel %vm1461, %v1662, %v1666
      %v1668 = vshrl.u32 %v1404, 16
      %v1670 = vrot.slane %v1668, 4
      %v1671 = vor.u32 %v1670, %v1666
      %v1672 = vrot.slane %v1671, 4
      %v1674 = vshll.u32 %v1405, 16
      %v1676 = vrot.slane %v1674, 5
      %v1677 = vsel %vm1461, %v1672, %v1676
      %v1679 = vshrl.u32 %v1406, 16
      %v1681 = vrot.slane %v1679, 4
      %v1682 = vshll.u32 %v1406, 16
      %v1684 = vrot.slane %v1682, 5
      %v1685 = vor.u32 %v1681, %v1684
      %v1686 = vrot.slane %v1685, 4
      %v1688 = vshll.u32 %v1407, 16
      %v1690 = vrot.slane %v1688, 5
      %v1691 = vsel %vm1461, %v1686, %v1690
      %v1692 = vshrl.u32 %v1407, 16
      %v1694 = vrot.slane %v1692, 4
      %v1695 = vor.u32 %v1694, %v1690
      %v1696 = vrot.slane %v1695, 4
      %v1698 = vshll.u32 %v1408, 16
      %v1700 = vrot.slane %v1698, 5
      %v1701 = vsel %vm1461, %v1696, %v1700
      %v1703 = vshrl.u32 %v1409, 16
      %v1705 = vrot.slane %v1703, 4
      %v1706 = vshll.u32 %v1409, 16
      %v1708 = vrot.slane %v1706, 5
      %v1709 = vor.u32 %v1705, %v1708
      %v1710 = vrot.slane %v1709, 4
      %v1712 = vshll.u32 %v1410, 16
      %v1714 = vrot.slane %v1712, 5
      %v1715 = vsel %vm1461, %v1710, %v1714
      %v1716 = vshrl.u32 %v1410, 16
      %v1718 = vrot.slane %v1716, 4
      %v1719 = vor.u32 %v1718, %v1714
      %v1720 = vrot.slane %v1719, 4
      %v1722 = vshll.u32 %v1411, 16
      %v1724 = vrot.slane %v1722, 5
      %v1725 = vsel %vm1461, %v1720, %v1724
      %v1727 = vshrl.u32 %v1412, 16
      %v1729 = vrot.slane %v1727, 4
      %v1730 = vshll.u32 %v1412, 16
      %v1732 = vrot.slane %v1730, 5
      %v1733 = vor.u32 %v1729, %v1732
      %v1734 = vrot.slane %v1733, 4
      %v1736 = vshll.u32 %v1413, 16
      %v1738 = vrot.slane %v1736, 5
      %v1739 = vsel %vm1461, %v1734, %v1738
      %v1740 = vshrl.u32 %v1413, 16
      %v1742 = vrot.slane %v1740, 4
      %v1743 = vor.u32 %v1742, %v1738
      %v1744 = vrot.slane %v1743, 4
      %v1746 = vshll.u32 %v1414, 16
      %v1748 = vrot.slane %v1746, 5
      %v1749 = vsel %vm1461, %v1744, %v1748
      %v1751 = vshrl.u32 %v1415, 16
      %v1753 = vrot.slane %v1751, 4
      %v1754 = vshll.u32 %v1415, 16
      %v1756 = vrot.slane %v1754, 5
      %v1757 = vor.u32 %v1753, %v1756
      %v1758 = vrot.slane %v1757, 4
      %v1760 = vshll.u32 %v1416, 16
      %v1762 = vrot.slane %v1760, 5
      %v1763 = vsel %vm1461, %v1758, %v1762
      %v1764 = vshrl.u32 %v1416, 16
      %v1766 = vrot.slane %v1764, 4
      %v1767 = vor.u32 %v1766, %v1762
      %v1768 = vrot.slane %v1767, 4
      %v1770 = vshll.u32 %v1417, 16
      %v1772 = vrot.slane %v1770, 5
      %v1773 = vsel %vm1461, %v1768, %v1772
      %v1775 = vshrl.u32 %v1418, 16
      %v1777 = vrot.slane %v1775, 4
      %v1778 = vshll.u32 %v1418, 16
      %v1780 = vrot.slane %v1778, 5
      %v1781 = vor.u32 %v1777, %v1780
      %v1782 = vrot.slane %v1781, 4
      %v1784 = vshll.u32 %v1419, 16
      %v1786 = vrot.slane %v1784, 5
      %v1787 = vsel %vm1461, %v1782, %v1786
      %v1788 = vshrl.u32 %v1419, 16
      %v1790 = vrot.slane %v1788, 4
      %v1791 = vor.u32 %v1790, %v1786
      %v1792 = vrot.slane %v1791, 4
      %v1794 = vshll.u32 %v1420, 16
      %v1796 = vrot.slane %v1794, 5
      %v1797 = vsel %vm1461, %v1792, %v1796
      %v1799 = vshrl.u32 %v1421, 16
      %v1801 = vrot.slane %v1799, 4
      %v1802 = vshll.u32 %v1421, 16
      %v1804 = vrot.slane %v1802, 5
      %v1805 = vor.u32 %v1801, %v1804
      %v1806 = vrot.slane %v1805, 4
      %v1808 = vshll.u32 %v1422, 16
      %v1810 = vrot.slane %v1808, 5
      %v1811 = vsel %vm1461, %v1806, %v1810
      %v1812 = vshrl.u32 %v1422, 16
      %v1814 = vrot.slane %v1812, 4
      %v1815 = vor.u32 %v1814, %v1810
      %v1816 = vrot.slane %v1815, 4
      %v1818 = vshll.u32 %v1423, 16
      %v1820 = vrot.slane %v1818, 5
      %v1821 = vsel %vm1461, %v1816, %v1820
      %v1823 = vshrl.u32 %v1424, 16
      %v1825 = vrot.slane %v1823, 4
      %v1826 = vshll.u32 %v1424, 16
      %v1828 = vrot.slane %v1826, 5
      %v1829 = vor.u32 %v1825, %v1828
      %v1830 = vrot.slane %v1829, 4
      %v1832 = vshll.u32 %v1425, 16
      %v1834 = vrot.slane %v1832, 5
      %v1835 = vsel %vm1461, %v1830, %v1834
      %v1836 = vshrl.u32 %v1425, 16
      %v1838 = vrot.slane %v1836, 4
      %v1839 = vor.u32 %v1838, %v1834
      %v1840 = vrot.slane %v1839, 4
      %v1842 = vshll.u32 %v1426, 16
      %v1844 = vrot.slane %v1842, 5
      %v1845 = vsel %vm1461, %v1840, %v1844
      %s1846 = scalar_lea.vmem %s3, 64
      %v1847 = vld [vmem:[%s1846] sm:$0xf]
      %v1848 = vld [vmem:[%s1846 + $0x4] sm:$0xf]
      %v1849 = vld [vmem:[%s1846 + $0x8] sm:$0xf]
      %v1850 = vld [vmem:[%s1846 + $0xc] sm:$0xf]
      %v1851 = vld [vmem:[%s1846 + $0x10] sm:$0xf]
      %v1852 = vld [vmem:[%s1846 + $0x14] sm:$0xf]
      %v1853 = vld [vmem:[%s1846 + $0x18] sm:$0xf]
      %v1854 = vld [vmem:[%s1846 + $0x1c] sm:$0xf]
      %v1855 = vld [vmem:[%s1846 + $0x20] sm:$0xf]
      %v1856 = vld [vmem:[%s1846 + $0x24] sm:$0xf]
      %v1857 = vld [vmem:[%s1846 + $0x28] sm:$0xf]
      %v1858 = vld [vmem:[%s1846 + $0x2c] sm:$0xf]
      %v1859 = vld [vmem:[%s1846 + $0x30] sm:$0xf]
      %v1860 = vld [vmem:[%s1846 + $0x34] sm:$0xf]
      %v1861 = vld [vmem:[%s1846 + $0x38] sm:$0xf]
      %v1862 = vld [vmem:[%s1846 + $0x3c] sm:$0xf]
      %v1863 = vunpack.c.l.b16 %v1475
      %v1864 = vunpack.c.l.b16 %v1485
      %v1865 = vunpack.c.l.b16 %v1499
      %v1866 = vunpack.c.l.b16 %v1509
      %v1867 = vunpack.c.l.b16 %v1523
      %v1868 = vunpack.c.l.b16 %v1533
      %v1869 = vunpack.c.l.b16 %v1547
      %v1870 = vunpack.c.l.b16 %v1557
      %v1871 = vunpack.c.l.b16 %v1571
      %v1872 = vunpack.c.l.b16 %v1581
      %v1873 = vunpack.c.l.b16 %v1595
      %v1874 = vunpack.c.l.b16 %v1605
      %v1875 = vunpack.c.l.b16 %v1619
      %v1876 = vunpack.c.l.b16 %v1629
      %v1877 = vunpack.c.l.b16 %v1643
      %v1878 = vunpack.c.l.b16 %v1653
      %v1879 = vunpack.c.l.b16 %v1667
      %v1880 = vunpack.c.l.b16 %v1677
      %v1881 = vunpack.c.l.b16 %v1691
      %v1882 = vunpack.c.l.b16 %v1701
      %v1883 = vunpack.c.l.b16 %v1715
      %v1884 = vunpack.c.l.b16 %v1725
      %v1885 = vunpack.c.l.b16 %v1739
      %v1886 = vunpack.c.l.b16 %v1749
      %v1887 = vunpack.c.l.b16 %v1763
      %v1888 = vunpack.c.l.b16 %v1773
      %v1889 = vunpack.c.l.b16 %v1787
      %v1890 = vunpack.c.l.b16 %v1797
      %v1891 = vunpack.c.l.b16 %v1811
      %v1892 = vunpack.c.l.b16 %v1821
      %v1893 = vunpack.c.l.b16 %v1835
      %v1894 = vunpack.c.l.b16 %v1845
      %v1895 = vpack.c.b16 %v1864, %v1863
      %v1896 = vpack.c.b16 %v1866, %v1865
      %v1897 = vpack.c.b16 %v1868, %v1867
      %v1898 = vpack.c.b16 %v1870, %v1869
      %v1899 = vpack.c.b16 %v1872, %v1871
      %v1900 = vpack.c.b16 %v1874, %v1873
      %v1901 = vpack.c.b16 %v1876, %v1875
      %v1902 = vpack.c.b16 %v1878, %v1877
      %v1903 = vpack.c.b16 %v1880, %v1879
      %v1904 = vpack.c.b16 %v1882, %v1881
      %v1905 = vpack.c.b16 %v1884, %v1883
      %v1906 = vpack.c.b16 %v1886, %v1885
      %v1907 = vpack.c.b16 %v1888, %v1887
      %v1908 = vpack.c.b16 %v1890, %v1889
      %v1909 = vpack.c.b16 %v1892, %v1891
      %v1910 = vpack.c.b16 %v1894, %v1893
      %v1943 = vunpack.c.l.b16 %v1847
      %v1944 = vunpack.c.l.b16 %v1848
      %v1945 = vunpack.c.l.b16 %v1849
      %v1946 = vunpack.c.l.b16 %v1850
      %v1947 = vunpack.c.l.b16 %v1851
      %v1948 = vunpack.c.l.b16 %v1852
      %v1949 = vunpack.c.l.b16 %v1853
      %v1950 = vunpack.c.l.b16 %v1854
      %v1951 = vunpack.c.l.b16 %v1855
      %v1952 = vunpack.c.l.b16 %v1856
      %v1953 = vunpack.c.l.b16 %v1857
      %v1954 = vunpack.c.l.b16 %v1858
      %v1955 = vunpack.c.l.b16 %v1859
      %v1956 = vunpack.c.l.b16 %v1860
      %v1957 = vunpack.c.l.b16 %v1861
      %v1958 = vunpack.c.l.b16 %v1862
      %v1959 = vpack.c.b16 %v1944, %v1943
      %v1960 = vpack.c.b16 %v1946, %v1945
      %v1961 = vpack.c.b16 %v1948, %v1947
      %v1962 = vpack.c.b16 %v1950, %v1949
      %v1963 = vpack.c.b16 %v1952, %v1951
      %v1964 = vpack.c.b16 %v1954, %v1953
      %v1965 = vpack.c.b16 %v1956, %v1955
      %v1966 = vpack.c.b16 %v1958, %v1957
      %1975 = vmatpush.bf16.msra.mxu0 %v1966
      %1976 = vmatpush.bf16.msra.mxu0 %v1965
      %1977 = vmatpush.bf16.msra.mxu0 %v1964
      %1978 = vmatpush.bf16.msra.mxu0 %v1963
      %1979 = vmatpush.bf16.msra.mxu0 %v1962
      %1980 = vmatpush.bf16.msra.mxu0 %v1961
      %1981 = vmatpush.bf16.msra.mxu0 %v1960
      %1982 = vmatpush.bf16.msra.mxu0 %v1959
      %1983 = vmatmul.bf16.gmra.mxu0 %v1895
      %v1984 = vpop.f32.mrf.mxu0
      %v1985 = vadd.f32 0.0, %v1984
      %v1986 = vpop.f32.mrf.mxu0
      %v1987 = vadd.f32 0.0, %v1986
      %1988 = vmatmul.bf16.gmra.mxu0 %v1896
      %v1989 = vpop.f32.mrf.mxu0
      %v1990 = vadd.f32 0.0, %v1989
      %v1991 = vpop.f32.mrf.mxu0
      %v1992 = vadd.f32 0.0, %v1991
      %1993 = vmatmul.bf16.gmra.mxu0 %v1897
      %v1994 = vpop.f32.mrf.mxu0
      %v1995 = vadd.f32 0.0, %v1994
      %v1996 = vpop.f32.mrf.mxu0
      %v1997 = vadd.f32 0.0, %v1996
      %1998 = vmatmul.bf16.gmra.mxu0 %v1898
      %v1999 = vpop.f32.mrf.mxu0
      %v2000 = vadd.f32 0.0, %v1999
      %v2001 = vpop.f32.mrf.mxu0
      %v2002 = vadd.f32 0.0, %v2001
      %2003 = vmatmul.bf16.gmra.mxu0 %v1899
      %v2004 = vpop.f32.mrf.mxu0
      %v2005 = vadd.f32 0.0, %v2004
      %v2006 = vpop.f32.mrf.mxu0
      %v2007 = vadd.f32 0.0, %v2006
      %2008 = vmatmul.bf16.gmra.mxu0 %v1900
      %v2009 = vpop.f32.mrf.mxu0
      %v2010 = vadd.f32 0.0, %v2009
      %v2011 = vpop.f32.mrf.mxu0
      %v2012 = vadd.f32 0.0, %v2011
      %2013 = vmatmul.bf16.gmra.mxu0 %v1901
      %v2014 = vpop.f32.mrf.mxu0
      %v2015 = vadd.f32 0.0, %v2014
      %v2016 = vpop.f32.mrf.mxu0
      %v2017 = vadd.f32 0.0, %v2016
      %2018 = vmatmul.bf16.gmra.mxu0 %v1902
      %v2019 = vpop.f32.mrf.mxu0
      %v2020 = vadd.f32 0.0, %v2019
      %v2021 = vpop.f32.mrf.mxu0
      %v2022 = vadd.f32 0.0, %v2021
      %2023 = vmatmul.bf16.gmra.mxu0 %v1903
      %v2024 = vpop.f32.mrf.mxu0
      %v2025 = vadd.f32 0.0, %v2024
      %v2026 = vpop.f32.mrf.mxu0
      %v2027 = vadd.f32 0.0, %v2026
      %2028 = vmatmul.bf16.gmra.mxu0 %v1904
      %v2029 = vpop.f32.mrf.mxu0
      %v2030 = vadd.f32 0.0, %v2029
      %v2031 = vpop.f32.mrf.mxu0
      %v2032 = vadd.f32 0.0, %v2031
      %2033 = vmatmul.bf16.gmra.mxu0 %v1905
      %v2034 = vpop.f32.mrf.mxu0
      %v2035 = vadd.f32 0.0, %v2034
      %v2036 = vpop.f32.mrf.mxu0
      %v2037 = vadd.f32 0.0, %v2036
      %2038 = vmatmul.bf16.gmra.mxu0 %v1906
      %v2039 = vpop.f32.mrf.mxu0
      %v2040 = vadd.f32 0.0, %v2039
      %v2041 = vpop.f32.mrf.mxu0
      %v2042 = vadd.f32 0.0, %v2041
      %2043 = vmatmul.bf16.gmra.mxu0 %v1907
      %v2044 = vpop.f32.mrf.mxu0
      %v2045 = vadd.f32 0.0, %v2044
      %v2046 = vpop.f32.mrf.mxu0
      %v2047 = vadd.f32 0.0, %v2046
      %2048 = vmatmul.bf16.gmra.mxu0 %v1908
      %v2049 = vpop.f32.mrf.mxu0
      %v2050 = vadd.f32 0.0, %v2049
      %v2051 = vpop.f32.mrf.mxu0
      %v2052 = vadd.f32 0.0, %v2051
      %2053 = vmatmul.bf16.gmra.mxu0 %v1909
      %v2054 = vpop.f32.mrf.mxu0
      %v2055 = vadd.f32 0.0, %v2054
      %v2056 = vpop.f32.mrf.mxu0
      %v2057 = vadd.f32 0.0, %v2056
      %2058 = vmatmul.bf16.gmra.mxu0 %v1910
      %v2059 = vpop.f32.mrf.mxu0
      %v2060 = vadd.f32 0.0, %v2059
      %v2061 = vpop.f32.mrf.mxu0
      %v2062 = vadd.f32 0.0, %v2061
      %2063 = vdwg.mxu0
      %v2064 = vadd.f32 %v1427, %v1985
      %v2065 = vadd.f32 %v1428, %v1987
      %v2066 = vadd.f32 %v1429, %v1990
      %v2067 = vadd.f32 %v1430, %v1992
      %v2068 = vadd.f32 %v1431, %v1995
      %v2069 = vadd.f32 %v1432, %v1997
      %v2070 = vadd.f32 %v1433, %v2000
      %v2071 = vadd.f32 %v1434, %v2002
      %v2072 = vadd.f32 %v1435, %v2005
      %v2073 = vadd.f32 %v1436, %v2007
      %v2074 = vadd.f32 %v1437, %v2010
      %v2075 = vadd.f32 %v1438, %v2012
      %v2076 = vadd.f32 %v1439, %v2015
      %v2077 = vadd.f32 %v1440, %v2017
      %v2078 = vadd.f32 %v1441, %v2020
      %v2079 = vadd.f32 %v1442, %v2022
      %v2080 = vadd.f32 %v1443, %v2025
      %v2081 = vadd.f32 %v1444, %v2027
      %v2082 = vadd.f32 %v1445, %v2030
      %v2083 = vadd.f32 %v1446, %v2032
      %v2084 = vadd.f32 %v1447, %v2035
      %v2085 = vadd.f32 %v1448, %v2037
      %v2086 = vadd.f32 %v1449, %v2040
      %v2087 = vadd.f32 %v1450, %v2042
      %v2088 = vadd.f32 %v1451, %v2045
      %v2089 = vadd.f32 %v1452, %v2047
      %v2090 = vadd.f32 %v1453, %v2050
      %v2091 = vadd.f32 %v1454, %v2052
      %v2092 = vadd.f32 %v1455, %v2055
      %v2093 = vadd.f32 %v1456, %v2057
      %v2094 = vadd.f32 %v1457, %v2060
      %v2095 = vadd.f32 %v1458, %v2062
      %2096 = vst [vmem:[#allocation3] sm:$0xff] %v2064
      %2097 = vst [vmem:[#allocation3 + $0x8] sm:$0xff] %v2065
      %2098 = vst [vmem:[#allocation3 + $0x10] sm:$0xff] %v2066
      %2099 = vst [vmem:[#allocation3 + $0x18] sm:$0xff] %v2067
      %2100 = vst [vmem:[#allocation3 + $0x20] sm:$0xff] %v2068
      %2101 = vst [vmem:[#allocation3 + $0x28] sm:$0xff] %v2069
      %2102 = vst [vmem:[#allocation3 + $0x30] sm:$0xff] %v2070
      %2103 = vst [vmem:[#allocation3 + $0x38] sm:$0xff] %v2071
      %2104 = vst [vmem:[#allocation3 + $0x40] sm:$0xff] %v2072
      %2105 = vst [vmem:[#allocation3 + $0x48] sm:$0xff] %v2073
      %2106 = vst [vmem:[#allocation3 + $0x50] sm:$0xff] %v2074
      %2107 = vst [vmem:[#allocation3 + $0x58] sm:$0xff] %v2075
      %2108 = vst [vmem:[#allocation3 + $0x60] sm:$0xff] %v2076
      %2109 = vst [vmem:[#allocation3 + $0x68] sm:$0xff] %v2077
      %2110 = vst [vmem:[#allocation3 + $0x70] sm:$0xff] %v2078
      %2111 = vst [vmem:[#allocation3 + $0x78] sm:$0xff] %v2079
      %2112 = vst [vmem:[#allocation3 + $0x80] sm:$0xff] %v2080
      %2113 = vst [vmem:[#allocation3 + $0x88] sm:$0xff] %v2081
      %2114 = vst [vmem:[#allocation3 + $0x90] sm:$0xff] %v2082
      %2115 = vst [vmem:[#allocation3 + $0x98] sm:$0xff] %v2083
      %2116 = vst [vmem:[#allocation3 + $0xa0] sm:$0xff] %v2084
      %2117 = vst [vmem:[#allocation3 + $0xa8] sm:$0xff] %v2085
      %2118 = vst [vmem:[#allocation3 + $0xb0] sm:$0xff] %v2086
      %2119 = vst [vmem:[#allocation3 + $0xb8] sm:$0xff] %v2087
      %2120 = vst [vmem:[#allocation3 + $0xc0] sm:$0xff] %v2088
      %2121 = vst [vmem:[#allocation3 + $0xc8] sm:$0xff] %v2089
      %2122 = vst [vmem:[#allocation3 + $0xd0] sm:$0xff] %v2090
      %2123 = vst [vmem:[#allocation3 + $0xd8] sm:$0xff] %v2091
      %2124 = vst [vmem:[#allocation3 + $0xe0] sm:$0xff] %v2092
      %2125 = vst [vmem:[#allocation3 + $0xe8] sm:$0xff] %v2093
      %2126 = vst [vmem:[#allocation3 + $0xf0] sm:$0xff] %v2094
      %2127 = vst [vmem:[#allocation3 + $0xf8] sm:$0xff] %v2095
      %v2128 = vld [vmem:[%s1001] sm:$0xe]
      %v2129 = vld [vmem:[%s1001 + $0x4] sm:$0xf]
      %v2130 = vld [vmem:[%s1001 + $0x8] sm:$0x1]
      %v2131 = vld [vmem:[%s1001 + $0xc] sm:$0xe]
      %v2132 = vld [vmem:[%s1001 + $0x10] sm:$0xf]
      %v2133 = vld [vmem:[%s1001 + $0x14] sm:$0x1]
      %v2134 = vld [vmem:[%s1001 + $0x18] sm:$0xe]
      %v2135 = vld [vmem:[%s1001 + $0x1c] sm:$0xf]
      %v2136 = vld [vmem:[%s1001 + $0x20] sm:$0x1]
      %v2137 = vld [vmem:[%s1001 + $0x24] sm:$0xe]
      %v2138 = vld [vmem:[%s1001 + $0x28] sm:$0xf]
      %v2139 = vld [vmem:[%s1001 + $0x2c] sm:$0x1]
      %v2140 = vld [vmem:[%s1001 + $0x30] sm:$0xe]
      %v2141 = vld [vmem:[%s1001 + $0x34] sm:$0xf]
      %v2142 = vld [vmem:[%s1001 + $0x38] sm:$0x1]
      %v2143 = vld [vmem:[%s1001 + $0x3c] sm:$0xe]
      %v2144 = vld [vmem:[%s1001 + $0x40] sm:$0xf]
      %v2145 = vld [vmem:[%s1001 + $0x44] sm:$0x1]
      %v2146 = vld [vmem:[%s1001 + $0x48] sm:$0xe]
      %v2147 = vld [vmem:[%s1001 + $0x4c] sm:$0xf]
      %v2148 = vld [vmem:[%s1001 + $0x50] sm:$0x1]
      %v2149 = vld [vmem:[%s1001 + $0x54] sm:$0xe]
      %v2150 = vld [vmem:[%s1001 + $0x58] sm:$0xf]
      %v2151 = vld [vmem:[%s1001 + $0x5c] sm:$0x1]
      %v2152 = vld [vmem:[%s1001 + $0x60] sm:$0xe]
      %v2153 = vld [vmem:[%s1001 + $0x64] sm:$0xf]
      %v2154 = vld [vmem:[%s1001 + $0x68] sm:$0x1]
      %v2155 = vld [vmem:[%s1001 + $0x6c] sm:$0xe]
      %v2156 = vld [vmem:[%s1001 + $0x70] sm:$0xf]
      %v2157 = vld [vmem:[%s1001 + $0x74] sm:$0x1]
      %v2158 = vld [vmem:[%s1001 + $0x78] sm:$0xe]
      %v2159 = vld [vmem:[%s1001 + $0x7c] sm:$0xf]
      %v2160 = vld [vmem:[%s1001 + $0x80] sm:$0x1]
      %v2161 = vld [vmem:[%s1001 + $0x84] sm:$0xe]
      %v2162 = vld [vmem:[%s1001 + $0x88] sm:$0xf]
      %v2163 = vld [vmem:[%s1001 + $0x8c] sm:$0x1]
      %v2164 = vld [vmem:[%s1001 + $0x90] sm:$0xe]
      %v2165 = vld [vmem:[%s1001 + $0x94] sm:$0xf]
      %v2166 = vld [vmem:[%s1001 + $0x98] sm:$0x1]
      %v2167 = vld [vmem:[%s1001 + $0x9c] sm:$0xe]
      %v2168 = vld [vmem:[%s1001 + $0xa0] sm:$0xf]
      %v2169 = vld [vmem:[%s1001 + $0xa4] sm:$0x1]
      %v2170 = vld [vmem:[%s1001 + $0xa8] sm:$0xe]
      %v2171 = vld [vmem:[%s1001 + $0xac] sm:$0xf]
      %v2172 = vld [vmem:[%s1001 + $0xb0] sm:$0x1]
      %v2173 = vld [vmem:[%s1001 + $0xb4] sm:$0xe]
      %v2174 = vld [vmem:[%s1001 + $0xb8] sm:$0xf]
      %v2175 = vld [vmem:[%s1001 + $0xbc] sm:$0x1]
      %v2176 = vld [vmem:[#allocation3] sm:$0xff]
      %v2177 = vld [vmem:[#allocation3 + $0x8] sm:$0xff]
      %v2178 = vld [vmem:[#allocation3 + $0x10] sm:$0xff]
      %v2179 = vld [vmem:[#allocation3 + $0x18] sm:$0xff]
      %v2180 = vld [vmem:[#allocation3 + $0x20] sm:$0xff]
      %v2181 = vld [vmem:[#allocation3 + $0x28] sm:$0xff]
      %v2182 = vld [vmem:[#allocation3 + $0x30] sm:$0xff]
      %v2183 = vld [vmem:[#allocation3 + $0x38] sm:$0xff]
      %v2184 = vld [vmem:[#allocation3 + $0x40] sm:$0xff]
      %v2185 = vld [vmem:[#allocation3 + $0x48] sm:$0xff]
      %v2186 = vld [vmem:[#allocation3 + $0x50] sm:$0xff]
      %v2187 = vld [vmem:[#allocation3 + $0x58] sm:$0xff]
      %v2188 = vld [vmem:[#allocation3 + $0x60] sm:$0xff]
      %v2189 = vld [vmem:[#allocation3 + $0x68] sm:$0xff]
      %v2190 = vld [vmem:[#allocation3 + $0x70] sm:$0xff]
      %v2191 = vld [vmem:[#allocation3 + $0x78] sm:$0xff]
      %v2192 = vld [vmem:[#allocation3 + $0x80] sm:$0xff]
      %v2193 = vld [vmem:[#allocation3 + $0x88] sm:$0xff]
      %v2194 = vld [vmem:[#allocation3 + $0x90] sm:$0xff]
      %v2195 = vld [vmem:[#allocation3 + $0x98] sm:$0xff]
      %v2196 = vld [vmem:[#allocation3 + $0xa0] sm:$0xff]
      %v2197 = vld [vmem:[#allocation3 + $0xa8] sm:$0xff]
      %v2198 = vld [vmem:[#allocation3 + $0xb0] sm:$0xff]
      %v2199 = vld [vmem:[#allocation3 + $0xb8] sm:$0xff]
      %v2200 = vld [vmem:[#allocation3 + $0xc0] sm:$0xff]
      %v2201 = vld [vmem:[#allocation3 + $0xc8] sm:$0xff]
      %v2202 = vld [vmem:[#allocation3 + $0xd0] sm:$0xff]
      %v2203 = vld [vmem:[#allocation3 + $0xd8] sm:$0xff]
      %v2204 = vld [vmem:[#allocation3 + $0xe0] sm:$0xff]
      %v2205 = vld [vmem:[#allocation3 + $0xe8] sm:$0xff]
      %v2206 = vld [vmem:[#allocation3 + $0xf0] sm:$0xff]
      %v2207 = vld [vmem:[#allocation3 + $0xf8] sm:$0xff]
      %vm2256 = vcmask 1042432
      %vm2257 = vcmask 1046532
      %vm2258 = vmor %vm2256, %vm2257
      %v2259 = vrot.slane %v2128, 5
      %v2260 = vrot.slane %v2259, 4
      %v2261 = vrot.slane %v2129, 5
      %v2262 = vsel %vm2258, %v2260, %v2261
      %v2263 = vrot.slane %v2261, 4
      %v2264 = vrot.slane %v2130, 5
      %v2265 = vsel %vm2258, %v2263, %v2264
      %v2266 = vrot.slane %v2131, 5
      %v2267 = vrot.slane %v2266, 4
      %v2268 = vrot.slane %v2132, 5
      %v2269 = vsel %vm2258, %v2267, %v2268
      %v2270 = vrot.slane %v2268, 4
      %v2271 = vrot.slane %v2133, 5
      %v2272 = vsel %vm2258, %v2270, %v2271
      %v2273 = vrot.slane %v2134, 5
      %v2274 = vrot.slane %v2273, 4
      %v2275 = vrot.slane %v2135, 5
      %v2276 = vsel %vm2258, %v2274, %v2275
      %v2277 = vrot.slane %v2275, 4
      %v2278 = vrot.slane %v2136, 5
      %v2279 = vsel %vm2258, %v2277, %v2278
      %v2280 = vrot.slane %v2137, 5
      %v2281 = vrot.slane %v2280, 4
      %v2282 = vrot.slane %v2138, 5
      %v2283 = vsel %vm2258, %v2281, %v2282
      %v2284 = vrot.slane %v2282, 4
      %v2285 = vrot.slane %v2139, 5
      %v2286 = vsel %vm2258, %v2284, %v2285
      %v2287 = vrot.slane %v2140, 5
      %v2288 = vrot.slane %v2287, 4
      %v2289 = vrot.slane %v2141, 5
      %v2290 = vsel %vm2258, %v2288, %v2289
      %v2291 = vrot.slane %v2289, 4
      %v2292 = vrot.slane %v2142, 5
      %v2293 = vsel %vm2258, %v2291, %v2292
      %v2294 = vrot.slane %v2143, 5
      %v2295 = vrot.slane %v2294, 4
      %v2296 = vrot.slane %v2144, 5
      %v2297 = vsel %vm2258, %v2295, %v2296
      %v2298 = vrot.slane %v2296, 4
      %v2299 = vrot.slane %v2145, 5
      %v2300 = vsel %vm2258, %v2298, %v2299
      %v2301 = vrot.slane %v2146, 5
      %v2302 = vrot.slane %v2301, 4
      %v2303 = vrot.slane %v2147, 5
      %v2304 = vsel %vm2258, %v2302, %v2303
      %v2305 = vrot.slane %v2303, 4
      %v2306 = vrot.slane %v2148, 5
      %v2307 = vsel %vm2258, %v2305, %v2306
      %v2308 = vrot.slane %v2149, 5
      %v2309 = vrot.slane %v2308, 4
      %v2310 = vrot.slane %v2150, 5
      %v2311 = vsel %vm2258, %v2309, %v2310
      %v2312 = vrot.slane %v2310, 4
      %v2313 = vrot.slane %v2151, 5
      %v2314 = vsel %vm2258, %v2312, %v2313
      %v2315 = vrot.slane %v2152, 5
      %v2316 = vrot.slane %v2315, 4
      %v2317 = vrot.slane %v2153, 5
      %v2318 = vsel %vm2258, %v2316, %v2317
      %v2319 = vrot.slane %v2317, 4
      %v2320 = vrot.slane %v2154, 5
      %v2321 = vsel %vm2258, %v2319, %v2320
      %v2322 = vrot.slane %v2155, 5
      %v2323 = vrot.slane %v2322, 4
      %v2324 = vrot.slane %v2156, 5
      %v2325 = vsel %vm2258, %v2323, %v2324
      %v2326 = vrot.slane %v2324, 4
      %v2327 = vrot.slane %v2157, 5
      %v2328 = vsel %vm2258, %v2326, %v2327
      %v2329 = vrot.slane %v2158, 5
      %v2330 = vrot.slane %v2329, 4
      %v2331 = vrot.slane %v2159, 5
      %v2332 = vsel %vm2258, %v2330, %v2331
      %v2333 = vrot.slane %v2331, 4
      %v2334 = vrot.slane %v2160, 5
      %v2335 = vsel %vm2258, %v2333, %v2334
      %v2336 = vrot.slane %v2161, 5
      %v2337 = vrot.slane %v2336, 4
      %v2338 = vrot.slane %v2162, 5
      %v2339 = vsel %vm2258, %v2337, %v2338
      %v2340 = vrot.slane %v2338, 4
      %v2341 = vrot.slane %v2163, 5
      %v2342 = vsel %vm2258, %v2340, %v2341
      %v2343 = vrot.slane %v2164, 5
      %v2344 = vrot.slane %v2343, 4
      %v2345 = vrot.slane %v2165, 5
      %v2346 = vsel %vm2258, %v2344, %v2345
      %v2347 = vrot.slane %v2345, 4
      %v2348 = vrot.slane %v2166, 5
      %v2349 = vsel %vm2258, %v2347, %v2348
      %v2350 = vrot.slane %v2167, 5
      %v2351 = vrot.slane %v2350, 4
      %v2352 = vrot.slane %v2168, 5
      %v2353 = vsel %vm2258, %v2351, %v2352
      %v2354 = vrot.slane %v2352, 4
      %v2355 = vrot.slane %v2169, 5
      %v2356 = vsel %vm2258, %v2354, %v2355
      %v2357 = vrot.slane %v2170, 5
      %v2358 = vrot.slane %v2357, 4
      %v2359 = vrot.slane %v2171, 5
      %v2360 = vsel %vm2258, %v2358, %v2359
      %v2361 = vrot.slane %v2359, 4
      %v2362 = vrot.slane %v2172, 5
      %v2363 = vsel %vm2258, %v2361, %v2362
      %v2364 = vrot.slane %v2173, 5
      %v2365 = vrot.slane %v2364, 4
      %v2366 = vrot.slane %v2174, 5
      %v2367 = vsel %vm2258, %v2365, %v2366
      %v2368 = vrot.slane %v2366, 4
      %v2369 = vrot.slane %v2175, 5
      %v2370 = vsel %vm2258, %v2368, %v2369
      %s2371 = scalar_lea.vmem %s3, 128
      %v2372 = vld [vmem:[%s2371] sm:$0xf]
      %v2373 = vld [vmem:[%s2371 + $0x4] sm:$0xf]
      %v2374 = vld [vmem:[%s2371 + $0x8] sm:$0xf]
      %v2375 = vld [vmem:[%s2371 + $0xc] sm:$0xf]
      %v2376 = vld [vmem:[%s2371 + $0x10] sm:$0xf]
      %v2377 = vld [vmem:[%s2371 + $0x14] sm:$0xf]
      %v2378 = vld [vmem:[%s2371 + $0x18] sm:$0xf]
      %v2379 = vld [vmem:[%s2371 + $0x1c] sm:$0xf]
      %v2380 = vld [vmem:[%s2371 + $0x20] sm:$0xf]
      %v2381 = vld [vmem:[%s2371 + $0x24] sm:$0xf]
      %v2382 = vld [vmem:[%s2371 + $0x28] sm:$0xf]
      %v2383 = vld [vmem:[%s2371 + $0x2c] sm:$0xf]
      %v2384 = vld [vmem:[%s2371 + $0x30] sm:$0xf]
      %v2385 = vld [vmem:[%s2371 + $0x34] sm:$0xf]
      %v2386 = vld [vmem:[%s2371 + $0x38] sm:$0xf]
      %v2387 = vld [vmem:[%s2371 + $0x3c] sm:$0xf]
      %v2388 = vunpack.c.l.b16 %v2262
      %v2389 = vunpack.c.l.b16 %v2265
      %v2390 = vunpack.c.l.b16 %v2269
      %v2391 = vunpack.c.l.b16 %v2272
      %v2392 = vunpack.c.l.b16 %v2276
      %v2393 = vunpack.c.l.b16 %v2279
      %v2394 = vunpack.c.l.b16 %v2283
      %v2395 = vunpack.c.l.b16 %v2286
      %v2396 = vunpack.c.l.b16 %v2290
      %v2397 = vunpack.c.l.b16 %v2293
      %v2398 = vunpack.c.l.b16 %v2297
      %v2399 = vunpack.c.l.b16 %v2300
      %v2400 = vunpack.c.l.b16 %v2304
      %v2401 = vunpack.c.l.b16 %v2307
      %v2402 = vunpack.c.l.b16 %v2311
      %v2403 = vunpack.c.l.b16 %v2314
      %v2404 = vunpack.c.l.b16 %v2318
      %v2405 = vunpack.c.l.b16 %v2321
      %v2406 = vunpack.c.l.b16 %v2325
      %v2407 = vunpack.c.l.b16 %v2328
      %v2408 = vunpack.c.l.b16 %v2332
      %v2409 = vunpack.c.l.b16 %v2335
      %v2410 = vunpack.c.l.b16 %v2339
      %v2411 = vunpack.c.l.b16 %v2342
      %v2412 = vunpack.c.l.b16 %v2346
      %v2413 = vunpack.c.l.b16 %v2349
      %v2414 = vunpack.c.l.b16 %v2353
      %v2415 = vunpack.c.l.b16 %v2356
      %v2416 = vunpack.c.l.b16 %v2360
      %v2417 = vunpack.c.l.b16 %v2363
      %v2418 = vunpack.c.l.b16 %v2367
      %v2419 = vunpack.c.l.b16 %v2370
      %v2420 = vpack.c.b16 %v2389, %v2388
      %v2421 = vpack.c.b16 %v2391, %v2390
      %v2422 = vpack.c.b16 %v2393, %v2392
      %v2423 = vpack.c.b16 %v2395, %v2394
      %v2424 = vpack.c.b16 %v2397, %v2396
      %v2425 = vpack.c.b16 %v2399, %v2398
      %v2426 = vpack.c.b16 %v2401, %v2400
      %v2427 = vpack.c.b16 %v2403, %v2402
      %v2428 = vpack.c.b16 %v2405, %v2404
      %v2429 = vpack.c.b16 %v2407, %v2406
      %v2430 = vpack.c.b16 %v2409, %v2408
      %v2431 = vpack.c.b16 %v2411, %v2410
      %v2432 = vpack.c.b16 %v2413, %v2412
      %v2433 = vpack.c.b16 %v2415, %v2414
      %v2434 = vpack.c.b16 %v2417, %v2416
      %v2435 = vpack.c.b16 %v2419, %v2418
      %v2468 = vunpack.c.l.b16 %v2372
      %v2469 = vunpack.c.l.b16 %v2373
      %v2470 = vunpack.c.l.b16 %v2374
      %v2471 = vunpack.c.l.b16 %v2375
      %v2472 = vunpack.c.l.b16 %v2376
      %v2473 = vunpack.c.l.b16 %v2377
      %v2474 = vunpack.c.l.b16 %v2378
      %v2475 = vunpack.c.l.b16 %v2379
      %v2476 = vunpack.c.l.b16 %v2380
      %v2477 = vunpack.c.l.b16 %v2381
      %v2478 = vunpack.c.l.b16 %v2382
      %v2479 = vunpack.c.l.b16 %v2383
      %v2480 = vunpack.c.l.b16 %v2384
      %v2481 = vunpack.c.l.b16 %v2385
      %v2482 = vunpack.c.l.b16 %v2386
      %v2483 = vunpack.c.l.b16 %v2387
      %v2484 = vpack.c.b16 %v2469, %v2468
      %v2485 = vpack.c.b16 %v2471, %v2470
      %v2486 = vpack.c.b16 %v2473, %v2472
      %v2487 = vpack.c.b16 %v2475, %v2474
      %v2488 = vpack.c.b16 %v2477, %v2476
      %v2489 = vpack.c.b16 %v2479, %v2478
      %v2490 = vpack.c.b16 %v2481, %v2480
      %v2491 = vpack.c.b16 %v2483, %v2482
      %2500 = vmatpush.bf16.msra.mxu0 %v2491
      %2501 = vmatpush.bf16.msra.mxu0 %v2490
      %2502 = vmatpush.bf16.msra.mxu0 %v2489
      %2503 = vmatpush.bf16.msra.mxu0 %v2488
      %2504 = vmatpush.bf16.msra.mxu0 %v2487
      %2505 = vmatpush.bf16.msra.mxu0 %v2486
      %2506 = vmatpush.bf16.msra.mxu0 %v2485
      %2507 = vmatpush.bf16.msra.mxu0 %v2484
      %2508 = vmatmul.bf16.gmra.mxu0 %v2420
      %v2509 = vpop.f32.mrf.mxu0
      %v2510 = vadd.f32 0.0, %v2509
      %v2511 = vpop.f32.mrf.mxu0
      %v2512 = vadd.f32 0.0, %v2511
      %2513 = vmatmul.bf16.gmra.mxu0 %v2421
      %v2514 = vpop.f32.mrf.mxu0
      %v2515 = vadd.f32 0.0, %v2514
      %v2516 = vpop.f32.mrf.mxu0
      %v2517 = vadd.f32 0.0, %v2516
      %2518 = vmatmul.bf16.gmra.mxu0 %v2422
      %v2519 = vpop.f32.mrf.mxu0
      %v2520 = vadd.f32 0.0, %v2519
      %v2521 = vpop.f32.mrf.mxu0
      %v2522 = vadd.f32 0.0, %v2521
      %2523 = vmatmul.bf16.gmra.mxu0 %v2423
      %v2524 = vpop.f32.mrf.mxu0
      %v2525 = vadd.f32 0.0, %v2524
      %v2526 = vpop.f32.mrf.mxu0
      %v2527 = vadd.f32 0.0, %v2526
      %2528 = vmatmul.bf16.gmra.mxu0 %v2424
      %v2529 = vpop.f32.mrf.mxu0
      %v2530 = vadd.f32 0.0, %v2529
      %v2531 = vpop.f32.mrf.mxu0
      %v2532 = vadd.f32 0.0, %v2531
      %2533 = vmatmul.bf16.gmra.mxu0 %v2425
      %v2534 = vpop.f32.mrf.mxu0
      %v2535 = vadd.f32 0.0, %v2534
      %v2536 = vpop.f32.mrf.mxu0
      %v2537 = vadd.f32 0.0, %v2536
      %2538 = vmatmul.bf16.gmra.mxu0 %v2426
      %v2539 = vpop.f32.mrf.mxu0
      %v2540 = vadd.f32 0.0, %v2539
      %v2541 = vpop.f32.mrf.mxu0
      %v2542 = vadd.f32 0.0, %v2541
      %2543 = vmatmul.bf16.gmra.mxu0 %v2427
      %v2544 = vpop.f32.mrf.mxu0
      %v2545 = vadd.f32 0.0, %v2544
      %v2546 = vpop.f32.mrf.mxu0
      %v2547 = vadd.f32 0.0, %v2546
      %2548 = vmatmul.bf16.gmra.mxu0 %v2428
      %v2549 = vpop.f32.mrf.mxu0
      %v2550 = vadd.f32 0.0, %v2549
      %v2551 = vpop.f32.mrf.mxu0
      %v2552 = vadd.f32 0.0, %v2551
      %2553 = vmatmul.bf16.gmra.mxu0 %v2429
      %v2554 = vpop.f32.mrf.mxu0
      %v2555 = vadd.f32 0.0, %v2554
      %v2556 = vpop.f32.mrf.mxu0
      %v2557 = vadd.f32 0.0, %v2556
      %2558 = vmatmul.bf16.gmra.mxu0 %v2430
      %v2559 = vpop.f32.mrf.mxu0
      %v2560 = vadd.f32 0.0, %v2559
      %v2561 = vpop.f32.mrf.mxu0
      %v2562 = vadd.f32 0.0, %v2561
      %2563 = vmatmul.bf16.gmra.mxu0 %v2431
      %v2564 = vpop.f32.mrf.mxu0
      %v2565 = vadd.f32 0.0, %v2564
      %v2566 = vpop.f32.mrf.mxu0
      %v2567 = vadd.f32 0.0, %v2566
      %2568 = vmatmul.bf16.gmra.mxu0 %v2432
      %v2569 = vpop.f32.mrf.mxu0
      %v2570 = vadd.f32 0.0, %v2569
      %v2571 = vpop.f32.mrf.mxu0
      %v2572 = vadd.f32 0.0, %v2571
      %2573 = vmatmul.bf16.gmra.mxu0 %v2433
      %v2574 = vpop.f32.mrf.mxu0
      %v2575 = vadd.f32 0.0, %v2574
      %v2576 = vpop.f32.mrf.mxu0
      %v2577 = vadd.f32 0.0, %v2576
      %2578 = vmatmul.bf16.gmra.mxu0 %v2434
      %v2579 = vpop.f32.mrf.mxu0
      %v2580 = vadd.f32 0.0, %v2579
      %v2581 = vpop.f32.mrf.mxu0
      %v2582 = vadd.f32 0.0, %v2581
      %2583 = vmatmul.bf16.gmra.mxu0 %v2435
      %v2584 = vpop.f32.mrf.mxu0
      %v2585 = vadd.f32 0.0, %v2584
      %v2586 = vpop.f32.mrf.mxu0
      %v2587 = vadd.f32 0.0, %v2586
      %2588 = vdwg.mxu0
      %v2589 = vadd.f32 %v2176, %v2510
      %v2590 = vadd.f32 %v2177, %v2512
      %v2591 = vadd.f32 %v2178, %v2515
      %v2592 = vadd.f32 %v2179, %v2517
      %v2593 = vadd.f32 %v2180, %v2520
      %v2594 = vadd.f32 %v2181, %v2522
      %v2595 = vadd.f32 %v2182, %v2525
      %v2596 = vadd.f32 %v2183, %v2527
      %v2597 = vadd.f32 %v2184, %v2530
      %v2598 = vadd.f32 %v2185, %v2532
      %v2599 = vadd.f32 %v2186, %v2535
      %v2600 = vadd.f32 %v2187, %v2537
      %v2601 = vadd.f32 %v2188, %v2540
      %v2602 = vadd.f32 %v2189, %v2542
      %v2603 = vadd.f32 %v2190, %v2545
      %v2604 = vadd.f32 %v2191, %v2547
      %v2605 = vadd.f32 %v2192, %v2550
      %v2606 = vadd.f32 %v2193, %v2552
      %v2607 = vadd.f32 %v2194, %v2555
      %v2608 = vadd.f32 %v2195, %v2557
      %v2609 = vadd.f32 %v2196, %v2560
      %v2610 = vadd.f32 %v2197, %v2562
      %v2611 = vadd.f32 %v2198, %v2565
      %v2612 = vadd.f32 %v2199, %v2567
      %v2613 = vadd.f32 %v2200, %v2570
      %v2614 = vadd.f32 %v2201, %v2572
      %v2615 = vadd.f32 %v2202, %v2575
      %v2616 = vadd.f32 %v2203, %v2577
      %v2617 = vadd.f32 %v2204, %v2580
      %v2618 = vadd.f32 %v2205, %v2582
      %v2619 = vadd.f32 %v2206, %v2585
      %v2620 = vadd.f32 %v2207, %v2587
      %2621 = vst [vmem:[#allocation3] sm:$0xff] %v2589
      %2622 = vst [vmem:[#allocation3 + $0x8] sm:$0xff] %v2590
      %2623 = vst [vmem:[#allocation3 + $0x10] sm:$0xff] %v2591
      %2624 = vst [vmem:[#allocation3 + $0x18] sm:$0xff] %v2592
      %2625 = vst [vmem:[#allocation3 + $0x20] sm:$0xff] %v2593
      %2626 = vst [vmem:[#allocation3 + $0x28] sm:$0xff] %v2594
      %2627 = vst [vmem:[#allocation3 + $0x30] sm:$0xff] %v2595
      %2628 = vst [vmem:[#allocation3 + $0x38] sm:$0xff] %v2596
      %2629 = vst [vmem:[#allocation3 + $0x40] sm:$0xff] %v2597
      %2630 = vst [vmem:[#allocation3 + $0x48] sm:$0xff] %v2598
      %2631 = vst [vmem:[#allocation3 + $0x50] sm:$0xff] %v2599
      %2632 = vst [vmem:[#allocation3 + $0x58] sm:$0xff] %v2600
      %2633 = vst [vmem:[#allocation3 + $0x60] sm:$0xff] %v2601
      %2634 = vst [vmem:[#allocation3 + $0x68] sm:$0xff] %v2602
      %2635 = vst [vmem:[#allocation3 + $0x70] sm:$0xff] %v2603
      %2636 = vst [vmem:[#allocation3 + $0x78] sm:$0xff] %v2604
      %2637 = vst [vmem:[#allocation3 + $0x80] sm:$0xff] %v2605
      %2638 = vst [vmem:[#allocation3 + $0x88] sm:$0xff] %v2606
      %2639 = vst [vmem:[#allocation3 + $0x90] sm:$0xff] %v2607
      %2640 = vst [vmem:[#allocation3 + $0x98] sm:$0xff] %v2608
      %2641 = vst [vmem:[#allocation3 + $0xa0] sm:$0xff] %v2609
      %2642 = vst [vmem:[#allocation3 + $0xa8] sm:$0xff] %v2610
      %2643 = vst [vmem:[#allocation3 + $0xb0] sm:$0xff] %v2611
      %2644 = vst [vmem:[#allocation3 + $0xb8] sm:$0xff] %v2612
      %2645 = vst [vmem:[#allocation3 + $0xc0] sm:$0xff] %v2613
      %2646 = vst [vmem:[#allocation3 + $0xc8] sm:$0xff] %v2614
      %2647 = vst [vmem:[#allocation3 + $0xd0] sm:$0xff] %v2615
      %2648 = vst [vmem:[#allocation3 + $0xd8] sm:$0xff] %v2616
      %2649 = vst [vmem:[#allocation3 + $0xe0] sm:$0xff] %v2617
      %2650 = vst [vmem:[#allocation3 + $0xe8] sm:$0xff] %v2618
      %2651 = vst [vmem:[#allocation3 + $0xf0] sm:$0xff] %v2619
      %2652 = vst [vmem:[#allocation3 + $0xf8] sm:$0xff] %v2620
      %s2653 = sadd.s32 %s966, 1
      %s2654 = smul.u32 %s2653, 3
      %s2655 = smul.addr %s2654, 4
      %s2656 = scalar_lea.vmem [#allocation2], %s2655
      %v2657 = vld [vmem:[%s2656] sm:$0xf]
      %v2658 = vld [vmem:[%s2656 + $0x4] sm:$0xf]
      %v2659 = vld [vmem:[%s2656 + $0xc] sm:$0xf]
      %v2660 = vld [vmem:[%s2656 + $0x10] sm:$0xf]
      %v2661 = vld [vmem:[%s2656 + $0x18] sm:$0xf]
      %v2662 = vld [vmem:[%s2656 + $0x1c] sm:$0xf]
      %v2663 = vld [vmem:[%s2656 + $0x24] sm:$0xf]
      %v2664 = vld [vmem:[%s2656 + $0x28] sm:$0xf]
      %v2665 = vld [vmem:[%s2656 + $0x30] sm:$0xf]
      %v2666 = vld [vmem:[%s2656 + $0x34] sm:$0xf]
      %v2667 = vld [vmem:[%s2656 + $0x3c] sm:$0xf]
      %v2668 = vld [vmem:[%s2656 + $0x40] sm:$0xf]
      %v2669 = vld [vmem:[%s2656 + $0x48] sm:$0xf]
      %v2670 = vld [vmem:[%s2656 + $0x4c] sm:$0xf]
      %v2671 = vld [vmem:[%s2656 + $0x54] sm:$0xf]
      %v2672 = vld [vmem:[%s2656 + $0x58] sm:$0xf]
      %v2673 = vld [vmem:[%s2656 + $0x60] sm:$0xf]
      %v2674 = vld [vmem:[%s2656 + $0x64] sm:$0xf]
      %v2675 = vld [vmem:[%s2656 + $0x6c] sm:$0xf]
      %v2676 = vld [vmem:[%s2656 + $0x70] sm:$0xf]
      %v2677 = vld [vmem:[%s2656 + $0x78] sm:$0xf]
      %v2678 = vld [vmem:[%s2656 + $0x7c] sm:$0xf]
      %v2679 = vld [vmem:[%s2656 + $0x84] sm:$0xf]
      %v2680 = vld [vmem:[%s2656 + $0x88] sm:$0xf]
      %v2681 = vld [vmem:[%s2656 + $0x90] sm:$0xf]
      %v2682 = vld [vmem:[%s2656 + $0x94] sm:$0xf]
      %v2683 = vld [vmem:[%s2656 + $0x9c] sm:$0xf]
      %v2684 = vld [vmem:[%s2656 + $0xa0] sm:$0xf]
      %v2685 = vld [vmem:[%s2656 + $0xa8] sm:$0xf]
      %v2686 = vld [vmem:[%s2656 + $0xac] sm:$0xf]
      %v2687 = vld [vmem:[%s2656 + $0xb4] sm:$0xf]
      %v2688 = vld [vmem:[%s2656 + $0xb8] sm:$0xf]
      %v2689 = vld [vmem:[#allocation3] sm:$0xff]
      %v2690 = vld [vmem:[#allocation3 + $0x8] sm:$0xff]
      %v2691 = vld [vmem:[#allocation3 + $0x10] sm:$0xff]
      %v2692 = vld [vmem:[#allocation3 + $0x18] sm:$0xff]
      %v2693 = vld [vmem:[#allocation3 + $0x20] sm:$0xff]
      %v2694 = vld [vmem:[#allocation3 + $0x28] sm:$0xff]
      %v2695 = vld [vmem:[#allocation3 + $0x30] sm:$0xff]
      %v2696 = vld [vmem:[#allocation3 + $0x38] sm:$0xff]
      %v2697 = vld [vmem:[#allocation3 + $0x40] sm:$0xff]
      %v2698 = vld [vmem:[#allocation3 + $0x48] sm:$0xff]
      %v2699 = vld [vmem:[#allocation3 + $0x50] sm:$0xff]
      %v2700 = vld [vmem:[#allocation3 + $0x58] sm:$0xff]
      %v2701 = vld [vmem:[#allocation3 + $0x60] sm:$0xff]
      %v2702 = vld [vmem:[#allocation3 + $0x68] sm:$0xff]
      %v2703 = vld [vmem:[#allocation3 + $0x70] sm:$0xff]
      %v2704 = vld [vmem:[#allocation3 + $0x78] sm:$0xff]
      %v2705 = vld [vmem:[#allocation3 + $0x80] sm:$0xff]
      %v2706 = vld [vmem:[#allocation3 + $0x88] sm:$0xff]
      %v2707 = vld [vmem:[#allocation3 + $0x90] sm:$0xff]
      %v2708 = vld [vmem:[#allocation3 + $0x98] sm:$0xff]
      %v2709 = vld [vmem:[#allocation3 + $0xa0] sm:$0xff]
      %v2710 = vld [vmem:[#allocation3 + $0xa8] sm:$0xff]
      %v2711 = vld [vmem:[#allocation3 + $0xb0] sm:$0xff]
      %v2712 = vld [vmem:[#allocation3 + $0xb8] sm:$0xff]
      %v2713 = vld [vmem:[#allocation3 + $0xc0] sm:$0xff]
      %v2714 = vld [vmem:[#allocation3 + $0xc8] sm:$0xff]
      %v2715 = vld [vmem:[#allocation3 + $0xd0] sm:$0xff]
      %v2716 = vld [vmem:[#allocation3 + $0xd8] sm:$0xff]
      %v2717 = vld [vmem:[#allocation3 + $0xe0] sm:$0xff]
      %v2718 = vld [vmem:[#allocation3 + $0xe8] sm:$0xff]
      %v2719 = vld [vmem:[#allocation3 + $0xf0] sm:$0xff]
      %v2720 = vld [vmem:[#allocation3 + $0xf8] sm:$0xff]
      %s2721 = scalar_lea.vmem %s3, 192
      %v2722 = vld [vmem:[%s2721] sm:$0xf]
      %v2723 = vld [vmem:[%s2721 + $0x4] sm:$0xf]
      %v2724 = vld [vmem:[%s2721 + $0x8] sm:$0xf]
      %v2725 = vld [vmem:[%s2721 + $0xc] sm:$0xf]
      %v2726 = vld [vmem:[%s2721 + $0x10] sm:$0xf]
      %v2727 = vld [vmem:[%s2721 + $0x14] sm:$0xf]
      %v2728 = vld [vmem:[%s2721 + $0x18] sm:$0xf]
      %v2729 = vld [vmem:[%s2721 + $0x1c] sm:$0xf]
      %v2730 = vld [vmem:[%s2721 + $0x20] sm:$0xf]
      %v2731 = vld [vmem:[%s2721 + $0x24] sm:$0xf]
      %v2732 = vld [vmem:[%s2721 + $0x28] sm:$0xf]
      %v2733 = vld [vmem:[%s2721 + $0x2c] sm:$0xf]
      %v2734 = vld [vmem:[%s2721 + $0x30] sm:$0xf]
      %v2735 = vld [vmem:[%s2721 + $0x34] sm:$0xf]
      %v2736 = vld [vmem:[%s2721 + $0x38] sm:$0xf]
      %v2737 = vld [vmem:[%s2721 + $0x3c] sm:$0xf]
      %v2770 = vunpack.c.l.b16 %v2657
      %v2771 = vunpack.c.l.b16 %v2658
      %v2772 = vunpack.c.l.b16 %v2659
      %v2773 = vunpack.c.l.b16 %v2660
      %v2774 = vunpack.c.l.b16 %v2661
      %v2775 = vunpack.c.l.b16 %v2662
      %v2776 = vunpack.c.l.b16 %v2663
      %v2777 = vunpack.c.l.b16 %v2664
      %v2778 = vunpack.c.l.b16 %v2665
      %v2779 = vunpack.c.l.b16 %v2666
      %v2780 = vunpack.c.l.b16 %v2667
      %v2781 = vunpack.c.l.b16 %v2668
      %v2782 = vunpack.c.l.b16 %v2669
      %v2783 = vunpack.c.l.b16 %v2670
      %v2784 = vunpack.c.l.b16 %v2671
      %v2785 = vunpack.c.l.b16 %v2672
      %v2786 = vunpack.c.l.b16 %v2673
      %v2787 = vunpack.c.l.b16 %v2674
      %v2788 = vunpack.c.l.b16 %v2675
      %v2789 = vunpack.c.l.b16 %v2676
      %v2790 = vunpack.c.l.b16 %v2677
      %v2791 = vunpack.c.l.b16 %v2678
      %v2792 = vunpack.c.l.b16 %v2679
      %v2793 = vunpack.c.l.b16 %v2680
      %v2794 = vunpack.c.l.b16 %v2681
      %v2795 = vunpack.c.l.b16 %v2682
      %v2796 = vunpack.c.l.b16 %v2683
      %v2797 = vunpack.c.l.b16 %v2684
      %v2798 = vunpack.c.l.b16 %v2685
      %v2799 = vunpack.c.l.b16 %v2686
      %v2800 = vunpack.c.l.b16 %v2687
      %v2801 = vunpack.c.l.b16 %v2688
      %v2802 = vpack.c.b16 %v2771, %v2770
      %v2803 = vpack.c.b16 %v2773, %v2772
      %v2804 = vpack.c.b16 %v2775, %v2774
      %v2805 = vpack.c.b16 %v2777, %v2776
      %v2806 = vpack.c.b16 %v2779, %v2778
      %v2807 = vpack.c.b16 %v2781, %v2780
      %v2808 = vpack.c.b16 %v2783, %v2782
      %v2809 = vpack.c.b16 %v2785, %v2784
      %v2810 = vpack.c.b16 %v2787, %v2786
      %v2811 = vpack.c.b16 %v2789, %v2788
      %v2812 = vpack.c.b16 %v2791, %v2790
      %v2813 = vpack.c.b16 %v2793, %v2792
      %v2814 = vpack.c.b16 %v2795, %v2794
      %v2815 = vpack.c.b16 %v2797, %v2796
      %v2816 = vpack.c.b16 %v2799, %v2798
      %v2817 = vpack.c.b16 %v2801, %v2800
      %v2850 = vunpack.c.l.b16 %v2722
      %v2851 = vunpack.c.l.b16 %v2723
      %v2852 = vunpack.c.l.b16 %v2724
      %v2853 = vunpack.c.l.b16 %v2725
      %v2854 = vunpack.c.l.b16 %v2726
      %v2855 = vunpack.c.l.b16 %v2727
      %v2856 = vunpack.c.l.b16 %v2728
      %v2857 = vunpack.c.l.b16 %v2729
      %v2858 = vunpack.c.l.b16 %v2730
      %v2859 = vunpack.c.l.b16 %v2731
      %v2860 = vunpack.c.l.b16 %v2732
      %v2861 = vunpack.c.l.b16 %v2733
      %v2862 = vunpack.c.l.b16 %v2734
      %v2863 = vunpack.c.l.b16 %v2735
      %v2864 = vunpack.c.l.b16 %v2736
      %v2865 = vunpack.c.l.b16 %v2737
      %v2866 = vpack.c.b16 %v2851, %v2850
      %v2867 = vpack.c.b16 %v2853, %v2852
      %v2868 = vpack.c.b16 %v2855, %v2854
      %v2869 = vpack.c.b16 %v2857, %v2856
      %v2870 = vpack.c.b16 %v2859, %v2858
      %v2871 = vpack.c.b16 %v2861, %v2860
      %v2872 = vpack.c.b16 %v2863, %v2862
      %v2873 = vpack.c.b16 %v2865, %v2864
      %2882 = vmatpush.bf16.msra.mxu0 %v2873
      %2883 = vmatpush.bf16.msra.mxu0 %v2872
      %2884 = vmatpush.bf16.msra.mxu0 %v2871
      %2885 = vmatpush.bf16.msra.mxu0 %v2870
      %2886 = vmatpush.bf16.msra.mxu0 %v2869
      %2887 = vmatpush.bf16.msra.mxu0 %v2868
      %2888 = vmatpush.bf16.msra.mxu0 %v2867
      %2889 = vmatpush.bf16.msra.mxu0 %v2866
      %2890 = vmatmul.bf16.gmra.mxu0 %v2802
      %v2891 = vpop.f32.mrf.mxu0
      %v2892 = vadd.f32 0.0, %v2891
      %v2893 = vpop.f32.mrf.mxu0
      %v2894 = vadd.f32 0.0, %v2893
      %2895 = vmatmul.bf16.gmra.mxu0 %v2803
      %v2896 = vpop.f32.mrf.mxu0
      %v2897 = vadd.f32 0.0, %v2896
      %v2898 = vpop.f32.mrf.mxu0
      %v2899 = vadd.f32 0.0, %v2898
      %2900 = vmatmul.bf16.gmra.mxu0 %v2804
      %v2901 = vpop.f32.mrf.mxu0
      %v2902 = vadd.f32 0.0, %v2901
      %v2903 = vpop.f32.mrf.mxu0
      %v2904 = vadd.f32 0.0, %v2903
      %2905 = vmatmul.bf16.gmra.mxu0 %v2805
      %v2906 = vpop.f32.mrf.mxu0
      %v2907 = vadd.f32 0.0, %v2906
      %v2908 = vpop.f32.mrf.mxu0
      %v2909 = vadd.f32 0.0, %v2908
      %2910 = vmatmul.bf16.gmra.mxu0 %v2806
      %v2911 = vpop.f32.mrf.mxu0
      %v2912 = vadd.f32 0.0, %v2911
      %v2913 = vpop.f32.mrf.mxu0
      %v2914 = vadd.f32 0.0, %v2913
      %2915 = vmatmul.bf16.gmra.mxu0 %v2807
      %v2916 = vpop.f32.mrf.mxu0
      %v2917 = vadd.f32 0.0, %v2916
      %v2918 = vpop.f32.mrf.mxu0
      %v2919 = vadd.f32 0.0, %v2918
      %2920 = vmatmul.bf16.gmra.mxu0 %v2808
      %v2921 = vpop.f32.mrf.mxu0
      %v2922 = vadd.f32 0.0, %v2921
      %v2923 = vpop.f32.mrf.mxu0
      %v2924 = vadd.f32 0.0, %v2923
      %2925 = vmatmul.bf16.gmra.mxu0 %v2809
      %v2926 = vpop.f32.mrf.mxu0
      %v2927 = vadd.f32 0.0, %v2926
      %v2928 = vpop.f32.mrf.mxu0
      %v2929 = vadd.f32 0.0, %v2928
      %2930 = vmatmul.bf16.gmra.mxu0 %v2810
      %v2931 = vpop.f32.mrf.mxu0
      %v2932 = vadd.f32 0.0, %v2931
      %v2933 = vpop.f32.mrf.mxu0
      %v2934 = vadd.f32 0.0, %v2933
      %2935 = vmatmul.bf16.gmra.mxu0 %v2811
      %v2936 = vpop.f32.mrf.mxu0
      %v2937 = vadd.f32 0.0, %v2936
      %v2938 = vpop.f32.mrf.mxu0
      %v2939 = vadd.f32 0.0, %v2938
      %2940 = vmatmul.bf16.gmra.mxu0 %v2812
      %v2941 = vpop.f32.mrf.mxu0
      %v2942 = vadd.f32 0.0, %v2941
      %v2943 = vpop.f32.mrf.mxu0
      %v2944 = vadd.f32 0.0, %v2943
      %2945 = vmatmul.bf16.gmra.mxu0 %v2813
      %v2946 = vpop.f32.mrf.mxu0
      %v2947 = vadd.f32 0.0, %v2946
      %v2948 = vpop.f32.mrf.mxu0
      %v2949 = vadd.f32 0.0, %v2948
      %2950 = vmatmul.bf16.gmra.mxu0 %v2814
      %v2951 = vpop.f32.mrf.mxu0
      %v2952 = vadd.f32 0.0, %v2951
      %v2953 = vpop.f32.mrf.mxu0
      %v2954 = vadd.f32 0.0, %v2953
      %2955 = vmatmul.bf16.gmra.mxu0 %v2815
      %v2956 = vpop.f32.mrf.mxu0
      %v2957 = vadd.f32 0.0, %v2956
      %v2958 = vpop.f32.mrf.mxu0
      %v2959 = vadd.f32 0.0, %v2958
      %2960 = vmatmul.bf16.gmra.mxu0 %v2816
      %v2961 = vpop.f32.mrf.mxu0
      %v2962 = vadd.f32 0.0, %v2961
      %v2963 = vpop.f32.mrf.mxu0
      %v2964 = vadd.f32 0.0, %v2963
      %2965 = vmatmul.bf16.gmra.mxu0 %v2817
      %v2966 = vpop.f32.mrf.mxu0
      %v2967 = vadd.f32 0.0, %v2966
      %v2968 = vpop.f32.mrf.mxu0
      %v2969 = vadd.f32 0.0, %v2968
      %2970 = vdwg.mxu0
      %v2971 = vadd.f32 %v2689, %v2892
      %v2972 = vadd.f32 %v2690, %v2894
      %v2973 = vadd.f32 %v2691, %v2897
      %v2974 = vadd.f32 %v2692, %v2899
      %v2975 = vadd.f32 %v2693, %v2902
      %v2976 = vadd.f32 %v2694, %v2904
      %v2977 = vadd.f32 %v2695, %v2907
      %v2978 = vadd.f32 %v2696, %v2909
      %v2979 = vadd.f32 %v2697, %v2912
      %v2980 = vadd.f32 %v2698, %v2914
      %v2981 = vadd.f32 %v2699, %v2917
      %v2982 = vadd.f32 %v2700, %v2919
      %v2983 = vadd.f32 %v2701, %v2922
      %v2984 = vadd.f32 %v2702, %v2924
      %v2985 = vadd.f32 %v2703, %v2927
      %v2986 = vadd.f32 %v2704, %v2929
      %v2987 = vadd.f32 %v2705, %v2932
      %v2988 = vadd.f32 %v2706, %v2934
      %v2989 = vadd.f32 %v2707, %v2937
      %v2990 = vadd.f32 %v2708, %v2939
      %v2991 = vadd.f32 %v2709, %v2942
      %v2992 = vadd.f32 %v2710, %v2944
      %v2993 = vadd.f32 %v2711, %v2947
      %v2994 = vadd.f32 %v2712, %v2949
      %v2995 = vadd.f32 %v2713, %v2952
      %v2996 = vadd.f32 %v2714, %v2954
      %v2997 = vadd.f32 %v2715, %v2957
      %v2998 = vadd.f32 %v2716, %v2959
      %v2999 = vadd.f32 %v2717, %v2962
      %v3000 = vadd.f32 %v2718, %v2964
      %v3001 = vadd.f32 %v2719, %v2967
      %v3002 = vadd.f32 %v2720, %v2969
      %3003 = vst [vmem:[#allocation3] sm:$0xff] %v2971
      %3004 = vst [vmem:[#allocation3 + $0x8] sm:$0xff] %v2972
      %3005 = vst [vmem:[#allocation3 + $0x10] sm:$0xff] %v2973
      %3006 = vst [vmem:[#allocation3 + $0x18] sm:$0xff] %v2974
      %3007 = vst [vmem:[#allocation3 + $0x20] sm:$0xff] %v2975
      %3008 = vst [vmem:[#allocation3 + $0x28] sm:$0xff] %v2976
      %3009 = vst [vmem:[#allocation3 + $0x30] sm:$0xff] %v2977
      %3010 = vst [vmem:[#allocation3 + $0x38] sm:$0xff] %v2978
      %3011 = vst [vmem:[#allocation3 + $0x40] sm:$0xff] %v2979
      %3012 = vst [vmem:[#allocation3 + $0x48] sm:$0xff] %v2980
      %3013 = vst [vmem:[#allocation3 + $0x50] sm:$0xff] %v2981
      %3014 = vst [vmem:[#allocation3 + $0x58] sm:$0xff] %v2982
      %3015 = vst [vmem:[#allocation3 + $0x60] sm:$0xff] %v2983
      %3016 = vst [vmem:[#allocation3 + $0x68] sm:$0xff] %v2984
      %3017 = vst [vmem:[#allocation3 + $0x70] sm:$0xff] %v2985
      %3018 = vst [vmem:[#allocation3 + $0x78] sm:$0xff] %v2986
      %3019 = vst [vmem:[#allocation3 + $0x80] sm:$0xff] %v2987
      %3020 = vst [vmem:[#allocation3 + $0x88] sm:$0xff] %v2988
      %3021 = vst [vmem:[#allocation3 + $0x90] sm:$0xff] %v2989
      %3022 = vst [vmem:[#allocation3 + $0x98] sm:$0xff] %v2990
      %3023 = vst [vmem:[#allocation3 + $0xa0] sm:$0xff] %v2991
      %3024 = vst [vmem:[#allocation3 + $0xa8] sm:$0xff] %v2992
      %3025 = vst [vmem:[#allocation3 + $0xb0] sm:$0xff] %v2993
      %3026 = vst [vmem:[#allocation3 + $0xb8] sm:$0xff] %v2994
      %3027 = vst [vmem:[#allocation3 + $0xc0] sm:$0xff] %v2995
      %3028 = vst [vmem:[#allocation3 + $0xc8] sm:$0xff] %v2996
      %3029 = vst [vmem:[#allocation3 + $0xd0] sm:$0xff] %v2997
      %3030 = vst [vmem:[#allocation3 + $0xd8] sm:$0xff] %v2998
      %3031 = vst [vmem:[#allocation3 + $0xe0] sm:$0xff] %v2999
      %3032 = vst [vmem:[#allocation3 + $0xe8] sm:$0xff] %v3000
      %3033 = vst [vmem:[#allocation3 + $0xf0] sm:$0xff] %v3001
      %3034 = vst [vmem:[#allocation3 + $0xf8] sm:$0xff] %v3002
      %v3035 = vld [vmem:[%s2656] sm:$0xf]
      %v3036 = vld [vmem:[%s2656 + $0x4] sm:$0xf]
      %v3037 = vld [vmem:[%s2656 + $0x8] sm:$0x1]
      %v3038 = vld [vmem:[%s2656 + $0xc] sm:$0xf]
      %v3039 = vld [vmem:[%s2656 + $0x10] sm:$0xf]
      %v3040 = vld [vmem:[%s2656 + $0x14] sm:$0x1]
      %v3041 = vld [vmem:[%s2656 + $0x18] sm:$0xf]
      %v3042 = vld [vmem:[%s2656 + $0x1c] sm:$0xf]
      %v3043 = vld [vmem:[%s2656 + $0x20] sm:$0x1]
      %v3044 = vld [vmem:[%s2656 + $0x24] sm:$0xf]
      %v3045 = vld [vmem:[%s2656 + $0x28] sm:$0xf]
      %v3046 = vld [vmem:[%s2656 + $0x2c] sm:$0x1]
      %v3047 = vld [vmem:[%s2656 + $0x30] sm:$0xf]
      %v3048 = vld [vmem:[%s2656 + $0x34] sm:$0xf]
      %v3049 = vld [vmem:[%s2656 + $0x38] sm:$0x1]
      %v3050 = vld [vmem:[%s2656 + $0x3c] sm:$0xf]
      %v3051 = vld [vmem:[%s2656 + $0x40] sm:$0xf]
      %v3052 = vld [vmem:[%s2656 + $0x44] sm:$0x1]
      %v3053 = vld [vmem:[%s2656 + $0x48] sm:$0xf]
      %v3054 = vld [vmem:[%s2656 + $0x4c] sm:$0xf]
      %v3055 = vld [vmem:[%s2656 + $0x50] sm:$0x1]
      %v3056 = vld [vmem:[%s2656 + $0x54] sm:$0xf]
      %v3057 = vld [vmem:[%s2656 + $0x58] sm:$0xf]
      %v3058 = vld [vmem:[%s2656 + $0x5c] sm:$0x1]
      %v3059 = vld [vmem:[%s2656 + $0x60] sm:$0xf]
      %v3060 = vld [vmem:[%s2656 + $0x64] sm:$0xf]
      %v3061 = vld [vmem:[%s2656 + $0x68] sm:$0x1]
      %v3062 = vld [vmem:[%s2656 + $0x6c] sm:$0xf]
      %v3063 = vld [vmem:[%s2656 + $0x70] sm:$0xf]
      %v3064 = vld [vmem:[%s2656 + $0x74] sm:$0x1]
      %v3065 = vld [vmem:[%s2656 + $0x78] sm:$0xf]
      %v3066 = vld [vmem:[%s2656 + $0x7c] sm:$0xf]
      %v3067 = vld [vmem:[%s2656 + $0x80] sm:$0x1]
      %v3068 = vld [vmem:[%s2656 + $0x84] sm:$0xf]
      %v3069 = vld [vmem:[%s2656 + $0x88] sm:$0xf]
      %v3070 = vld [vmem:[%s2656 + $0x8c] sm:$0x1]
      %v3071 = vld [vmem:[%s2656 + $0x90] sm:$0xf]
      %v3072 = vld [vmem:[%s2656 + $0x94] sm:$0xf]
      %v3073 = vld [vmem:[%s2656 + $0x98] sm:$0x1]
      %v3074 = vld [vmem:[%s2656 + $0x9c] sm:$0xf]
      %v3075 = vld [vmem:[%s2656 + $0xa0] sm:$0xf]
      %v3076 = vld [vmem:[%s2656 + $0xa4] sm:$0x1]
      %v3077 = vld [vmem:[%s2656 + $0xa8] sm:$0xf]
      %v3078 = vld [vmem:[%s2656 + $0xac] sm:$0xf]
      %v3079 = vld [vmem:[%s2656 + $0xb0] sm:$0x1]
      %v3080 = vld [vmem:[%s2656 + $0xb4] sm:$0xf]
      %v3081 = vld [vmem:[%s2656 + $0xb8] sm:$0xf]
      %v3082 = vld [vmem:[%s2656 + $0xbc] sm:$0x1]
      %v3083 = vld [vmem:[#allocation3] sm:$0xff]
      %v3084 = vld [vmem:[#allocation3 + $0x8] sm:$0xff]
      %v3085 = vld [vmem:[#allocation3 + $0x10] sm:$0xff]
      %v3086 = vld [vmem:[#allocation3 + $0x18] sm:$0xff]
      %v3087 = vld [vmem:[#allocation3 + $0x20] sm:$0xff]
      %v3088 = vld [vmem:[#allocation3 + $0x28] sm:$0xff]
      %v3089 = vld [vmem:[#allocation3 + $0x30] sm:$0xff]
      %v3090 = vld [vmem:[#allocation3 + $0x38] sm:$0xff]
      %v3091 = vld [vmem:[#allocation3 + $0x40] sm:$0xff]
      %v3092 = vld [vmem:[#allocation3 + $0x48] sm:$0xff]
      %v3093 = vld [vmem:[#allocation3 + $0x50] sm:$0xff]
      %v3094 = vld [vmem:[#allocation3 + $0x58] sm:$0xff]
      %v3095 = vld [vmem:[#allocation3 + $0x60] sm:$0xff]
      %v3096 = vld [vmem:[#allocation3 + $0x68] sm:$0xff]
      %v3097 = vld [vmem:[#allocation3 + $0x70] sm:$0xff]
      %v3098 = vld [vmem:[#allocation3 + $0x78] sm:$0xff]
      %v3099 = vld [vmem:[#allocation3 + $0x80] sm:$0xff]
      %v3100 = vld [vmem:[#allocation3 + $0x88] sm:$0xff]
      %v3101 = vld [vmem:[#allocation3 + $0x90] sm:$0xff]
      %v3102 = vld [vmem:[#allocation3 + $0x98] sm:$0xff]
      %v3103 = vld [vmem:[#allocation3 + $0xa0] sm:$0xff]
      %v3104 = vld [vmem:[#allocation3 + $0xa8] sm:$0xff]
      %v3105 = vld [vmem:[#allocation3 + $0xb0] sm:$0xff]
      %v3106 = vld [vmem:[#allocation3 + $0xb8] sm:$0xff]
      %v3107 = vld [vmem:[#allocation3 + $0xc0] sm:$0xff]
      %v3108 = vld [vmem:[#allocation3 + $0xc8] sm:$0xff]
      %v3109 = vld [vmem:[#allocation3 + $0xd0] sm:$0xff]
      %v3110 = vld [vmem:[#allocation3 + $0xd8] sm:$0xff]
      %v3111 = vld [vmem:[#allocation3 + $0xe0] sm:$0xff]
      %v3112 = vld [vmem:[#allocation3 + $0xe8] sm:$0xff]
      %v3113 = vld [vmem:[#allocation3 + $0xf0] sm:$0xff]
      %v3114 = vld [vmem:[#allocation3 + $0xf8] sm:$0xff]
      %v3116 = vshrl.u32 %v3035, 16
      %v3118 = vrot.slane %v3116, 4
      %v3119 = vshll.u32 %v3035, 16
      %v3121 = vrot.slane %v3119, 5
      %v3122 = vor.u32 %v3118, %v3121
      %v3123 = vrot.slane %v3122, 4
      %v3125 = vshll.u32 %v3036, 16
      %v3127 = vrot.slane %v3125, 5
      %v3128 = vsel %vm1461, %v3123, %v3127
      %v3129 = vshrl.u32 %v3036, 16
      %v3131 = vrot.slane %v3129, 4
      %v3132 = vor.u32 %v3131, %v3127
      %v3133 = vrot.slane %v3132, 4
      %v3135 = vshll.u32 %v3037, 16
      %v3137 = vrot.slane %v3135, 5
      %v3138 = vsel %vm1461, %v3133, %v3137
      %v3140 = vshrl.u32 %v3038, 16
      %v3142 = vrot.slane %v3140, 4
      %v3143 = vshll.u32 %v3038, 16
      %v3145 = vrot.slane %v3143, 5
      %v3146 = vor.u32 %v3142, %v3145
      %v3147 = vrot.slane %v3146, 4
      %v3149 = vshll.u32 %v3039, 16
      %v3151 = vrot.slane %v3149, 5
      %v3152 = vsel %vm1461, %v3147, %v3151
      %v3153 = vshrl.u32 %v3039, 16
      %v3155 = vrot.slane %v3153, 4
      %v3156 = vor.u32 %v3155, %v3151
      %v3157 = vrot.slane %v3156, 4
      %v3159 = vshll.u32 %v3040, 16
      %v3161 = vrot.slane %v3159, 5
      %v3162 = vsel %vm1461, %v3157, %v3161
      %v3164 = vshrl.u32 %v3041, 16
      %v3166 = vrot.slane %v3164, 4
      %v3167 = vshll.u32 %v3041, 16
      %v3169 = vrot.slane %v3167, 5
      %v3170 = vor.u32 %v3166, %v3169
      %v3171 = vrot.slane %v3170, 4
      %v3173 = vshll.u32 %v3042, 16
      %v3175 = vrot.slane %v3173, 5
      %v3176 = vsel %vm1461, %v3171, %v3175
      %v3177 = vshrl.u32 %v3042, 16
      %v3179 = vrot.slane %v3177, 4
      %v3180 = vor.u32 %v3179, %v3175
      %v3181 = vrot.slane %v3180, 4
      %v3183 = vshll.u32 %v3043, 16
      %v3185 = vrot.slane %v3183, 5
      %v3186 = vsel %vm1461, %v3181, %v3185
      %v3188 = vshrl.u32 %v3044, 16
      %v3190 = vrot.slane %v3188, 4
      %v3191 = vshll.u32 %v3044, 16
      %v3193 = vrot.slane %v3191, 5
      %v3194 = vor.u32 %v3190, %v3193
      %v3195 = vrot.slane %v3194, 4
      %v3197 = vshll.u32 %v3045, 16
      %v3199 = vrot.slane %v3197, 5
      %v3200 = vsel %vm1461, %v3195, %v3199
      %v3201 = vshrl.u32 %v3045, 16
      %v3203 = vrot.slane %v3201, 4
      %v3204 = vor.u32 %v3203, %v3199
      %v3205 = vrot.slane %v3204, 4
      %v3207 = vshll.u32 %v3046, 16
      %v3209 = vrot.slane %v3207, 5
      %v3210 = vsel %vm1461, %v3205, %v3209
      %v3212 = vshrl.u32 %v3047, 16
      %v3214 = vrot.slane %v3212, 4
      %v3215 = vshll.u32 %v3047, 16
      %v3217 = vrot.slane %v3215, 5
      %v3218 = vor.u32 %v3214, %v3217
      %v3219 = vrot.slane %v3218, 4
      %v3221 = vshll.u32 %v3048, 16
      %v3223 = vrot.slane %v3221, 5
      %v3224 = vsel %vm1461, %v3219, %v3223
      %v3225 = vshrl.u32 %v3048, 16
      %v3227 = vrot.slane %v3225, 4
      %v3228 = vor.u32 %v3227, %v3223
      %v3229 = vrot.slane %v3228, 4
      %v3231 = vshll.u32 %v3049, 16
      %v3233 = vrot.slane %v3231, 5
      %v3234 = vsel %vm1461, %v3229, %v3233
      %v3236 = vshrl.u32 %v3050, 16
      %v3238 = vrot.slane %v3236, 4
      %v3239 = vshll.u32 %v3050, 16
      %v3241 = vrot.slane %v3239, 5
      %v3242 = vor.u32 %v3238, %v3241
      %v3243 = vrot.slane %v3242, 4
      %v3245 = vshll.u32 %v3051, 16
      %v3247 = vrot.slane %v3245, 5
      %v3248 = vsel %vm1461, %v3243, %v3247
      %v3249 = vshrl.u32 %v3051, 16
      %v3251 = vrot.slane %v3249, 4
      %v3252 = vor.u32 %v3251, %v3247
      %v3253 = vrot.slane %v3252, 4
      %v3255 = vshll.u32 %v3052, 16
      %v3257 = vrot.slane %v3255, 5
      %v3258 = vsel %vm1461, %v3253, %v3257
      %v3260 = vshrl.u32 %v3053, 16
      %v3262 = vrot.slane %v3260, 4
      %v3263 = vshll.u32 %v3053, 16
      %v3265 = vrot.slane %v3263, 5
      %v3266 = vor.u32 %v3262, %v3265
      %v3267 = vrot.slane %v3266, 4
      %v3269 = vshll.u32 %v3054, 16
      %v3271 = vrot.slane %v3269, 5
      %v3272 = vsel %vm1461, %v3267, %v3271
      %v3273 = vshrl.u32 %v3054, 16
      %v3275 = vrot.slane %v3273, 4
      %v3276 = vor.u32 %v3275, %v3271
      %v3277 = vrot.slane %v3276, 4
      %v3279 = vshll.u32 %v3055, 16
      %v3281 = vrot.slane %v3279, 5
      %v3282 = vsel %vm1461, %v3277, %v3281
      %v3284 = vshrl.u32 %v3056, 16
      %v3286 = vrot.slane %v3284, 4
      %v3287 = vshll.u32 %v3056, 16
      %v3289 = vrot.slane %v3287, 5
      %v3290 = vor.u32 %v3286, %v3289
      %v3291 = vrot.slane %v3290, 4
      %v3293 = vshll.u32 %v3057, 16
      %v3295 = vrot.slane %v3293, 5
      %v3296 = vsel %vm1461, %v3291, %v3295
      %v3297 = vshrl.u32 %v3057, 16
      %v3299 = vrot.slane %v3297, 4
      %v3300 = vor.u32 %v3299, %v3295
      %v3301 = vrot.slane %v3300, 4
      %v3303 = vshll.u32 %v3058, 16
      %v3305 = vrot.slane %v3303, 5
      %v3306 = vsel %vm1461, %v3301, %v3305
      %v3308 = vshrl.u32 %v3059, 16
      %v3310 = vrot.slane %v3308, 4
      %v3311 = vshll.u32 %v3059, 16
      %v3313 = vrot.slane %v3311, 5
      %v3314 = vor.u32 %v3310, %v3313
      %v3315 = vrot.slane %v3314, 4
      %v3317 = vshll.u32 %v3060, 16
      %v3319 = vrot.slane %v3317, 5
      %v3320 = vsel %vm1461, %v3315, %v3319
      %v3321 = vshrl.u32 %v3060, 16
      %v3323 = vrot.slane %v3321, 4
      %v3324 = vor.u32 %v3323, %v3319
      %v3325 = vrot.slane %v3324, 4
      %v3327 = vshll.u32 %v3061, 16
      %v3329 = vrot.slane %v3327, 5
      %v3330 = vsel %vm1461, %v3325, %v3329
      %v3332 = vshrl.u32 %v3062, 16
      %v3334 = vrot.slane %v3332, 4
      %v3335 = vshll.u32 %v3062, 16
      %v3337 = vrot.slane %v3335, 5
      %v3338 = vor.u32 %v3334, %v3337
      %v3339 = vrot.slane %v3338, 4
      %v3341 = vshll.u32 %v3063, 16
      %v3343 = vrot.slane %v3341, 5
      %v3344 = vsel %vm1461, %v3339, %v3343
      %v3345 = vshrl.u32 %v3063, 16
      %v3347 = vrot.slane %v3345, 4
      %v3348 = vor.u32 %v3347, %v3343
      %v3349 = vrot.slane %v3348, 4
      %v3351 = vshll.u32 %v3064, 16
      %v3353 = vrot.slane %v3351, 5
      %v3354 = vsel %vm1461, %v3349, %v3353
      %v3356 = vshrl.u32 %v3065, 16
      %v3358 = vrot.slane %v3356, 4
      %v3359 = vshll.u32 %v3065, 16
      %v3361 = vrot.slane %v3359, 5
      %v3362 = vor.u32 %v3358, %v3361
      %v3363 = vrot.slane %v3362, 4
      %v3365 = vshll.u32 %v3066, 16
      %v3367 = vrot.slane %v3365, 5
      %v3368 = vsel %vm1461, %v3363, %v3367
      %v3369 = vshrl.u32 %v3066, 16
      %v3371 = vrot.slane %v3369, 4
      %v3372 = vor.u32 %v3371, %v3367
      %v3373 = vrot.slane %v3372, 4
      %v3375 = vshll.u32 %v3067, 16
      %v3377 = vrot.slane %v3375, 5
      %v3378 = vsel %vm1461, %v3373, %v3377
      %v3380 = vshrl.u32 %v3068, 16
      %v3382 = vrot.slane %v3380, 4
      %v3383 = vshll.u32 %v3068, 16
      %v3385 = vrot.slane %v3383, 5
      %v3386 = vor.u32 %v3382, %v3385
      %v3387 = vrot.slane %v3386, 4
      %v3389 = vshll.u32 %v3069, 16
      %v3391 = vrot.slane %v3389, 5
      %v3392 = vsel %vm1461, %v3387, %v3391
      %v3393 = vshrl.u32 %v3069, 16
      %v3395 = vrot.slane %v3393, 4
      %v3396 = vor.u32 %v3395, %v3391
      %v3397 = vrot.slane %v3396, 4
      %v3399 = vshll.u32 %v3070, 16
      %v3401 = vrot.slane %v3399, 5
      %v3402 = vsel %vm1461, %v3397, %v3401
      %v3404 = vshrl.u32 %v3071, 16
      %v3406 = vrot.slane %v3404, 4
      %v3407 = vshll.u32 %v3071, 16
      %v3409 = vrot.slane %v3407, 5
      %v3410 = vor.u32 %v3406, %v3409
      %v3411 = vrot.slane %v3410, 4
      %v3413 = vshll.u32 %v3072, 16
      %v3415 = vrot.slane %v3413, 5
      %v3416 = vsel %vm1461, %v3411, %v3415
      %v3417 = vshrl.u32 %v3072, 16
      %v3419 = vrot.slane %v3417, 4
      %v3420 = vor.u32 %v3419, %v3415
      %v3421 = vrot.slane %v3420, 4
      %v3423 = vshll.u32 %v3073, 16
      %v3425 = vrot.slane %v3423, 5
      %v3426 = vsel %vm1461, %v3421, %v3425
      %v3428 = vshrl.u32 %v3074, 16
      %v3430 = vrot.slane %v3428, 4
      %v3431 = vshll.u32 %v3074, 16
      %v3433 = vrot.slane %v3431, 5
      %v3434 = vor.u32 %v3430, %v3433
      %v3435 = vrot.slane %v3434, 4
      %v3437 = vshll.u32 %v3075, 16
      %v3439 = vrot.slane %v3437, 5
      %v3440 = vsel %vm1461, %v3435, %v3439
      %v3441 = vshrl.u32 %v3075, 16
      %v3443 = vrot.slane %v3441, 4
      %v3444 = vor.u32 %v3443, %v3439
      %v3445 = vrot.slane %v3444, 4
      %v3447 = vshll.u32 %v3076, 16
      %v3449 = vrot.slane %v3447, 5
      %v3450 = vsel %vm1461, %v3445, %v3449
      %v3452 = vshrl.u32 %v3077, 16
      %v3454 = vrot.slane %v3452, 4
      %v3455 = vshll.u32 %v3077, 16
      %v3457 = vrot.slane %v3455, 5
      %v3458 = vor.u32 %v3454, %v3457
      %v3459 = vrot.slane %v3458, 4
      %v3461 = vshll.u32 %v3078, 16
      %v3463 = vrot.slane %v3461, 5
      %v3464 = vsel %vm1461, %v3459, %v3463
      %v3465 = vshrl.u32 %v3078, 16
      %v3467 = vrot.slane %v3465, 4
      %v3468 = vor.u32 %v3467, %v3463
      %v3469 = vrot.slane %v3468, 4
      %v3471 = vshll.u32 %v3079, 16
      %v3473 = vrot.slane %v3471, 5
      %v3474 = vsel %vm1461, %v3469, %v3473
      %v3476 = vshrl.u32 %v3080, 16
      %v3478 = vrot.slane %v3476, 4
      %v3479 = vshll.u32 %v3080, 16
      %v3481 = vrot.slane %v3479, 5
      %v3482 = vor.u32 %v3478, %v3481
      %v3483 = vrot.slane %v3482, 4
      %v3485 = vshll.u32 %v3081, 16
      %v3487 = vrot.slane %v3485, 5
      %v3488 = vsel %vm1461, %v3483, %v3487
      %v3489 = vshrl.u32 %v3081, 16
      %v3491 = vrot.slane %v3489, 4
      %v3492 = vor.u32 %v3491, %v3487
      %v3493 = vrot.slane %v3492, 4
      %v3495 = vshll.u32 %v3082, 16
      %v3497 = vrot.slane %v3495, 5
      %v3498 = vsel %vm1461, %v3493, %v3497
      %s3499 = scalar_lea.vmem %s3, 256
      %v3500 = vld [vmem:[%s3499] sm:$0xf]
      %v3501 = vld [vmem:[%s3499 + $0x4] sm:$0xf]
      %v3502 = vld [vmem:[%s3499 + $0x8] sm:$0xf]
      %v3503 = vld [vmem:[%s3499 + $0xc] sm:$0xf]
      %v3504 = vld [vmem:[%s3499 + $0x10] sm:$0xf]
      %v3505 = vld [vmem:[%s3499 + $0x14] sm:$0xf]
      %v3506 = vld [vmem:[%s3499 + $0x18] sm:$0xf]
      %v3507 = vld [vmem:[%s3499 + $0x1c] sm:$0xf]
      %v3508 = vld [vmem:[%s3499 + $0x20] sm:$0xf]
      %v3509 = vld [vmem:[%s3499 + $0x24] sm:$0xf]
      %v3510 = vld [vmem:[%s3499 + $0x28] sm:$0xf]
      %v3511 = vld [vmem:[%s3499 + $0x2c] sm:$0xf]
      %v3512 = vld [vmem:[%s3499 + $0x30] sm:$0xf]
      %v3513 = vld [vmem:[%s3499 + $0x34] sm:$0xf]
      %v3514 = vld [vmem:[%s3499 + $0x38] sm:$0xf]
      %v3515 = vld [vmem:[%s3499 + $0x3c] sm:$0xf]
      %v3516 = vunpack.c.l.b16 %v3128
      %v3517 = vunpack.c.l.b16 %v3138
      %v3518 = vunpack.c.l.b16 %v3152
      %v3519 = vunpack.c.l.b16 %v3162
      %v3520 = vunpack.c.l.b16 %v3176
      %v3521 = vunpack.c.l.b16 %v3186
      %v3522 = vunpack.c.l.b16 %v3200
      %v3523 = vunpack.c.l.b16 %v3210
      %v3524 = vunpack.c.l.b16 %v3224
      %v3525 = vunpack.c.l.b16 %v3234
      %v3526 = vunpack.c.l.b16 %v3248
      %v3527 = vunpack.c.l.b16 %v3258
      %v3528 = vunpack.c.l.b16 %v3272
      %v3529 = vunpack.c.l.b16 %v3282
      %v3530 = vunpack.c.l.b16 %v3296
      %v3531 = vunpack.c.l.b16 %v3306
      %v3532 = vunpack.c.l.b16 %v3320
      %v3533 = vunpack.c.l.b16 %v3330
      %v3534 = vunpack.c.l.b16 %v3344
      %v3535 = vunpack.c.l.b16 %v3354
      %v3536 = vunpack.c.l.b16 %v3368
      %v3537 = vunpack.c.l.b16 %v3378
      %v3538 = vunpack.c.l.b16 %v3392
      %v3539 = vunpack.c.l.b16 %v3402
      %v3540 = vunpack.c.l.b16 %v3416
      %v3541 = vunpack.c.l.b16 %v3426
      %v3542 = vunpack.c.l.b16 %v3440
      %v3543 = vunpack.c.l.b16 %v3450
      %v3544 = vunpack.c.l.b16 %v3464
      %v3545 = vunpack.c.l.b16 %v3474
      %v3546 = vunpack.c.l.b16 %v3488
      %v3547 = vunpack.c.l.b16 %v3498
      %v3548 = vpack.c.b16 %v3517, %v3516
      %v3549 = vpack.c.b16 %v3519, %v3518
      %v3550 = vpack.c.b16 %v3521, %v3520
      %v3551 = vpack.c.b16 %v3523, %v3522
      %v3552 = vpack.c.b16 %v3525, %v3524
      %v3553 = vpack.c.b16 %v3527, %v3526
      %v3554 = vpack.c.b16 %v3529, %v3528
      %v3555 = vpack.c.b16 %v3531, %v3530
      %v3556 = vpack.c.b16 %v3533, %v3532
      %v3557 = vpack.c.b16 %v3535, %v3534
      %v3558 = vpack.c.b16 %v3537, %v3536
      %v3559 = vpack.c.b16 %v3539, %v3538
      %v3560 = vpack.c.b16 %v3541, %v3540
      %v3561 = vpack.c.b16 %v3543, %v3542
      %v3562 = vpack.c.b16 %v3545, %v3544
      %v3563 = vpack.c.b16 %v3547, %v3546
      %v3596 = vunpack.c.l.b16 %v3500
      %v3597 = vunpack.c.l.b16 %v3501
      %v3598 = vunpack.c.l.b16 %v3502
      %v3599 = vunpack.c.l.b16 %v3503
      %v3600 = vunpack.c.l.b16 %v3504
      %v3601 = vunpack.c.l.b16 %v3505
      %v3602 = vunpack.c.l.b16 %v3506
      %v3603 = vunpack.c.l.b16 %v3507
      %v3604 = vunpack.c.l.b16 %v3508
      %v3605 = vunpack.c.l.b16 %v3509
      %v3606 = vunpack.c.l.b16 %v3510
      %v3607 = vunpack.c.l.b16 %v3511
      %v3608 = vunpack.c.l.b16 %v3512
      %v3609 = vunpack.c.l.b16 %v3513
      %v3610 = vunpack.c.l.b16 %v3514
      %v3611 = vunpack.c.l.b16 %v3515
      %v3612 = vpack.c.b16 %v3597, %v3596
      %v3613 = vpack.c.b16 %v3599, %v3598
      %v3614 = vpack.c.b16 %v3601, %v3600
      %v3615 = vpack.c.b16 %v3603, %v3602
      %v3616 = vpack.c.b16 %v3605, %v3604
      %v3617 = vpack.c.b16 %v3607, %v3606
      %v3618 = vpack.c.b16 %v3609, %v3608
      %v3619 = vpack.c.b16 %v3611, %v3610
      %3628 = vmatpush.bf16.msra.mxu0 %v3619
      %3629 = vmatpush.bf16.msra.mxu0 %v3618
      %3630 = vmatpush.bf16.msra.mxu0 %v3617
      %3631 = vmatpush.bf16.msra.mxu0 %v3616
      %3632 = vmatpush.bf16.msra.mxu0 %v3615
      %3633 = vmatpush.bf16.msra.mxu0 %v3614
      %3634 = vmatpush.bf16.msra.mxu0 %v3613
      %3635 = vmatpush.bf16.msra.mxu0 %v3612
      %3636 = vmatmul.bf16.gmra.mxu0 %v3548
      %v3637 = vpop.f32.mrf.mxu0
      %v3638 = vadd.f32 0.0, %v3637
      %v3639 = vpop.f32.mrf.mxu0
      %v3640 = vadd.f32 0.0, %v3639
      %3641 = vmatmul.bf16.gmra.mxu0 %v3549
      %v3642 = vpop.f32.mrf.mxu0
      %v3643 = vadd.f32 0.0, %v3642
      %v3644 = vpop.f32.mrf.mxu0
      %v3645 = vadd.f32 0.0, %v3644
      %3646 = vmatmul.bf16.gmra.mxu0 %v3550
      %v3647 = vpop.f32.mrf.mxu0
      %v3648 = vadd.f32 0.0, %v3647
      %v3649 = vpop.f32.mrf.mxu0
      %v3650 = vadd.f32 0.0, %v3649
      %3651 = vmatmul.bf16.gmra.mxu0 %v3551
      %v3652 = vpop.f32.mrf.mxu0
      %v3653 = vadd.f32 0.0, %v3652
      %v3654 = vpop.f32.mrf.mxu0
      %v3655 = vadd.f32 0.0, %v3654
      %3656 = vmatmul.bf16.gmra.mxu0 %v3552
      %v3657 = vpop.f32.mrf.mxu0
      %v3658 = vadd.f32 0.0, %v3657
      %v3659 = vpop.f32.mrf.mxu0
      %v3660 = vadd.f32 0.0, %v3659
      %3661 = vmatmul.bf16.gmra.mxu0 %v3553
      %v3662 = vpop.f32.mrf.mxu0
      %v3663 = vadd.f32 0.0, %v3662
      %v3664 = vpop.f32.mrf.mxu0
      %v3665 = vadd.f32 0.0, %v3664
      %3666 = vmatmul.bf16.gmra.mxu0 %v3554
      %v3667 = vpop.f32.mrf.mxu0
      %v3668 = vadd.f32 0.0, %v3667
      %v3669 = vpop.f32.mrf.mxu0
      %v3670 = vadd.f32 0.0, %v3669
      %3671 = vmatmul.bf16.gmra.mxu0 %v3555
      %v3672 = vpop.f32.mrf.mxu0
      %v3673 = vadd.f32 0.0, %v3672
      %v3674 = vpop.f32.mrf.mxu0
      %v3675 = vadd.f32 0.0, %v3674
      %3676 = vmatmul.bf16.gmra.mxu0 %v3556
      %v3677 = vpop.f32.mrf.mxu0
      %v3678 = vadd.f32 0.0, %v3677
      %v3679 = vpop.f32.mrf.mxu0
      %v3680 = vadd.f32 0.0, %v3679
      %3681 = vmatmul.bf16.gmra.mxu0 %v3557
      %v3682 = vpop.f32.mrf.mxu0
      %v3683 = vadd.f32 0.0, %v3682
      %v3684 = vpop.f32.mrf.mxu0
      %v3685 = vadd.f32 0.0, %v3684
      %3686 = vmatmul.bf16.gmra.mxu0 %v3558
      %v3687 = vpop.f32.mrf.mxu0
      %v3688 = vadd.f32 0.0, %v3687
      %v3689 = vpop.f32.mrf.mxu0
      %v3690 = vadd.f32 0.0, %v3689
      %3691 = vmatmul.bf16.gmra.mxu0 %v3559
      %v3692 = vpop.f32.mrf.mxu0
      %v3693 = vadd.f32 0.0, %v3692
      %v3694 = vpop.f32.mrf.mxu0
      %v3695 = vadd.f32 0.0, %v3694
      %3696 = vmatmul.bf16.gmra.mxu0 %v3560
      %v3697 = vpop.f32.mrf.mxu0
      %v3698 = vadd.f32 0.0, %v3697
      %v3699 = vpop.f32.mrf.mxu0
      %v3700 = vadd.f32 0.0, %v3699
      %3701 = vmatmul.bf16.gmra.mxu0 %v3561
      %v3702 = vpop.f32.mrf.mxu0
      %v3703 = vadd.f32 0.0, %v3702
      %v3704 = vpop.f32.mrf.mxu0
      %v3705 = vadd.f32 0.0, %v3704
      %3706 = vmatmul.bf16.gmra.mxu0 %v3562
      %v3707 = vpop.f32.mrf.mxu0
      %v3708 = vadd.f32 0.0, %v3707
      %v3709 = vpop.f32.mrf.mxu0
      %v3710 = vadd.f32 0.0, %v3709
      %3711 = vmatmul.bf16.gmra.mxu0 %v3563
      %v3712 = vpop.f32.mrf.mxu0
      %v3713 = vadd.f32 0.0, %v3712
      %v3714 = vpop.f32.mrf.mxu0
      %v3715 = vadd.f32 0.0, %v3714
      %3716 = vdwg.mxu0
      %v3717 = vadd.f32 %v3083, %v3638
      %v3718 = vadd.f32 %v3084, %v3640
      %v3719 = vadd.f32 %v3085, %v3643
      %v3720 = vadd.f32 %v3086, %v3645
      %v3721 = vadd.f32 %v3087, %v3648
      %v3722 = vadd.f32 %v3088, %v3650
      %v3723 = vadd.f32 %v3089, %v3653
      %v3724 = vadd.f32 %v3090, %v3655
      %v3725 = vadd.f32 %v3091, %v3658
      %v3726 = vadd.f32 %v3092, %v3660
      %v3727 = vadd.f32 %v3093, %v3663
      %v3728 = vadd.f32 %v3094, %v3665
      %v3729 = vadd.f32 %v3095, %v3668
      %v3730 = vadd.f32 %v3096, %v3670
      %v3731 = vadd.f32 %v3097, %v3673
      %v3732 = vadd.f32 %v3098, %v3675
      %v3733 = vadd.f32 %v3099, %v3678
      %v3734 = vadd.f32 %v3100, %v3680
      %v3735 = vadd.f32 %v3101, %v3683
      %v3736 = vadd.f32 %v3102, %v3685
      %v3737 = vadd.f32 %v3103, %v3688
      %v3738 = vadd.f32 %v3104, %v3690
      %v3739 = vadd.f32 %v3105, %v3693
      %v3740 = vadd.f32 %v3106, %v3695
      %v3741 = vadd.f32 %v3107, %v3698
      %v3742 = vadd.f32 %v3108, %v3700
      %v3743 = vadd.f32 %v3109, %v3703
      %v3744 = vadd.f32 %v3110, %v3705
      %v3745 = vadd.f32 %v3111, %v3708
      %v3746 = vadd.f32 %v3112, %v3710
      %v3747 = vadd.f32 %v3113, %v3713
      %v3748 = vadd.f32 %v3114, %v3715
      %3749 = vst [vmem:[#allocation3] sm:$0xff] %v3717
      %3750 = vst [vmem:[#allocation3 + $0x8] sm:$0xff] %v3718
      %3751 = vst [vmem:[#allocation3 + $0x10] sm:$0xff] %v3719
      %3752 = vst [vmem:[#allocation3 + $0x18] sm:$0xff] %v3720
      %3753 = vst [vmem:[#allocation3 + $0x20] sm:$0xff] %v3721
      %3754 = vst [vmem:[#allocation3 + $0x28] sm:$0xff] %v3722
      %3755 = vst [vmem:[#allocation3 + $0x30] sm:$0xff] %v3723
      %3756 = vst [vmem:[#allocation3 + $0x38] sm:$0xff] %v3724
      %3757 = vst [vmem:[#allocation3 + $0x40] sm:$0xff] %v3725
      %3758 = vst [vmem:[#allocation3 + $0x48] sm:$0xff] %v3726
      %3759 = vst [vmem:[#allocation3 + $0x50] sm:$0xff] %v3727
      %3760 = vst [vmem:[#allocation3 + $0x58] sm:$0xff] %v3728
      %3761 = vst [vmem:[#allocation3 + $0x60] sm:$0xff] %v3729
      %3762 = vst [vmem:[#allocation3 + $0x68] sm:$0xff] %v3730
      %3763 = vst [vmem:[#allocation3 + $0x70] sm:$0xff] %v3731
      %3764 = vst [vmem:[#allocation3 + $0x78] sm:$0xff] %v3732
      %3765 = vst [vmem:[#allocation3 + $0x80] sm:$0xff] %v3733
      %3766 = vst [vmem:[#allocation3 + $0x88] sm:$0xff] %v3734
      %3767 = vst [vmem:[#allocation3 + $0x90] sm:$0xff] %v3735
      %3768 = vst [vmem:[#allocation3 + $0x98] sm:$0xff] %v3736
      %3769 = vst [vmem:[#allocation3 + $0xa0] sm:$0xff] %v3737
      %3770 = vst [vmem:[#allocation3 + $0xa8] sm:$0xff] %v3738
      %3771 = vst [vmem:[#allocation3 + $0xb0] sm:$0xff] %v3739
      %3772 = vst [vmem:[#allocation3 + $0xb8] sm:$0xff] %v3740
      %3773 = vst [vmem:[#allocation3 + $0xc0] sm:$0xff] %v3741
      %3774 = vst [vmem:[#allocation3 + $0xc8] sm:$0xff] %v3742
      %3775 = vst [vmem:[#allocation3 + $0xd0] sm:$0xff] %v3743
      %3776 = vst [vmem:[#allocation3 + $0xd8] sm:$0xff] %v3744
      %3777 = vst [vmem:[#allocation3 + $0xe0] sm:$0xff] %v3745
      %3778 = vst [vmem:[#allocation3 + $0xe8] sm:$0xff] %v3746
      %3779 = vst [vmem:[#allocation3 + $0xf0] sm:$0xff] %v3747
      %3780 = vst [vmem:[#allocation3 + $0xf8] sm:$0xff] %v3748
      %v3781 = vld [vmem:[%s2656] sm:$0xe]
      %v3782 = vld [vmem:[%s2656 + $0x4] sm:$0xf]
      %v3783 = vld [vmem:[%s2656 + $0x8] sm:$0x1]
      %v3784 = vld [vmem:[%s2656 + $0xc] sm:$0xe]
      %v3785 = vld [vmem:[%s2656 + $0x10] sm:$0xf]
      %v3786 = vld [vmem:[%s2656 + $0x14] sm:$0x1]
      %v3787 = vld [vmem:[%s2656 + $0x18] sm:$0xe]
      %v3788 = vld [vmem:[%s2656 + $0x1c] sm:$0xf]
      %v3789 = vld [vmem:[%s2656 + $0x20] sm:$0x1]
      %v3790 = vld [vmem:[%s2656 + $0x24] sm:$0xe]
      %v3791 = vld [vmem:[%s2656 + $0x28] sm:$0xf]
      %v3792 = vld [vmem:[%s2656 + $0x2c] sm:$0x1]
      %v3793 = vld [vmem:[%s2656 + $0x30] sm:$0xe]
      %v3794 = vld [vmem:[%s2656 + $0x34] sm:$0xf]
      %v3795 = vld [vmem:[%s2656 + $0x38] sm:$0x1]
      %v3796 = vld [vmem:[%s2656 + $0x3c] sm:$0xe]
      %v3797 = vld [vmem:[%s2656 + $0x40] sm:$0xf]
      %v3798 = vld [vmem:[%s2656 + $0x44] sm:$0x1]
      %v3799 = vld [vmem:[%s2656 + $0x48] sm:$0xe]
      %v3800 = vld [vmem:[%s2656 + $0x4c] sm:$0xf]
      %v3801 = vld [vmem:[%s2656 + $0x50] sm:$0x1]
      %v3802 = vld [vmem:[%s2656 + $0x54] sm:$0xe]
      %v3803 = vld [vmem:[%s2656 + $0x58] sm:$0xf]
      %v3804 = vld [vmem:[%s2656 + $0x5c] sm:$0x1]
      %v3805 = vld [vmem:[%s2656 + $0x60] sm:$0xe]
      %v3806 = vld [vmem:[%s2656 + $0x64] sm:$0xf]
      %v3807 = vld [vmem:[%s2656 + $0x68] sm:$0x1]
      %v3808 = vld [vmem:[%s2656 + $0x6c] sm:$0xe]
      %v3809 = vld [vmem:[%s2656 + $0x70] sm:$0xf]
      %v3810 = vld [vmem:[%s2656 + $0x74] sm:$0x1]
      %v3811 = vld [vmem:[%s2656 + $0x78] sm:$0xe]
      %v3812 = vld [vmem:[%s2656 + $0x7c] sm:$0xf]
      %v3813 = vld [vmem:[%s2656 + $0x80] sm:$0x1]
      %v3814 = vld [vmem:[%s2656 + $0x84] sm:$0xe]
      %v3815 = vld [vmem:[%s2656 + $0x88] sm:$0xf]
      %v3816 = vld [vmem:[%s2656 + $0x8c] sm:$0x1]
      %v3817 = vld [vmem:[%s2656 + $0x90] sm:$0xe]
      %v3818 = vld [vmem:[%s2656 + $0x94] sm:$0xf]
      %v3819 = vld [vmem:[%s2656 + $0x98] sm:$0x1]
      %v3820 = vld [vmem:[%s2656 + $0x9c] sm:$0xe]
      %v3821 = vld [vmem:[%s2656 + $0xa0] sm:$0xf]
      %v3822 = vld [vmem:[%s2656 + $0xa4] sm:$0x1]
      %v3823 = vld [vmem:[%s2656 + $0xa8] sm:$0xe]
      %v3824 = vld [vmem:[%s2656 + $0xac] sm:$0xf]
      %v3825 = vld [vmem:[%s2656 + $0xb0] sm:$0x1]
      %v3826 = vld [vmem:[%s2656 + $0xb4] sm:$0xe]
      %v3827 = vld [vmem:[%s2656 + $0xb8] sm:$0xf]
      %v3828 = vld [vmem:[%s2656 + $0xbc] sm:$0x1]
      %v3829 = vld [vmem:[#allocation3] sm:$0xff]
      %v3830 = vld [vmem:[#allocation3 + $0x8] sm:$0xff]
      %v3831 = vld [vmem:[#allocation3 + $0x10] sm:$0xff]
      %v3832 = vld [vmem:[#allocation3 + $0x18] sm:$0xff]
      %v3833 = vld [vmem:[#allocation3 + $0x20] sm:$0xff]
      %v3834 = vld [vmem:[#allocation3 + $0x28] sm:$0xff]
      %v3835 = vld [vmem:[#allocation3 + $0x30] sm:$0xff]
      %v3836 = vld [vmem:[#allocation3 + $0x38] sm:$0xff]
      %v3837 = vld [vmem:[#allocation3 + $0x40] sm:$0xff]
      %v3838 = vld [vmem:[#allocation3 + $0x48] sm:$0xff]
      %v3839 = vld [vmem:[#allocation3 + $0x50] sm:$0xff]
      %v3840 = vld [vmem:[#allocation3 + $0x58] sm:$0xff]
      %v3841 = vld [vmem:[#allocation3 + $0x60] sm:$0xff]
      %v3842 = vld [vmem:[#allocation3 + $0x68] sm:$0xff]
      %v3843 = vld [vmem:[#allocation3 + $0x70] sm:$0xff]
      %v3844 = vld [vmem:[#allocation3 + $0x78] sm:$0xff]
      %v3845 = vld [vmem:[#allocation3 + $0x80] sm:$0xff]
      %v3846 = vld [vmem:[#allocation3 + $0x88] sm:$0xff]
      %v3847 = vld [vmem:[#allocation3 + $0x90] sm:$0xff]
      %v3848 = vld [vmem:[#allocation3 + $0x98] sm:$0xff]
      %v3849 = vld [vmem:[#allocation3 + $0xa0] sm:$0xff]
      %v3850 = vld [vmem:[#allocation3 + $0xa8] sm:$0xff]
      %v3851 = vld [vmem:[#allocation3 + $0xb0] sm:$0xff]
      %v3852 = vld [vmem:[#allocation3 + $0xb8] sm:$0xff]
      %v3853 = vld [vmem:[#allocation3 + $0xc0] sm:$0xff]
      %v3854 = vld [vmem:[#allocation3 + $0xc8] sm:$0xff]
      %v3855 = vld [vmem:[#allocation3 + $0xd0] sm:$0xff]
      %v3856 = vld [vmem:[#allocation3 + $0xd8] sm:$0xff]
      %v3857 = vld [vmem:[#allocation3 + $0xe0] sm:$0xff]
      %v3858 = vld [vmem:[#allocation3 + $0xe8] sm:$0xff]
      %v3859 = vld [vmem:[#allocation3 + $0xf0] sm:$0xff]
      %v3860 = vld [vmem:[#allocation3 + $0xf8] sm:$0xff]
      %v3909 = vrot.slane %v3781, 5
      %v3910 = vrot.slane %v3909, 4
      %v3911 = vrot.slane %v3782, 5
      %v3912 = vsel %vm2258, %v3910, %v3911
      %v3913 = vrot.slane %v3911, 4
      %v3914 = vrot.slane %v3783, 5
      %v3915 = vsel %vm2258, %v3913, %v3914
      %v3916 = vrot.slane %v3784, 5
      %v3917 = vrot.slane %v3916, 4
      %v3918 = vrot.slane %v3785, 5
      %v3919 = vsel %vm2258, %v3917, %v3918
      %v3920 = vrot.slane %v3918, 4
      %v3921 = vrot.slane %v3786, 5
      %v3922 = vsel %vm2258, %v3920, %v3921
      %v3923 = vrot.slane %v3787, 5
      %v3924 = vrot.slane %v3923, 4
      %v3925 = vrot.slane %v3788, 5
      %v3926 = vsel %vm2258, %v3924, %v3925
      %v3927 = vrot.slane %v3925, 4
      %v3928 = vrot.slane %v3789, 5
      %v3929 = vsel %vm2258, %v3927, %v3928
      %v3930 = vrot.slane %v3790, 5
      %v3931 = vrot.slane %v3930, 4
      %v3932 = vrot.slane %v3791, 5
      %v3933 = vsel %vm2258, %v3931, %v3932
      %v3934 = vrot.slane %v3932, 4
      %v3935 = vrot.slane %v3792, 5
      %v3936 = vsel %vm2258, %v3934, %v3935
      %v3937 = vrot.slane %v3793, 5
      %v3938 = vrot.slane %v3937, 4
      %v3939 = vrot.slane %v3794, 5
      %v3940 = vsel %vm2258, %v3938, %v3939
      %v3941 = vrot.slane %v3939, 4
      %v3942 = vrot.slane %v3795, 5
      %v3943 = vsel %vm2258, %v3941, %v3942
      %v3944 = vrot.slane %v3796, 5
      %v3945 = vrot.slane %v3944, 4
      %v3946 = vrot.slane %v3797, 5
      %v3947 = vsel %vm2258, %v3945, %v3946
      %v3948 = vrot.slane %v3946, 4
      %v3949 = vrot.slane %v3798, 5
      %v3950 = vsel %vm2258, %v3948, %v3949
      %v3951 = vrot.slane %v3799, 5
      %v3952 = vrot.slane %v3951, 4
      %v3953 = vrot.slane %v3800, 5
      %v3954 = vsel %vm2258, %v3952, %v3953
      %v3955 = vrot.slane %v3953, 4
      %v3956 = vrot.slane %v3801, 5
      %v3957 = vsel %vm2258, %v3955, %v3956
      %v3958 = vrot.slane %v3802, 5
      %v3959 = vrot.slane %v3958, 4
      %v3960 = vrot.slane %v3803, 5
      %v3961 = vsel %vm2258, %v3959, %v3960
      %v3962 = vrot.slane %v3960, 4
      %v3963 = vrot.slane %v3804, 5
      %v3964 = vsel %vm2258, %v3962, %v3963
      %v3965 = vrot.slane %v3805, 5
      %v3966 = vrot.slane %v3965, 4
      %v3967 = vrot.slane %v3806, 5
      %v3968 = vsel %vm2258, %v3966, %v3967
      %v3969 = vrot.slane %v3967, 4
      %v3970 = vrot.slane %v3807, 5
      %v3971 = vsel %vm2258, %v3969, %v3970
      %v3972 = vrot.slane %v3808, 5
      %v3973 = vrot.slane %v3972, 4
      %v3974 = vrot.slane %v3809, 5
      %v3975 = vsel %vm2258, %v3973, %v3974
      %v3976 = vrot.slane %v3974, 4
      %v3977 = vrot.slane %v3810, 5
      %v3978 = vsel %vm2258, %v3976, %v3977
      %v3979 = vrot.slane %v3811, 5
      %v3980 = vrot.slane %v3979, 4
      %v3981 = vrot.slane %v3812, 5
      %v3982 = vsel %vm2258, %v3980, %v3981
      %v3983 = vrot.slane %v3981, 4
      %v3984 = vrot.slane %v3813, 5
      %v3985 = vsel %vm2258, %v3983, %v3984
      %v3986 = vrot.slane %v3814, 5
      %v3987 = vrot.slane %v3986, 4
      %v3988 = vrot.slane %v3815, 5
      %v3989 = vsel %vm2258, %v3987, %v3988
      %v3990 = vrot.slane %v3988, 4
      %v3991 = vrot.slane %v3816, 5
      %v3992 = vsel %vm2258, %v3990, %v3991
      %v3993 = vrot.slane %v3817, 5
      %v3994 = vrot.slane %v3993, 4
      %v3995 = vrot.slane %v3818, 5
      %v3996 = vsel %vm2258, %v3994, %v3995
      %v3997 = vrot.slane %v3995, 4
      %v3998 = vrot.slane %v3819, 5
      %v3999 = vsel %vm2258, %v3997, %v3998
      %v4000 = vrot.slane %v3820, 5
      %v4001 = vrot.slane %v4000, 4
      %v4002 = vrot.slane %v3821, 5
      %v4003 = vsel %vm2258, %v4001, %v4002
      %v4004 = vrot.slane %v4002, 4
      %v4005 = vrot.slane %v3822, 5
      %v4006 = vsel %vm2258, %v4004, %v4005
      %v4007 = vrot.slane %v3823, 5
      %v4008 = vrot.slane %v4007, 4
      %v4009 = vrot.slane %v3824, 5
      %v4010 = vsel %vm2258, %v4008, %v4009
      %v4011 = vrot.slane %v4009, 4
      %v4012 = vrot.slane %v3825, 5
      %v4013 = vsel %vm2258, %v4011, %v4012
      %v4014 = vrot.slane %v3826, 5
      %v4015 = vrot.slane %v4014, 4
      %v4016 = vrot.slane %v3827, 5
      %v4017 = vsel %vm2258, %v4015, %v4016
      %v4018 = vrot.slane %v4016, 4
      %v4019 = vrot.slane %v3828, 5
      %v4020 = vsel %vm2258, %v4018, %v4019
      %s4021 = scalar_lea.vmem %s3, 320
      %v4022 = vld [vmem:[%s4021] sm:$0xf]
      %v4023 = vld [vmem:[%s4021 + $0x4] sm:$0xf]
      %v4024 = vld [vmem:[%s4021 + $0x8] sm:$0xf]
      %v4025 = vld [vmem:[%s4021 + $0xc] sm:$0xf]
      %v4026 = vld [vmem:[%s4021 + $0x10] sm:$0xf]
      %v4027 = vld [vmem:[%s4021 + $0x14] sm:$0xf]
      %v4028 = vld [vmem:[%s4021 + $0x18] sm:$0xf]
      %v4029 = vld [vmem:[%s4021 + $0x1c] sm:$0xf]
      %v4030 = vld [vmem:[%s4021 + $0x20] sm:$0xf]
      %v4031 = vld [vmem:[%s4021 + $0x24] sm:$0xf]
      %v4032 = vld [vmem:[%s4021 + $0x28] sm:$0xf]
      %v4033 = vld [vmem:[%s4021 + $0x2c] sm:$0xf]
      %v4034 = vld [vmem:[%s4021 + $0x30] sm:$0xf]
      %v4035 = vld [vmem:[%s4021 + $0x34] sm:$0xf]
      %v4036 = vld [vmem:[%s4021 + $0x38] sm:$0xf]
      %v4037 = vld [vmem:[%s4021 + $0x3c] sm:$0xf]
      %v4038 = vunpack.c.l.b16 %v3912
      %v4039 = vunpack.c.l.b16 %v3915
      %v4040 = vunpack.c.l.b16 %v3919
      %v4041 = vunpack.c.l.b16 %v3922
      %v4042 = vunpack.c.l.b16 %v3926
      %v4043 = vunpack.c.l.b16 %v3929
      %v4044 = vunpack.c.l.b16 %v3933
      %v4045 = vunpack.c.l.b16 %v3936
      %v4046 = vunpack.c.l.b16 %v3940
      %v4047 = vunpack.c.l.b16 %v3943
      %v4048 = vunpack.c.l.b16 %v3947
      %v4049 = vunpack.c.l.b16 %v3950
      %v4050 = vunpack.c.l.b16 %v3954
      %v4051 = vunpack.c.l.b16 %v3957
      %v4052 = vunpack.c.l.b16 %v3961
      %v4053 = vunpack.c.l.b16 %v3964
      %v4054 = vunpack.c.l.b16 %v3968
      %v4055 = vunpack.c.l.b16 %v3971
      %v4056 = vunpack.c.l.b16 %v3975
      %v4057 = vunpack.c.l.b16 %v3978
      %v4058 = vunpack.c.l.b16 %v3982
      %v4059 = vunpack.c.l.b16 %v3985
      %v4060 = vunpack.c.l.b16 %v3989
      %v4061 = vunpack.c.l.b16 %v3992
      %v4062 = vunpack.c.l.b16 %v3996
      %v4063 = vunpack.c.l.b16 %v3999
      %v4064 = vunpack.c.l.b16 %v4003
      %v4065 = vunpack.c.l.b16 %v4006
      %v4066 = vunpack.c.l.b16 %v4010
      %v4067 = vunpack.c.l.b16 %v4013
      %v4068 = vunpack.c.l.b16 %v4017
      %v4069 = vunpack.c.l.b16 %v4020
      %v4070 = vpack.c.b16 %v4039, %v4038
      %v4071 = vpack.c.b16 %v4041, %v4040
      %v4072 = vpack.c.b16 %v4043, %v4042
      %v4073 = vpack.c.b16 %v4045, %v4044
      %v4074 = vpack.c.b16 %v4047, %v4046
      %v4075 = vpack.c.b16 %v4049, %v4048
      %v4076 = vpack.c.b16 %v4051, %v4050
      %v4077 = vpack.c.b16 %v4053, %v4052
      %v4078 = vpack.c.b16 %v4055, %v4054
      %v4079 = vpack.c.b16 %v4057, %v4056
      %v4080 = vpack.c.b16 %v4059, %v4058
      %v4081 = vpack.c.b16 %v4061, %v4060
      %v4082 = vpack.c.b16 %v4063, %v4062
      %v4083 = vpack.c.b16 %v4065, %v4064
      %v4084 = vpack.c.b16 %v4067, %v4066
      %v4085 = vpack.c.b16 %v4069, %v4068
      %v4118 = vunpack.c.l.b16 %v4022
      %v4119 = vunpack.c.l.b16 %v4023
      %v4120 = vunpack.c.l.b16 %v4024
      %v4121 = vunpack.c.l.b16 %v4025
      %v4122 = vunpack.c.l.b16 %v4026
      %v4123 = vunpack.c.l.b16 %v4027
      %v4124 = vunpack.c.l.b16 %v4028
      %v4125 = vunpack.c.l.b16 %v4029
      %v4126 = vunpack.c.l.b16 %v4030
      %v4127 = vunpack.c.l.b16 %v4031
      %v4128 = vunpack.c.l.b16 %v4032
      %v4129 = vunpack.c.l.b16 %v4033
      %v4130 = vunpack.c.l.b16 %v4034
      %v4131 = vunpack.c.l.b16 %v4035
      %v4132 = vunpack.c.l.b16 %v4036
      %v4133 = vunpack.c.l.b16 %v4037
      %v4134 = vpack.c.b16 %v4119, %v4118
      %v4135 = vpack.c.b16 %v4121, %v4120
      %v4136 = vpack.c.b16 %v4123, %v4122
      %v4137 = vpack.c.b16 %v4125, %v4124
      %v4138 = vpack.c.b16 %v4127, %v4126
      %v4139 = vpack.c.b16 %v4129, %v4128
      %v4140 = vpack.c.b16 %v4131, %v4130
      %v4141 = vpack.c.b16 %v4133, %v4132
      %4150 = vmatpush.bf16.msra.mxu0 %v4141
      %4151 = vmatpush.bf16.msra.mxu0 %v4140
      %4152 = vmatpush.bf16.msra.mxu0 %v4139
      %4153 = vmatpush.bf16.msra.mxu0 %v4138
      %4154 = vmatpush.bf16.msra.mxu0 %v4137
      %4155 = vmatpush.bf16.msra.mxu0 %v4136
      %4156 = vmatpush.bf16.msra.mxu0 %v4135
      %4157 = vmatpush.bf16.msra.mxu0 %v4134
      %4158 = vmatmul.bf16.gmra.mxu0 %v4070
      %v4159 = vpop.f32.mrf.mxu0
      %v4160 = vadd.f32 0.0, %v4159
      %v4161 = vpop.f32.mrf.mxu0
      %v4162 = vadd.f32 0.0, %v4161
      %4163 = vmatmul.bf16.gmra.mxu0 %v4071
      %v4164 = vpop.f32.mrf.mxu0
      %v4165 = vadd.f32 0.0, %v4164
      %v4166 = vpop.f32.mrf.mxu0
      %v4167 = vadd.f32 0.0, %v4166
      %4168 = vmatmul.bf16.gmra.mxu0 %v4072
      %v4169 = vpop.f32.mrf.mxu0
      %v4170 = vadd.f32 0.0, %v4169
      %v4171 = vpop.f32.mrf.mxu0
      %v4172 = vadd.f32 0.0, %v4171
      %4173 = vmatmul.bf16.gmra.mxu0 %v4073
      %v4174 = vpop.f32.mrf.mxu0
      %v4175 = vadd.f32 0.0, %v4174
      %v4176 = vpop.f32.mrf.mxu0
      %v4177 = vadd.f32 0.0, %v4176
      %4178 = vmatmul.bf16.gmra.mxu0 %v4074
      %v4179 = vpop.f32.mrf.mxu0
      %v4180 = vadd.f32 0.0, %v4179
      %v4181 = vpop.f32.mrf.mxu0
      %v4182 = vadd.f32 0.0, %v4181
      %4183 = vmatmul.bf16.gmra.mxu0 %v4075
      %v4184 = vpop.f32.mrf.mxu0
      %v4185 = vadd.f32 0.0, %v4184
      %v4186 = vpop.f32.mrf.mxu0
      %v4187 = vadd.f32 0.0, %v4186
      %4188 = vmatmul.bf16.gmra.mxu0 %v4076
      %v4189 = vpop.f32.mrf.mxu0
      %v4190 = vadd.f32 0.0, %v4189
      %v4191 = vpop.f32.mrf.mxu0
      %v4192 = vadd.f32 0.0, %v4191
      %4193 = vmatmul.bf16.gmra.mxu0 %v4077
      %v4194 = vpop.f32.mrf.mxu0
      %v4195 = vadd.f32 0.0, %v4194
      %v4196 = vpop.f32.mrf.mxu0
      %v4197 = vadd.f32 0.0, %v4196
      %4198 = vmatmul.bf16.gmra.mxu0 %v4078
      %v4199 = vpop.f32.mrf.mxu0
      %v4200 = vadd.f32 0.0, %v4199
      %v4201 = vpop.f32.mrf.mxu0
      %v4202 = vadd.f32 0.0, %v4201
      %4203 = vmatmul.bf16.gmra.mxu0 %v4079
      %v4204 = vpop.f32.mrf.mxu0
      %v4205 = vadd.f32 0.0, %v4204
      %v4206 = vpop.f32.mrf.mxu0
      %v4207 = vadd.f32 0.0, %v4206
      %4208 = vmatmul.bf16.gmra.mxu0 %v4080
      %v4209 = vpop.f32.mrf.mxu0
      %v4210 = vadd.f32 0.0, %v4209
      %v4211 = vpop.f32.mrf.mxu0
      %v4212 = vadd.f32 0.0, %v4211
      %4213 = vmatmul.bf16.gmra.mxu0 %v4081
      %v4214 = vpop.f32.mrf.mxu0
      %v4215 = vadd.f32 0.0, %v4214
      %v4216 = vpop.f32.mrf.mxu0
      %v4217 = vadd.f32 0.0, %v4216
      %4218 = vmatmul.bf16.gmra.mxu0 %v4082
      %v4219 = vpop.f32.mrf.mxu0
      %v4220 = vadd.f32 0.0, %v4219
      %v4221 = vpop.f32.mrf.mxu0
      %v4222 = vadd.f32 0.0, %v4221
      %4223 = vmatmul.bf16.gmra.mxu0 %v4083
      %v4224 = vpop.f32.mrf.mxu0
      %v4225 = vadd.f32 0.0, %v4224
      %v4226 = vpop.f32.mrf.mxu0
      %v4227 = vadd.f32 0.0, %v4226
      %4228 = vmatmul.bf16.gmra.mxu0 %v4084
      %v4229 = vpop.f32.mrf.mxu0
      %v4230 = vadd.f32 0.0, %v4229
      %v4231 = vpop.f32.mrf.mxu0
      %v4232 = vadd.f32 0.0, %v4231
      %4233 = vmatmul.bf16.gmra.mxu0 %v4085
      %v4234 = vpop.f32.mrf.mxu0
      %v4235 = vadd.f32 0.0, %v4234
      %v4236 = vpop.f32.mrf.mxu0
      %v4237 = vadd.f32 0.0, %v4236
      %4238 = vdwg.mxu0
      %v4239 = vadd.f32 %v3829, %v4160
      %v4240 = vadd.f32 %v3830, %v4162
      %v4241 = vadd.f32 %v3831, %v4165
      %v4242 = vadd.f32 %v3832, %v4167
      %v4243 = vadd.f32 %v3833, %v4170
      %v4244 = vadd.f32 %v3834, %v4172
      %v4245 = vadd.f32 %v3835, %v4175
      %v4246 = vadd.f32 %v3836, %v4177
      %v4247 = vadd.f32 %v3837, %v4180
      %v4248 = vadd.f32 %v3838, %v4182
      %v4249 = vadd.f32 %v3839, %v4185
      %v4250 = vadd.f32 %v3840, %v4187
      %v4251 = vadd.f32 %v3841, %v4190
      %v4252 = vadd.f32 %v3842, %v4192
      %v4253 = vadd.f32 %v3843, %v4195
      %v4254 = vadd.f32 %v3844, %v4197
      %v4255 = vadd.f32 %v3845, %v4200
      %v4256 = vadd.f32 %v3846, %v4202
      %v4257 = vadd.f32 %v3847, %v4205
      %v4258 = vadd.f32 %v3848, %v4207
      %v4259 = vadd.f32 %v3849, %v4210
      %v4260 = vadd.f32 %v3850, %v4212
      %v4261 = vadd.f32 %v3851, %v4215
      %v4262 = vadd.f32 %v3852, %v4217
      %v4263 = vadd.f32 %v3853, %v4220
      %v4264 = vadd.f32 %v3854, %v4222
      %v4265 = vadd.f32 %v3855, %v4225
      %v4266 = vadd.f32 %v3856, %v4227
      %v4267 = vadd.f32 %v3857, %v4230
      %v4268 = vadd.f32 %v3858, %v4232
      %v4269 = vadd.f32 %v3859, %v4235
      %v4270 = vadd.f32 %v3860, %v4237
      %4271 = vst [vmem:[#allocation3] sm:$0xff] %v4239
      %4272 = vst [vmem:[#allocation3 + $0x8] sm:$0xff] %v4240
      %4273 = vst [vmem:[#allocation3 + $0x10] sm:$0xff] %v4241
      %4274 = vst [vmem:[#allocation3 + $0x18] sm:$0xff] %v4242
      %4275 = vst [vmem:[#allocation3 + $0x20] sm:$0xff] %v4243
      %4276 = vst [vmem:[#allocation3 + $0x28] sm:$0xff] %v4244
      %4277 = vst [vmem:[#allocation3 + $0x30] sm:$0xff] %v4245
      %4278 = vst [vmem:[#allocation3 + $0x38] sm:$0xff] %v4246
      %4279 = vst [vmem:[#allocation3 + $0x40] sm:$0xff] %v4247
      %4280 = vst [vmem:[#allocation3 + $0x48] sm:$0xff] %v4248
      %4281 = vst [vmem:[#allocation3 + $0x50] sm:$0xff] %v4249
      %4282 = vst [vmem:[#allocation3 + $0x58] sm:$0xff] %v4250
      %4283 = vst [vmem:[#allocation3 + $0x60] sm:$0xff] %v4251
      %4284 = vst [vmem:[#allocation3 + $0x68] sm:$0xff] %v4252
      %4285 = vst [vmem:[#allocation3 + $0x70] sm:$0xff] %v4253
      %4286 = vst [vmem:[#allocation3 + $0x78] sm:$0xff] %v4254
      %4287 = vst [vmem:[#allocation3 + $0x80] sm:$0xff] %v4255
      %4288 = vst [vmem:[#allocation3 + $0x88] sm:$0xff] %v4256
      %4289 = vst [vmem:[#allocation3 + $0x90] sm:$0xff] %v4257
      %4290 = vst [vmem:[#allocation3 + $0x98] sm:$0xff] %v4258
      %4291 = vst [vmem:[#allocation3 + $0xa0] sm:$0xff] %v4259
      %4292 = vst [vmem:[#allocation3 + $0xa8] sm:$0xff] %v4260
      %4293 = vst [vmem:[#allocation3 + $0xb0] sm:$0xff] %v4261
      %4294 = vst [vmem:[#allocation3 + $0xb8] sm:$0xff] %v4262
      %4295 = vst [vmem:[#allocation3 + $0xc0] sm:$0xff] %v4263
      %4296 = vst [vmem:[#allocation3 + $0xc8] sm:$0xff] %v4264
      %4297 = vst [vmem:[#allocation3 + $0xd0] sm:$0xff] %v4265
      %4298 = vst [vmem:[#allocation3 + $0xd8] sm:$0xff] %v4266
      %4299 = vst [vmem:[#allocation3 + $0xe0] sm:$0xff] %v4267
      %4300 = vst [vmem:[#allocation3 + $0xe8] sm:$0xff] %v4268
      %4301 = vst [vmem:[#allocation3 + $0xf0] sm:$0xff] %v4269
      %4302 = vst [vmem:[#allocation3 + $0xf8] sm:$0xff] %v4270
      %s4303 = sadd.s32 %s966, 2
      %s4304 = smul.u32 %s4303, 3
      %s4305 = smul.addr %s4304, 4
      %s4306 = scalar_lea.vmem [#allocation2], %s4305
      %v4307 = vld [vmem:[%s4306] sm:$0xf]
      %v4308 = vld [vmem:[%s4306 + $0x4] sm:$0xf]
      %v4309 = vld [vmem:[%s4306 + $0xc] sm:$0xf]
      %v4310 = vld [vmem:[%s4306 + $0x10] sm:$0xf]
      %v4311 = vld [vmem:[%s4306 + $0x18] sm:$0xf]
      %v4312 = vld [vmem:[%s4306 + $0x1c] sm:$0xf]
      %v4313 = vld [vmem:[%s4306 + $0x24] sm:$0xf]
      %v4314 = vld [vmem:[%s4306 + $0x28] sm:$0xf]
      %v4315 = vld [vmem:[%s4306 + $0x30] sm:$0xf]
      %v4316 = vld [vmem:[%s4306 + $0x34] sm:$0xf]
      %v4317 = vld [vmem:[%s4306 + $0x3c] sm:$0xf]
      %v4318 = vld [vmem:[%s4306 + $0x40] sm:$0xf]
      %v4319 = vld [vmem:[%s4306 + $0x48] sm:$0xf]
      %v4320 = vld [vmem:[%s4306 + $0x4c] sm:$0xf]
      %v4321 = vld [vmem:[%s4306 + $0x54] sm:$0xf]
      %v4322 = vld [vmem:[%s4306 + $0x58] sm:$0xf]
      %v4323 = vld [vmem:[%s4306 + $0x60] sm:$0xf]
      %v4324 = vld [vmem:[%s4306 + $0x64] sm:$0xf]
      %v4325 = vld [vmem:[%s4306 + $0x6c] sm:$0xf]
      %v4326 = vld [vmem:[%s4306 + $0x70] sm:$0xf]
      %v4327 = vld [vmem:[%s4306 + $0x78] sm:$0xf]
      %v4328 = vld [vmem:[%s4306 + $0x7c] sm:$0xf]
      %v4329 = vld [vmem:[%s4306 + $0x84] sm:$0xf]
      %v4330 = vld [vmem:[%s4306 + $0x88] sm:$0xf]
      %v4331 = vld [vmem:[%s4306 + $0x90] sm:$0xf]
      %v4332 = vld [vmem:[%s4306 + $0x94] sm:$0xf]
      %v4333 = vld [vmem:[%s4306 + $0x9c] sm:$0xf]
      %v4334 = vld [vmem:[%s4306 + $0xa0] sm:$0xf]
      %v4335 = vld [vmem:[%s4306 + $0xa8] sm:$0xf]
      %v4336 = vld [vmem:[%s4306 + $0xac] sm:$0xf]
      %v4337 = vld [vmem:[%s4306 + $0xb4] sm:$0xf]
      %v4338 = vld [vmem:[%s4306 + $0xb8] sm:$0xf]
      %v4339 = vld [vmem:[#allocation3] sm:$0xff]
      %v4340 = vld [vmem:[#allocation3 + $0x8] sm:$0xff]
      %v4341 = vld [vmem:[#allocation3 + $0x10] sm:$0xff]
      %v4342 = vld [vmem:[#allocation3 + $0x18] sm:$0xff]
      %v4343 = vld [vmem:[#allocation3 + $0x20] sm:$0xff]
      %v4344 = vld [vmem:[#allocation3 + $0x28] sm:$0xff]
      %v4345 = vld [vmem:[#allocation3 + $0x30] sm:$0xff]
      %v4346 = vld [vmem:[#allocation3 + $0x38] sm:$0xff]
      %v4347 = vld [vmem:[#allocation3 + $0x40] sm:$0xff]
      %v4348 = vld [vmem:[#allocation3 + $0x48] sm:$0xff]
      %v4349 = vld [vmem:[#allocation3 + $0x50] sm:$0xff]
      %v4350 = vld [vmem:[#allocation3 + $0x58] sm:$0xff]
      %v4351 = vld [vmem:[#allocation3 + $0x60] sm:$0xff]
      %v4352 = vld [vmem:[#allocation3 + $0x68] sm:$0xff]
      %v4353 = vld [vmem:[#allocation3 + $0x70] sm:$0xff]
      %v4354 = vld [vmem:[#allocation3 + $0x78] sm:$0xff]
      %v4355 = vld [vmem:[#allocation3 + $0x80] sm:$0xff]
      %v4356 = vld [vmem:[#allocation3 + $0x88] sm:$0xff]
      %v4357 = vld [vmem:[#allocation3 + $0x90] sm:$0xff]
      %v4358 = vld [vmem:[#allocation3 + $0x98] sm:$0xff]
      %v4359 = vld [vmem:[#allocation3 + $0xa0] sm:$0xff]
      %v4360 = vld [vmem:[#allocation3 + $0xa8] sm:$0xff]
      %v4361 = vld [vmem:[#allocation3 + $0xb0] sm:$0xff]
      %v4362 = vld [vmem:[#allocation3 + $0xb8] sm:$0xff]
      %v4363 = vld [vmem:[#allocation3 + $0xc0] sm:$0xff]
      %v4364 = vld [vmem:[#allocation3 + $0xc8] sm:$0xff]
      %v4365 = vld [vmem:[#allocation3 + $0xd0] sm:$0xff]
      %v4366 = vld [vmem:[#allocation3 + $0xd8] sm:$0xff]
      %v4367 = vld [vmem:[#allocation3 + $0xe0] sm:$0xff]
      %v4368 = vld [vmem:[#allocation3 + $0xe8] sm:$0xff]
      %v4369 = vld [vmem:[#allocation3 + $0xf0] sm:$0xff]
      %v4370 = vld [vmem:[#allocation3 + $0xf8] sm:$0xff]
      %s4371 = scalar_lea.vmem %s3, 384
      %v4372 = vld [vmem:[%s4371] sm:$0xf]
      %v4373 = vld [vmem:[%s4371 + $0x4] sm:$0xf]
      %v4374 = vld [vmem:[%s4371 + $0x8] sm:$0xf]
      %v4375 = vld [vmem:[%s4371 + $0xc] sm:$0xf]
      %v4376 = vld [vmem:[%s4371 + $0x10] sm:$0xf]
      %v4377 = vld [vmem:[%s4371 + $0x14] sm:$0xf]
      %v4378 = vld [vmem:[%s4371 + $0x18] sm:$0xf]
      %v4379 = vld [vmem:[%s4371 + $0x1c] sm:$0xf]
      %v4380 = vld [vmem:[%s4371 + $0x20] sm:$0xf]
      %v4381 = vld [vmem:[%s4371 + $0x24] sm:$0xf]
      %v4382 = vld [vmem:[%s4371 + $0x28] sm:$0xf]
      %v4383 = vld [vmem:[%s4371 + $0x2c] sm:$0xf]
      %v4384 = vld [vmem:[%s4371 + $0x30] sm:$0xf]
      %v4385 = vld [vmem:[%s4371 + $0x34] sm:$0xf]
      %v4386 = vld [vmem:[%s4371 + $0x38] sm:$0xf]
      %v4387 = vld [vmem:[%s4371 + $0x3c] sm:$0xf]
      %v4420 = vunpack.c.l.b16 %v4307
      %v4421 = vunpack.c.l.b16 %v4308
      %v4422 = vunpack.c.l.b16 %v4309
      %v4423 = vunpack.c.l.b16 %v4310
      %v4424 = vunpack.c.l.b16 %v4311
      %v4425 = vunpack.c.l.b16 %v4312
      %v4426 = vunpack.c.l.b16 %v4313
      %v4427 = vunpack.c.l.b16 %v4314
      %v4428 = vunpack.c.l.b16 %v4315
      %v4429 = vunpack.c.l.b16 %v4316
      %v4430 = vunpack.c.l.b16 %v4317
      %v4431 = vunpack.c.l.b16 %v4318
      %v4432 = vunpack.c.l.b16 %v4319
      %v4433 = vunpack.c.l.b16 %v4320
      %v4434 = vunpack.c.l.b16 %v4321
      %v4435 = vunpack.c.l.b16 %v4322
      %v4436 = vunpack.c.l.b16 %v4323
      %v4437 = vunpack.c.l.b16 %v4324
      %v4438 = vunpack.c.l.b16 %v4325
      %v4439 = vunpack.c.l.b16 %v4326
      %v4440 = vunpack.c.l.b16 %v4327
      %v4441 = vunpack.c.l.b16 %v4328
      %v4442 = vunpack.c.l.b16 %v4329
      %v4443 = vunpack.c.l.b16 %v4330
      %v4444 = vunpack.c.l.b16 %v4331
      %v4445 = vunpack.c.l.b16 %v4332
      %v4446 = vunpack.c.l.b16 %v4333
      %v4447 = vunpack.c.l.b16 %v4334
      %v4448 = vunpack.c.l.b16 %v4335
      %v4449 = vunpack.c.l.b16 %v4336
      %v4450 = vunpack.c.l.b16 %v4337
      %v4451 = vunpack.c.l.b16 %v4338
      %v4452 = vpack.c.b16 %v4421, %v4420
      %v4453 = vpack.c.b16 %v4423, %v4422
      %v4454 = vpack.c.b16 %v4425, %v4424
      %v4455 = vpack.c.b16 %v4427, %v4426
      %v4456 = vpack.c.b16 %v4429, %v4428
      %v4457 = vpack.c.b16 %v4431, %v4430
      %v4458 = vpack.c.b16 %v4433, %v4432
      %v4459 = vpack.c.b16 %v4435, %v4434
      %v4460 = vpack.c.b16 %v4437, %v4436
      %v4461 = vpack.c.b16 %v4439, %v4438
      %v4462 = vpack.c.b16 %v4441, %v4440
      %v4463 = vpack.c.b16 %v4443, %v4442
      %v4464 = vpack.c.b16 %v4445, %v4444
      %v4465 = vpack.c.b16 %v4447, %v4446
      %v4466 = vpack.c.b16 %v4449, %v4448
      %v4467 = vpack.c.b16 %v4451, %v4450
      %v4500 = vunpack.c.l.b16 %v4372
      %v4501 = vunpack.c.l.b16 %v4373
      %v4502 = vunpack.c.l.b16 %v4374
      %v4503 = vunpack.c.l.b16 %v4375
      %v4504 = vunpack.c.l.b16 %v4376
      %v4505 = vunpack.c.l.b16 %v4377
      %v4506 = vunpack.c.l.b16 %v4378
      %v4507 = vunpack.c.l.b16 %v4379
      %v4508 = vunpack.c.l.b16 %v4380
      %v4509 = vunpack.c.l.b16 %v4381
      %v4510 = vunpack.c.l.b16 %v4382
      %v4511 = vunpack.c.l.b16 %v4383
      %v4512 = vunpack.c.l.b16 %v4384
      %v4513 = vunpack.c.l.b16 %v4385
      %v4514 = vunpack.c.l.b16 %v4386
      %v4515 = vunpack.c.l.b16 %v4387
      %v4516 = vpack.c.b16 %v4501, %v4500
      %v4517 = vpack.c.b16 %v4503, %v4502
      %v4518 = vpack.c.b16 %v4505, %v4504
      %v4519 = vpack.c.b16 %v4507, %v4506
      %v4520 = vpack.c.b16 %v4509, %v4508
      %v4521 = vpack.c.b16 %v4511, %v4510
      %v4522 = vpack.c.b16 %v4513, %v4512
      %v4523 = vpack.c.b16 %v4515, %v4514
      %4532 = vmatpush.bf16.msra.mxu0 %v4523
      %4533 = vmatpush.bf16.msra.mxu0 %v4522
      %4534 = vmatpush.bf16.msra.mxu0 %v4521
      %4535 = vmatpush.bf16.msra.mxu0 %v4520
      %4536 = vmatpush.bf16.msra.mxu0 %v4519
      %4537 = vmatpush.bf16.msra.mxu0 %v4518
      %4538 = vmatpush.bf16.msra.mxu0 %v4517
      %4539 = vmatpush.bf16.msra.mxu0 %v4516
      %4540 = vmatmul.bf16.gmra.mxu0 %v4452
      %v4541 = vpop.f32.mrf.mxu0
      %v4542 = vadd.f32 0.0, %v4541
      %v4543 = vpop.f32.mrf.mxu0
      %v4544 = vadd.f32 0.0, %v4543
      %4545 = vmatmul.bf16.gmra.mxu0 %v4453
      %v4546 = vpop.f32.mrf.mxu0
      %v4547 = vadd.f32 0.0, %v4546
      %v4548 = vpop.f32.mrf.mxu0
      %v4549 = vadd.f32 0.0, %v4548
      %4550 = vmatmul.bf16.gmra.mxu0 %v4454
      %v4551 = vpop.f32.mrf.mxu0
      %v4552 = vadd.f32 0.0, %v4551
      %v4553 = vpop.f32.mrf.mxu0
      %v4554 = vadd.f32 0.0, %v4553
      %4555 = vmatmul.bf16.gmra.mxu0 %v4455
      %v4556 = vpop.f32.mrf.mxu0
      %v4557 = vadd.f32 0.0, %v4556
      %v4558 = vpop.f32.mrf.mxu0
      %v4559 = vadd.f32 0.0, %v4558
      %4560 = vmatmul.bf16.gmra.mxu0 %v4456
      %v4561 = vpop.f32.mrf.mxu0
      %v4562 = vadd.f32 0.0, %v4561
      %v4563 = vpop.f32.mrf.mxu0
      %v4564 = vadd.f32 0.0, %v4563
      %4565 = vmatmul.bf16.gmra.mxu0 %v4457
      %v4566 = vpop.f32.mrf.mxu0
      %v4567 = vadd.f32 0.0, %v4566
      %v4568 = vpop.f32.mrf.mxu0
      %v4569 = vadd.f32 0.0, %v4568
      %4570 = vmatmul.bf16.gmra.mxu0 %v4458
      %v4571 = vpop.f32.mrf.mxu0
      %v4572 = vadd.f32 0.0, %v4571
      %v4573 = vpop.f32.mrf.mxu0
      %v4574 = vadd.f32 0.0, %v4573
      %4575 = vmatmul.bf16.gmra.mxu0 %v4459
      %v4576 = vpop.f32.mrf.mxu0
      %v4577 = vadd.f32 0.0, %v4576
      %v4578 = vpop.f32.mrf.mxu0
      %v4579 = vadd.f32 0.0, %v4578
      %4580 = vmatmul.bf16.gmra.mxu0 %v4460
      %v4581 = vpop.f32.mrf.mxu0
      %v4582 = vadd.f32 0.0, %v4581
      %v4583 = vpop.f32.mrf.mxu0
      %v4584 = vadd.f32 0.0, %v4583
      %4585 = vmatmul.bf16.gmra.mxu0 %v4461
      %v4586 = vpop.f32.mrf.mxu0
      %v4587 = vadd.f32 0.0, %v4586
      %v4588 = vpop.f32.mrf.mxu0
      %v4589 = vadd.f32 0.0, %v4588
      %4590 = vmatmul.bf16.gmra.mxu0 %v4462
      %v4591 = vpop.f32.mrf.mxu0
      %v4592 = vadd.f32 0.0, %v4591
      %v4593 = vpop.f32.mrf.mxu0
      %v4594 = vadd.f32 0.0, %v4593
      %4595 = vmatmul.bf16.gmra.mxu0 %v4463
      %v4596 = vpop.f32.mrf.mxu0
      %v4597 = vadd.f32 0.0, %v4596
      %v4598 = vpop.f32.mrf.mxu0
      %v4599 = vadd.f32 0.0, %v4598
      %4600 = vmatmul.bf16.gmra.mxu0 %v4464
      %v4601 = vpop.f32.mrf.mxu0
      %v4602 = vadd.f32 0.0, %v4601
      %v4603 = vpop.f32.mrf.mxu0
      %v4604 = vadd.f32 0.0, %v4603
      %4605 = vmatmul.bf16.gmra.mxu0 %v4465
      %v4606 = vpop.f32.mrf.mxu0
      %v4607 = vadd.f32 0.0, %v4606
      %v4608 = vpop.f32.mrf.mxu0
      %v4609 = vadd.f32 0.0, %v4608
      %4610 = vmatmul.bf16.gmra.mxu0 %v4466
      %v4611 = vpop.f32.mrf.mxu0
      %v4612 = vadd.f32 0.0, %v4611
      %v4613 = vpop.f32.mrf.mxu0
      %v4614 = vadd.f32 0.0, %v4613
      %4615 = vmatmul.bf16.gmra.mxu0 %v4467
      %v4616 = vpop.f32.mrf.mxu0
      %v4617 = vadd.f32 0.0, %v4616
      %v4618 = vpop.f32.mrf.mxu0
      %v4619 = vadd.f32 0.0, %v4618
      %4620 = vdwg.mxu0
      %v4621 = vadd.f32 %v4339, %v4542
      %v4622 = vadd.f32 %v4340, %v4544
      %v4623 = vadd.f32 %v4341, %v4547
      %v4624 = vadd.f32 %v4342, %v4549
      %v4625 = vadd.f32 %v4343, %v4552
      %v4626 = vadd.f32 %v4344, %v4554
      %v4627 = vadd.f32 %v4345, %v4557
      %v4628 = vadd.f32 %v4346, %v4559
      %v4629 = vadd.f32 %v4347, %v4562
      %v4630 = vadd.f32 %v4348, %v4564
      %v4631 = vadd.f32 %v4349, %v4567
      %v4632 = vadd.f32 %v4350, %v4569
      %v4633 = vadd.f32 %v4351, %v4572
      %v4634 = vadd.f32 %v4352, %v4574
      %v4635 = vadd.f32 %v4353, %v4577
      %v4636 = vadd.f32 %v4354, %v4579
      %v4637 = vadd.f32 %v4355, %v4582
      %v4638 = vadd.f32 %v4356, %v4584
      %v4639 = vadd.f32 %v4357, %v4587
      %v4640 = vadd.f32 %v4358, %v4589
      %v4641 = vadd.f32 %v4359, %v4592
      %v4642 = vadd.f32 %v4360, %v4594
      %v4643 = vadd.f32 %v4361, %v4597
      %v4644 = vadd.f32 %v4362, %v4599
      %v4645 = vadd.f32 %v4363, %v4602
      %v4646 = vadd.f32 %v4364, %v4604
      %v4647 = vadd.f32 %v4365, %v4607
      %v4648 = vadd.f32 %v4366, %v4609
      %v4649 = vadd.f32 %v4367, %v4612
      %v4650 = vadd.f32 %v4368, %v4614
      %v4651 = vadd.f32 %v4369, %v4617
      %v4652 = vadd.f32 %v4370, %v4619
      %4653 = vst [vmem:[#allocation3] sm:$0xff] %v4621
      %4654 = vst [vmem:[#allocation3 + $0x8] sm:$0xff] %v4622
      %4655 = vst [vmem:[#allocation3 + $0x10] sm:$0xff] %v4623
      %4656 = vst [vmem:[#allocation3 + $0x18] sm:$0xff] %v4624
      %4657 = vst [vmem:[#allocation3 + $0x20] sm:$0xff] %v4625
      %4658 = vst [vmem:[#allocation3 + $0x28] sm:$0xff] %v4626
      %4659 = vst [vmem:[#allocation3 + $0x30] sm:$0xff] %v4627
      %4660 = vst [vmem:[#allocation3 + $0x38] sm:$0xff] %v4628
      %4661 = vst [vmem:[#allocation3 + $0x40] sm:$0xff] %v4629
      %4662 = vst [vmem:[#allocation3 + $0x48] sm:$0xff] %v4630
      %4663 = vst [vmem:[#allocation3 + $0x50] sm:$0xff] %v4631
      %4664 = vst [vmem:[#allocation3 + $0x58] sm:$0xff] %v4632
      %4665 = vst [vmem:[#allocation3 + $0x60] sm:$0xff] %v4633
      %4666 = vst [vmem:[#allocation3 + $0x68] sm:$0xff] %v4634
      %4667 = vst [vmem:[#allocation3 + $0x70] sm:$0xff] %v4635
      %4668 = vst [vmem:[#allocation3 + $0x78] sm:$0xff] %v4636
      %4669 = vst [vmem:[#allocation3 + $0x80] sm:$0xff] %v4637
      %4670 = vst [vmem:[#allocation3 + $0x88] sm:$0xff] %v4638
      %4671 = vst [vmem:[#allocation3 + $0x90] sm:$0xff] %v4639
      %4672 = vst [vmem:[#allocation3 + $0x98] sm:$0xff] %v4640
      %4673 = vst [vmem:[#allocation3 + $0xa0] sm:$0xff] %v4641
      %4674 = vst [vmem:[#allocation3 + $0xa8] sm:$0xff] %v4642
      %4675 = vst [vmem:[#allocation3 + $0xb0] sm:$0xff] %v4643
      %4676 = vst [vmem:[#allocation3 + $0xb8] sm:$0xff] %v4644
      %4677 = vst [vmem:[#allocation3 + $0xc0] sm:$0xff] %v4645
      %4678 = vst [vmem:[#allocation3 + $0xc8] sm:$0xff] %v4646
      %4679 = vst [vmem:[#allocation3 + $0xd0] sm:$0xff] %v4647
      %4680 = vst [vmem:[#allocation3 + $0xd8] sm:$0xff] %v4648
      %4681 = vst [vmem:[#allocation3 + $0xe0] sm:$0xff] %v4649
      %4682 = vst [vmem:[#allocation3 + $0xe8] sm:$0xff] %v4650
      %4683 = vst [vmem:[#allocation3 + $0xf0] sm:$0xff] %v4651
      %4684 = vst [vmem:[#allocation3 + $0xf8] sm:$0xff] %v4652
      %v4685 = vld [vmem:[%s4306] sm:$0xf]
      %v4686 = vld [vmem:[%s4306 + $0x4] sm:$0xf]
      %v4687 = vld [vmem:[%s4306 + $0x8] sm:$0x1]
      %v4688 = vld [vmem:[%s4306 + $0xc] sm:$0xf]
      %v4689 = vld [vmem:[%s4306 + $0x10] sm:$0xf]
      %v4690 = vld [vmem:[%s4306 + $0x14] sm:$0x1]
      %v4691 = vld [vmem:[%s4306 + $0x18] sm:$0xf]
      %v4692 = vld [vmem:[%s4306 + $0x1c] sm:$0xf]
      %v4693 = vld [vmem:[%s4306 + $0x20] sm:$0x1]
      %v4694 = vld [vmem:[%s4306 + $0x24] sm:$0xf]
      %v4695 = vld [vmem:[%s4306 + $0x28] sm:$0xf]
      %v4696 = vld [vmem:[%s4306 + $0x2c] sm:$0x1]
      %v4697 = vld [vmem:[%s4306 + $0x30] sm:$0xf]
      %v4698 = vld [vmem:[%s4306 + $0x34] sm:$0xf]
      %v4699 = vld [vmem:[%s4306 + $0x38] sm:$0x1]
      %v4700 = vld [vmem:[%s4306 + $0x3c] sm:$0xf]
      %v4701 = vld [vmem:[%s4306 + $0x40] sm:$0xf]
      %v4702 = vld [vmem:[%s4306 + $0x44] sm:$0x1]
      %v4703 = vld [vmem:[%s4306 + $0x48] sm:$0xf]
      %v4704 = vld [vmem:[%s4306 + $0x4c] sm:$0xf]
      %v4705 = vld [vmem:[%s4306 + $0x50] sm:$0x1]
      %v4706 = vld [vmem:[%s4306 + $0x54] sm:$0xf]
      %v4707 = vld [vmem:[%s4306 + $0x58] sm:$0xf]
      %v4708 = vld [vmem:[%s4306 + $0x5c] sm:$0x1]
      %v4709 = vld [vmem:[%s4306 + $0x60] sm:$0xf]
      %v4710 = vld [vmem:[%s4306 + $0x64] sm:$0xf]
      %v4711 = vld [vmem:[%s4306 + $0x68] sm:$0x1]
      %v4712 = vld [vmem:[%s4306 + $0x6c] sm:$0xf]
      %v4713 = vld [vmem:[%s4306 + $0x70] sm:$0xf]
      %v4714 = vld [vmem:[%s4306 + $0x74] sm:$0x1]
      %v4715 = vld [vmem:[%s4306 + $0x78] sm:$0xf]
      %v4716 = vld [vmem:[%s4306 + $0x7c] sm:$0xf]
      %v4717 = vld [vmem:[%s4306 + $0x80] sm:$0x1]
      %v4718 = vld [vmem:[%s4306 + $0x84] sm:$0xf]
      %v4719 = vld [vmem:[%s4306 + $0x88] sm:$0xf]
      %v4720 = vld [vmem:[%s4306 + $0x8c] sm:$0x1]
      %v4721 = vld [vmem:[%s4306 + $0x90] sm:$0xf]
      %v4722 = vld [vmem:[%s4306 + $0x94] sm:$0xf]
      %v4723 = vld [vmem:[%s4306 + $0x98] sm:$0x1]
      %v4724 = vld [vmem:[%s4306 + $0x9c] sm:$0xf]
      %v4725 = vld [vmem:[%s4306 + $0xa0] sm:$0xf]
      %v4726 = vld [vmem:[%s4306 + $0xa4] sm:$0x1]
      %v4727 = vld [vmem:[%s4306 + $0xa8] sm:$0xf]
      %v4728 = vld [vmem:[%s4306 + $0xac] sm:$0xf]
      %v4729 = vld [vmem:[%s4306 + $0xb0] sm:$0x1]
      %v4730 = vld [vmem:[%s4306 + $0xb4] sm:$0xf]
      %v4731 = vld [vmem:[%s4306 + $0xb8] sm:$0xf]
      %v4732 = vld [vmem:[%s4306 + $0xbc] sm:$0x1]
      %v4733 = vld [vmem:[#allocation3] sm:$0xff]
      %v4734 = vld [vmem:[#allocation3 + $0x8] sm:$0xff]
      %v4735 = vld [vmem:[#allocation3 + $0x10] sm:$0xff]
      %v4736 = vld [vmem:[#allocation3 + $0x18] sm:$0xff]
      %v4737 = vld [vmem:[#allocation3 + $0x20] sm:$0xff]
      %v4738 = vld [vmem:[#allocation3 + $0x28] sm:$0xff]
      %v4739 = vld [vmem:[#allocation3 + $0x30] sm:$0xff]
      %v4740 = vld [vmem:[#allocation3 + $0x38] sm:$0xff]
      %v4741 = vld [vmem:[#allocation3 + $0x40] sm:$0xff]
      %v4742 = vld [vmem:[#allocation3 + $0x48] sm:$0xff]
      %v4743 = vld [vmem:[#allocation3 + $0x50] sm:$0xff]
      %v4744 = vld [vmem:[#allocation3 + $0x58] sm:$0xff]
      %v4745 = vld [vmem:[#allocation3 + $0x60] sm:$0xff]
      %v4746 = vld [vmem:[#allocation3 + $0x68] sm:$0xff]
      %v4747 = vld [vmem:[#allocation3 + $0x70] sm:$0xff]
      %v4748 = vld [vmem:[#allocation3 + $0x78] sm:$0xff]
      %v4749 = vld [vmem:[#allocation3 + $0x80] sm:$0xff]
      %v4750 = vld [vmem:[#allocation3 + $0x88] sm:$0xff]
      %v4751 = vld [vmem:[#allocation3 + $0x90] sm:$0xff]
      %v4752 = vld [vmem:[#allocation3 + $0x98] sm:$0xff]
      %v4753 = vld [vmem:[#allocation3 + $0xa0] sm:$0xff]
      %v4754 = vld [vmem:[#allocation3 + $0xa8] sm:$0xff]
      %v4755 = vld [vmem:[#allocation3 + $0xb0] sm:$0xff]
      %v4756 = vld [vmem:[#allocation3 + $0xb8] sm:$0xff]
      %v4757 = vld [vmem:[#allocation3 + $0xc0] sm:$0xff]
      %v4758 = vld [vmem:[#allocation3 + $0xc8] sm:$0xff]
      %v4759 = vld [vmem:[#allocation3 + $0xd0] sm:$0xff]
      %v4760 = vld [vmem:[#allocation3 + $0xd8] sm:$0xff]
      %v4761 = vld [vmem:[#allocation3 + $0xe0] sm:$0xff]
      %v4762 = vld [vmem:[#allocation3 + $0xe8] sm:$0xff]
      %v4763 = vld [vmem:[#allocation3 + $0xf0] sm:$0xff]
      %v4764 = vld [vmem:[#allocation3 + $0xf8] sm:$0xff]
      %v4766 = vshrl.u32 %v4685, 16
      %v4768 = vrot.slane %v4766, 4
      %v4769 = vshll.u32 %v4685, 16
      %v4771 = vrot.slane %v4769, 5
      %v4772 = vor.u32 %v4768, %v4771
      %v4773 = vrot.slane %v4772, 4
      %v4775 = vshll.u32 %v4686, 16
      %v4777 = vrot.slane %v4775, 5
      %v4778 = vsel %vm1461, %v4773, %v4777
      %v4779 = vshrl.u32 %v4686, 16
      %v4781 = vrot.slane %v4779, 4
      %v4782 = vor.u32 %v4781, %v4777
      %v4783 = vrot.slane %v4782, 4
      %v4785 = vshll.u32 %v4687, 16
      %v4787 = vrot.slane %v4785, 5
      %v4788 = vsel %vm1461, %v4783, %v4787
      %v4790 = vshrl.u32 %v4688, 16
      %v4792 = vrot.slane %v4790, 4
      %v4793 = vshll.u32 %v4688, 16
      %v4795 = vrot.slane %v4793, 5
      %v4796 = vor.u32 %v4792, %v4795
      %v4797 = vrot.slane %v4796, 4
      %v4799 = vshll.u32 %v4689, 16
      %v4801 = vrot.slane %v4799, 5
      %v4802 = vsel %vm1461, %v4797, %v4801
      %v4803 = vshrl.u32 %v4689, 16
      %v4805 = vrot.slane %v4803, 4
      %v4806 = vor.u32 %v4805, %v4801
      %v4807 = vrot.slane %v4806, 4
      %v4809 = vshll.u32 %v4690, 16
      %v4811 = vrot.slane %v4809, 5
      %v4812 = vsel %vm1461, %v4807, %v4811
      %v4814 = vshrl.u32 %v4691, 16
      %v4816 = vrot.slane %v4814, 4
      %v4817 = vshll.u32 %v4691, 16
      %v4819 = vrot.slane %v4817, 5
      %v4820 = vor.u32 %v4816, %v4819
      %v4821 = vrot.slane %v4820, 4
      %v4823 = vshll.u32 %v4692, 16
      %v4825 = vrot.slane %v4823, 5
      %v4826 = vsel %vm1461, %v4821, %v4825
      %v4827 = vshrl.u32 %v4692, 16
      %v4829 = vrot.slane %v4827, 4
      %v4830 = vor.u32 %v4829, %v4825
      %v4831 = vrot.slane %v4830, 4
      %v4833 = vshll.u32 %v4693, 16
      %v4835 = vrot.slane %v4833, 5
      %v4836 = vsel %vm1461, %v4831, %v4835
      %v4838 = vshrl.u32 %v4694, 16
      %v4840 = vrot.slane %v4838, 4
      %v4841 = vshll.u32 %v4694, 16
      %v4843 = vrot.slane %v4841, 5
      %v4844 = vor.u32 %v4840, %v4843
      %v4845 = vrot.slane %v4844, 4
      %v4847 = vshll.u32 %v4695, 16
      %v4849 = vrot.slane %v4847, 5
      %v4850 = vsel %vm1461, %v4845, %v4849
      %v4851 = vshrl.u32 %v4695, 16
      %v4853 = vrot.slane %v4851, 4
      %v4854 = vor.u32 %v4853, %v4849
      %v4855 = vrot.slane %v4854, 4
      %v4857 = vshll.u32 %v4696, 16
      %v4859 = vrot.slane %v4857, 5
      %v4860 = vsel %vm1461, %v4855, %v4859
      %v4862 = vshrl.u32 %v4697, 16
      %v4864 = vrot.slane %v4862, 4
      %v4865 = vshll.u32 %v4697, 16
      %v4867 = vrot.slane %v4865, 5
      %v4868 = vor.u32 %v4864, %v4867
      %v4869 = vrot.slane %v4868, 4
      %v4871 = vshll.u32 %v4698, 16
      %v4873 = vrot.slane %v4871, 5
      %v4874 = vsel %vm1461, %v4869, %v4873
      %v4875 = vshrl.u32 %v4698, 16
      %v4877 = vrot.slane %v4875, 4
      %v4878 = vor.u32 %v4877, %v4873
      %v4879 = vrot.slane %v4878, 4
      %v4881 = vshll.u32 %v4699, 16
      %v4883 = vrot.slane %v4881, 5
      %v4884 = vsel %vm1461, %v4879, %v4883
      %v4886 = vshrl.u32 %v4700, 16
      %v4888 = vrot.slane %v4886, 4
      %v4889 = vshll.u32 %v4700, 16
      %v4891 = vrot.slane %v4889, 5
      %v4892 = vor.u32 %v4888, %v4891
      %v4893 = vrot.slane %v4892, 4
      %v4895 = vshll.u32 %v4701, 16
      %v4897 = vrot.slane %v4895, 5
      %v4898 = vsel %vm1461, %v4893, %v4897
      %v4899 = vshrl.u32 %v4701, 16
      %v4901 = vrot.slane %v4899, 4
      %v4902 = vor.u32 %v4901, %v4897
      %v4903 = vrot.slane %v4902, 4
      %v4905 = vshll.u32 %v4702, 16
      %v4907 = vrot.slane %v4905, 5
      %v4908 = vsel %vm1461, %v4903, %v4907
      %v4910 = vshrl.u32 %v4703, 16
      %v4912 = vrot.slane %v4910, 4
      %v4913 = vshll.u32 %v4703, 16
      %v4915 = vrot.slane %v4913, 5
      %v4916 = vor.u32 %v4912, %v4915
      %v4917 = vrot.slane %v4916, 4
      %v4919 = vshll.u32 %v4704, 16
      %v4921 = vrot.slane %v4919, 5
      %v4922 = vsel %vm1461, %v4917, %v4921
      %v4923 = vshrl.u32 %v4704, 16
      %v4925 = vrot.slane %v4923, 4
      %v4926 = vor.u32 %v4925, %v4921
      %v4927 = vrot.slane %v4926, 4
      %v4929 = vshll.u32 %v4705, 16
      %v4931 = vrot.slane %v4929, 5
      %v4932 = vsel %vm1461, %v4927, %v4931
      %v4934 = vshrl.u32 %v4706, 16
      %v4936 = vrot.slane %v4934, 4
      %v4937 = vshll.u32 %v4706, 16
      %v4939 = vrot.slane %v4937, 5
      %v4940 = vor.u32 %v4936, %v4939
      %v4941 = vrot.slane %v4940, 4
      %v4943 = vshll.u32 %v4707, 16
      %v4945 = vrot.slane %v4943, 5
      %v4946 = vsel %vm1461, %v4941, %v4945
      %v4947 = vshrl.u32 %v4707, 16
      %v4949 = vrot.slane %v4947, 4
      %v4950 = vor.u32 %v4949, %v4945
      %v4951 = vrot.slane %v4950, 4
      %v4953 = vshll.u32 %v4708, 16
      %v4955 = vrot.slane %v4953, 5
      %v4956 = vsel %vm1461, %v4951, %v4955
      %v4958 = vshrl.u32 %v4709, 16
      %v4960 = vrot.slane %v4958, 4
      %v4961 = vshll.u32 %v4709, 16
      %v4963 = vrot.slane %v4961, 5
      %v4964 = vor.u32 %v4960, %v4963
      %v4965 = vrot.slane %v4964, 4
      %v4967 = vshll.u32 %v4710, 16
      %v4969 = vrot.slane %v4967, 5
      %v4970 = vsel %vm1461, %v4965, %v4969
      %v4971 = vshrl.u32 %v4710, 16
      %v4973 = vrot.slane %v4971, 4
      %v4974 = vor.u32 %v4973, %v4969
      %v4975 = vrot.slane %v4974, 4
      %v4977 = vshll.u32 %v4711, 16
      %v4979 = vrot.slane %v4977, 5
      %v4980 = vsel %vm1461, %v4975, %v4979
      %v4982 = vshrl.u32 %v4712, 16
      %v4984 = vrot.slane %v4982, 4
      %v4985 = vshll.u32 %v4712, 16
      %v4987 = vrot.slane %v4985, 5
      %v4988 = vor.u32 %v4984, %v4987
      %v4989 = vrot.slane %v4988, 4
      %v4991 = vshll.u32 %v4713, 16
      %v4993 = vrot.slane %v4991, 5
      %v4994 = vsel %vm1461, %v4989, %v4993
      %v4995 = vshrl.u32 %v4713, 16
      %v4997 = vrot.slane %v4995, 4
      %v4998 = vor.u32 %v4997, %v4993
      %v4999 = vrot.slane %v4998, 4
      %v5001 = vshll.u32 %v4714, 16
      %v5003 = vrot.slane %v5001, 5
      %v5004 = vsel %vm1461, %v4999, %v5003
      %v5006 = vshrl.u32 %v4715, 16
      %v5008 = vrot.slane %v5006, 4
      %v5009 = vshll.u32 %v4715, 16
      %v5011 = vrot.slane %v5009, 5
      %v5012 = vor.u32 %v5008, %v5011
      %v5013 = vrot.slane %v5012, 4
      %v5015 = vshll.u32 %v4716, 16
      %v5017 = vrot.slane %v5015, 5
      %v5018 = vsel %vm1461, %v5013, %v5017
      %v5019 = vshrl.u32 %v4716, 16
      %v5021 = vrot.slane %v5019, 4
      %v5022 = vor.u32 %v5021, %v5017
      %v5023 = vrot.slane %v5022, 4
      %v5025 = vshll.u32 %v4717, 16
      %v5027 = vrot.slane %v5025, 5
      %v5028 = vsel %vm1461, %v5023, %v5027
      %v5030 = vshrl.u32 %v4718, 16
      %v5032 = vrot.slane %v5030, 4
      %v5033 = vshll.u32 %v4718, 16
      %v5035 = vrot.slane %v5033, 5
      %v5036 = vor.u32 %v5032, %v5035
      %v5037 = vrot.slane %v5036, 4
      %v5039 = vshll.u32 %v4719, 16
      %v5041 = vrot.slane %v5039, 5
      %v5042 = vsel %vm1461, %v5037, %v5041
      %v5043 = vshrl.u32 %v4719, 16
      %v5045 = vrot.slane %v5043, 4
      %v5046 = vor.u32 %v5045, %v5041
      %v5047 = vrot.slane %v5046, 4
      %v5049 = vshll.u32 %v4720, 16
      %v5051 = vrot.slane %v5049, 5
      %v5052 = vsel %vm1461, %v5047, %v5051
      %v5054 = vshrl.u32 %v4721, 16
      %v5056 = vrot.slane %v5054, 4
      %v5057 = vshll.u32 %v4721, 16
      %v5059 = vrot.slane %v5057, 5
      %v5060 = vor.u32 %v5056, %v5059
      %v5061 = vrot.slane %v5060, 4
      %v5063 = vshll.u32 %v4722, 16
      %v5065 = vrot.slane %v5063, 5
      %v5066 = vsel %vm1461, %v5061, %v5065
      %v5067 = vshrl.u32 %v4722, 16
      %v5069 = vrot.slane %v5067, 4
      %v5070 = vor.u32 %v5069, %v5065
      %v5071 = vrot.slane %v5070, 4
      %v5073 = vshll.u32 %v4723, 16
      %v5075 = vrot.slane %v5073, 5
      %v5076 = vsel %vm1461, %v5071, %v5075
      %v5078 = vshrl.u32 %v4724, 16
      %v5080 = vrot.slane %v5078, 4
      %v5081 = vshll.u32 %v4724, 16
      %v5083 = vrot.slane %v5081, 5
      %v5084 = vor.u32 %v5080, %v5083
      %v5085 = vrot.slane %v5084, 4
      %v5087 = vshll.u32 %v4725, 16
      %v5089 = vrot.slane %v5087, 5
      %v5090 = vsel %vm1461, %v5085, %v5089
      %v5091 = vshrl.u32 %v4725, 16
      %v5093 = vrot.slane %v5091, 4
      %v5094 = vor.u32 %v5093, %v5089
      %v5095 = vrot.slane %v5094, 4
      %v5097 = vshll.u32 %v4726, 16
      %v5099 = vrot.slane %v5097, 5
      %v5100 = vsel %vm1461, %v5095, %v5099
      %v5102 = vshrl.u32 %v4727, 16
      %v5104 = vrot.slane %v5102, 4
      %v5105 = vshll.u32 %v4727, 16
      %v5107 = vrot.slane %v5105, 5
      %v5108 = vor.u32 %v5104, %v5107
      %v5109 = vrot.slane %v5108, 4
      %v5111 = vshll.u32 %v4728, 16
      %v5113 = vrot.slane %v5111, 5
      %v5114 = vsel %vm1461, %v5109, %v5113
      %v5115 = vshrl.u32 %v4728, 16
      %v5117 = vrot.slane %v5115, 4
      %v5118 = vor.u32 %v5117, %v5113
      %v5119 = vrot.slane %v5118, 4
      %v5121 = vshll.u32 %v4729, 16
      %v5123 = vrot.slane %v5121, 5
      %v5124 = vsel %vm1461, %v5119, %v5123
      %v5126 = vshrl.u32 %v4730, 16
      %v5128 = vrot.slane %v5126, 4
      %v5129 = vshll.u32 %v4730, 16
      %v5131 = vrot.slane %v5129, 5
      %v5132 = vor.u32 %v5128, %v5131
      %v5133 = vrot.slane %v5132, 4
      %v5135 = vshll.u32 %v4731, 16
      %v5137 = vrot.slane %v5135, 5
      %v5138 = vsel %vm1461, %v5133, %v5137
      %v5139 = vshrl.u32 %v4731, 16
      %v5141 = vrot.slane %v5139, 4
      %v5142 = vor.u32 %v5141, %v5137
      %v5143 = vrot.slane %v5142, 4
      %v5145 = vshll.u32 %v4732, 16
      %v5147 = vrot.slane %v5145, 5
      %v5148 = vsel %vm1461, %v5143, %v5147
      %s5149 = scalar_lea.vmem %s3, 448
      %v5150 = vld [vmem:[%s5149] sm:$0xf]
      %v5151 = vld [vmem:[%s5149 + $0x4] sm:$0xf]
      %v5152 = vld [vmem:[%s5149 + $0x8] sm:$0xf]
      %v5153 = vld [vmem:[%s5149 + $0xc] sm:$0xf]
      %v5154 = vld [vmem:[%s5149 + $0x10] sm:$0xf]
      %v5155 = vld [vmem:[%s5149 + $0x14] sm:$0xf]
      %v5156 = vld [vmem:[%s5149 + $0x18] sm:$0xf]
      %v5157 = vld [vmem:[%s5149 + $0x1c] sm:$0xf]
      %v5158 = vld [vmem:[%s5149 + $0x20] sm:$0xf]
      %v5159 = vld [vmem:[%s5149 + $0x24] sm:$0xf]
      %v5160 = vld [vmem:[%s5149 + $0x28] sm:$0xf]
      %v5161 = vld [vmem:[%s5149 + $0x2c] sm:$0xf]
      %v5162 = vld [vmem:[%s5149 + $0x30] sm:$0xf]
      %v5163 = vld [vmem:[%s5149 + $0x34] sm:$0xf]
      %v5164 = vld [vmem:[%s5149 + $0x38] sm:$0xf]
      %v5165 = vld [vmem:[%s5149 + $0x3c] sm:$0xf]
      %v5166 = vunpack.c.l.b16 %v4778
      %v5167 = vunpack.c.l.b16 %v4788
      %v5168 = vunpack.c.l.b16 %v4802
      %v5169 = vunpack.c.l.b16 %v4812
      %v5170 = vunpack.c.l.b16 %v4826
      %v5171 = vunpack.c.l.b16 %v4836
      %v5172 = vunpack.c.l.b16 %v4850
      %v5173 = vunpack.c.l.b16 %v4860
      %v5174 = vunpack.c.l.b16 %v4874
      %v5175 = vunpack.c.l.b16 %v4884
      %v5176 = vunpack.c.l.b16 %v4898
      %v5177 = vunpack.c.l.b16 %v4908
      %v5178 = vunpack.c.l.b16 %v4922
      %v5179 = vunpack.c.l.b16 %v4932
      %v5180 = vunpack.c.l.b16 %v4946
      %v5181 = vunpack.c.l.b16 %v4956
      %v5182 = vunpack.c.l.b16 %v4970
      %v5183 = vunpack.c.l.b16 %v4980
      %v5184 = vunpack.c.l.b16 %v4994
      %v5185 = vunpack.c.l.b16 %v5004
      %v5186 = vunpack.c.l.b16 %v5018
      %v5187 = vunpack.c.l.b16 %v5028
      %v5188 = vunpack.c.l.b16 %v5042
      %v5189 = vunpack.c.l.b16 %v5052
      %v5190 = vunpack.c.l.b16 %v5066
      %v5191 = vunpack.c.l.b16 %v5076
      %v5192 = vunpack.c.l.b16 %v5090
      %v5193 = vunpack.c.l.b16 %v5100
      %v5194 = vunpack.c.l.b16 %v5114
      %v5195 = vunpack.c.l.b16 %v5124
      %v5196 = vunpack.c.l.b16 %v5138
      %v5197 = vunpack.c.l.b16 %v5148
      %v5198 = vpack.c.b16 %v5167, %v5166
      %v5199 = vpack.c.b16 %v5169, %v5168
      %v5200 = vpack.c.b16 %v5171, %v5170
      %v5201 = vpack.c.b16 %v5173, %v5172
      %v5202 = vpack.c.b16 %v5175, %v5174
      %v5203 = vpack.c.b16 %v5177, %v5176
      %v5204 = vpack.c.b16 %v5179, %v5178
      %v5205 = vpack.c.b16 %v5181, %v5180
      %v5206 = vpack.c.b16 %v5183, %v5182
      %v5207 = vpack.c.b16 %v5185, %v5184
      %v5208 = vpack.c.b16 %v5187, %v5186
      %v5209 = vpack.c.b16 %v5189, %v5188
      %v5210 = vpack.c.b16 %v5191, %v5190
      %v5211 = vpack.c.b16 %v5193, %v5192
      %v5212 = vpack.c.b16 %v5195, %v5194
      %v5213 = vpack.c.b16 %v5197, %v5196
      %v5246 = vunpack.c.l.b16 %v5150
      %v5247 = vunpack.c.l.b16 %v5151
      %v5248 = vunpack.c.l.b16 %v5152
      %v5249 = vunpack.c.l.b16 %v5153
      %v5250 = vunpack.c.l.b16 %v5154
      %v5251 = vunpack.c.l.b16 %v5155
      %v5252 = vunpack.c.l.b16 %v5156
      %v5253 = vunpack.c.l.b16 %v5157
      %v5254 = vunpack.c.l.b16 %v5158
      %v5255 = vunpack.c.l.b16 %v5159
      %v5256 = vunpack.c.l.b16 %v5160
      %v5257 = vunpack.c.l.b16 %v5161
      %v5258 = vunpack.c.l.b16 %v5162
      %v5259 = vunpack.c.l.b16 %v5163
      %v5260 = vunpack.c.l.b16 %v5164
      %v5261 = vunpack.c.l.b16 %v5165
      %v5262 = vpack.c.b16 %v5247, %v5246
      %v5263 = vpack.c.b16 %v5249, %v5248
      %v5264 = vpack.c.b16 %v5251, %v5250
      %v5265 = vpack.c.b16 %v5253, %v5252
      %v5266 = vpack.c.b16 %v5255, %v5254
      %v5267 = vpack.c.b16 %v5257, %v5256
      %v5268 = vpack.c.b16 %v5259, %v5258
      %v5269 = vpack.c.b16 %v5261, %v5260
      %5278 = vmatpush.bf16.msra.mxu0 %v5269
      %5279 = vmatpush.bf16.msra.mxu0 %v5268
      %5280 = vmatpush.bf16.msra.mxu0 %v5267
      %5281 = vmatpush.bf16.msra.mxu0 %v5266
      %5282 = vmatpush.bf16.msra.mxu0 %v5265
      %5283 = vmatpush.bf16.msra.mxu0 %v5264
      %5284 = vmatpush.bf16.msra.mxu0 %v5263
      %5285 = vmatpush.bf16.msra.mxu0 %v5262
      %5286 = vmatmul.bf16.gmra.mxu0 %v5198
      %v5287 = vpop.f32.mrf.mxu0
      %v5288 = vadd.f32 0.0, %v5287
      %v5289 = vpop.f32.mrf.mxu0
      %v5290 = vadd.f32 0.0, %v5289
      %5291 = vmatmul.bf16.gmra.mxu0 %v5199
      %v5292 = vpop.f32.mrf.mxu0
      %v5293 = vadd.f32 0.0, %v5292
      %v5294 = vpop.f32.mrf.mxu0
      %v5295 = vadd.f32 0.0, %v5294
      %5296 = vmatmul.bf16.gmra.mxu0 %v5200
      %v5297 = vpop.f32.mrf.mxu0
      %v5298 = vadd.f32 0.0, %v5297
      %v5299 = vpop.f32.mrf.mxu0
      %v5300 = vadd.f32 0.0, %v5299
      %5301 = vmatmul.bf16.gmra.mxu0 %v5201
      %v5302 = vpop.f32.mrf.mxu0
      %v5303 = vadd.f32 0.0, %v5302
      %v5304 = vpop.f32.mrf.mxu0
      %v5305 = vadd.f32 0.0, %v5304
      %5306 = vmatmul.bf16.gmra.mxu0 %v5202
      %v5307 = vpop.f32.mrf.mxu0
      %v5308 = vadd.f32 0.0, %v5307
      %v5309 = vpop.f32.mrf.mxu0
      %v5310 = vadd.f32 0.0, %v5309
      %5311 = vmatmul.bf16.gmra.mxu0 %v5203
      %v5312 = vpop.f32.mrf.mxu0
      %v5313 = vadd.f32 0.0, %v5312
      %v5314 = vpop.f32.mrf.mxu0
      %v5315 = vadd.f32 0.0, %v5314
      %5316 = vmatmul.bf16.gmra.mxu0 %v5204
      %v5317 = vpop.f32.mrf.mxu0
      %v5318 = vadd.f32 0.0, %v5317
      %v5319 = vpop.f32.mrf.mxu0
      %v5320 = vadd.f32 0.0, %v5319
      %5321 = vmatmul.bf16.gmra.mxu0 %v5205
      %v5322 = vpop.f32.mrf.mxu0
      %v5323 = vadd.f32 0.0, %v5322
      %v5324 = vpop.f32.mrf.mxu0
      %v5325 = vadd.f32 0.0, %v5324
      %5326 = vmatmul.bf16.gmra.mxu0 %v5206
      %v5327 = vpop.f32.mrf.mxu0
      %v5328 = vadd.f32 0.0, %v5327
      %v5329 = vpop.f32.mrf.mxu0
      %v5330 = vadd.f32 0.0, %v5329
      %5331 = vmatmul.bf16.gmra.mxu0 %v5207
      %v5332 = vpop.f32.mrf.mxu0
      %v5333 = vadd.f32 0.0, %v5332
      %v5334 = vpop.f32.mrf.mxu0
      %v5335 = vadd.f32 0.0, %v5334
      %5336 = vmatmul.bf16.gmra.mxu0 %v5208
      %v5337 = vpop.f32.mrf.mxu0
      %v5338 = vadd.f32 0.0, %v5337
      %v5339 = vpop.f32.mrf.mxu0
      %v5340 = vadd.f32 0.0, %v5339
      %5341 = vmatmul.bf16.gmra.mxu0 %v5209
      %v5342 = vpop.f32.mrf.mxu0
      %v5343 = vadd.f32 0.0, %v5342
      %v5344 = vpop.f32.mrf.mxu0
      %v5345 = vadd.f32 0.0, %v5344
      %5346 = vmatmul.bf16.gmra.mxu0 %v5210
      %v5347 = vpop.f32.mrf.mxu0
      %v5348 = vadd.f32 0.0, %v5347
      %v5349 = vpop.f32.mrf.mxu0
      %v5350 = vadd.f32 0.0, %v5349
      %5351 = vmatmul.bf16.gmra.mxu0 %v5211
      %v5352 = vpop.f32.mrf.mxu0
      %v5353 = vadd.f32 0.0, %v5352
      %v5354 = vpop.f32.mrf.mxu0
      %v5355 = vadd.f32 0.0, %v5354
      %5356 = vmatmul.bf16.gmra.mxu0 %v5212
      %v5357 = vpop.f32.mrf.mxu0
      %v5358 = vadd.f32 0.0, %v5357
      %v5359 = vpop.f32.mrf.mxu0
      %v5360 = vadd.f32 0.0, %v5359
      %5361 = vmatmul.bf16.gmra.mxu0 %v5213
      %v5362 = vpop.f32.mrf.mxu0
      %v5363 = vadd.f32 0.0, %v5362
      %v5364 = vpop.f32.mrf.mxu0
      %v5365 = vadd.f32 0.0, %v5364
      %5366 = vdwg.mxu0
      %v5367 = vadd.f32 %v4733, %v5288
      %v5368 = vadd.f32 %v4734, %v5290
      %v5369 = vadd.f32 %v4735, %v5293
      %v5370 = vadd.f32 %v4736, %v5295
      %v5371 = vadd.f32 %v4737, %v5298
      %v5372 = vadd.f32 %v4738, %v5300
      %v5373 = vadd.f32 %v4739, %v5303
      %v5374 = vadd.f32 %v4740, %v5305
      %v5375 = vadd.f32 %v4741, %v5308
      %v5376 = vadd.f32 %v4742, %v5310
      %v5377 = vadd.f32 %v4743, %v5313
      %v5378 = vadd.f32 %v4744, %v5315
      %v5379 = vadd.f32 %v4745, %v5318
      %v5380 = vadd.f32 %v4746, %v5320
      %v5381 = vadd.f32 %v4747, %v5323
      %v5382 = vadd.f32 %v4748, %v5325
      %v5383 = vadd.f32 %v4749, %v5328
      %v5384 = vadd.f32 %v4750, %v5330
      %v5385 = vadd.f32 %v4751, %v5333
      %v5386 = vadd.f32 %v4752, %v5335
      %v5387 = vadd.f32 %v4753, %v5338
      %v5388 = vadd.f32 %v4754, %v5340
      %v5389 = vadd.f32 %v4755, %v5343
      %v5390 = vadd.f32 %v4756, %v5345
      %v5391 = vadd.f32 %v4757, %v5348
      %v5392 = vadd.f32 %v4758, %v5350
      %v5393 = vadd.f32 %v4759, %v5353
      %v5394 = vadd.f32 %v4760, %v5355
      %v5395 = vadd.f32 %v4761, %v5358
      %v5396 = vadd.f32 %v4762, %v5360
      %v5397 = vadd.f32 %v4763, %v5363
      %v5398 = vadd.f32 %v4764, %v5365
      %5399 = vst [vmem:[#allocation3] sm:$0xff] %v5367
      %5400 = vst [vmem:[#allocation3 + $0x8] sm:$0xff] %v5368
      %5401 = vst [vmem:[#allocation3 + $0x10] sm:$0xff] %v5369
      %5402 = vst [vmem:[#allocation3 + $0x18] sm:$0xff] %v5370
      %5403 = vst [vmem:[#allocation3 + $0x20] sm:$0xff] %v5371
      %5404 = vst [vmem:[#allocation3 + $0x28] sm:$0xff] %v5372
      %5405 = vst [vmem:[#allocation3 + $0x30] sm:$0xff] %v5373
      %5406 = vst [vmem:[#allocation3 + $0x38] sm:$0xff] %v5374
      %5407 = vst [vmem:[#allocation3 + $0x40] sm:$0xff] %v5375
      %5408 = vst [vmem:[#allocation3 + $0x48] sm:$0xff] %v5376
      %5409 = vst [vmem:[#allocation3 + $0x50] sm:$0xff] %v5377
      %5410 = vst [vmem:[#allocation3 + $0x58] sm:$0xff] %v5378
      %5411 = vst [vmem:[#allocation3 + $0x60] sm:$0xff] %v5379
      %5412 = vst [vmem:[#allocation3 + $0x68] sm:$0xff] %v5380
      %5413 = vst [vmem:[#allocation3 + $0x70] sm:$0xff] %v5381
      %5414 = vst [vmem:[#allocation3 + $0x78] sm:$0xff] %v5382
      %5415 = vst [vmem:[#allocation3 + $0x80] sm:$0xff] %v5383
      %5416 = vst [vmem:[#allocation3 + $0x88] sm:$0xff] %v5384
      %5417 = vst [vmem:[#allocation3 + $0x90] sm:$0xff] %v5385
      %5418 = vst [vmem:[#allocation3 + $0x98] sm:$0xff] %v5386
      %5419 = vst [vmem:[#allocation3 + $0xa0] sm:$0xff] %v5387
      %5420 = vst [vmem:[#allocation3 + $0xa8] sm:$0xff] %v5388
      %5421 = vst [vmem:[#allocation3 + $0xb0] sm:$0xff] %v5389
      %5422 = vst [vmem:[#allocation3 + $0xb8] sm:$0xff] %v5390
      %5423 = vst [vmem:[#allocation3 + $0xc0] sm:$0xff] %v5391
      %5424 = vst [vmem:[#allocation3 + $0xc8] sm:$0xff] %v5392
      %5425 = vst [vmem:[#allocation3 + $0xd0] sm:$0xff] %v5393
      %5426 = vst [vmem:[#allocation3 + $0xd8] sm:$0xff] %v5394
      %5427 = vst [vmem:[#allocation3 + $0xe0] sm:$0xff] %v5395
      %5428 = vst [vmem:[#allocation3 + $0xe8] sm:$0xff] %v5396
      %5429 = vst [vmem:[#allocation3 + $0xf0] sm:$0xff] %v5397
      %5430 = vst [vmem:[#allocation3 + $0xf8] sm:$0xff] %v5398
      %v5431 = vld [vmem:[%s4306] sm:$0xe]
      %v5432 = vld [vmem:[%s4306 + $0x4] sm:$0xf]
      %v5433 = vld [vmem:[%s4306 + $0x8] sm:$0x1]
      %v5434 = vld [vmem:[%s4306 + $0xc] sm:$0xe]
      %v5435 = vld [vmem:[%s4306 + $0x10] sm:$0xf]
      %v5436 = vld [vmem:[%s4306 + $0x14] sm:$0x1]
      %v5437 = vld [vmem:[%s4306 + $0x18] sm:$0xe]
      %v5438 = vld [vmem:[%s4306 + $0x1c] sm:$0xf]
      %v5439 = vld [vmem:[%s4306 + $0x20] sm:$0x1]
      %v5440 = vld [vmem:[%s4306 + $0x24] sm:$0xe]
      %v5441 = vld [vmem:[%s4306 + $0x28] sm:$0xf]
      %v5442 = vld [vmem:[%s4306 + $0x2c] sm:$0x1]
      %v5443 = vld [vmem:[%s4306 + $0x30] sm:$0xe]
      %v5444 = vld [vmem:[%s4306 + $0x34] sm:$0xf]
      %v5445 = vld [vmem:[%s4306 + $0x38] sm:$0x1]
      %v5446 = vld [vmem:[%s4306 + $0x3c] sm:$0xe]
      %v5447 = vld [vmem:[%s4306 + $0x40] sm:$0xf]
      %v5448 = vld [vmem:[%s4306 + $0x44] sm:$0x1]
      %v5449 = vld [vmem:[%s4306 + $0x48] sm:$0xe]
      %v5450 = vld [vmem:[%s4306 + $0x4c] sm:$0xf]
      %v5451 = vld [vmem:[%s4306 + $0x50] sm:$0x1]
      %v5452 = vld [vmem:[%s4306 + $0x54] sm:$0xe]
      %v5453 = vld [vmem:[%s4306 + $0x58] sm:$0xf]
      %v5454 = vld [vmem:[%s4306 + $0x5c] sm:$0x1]
      %v5455 = vld [vmem:[%s4306 + $0x60] sm:$0xe]
      %v5456 = vld [vmem:[%s4306 + $0x64] sm:$0xf]
      %v5457 = vld [vmem:[%s4306 + $0x68] sm:$0x1]
      %v5458 = vld [vmem:[%s4306 + $0x6c] sm:$0xe]
      %v5459 = vld [vmem:[%s4306 + $0x70] sm:$0xf]
      %v5460 = vld [vmem:[%s4306 + $0x74] sm:$0x1]
      %v5461 = vld [vmem:[%s4306 + $0x78] sm:$0xe]
      %v5462 = vld [vmem:[%s4306 + $0x7c] sm:$0xf]
      %v5463 = vld [vmem:[%s4306 + $0x80] sm:$0x1]
      %v5464 = vld [vmem:[%s4306 + $0x84] sm:$0xe]
      %v5465 = vld [vmem:[%s4306 + $0x88] sm:$0xf]
      %v5466 = vld [vmem:[%s4306 + $0x8c] sm:$0x1]
      %v5467 = vld [vmem:[%s4306 + $0x90] sm:$0xe]
      %v5468 = vld [vmem:[%s4306 + $0x94] sm:$0xf]
      %v5469 = vld [vmem:[%s4306 + $0x98] sm:$0x1]
      %v5470 = vld [vmem:[%s4306 + $0x9c] sm:$0xe]
      %v5471 = vld [vmem:[%s4306 + $0xa0] sm:$0xf]
      %v5472 = vld [vmem:[%s4306 + $0xa4] sm:$0x1]
      %v5473 = vld [vmem:[%s4306 + $0xa8] sm:$0xe]
      %v5474 = vld [vmem:[%s4306 + $0xac] sm:$0xf]
      %v5475 = vld [vmem:[%s4306 + $0xb0] sm:$0x1]
      %v5476 = vld [vmem:[%s4306 + $0xb4] sm:$0xe]
      %v5477 = vld [vmem:[%s4306 + $0xb8] sm:$0xf]
      %v5478 = vld [vmem:[%s4306 + $0xbc] sm:$0x1]
      %v5479 = vld [vmem:[#allocation3] sm:$0xff]
      %v5480 = vld [vmem:[#allocation3 + $0x8] sm:$0xff]
      %v5481 = vld [vmem:[#allocation3 + $0x10] sm:$0xff]
      %v5482 = vld [vmem:[#allocation3 + $0x18] sm:$0xff]
      %v5483 = vld [vmem:[#allocation3 + $0x20] sm:$0xff]
      %v5484 = vld [vmem:[#allocation3 + $0x28] sm:$0xff]
      %v5485 = vld [vmem:[#allocation3 + $0x30] sm:$0xff]
      %v5486 = vld [vmem:[#allocation3 + $0x38] sm:$0xff]
      %v5487 = vld [vmem:[#allocation3 + $0x40] sm:$0xff]
      %v5488 = vld [vmem:[#allocation3 + $0x48] sm:$0xff]
      %v5489 = vld [vmem:[#allocation3 + $0x50] sm:$0xff]
      %v5490 = vld [vmem:[#allocation3 + $0x58] sm:$0xff]
      %v5491 = vld [vmem:[#allocation3 + $0x60] sm:$0xff]
      %v5492 = vld [vmem:[#allocation3 + $0x68] sm:$0xff]
      %v5493 = vld [vmem:[#allocation3 + $0x70] sm:$0xff]
      %v5494 = vld [vmem:[#allocation3 + $0x78] sm:$0xff]
      %v5495 = vld [vmem:[#allocation3 + $0x80] sm:$0xff]
      %v5496 = vld [vmem:[#allocation3 + $0x88] sm:$0xff]
      %v5497 = vld [vmem:[#allocation3 + $0x90] sm:$0xff]
      %v5498 = vld [vmem:[#allocation3 + $0x98] sm:$0xff]
      %v5499 = vld [vmem:[#allocation3 + $0xa0] sm:$0xff]
      %v5500 = vld [vmem:[#allocation3 + $0xa8] sm:$0xff]
      %v5501 = vld [vmem:[#allocation3 + $0xb0] sm:$0xff]
      %v5502 = vld [vmem:[#allocation3 + $0xb8] sm:$0xff]
      %v5503 = vld [vmem:[#allocation3 + $0xc0] sm:$0xff]
      %v5504 = vld [vmem:[#allocation3 + $0xc8] sm:$0xff]
      %v5505 = vld [vmem:[#allocation3 + $0xd0] sm:$0xff]
      %v5506 = vld [vmem:[#allocation3 + $0xd8] sm:$0xff]
      %v5507 = vld [vmem:[#allocation3 + $0xe0] sm:$0xff]
      %v5508 = vld [vmem:[#allocation3 + $0xe8] sm:$0xff]
      %v5509 = vld [vmem:[#allocation3 + $0xf0] sm:$0xff]
      %v5510 = vld [vmem:[#allocation3 + $0xf8] sm:$0xff]
      %v5559 = vrot.slane %v5431, 5
      %v5560 = vrot.slane %v5559, 4
      %v5561 = vrot.slane %v5432, 5
      %v5562 = vsel %vm2258, %v5560, %v5561
      %v5563 = vrot.slane %v5561, 4
      %v5564 = vrot.slane %v5433, 5
      %v5565 = vsel %vm2258, %v5563, %v5564
      %v5566 = vrot.slane %v5434, 5
      %v5567 = vrot.slane %v5566, 4
      %v5568 = vrot.slane %v5435, 5
      %v5569 = vsel %vm2258, %v5567, %v5568
      %v5570 = vrot.slane %v5568, 4
      %v5571 = vrot.slane %v5436, 5
      %v5572 = vsel %vm2258, %v5570, %v5571
      %v5573 = vrot.slane %v5437, 5
      %v5574 = vrot.slane %v5573, 4
      %v5575 = vrot.slane %v5438, 5
      %v5576 = vsel %vm2258, %v5574, %v5575
      %v5577 = vrot.slane %v5575, 4
      %v5578 = vrot.slane %v5439, 5
      %v5579 = vsel %vm2258, %v5577, %v5578
      %v5580 = vrot.slane %v5440, 5
      %v5581 = vrot.slane %v5580, 4
      %v5582 = vrot.slane %v5441, 5
      %v5583 = vsel %vm2258, %v5581, %v5582
      %v5584 = vrot.slane %v5582, 4
      %v5585 = vrot.slane %v5442, 5
      %v5586 = vsel %vm2258, %v5584, %v5585
      %v5587 = vrot.slane %v5443, 5
      %v5588 = vrot.slane %v5587, 4
      %v5589 = vrot.slane %v5444, 5
      %v5590 = vsel %vm2258, %v5588, %v5589
      %v5591 = vrot.slane %v5589, 4
      %v5592 = vrot.slane %v5445, 5
      %v5593 = vsel %vm2258, %v5591, %v5592
      %v5594 = vrot.slane %v5446, 5
      %v5595 = vrot.slane %v5594, 4
      %v5596 = vrot.slane %v5447, 5
      %v5597 = vsel %vm2258, %v5595, %v5596
      %v5598 = vrot.slane %v5596, 4
      %v5599 = vrot.slane %v5448, 5
      %v5600 = vsel %vm2258, %v5598, %v5599
      %v5601 = vrot.slane %v5449, 5
      %v5602 = vrot.slane %v5601, 4
      %v5603 = vrot.slane %v5450, 5
      %v5604 = vsel %vm2258, %v5602, %v5603
      %v5605 = vrot.slane %v5603, 4
      %v5606 = vrot.slane %v5451, 5
      %v5607 = vsel %vm2258, %v5605, %v5606
      %v5608 = vrot.slane %v5452, 5
      %v5609 = vrot.slane %v5608, 4
      %v5610 = vrot.slane %v5453, 5
      %v5611 = vsel %vm2258, %v5609, %v5610
      %v5612 = vrot.slane %v5610, 4
      %v5613 = vrot.slane %v5454, 5
      %v5614 = vsel %vm2258, %v5612, %v5613
      %v5615 = vrot.slane %v5455, 5
      %v5616 = vrot.slane %v5615, 4
      %v5617 = vrot.slane %v5456, 5
      %v5618 = vsel %vm2258, %v5616, %v5617
      %v5619 = vrot.slane %v5617, 4
      %v5620 = vrot.slane %v5457, 5
      %v5621 = vsel %vm2258, %v5619, %v5620
      %v5622 = vrot.slane %v5458, 5
      %v5623 = vrot.slane %v5622, 4
      %v5624 = vrot.slane %v5459, 5
      %v5625 = vsel %vm2258, %v5623, %v5624
      %v5626 = vrot.slane %v5624, 4
      %v5627 = vrot.slane %v5460, 5
      %v5628 = vsel %vm2258, %v5626, %v5627
      %v5629 = vrot.slane %v5461, 5
      %v5630 = vrot.slane %v5629, 4
      %v5631 = vrot.slane %v5462, 5
      %v5632 = vsel %vm2258, %v5630, %v5631
      %v5633 = vrot.slane %v5631, 4
      %v5634 = vrot.slane %v5463, 5
      %v5635 = vsel %vm2258, %v5633, %v5634
      %v5636 = vrot.slane %v5464, 5
      %v5637 = vrot.slane %v5636, 4
      %v5638 = vrot.slane %v5465, 5
      %v5639 = vsel %vm2258, %v5637, %v5638
      %v5640 = vrot.slane %v5638, 4
      %v5641 = vrot.slane %v5466, 5
      %v5642 = vsel %vm2258, %v5640, %v5641
      %v5643 = vrot.slane %v5467, 5
      %v5644 = vrot.slane %v5643, 4
      %v5645 = vrot.slane %v5468, 5
      %v5646 = vsel %vm2258, %v5644, %v5645
      %v5647 = vrot.slane %v5645, 4
      %v5648 = vrot.slane %v5469, 5
      %v5649 = vsel %vm2258, %v5647, %v5648
      %v5650 = vrot.slane %v5470, 5
      %v5651 = vrot.slane %v5650, 4
      %v5652 = vrot.slane %v5471, 5
      %v5653 = vsel %vm2258, %v5651, %v5652
      %v5654 = vrot.slane %v5652, 4
      %v5655 = vrot.slane %v5472, 5
      %v5656 = vsel %vm2258, %v5654, %v5655
      %v5657 = vrot.slane %v5473, 5
      %v5658 = vrot.slane %v5657, 4
      %v5659 = vrot.slane %v5474, 5
      %v5660 = vsel %vm2258, %v5658, %v5659
      %v5661 = vrot.slane %v5659, 4
      %v5662 = vrot.slane %v5475, 5
      %v5663 = vsel %vm2258, %v5661, %v5662
      %v5664 = vrot.slane %v5476, 5
      %v5665 = vrot.slane %v5664, 4
      %v5666 = vrot.slane %v5477, 5
      %v5667 = vsel %vm2258, %v5665, %v5666
      %v5668 = vrot.slane %v5666, 4
      %v5669 = vrot.slane %v5478, 5
      %v5670 = vsel %vm2258, %v5668, %v5669
      %s5671 = scalar_lea.vmem %s3, 512
      %v5672 = vld [vmem:[%s5671] sm:$0xf]
      %v5673 = vld [vmem:[%s5671 + $0x4] sm:$0xf]
      %v5674 = vld [vmem:[%s5671 + $0x8] sm:$0xf]
      %v5675 = vld [vmem:[%s5671 + $0xc] sm:$0xf]
      %v5676 = vld [vmem:[%s5671 + $0x10] sm:$0xf]
      %v5677 = vld [vmem:[%s5671 + $0x14] sm:$0xf]
      %v5678 = vld [vmem:[%s5671 + $0x18] sm:$0xf]
      %v5679 = vld [vmem:[%s5671 + $0x1c] sm:$0xf]
      %v5680 = vld [vmem:[%s5671 + $0x20] sm:$0xf]
      %v5681 = vld [vmem:[%s5671 + $0x24] sm:$0xf]
      %v5682 = vld [vmem:[%s5671 + $0x28] sm:$0xf]
      %v5683 = vld [vmem:[%s5671 + $0x2c] sm:$0xf]
      %v5684 = vld [vmem:[%s5671 + $0x30] sm:$0xf]
      %v5685 = vld [vmem:[%s5671 + $0x34] sm:$0xf]
      %v5686 = vld [vmem:[%s5671 + $0x38] sm:$0xf]
      %v5687 = vld [vmem:[%s5671 + $0x3c] sm:$0xf]
      %v5688 = vunpack.c.l.b16 %v5562
      %v5689 = vunpack.c.l.b16 %v5565
      %v5690 = vunpack.c.l.b16 %v5569
      %v5691 = vunpack.c.l.b16 %v5572
      %v5692 = vunpack.c.l.b16 %v5576
      %v5693 = vunpack.c.l.b16 %v5579
      %v5694 = vunpack.c.l.b16 %v5583
      %v5695 = vunpack.c.l.b16 %v5586
      %v5696 = vunpack.c.l.b16 %v5590
      %v5697 = vunpack.c.l.b16 %v5593
      %v5698 = vunpack.c.l.b16 %v5597
      %v5699 = vunpack.c.l.b16 %v5600
      %v5700 = vunpack.c.l.b16 %v5604
      %v5701 = vunpack.c.l.b16 %v5607
      %v5702 = vunpack.c.l.b16 %v5611
      %v5703 = vunpack.c.l.b16 %v5614
      %v5704 = vunpack.c.l.b16 %v5618
      %v5705 = vunpack.c.l.b16 %v5621
      %v5706 = vunpack.c.l.b16 %v5625
      %v5707 = vunpack.c.l.b16 %v5628
      %v5708 = vunpack.c.l.b16 %v5632
      %v5709 = vunpack.c.l.b16 %v5635
      %v5710 = vunpack.c.l.b16 %v5639
      %v5711 = vunpack.c.l.b16 %v5642
      %v5712 = vunpack.c.l.b16 %v5646
      %v5713 = vunpack.c.l.b16 %v5649
      %v5714 = vunpack.c.l.b16 %v5653
      %v5715 = vunpack.c.l.b16 %v5656
      %v5716 = vunpack.c.l.b16 %v5660
      %v5717 = vunpack.c.l.b16 %v5663
      %v5718 = vunpack.c.l.b16 %v5667
      %v5719 = vunpack.c.l.b16 %v5670
      %v5720 = vpack.c.b16 %v5689, %v5688
      %v5721 = vpack.c.b16 %v5691, %v5690
      %v5722 = vpack.c.b16 %v5693, %v5692
      %v5723 = vpack.c.b16 %v5695, %v5694
      %v5724 = vpack.c.b16 %v5697, %v5696
      %v5725 = vpack.c.b16 %v5699, %v5698
      %v5726 = vpack.c.b16 %v5701, %v5700
      %v5727 = vpack.c.b16 %v5703, %v5702
      %v5728 = vpack.c.b16 %v5705, %v5704
      %v5729 = vpack.c.b16 %v5707, %v5706
      %v5730 = vpack.c.b16 %v5709, %v5708
      %v5731 = vpack.c.b16 %v5711, %v5710
      %v5732 = vpack.c.b16 %v5713, %v5712
      %v5733 = vpack.c.b16 %v5715, %v5714
      %v5734 = vpack.c.b16 %v5717, %v5716
      %v5735 = vpack.c.b16 %v5719, %v5718
      %v5768 = vunpack.c.l.b16 %v5672
      %v5769 = vunpack.c.l.b16 %v5673
      %v5770 = vunpack.c.l.b16 %v5674
      %v5771 = vunpack.c.l.b16 %v5675
      %v5772 = vunpack.c.l.b16 %v5676
      %v5773 = vunpack.c.l.b16 %v5677
      %v5774 = vunpack.c.l.b16 %v5678
      %v5775 = vunpack.c.l.b16 %v5679
      %v5776 = vunpack.c.l.b16 %v5680
      %v5777 = vunpack.c.l.b16 %v5681
      %v5778 = vunpack.c.l.b16 %v5682
      %v5779 = vunpack.c.l.b16 %v5683
      %v5780 = vunpack.c.l.b16 %v5684
      %v5781 = vunpack.c.l.b16 %v5685
      %v5782 = vunpack.c.l.b16 %v5686
      %v5783 = vunpack.c.l.b16 %v5687
      %v5784 = vpack.c.b16 %v5769, %v5768
      %v5785 = vpack.c.b16 %v5771, %v5770
      %v5786 = vpack.c.b16 %v5773, %v5772
      %v5787 = vpack.c.b16 %v5775, %v5774
      %v5788 = vpack.c.b16 %v5777, %v5776
      %v5789 = vpack.c.b16 %v5779, %v5778
      %v5790 = vpack.c.b16 %v5781, %v5780
      %v5791 = vpack.c.b16 %v5783, %v5782
      %5800 = vmatpush.bf16.msra.mxu0 %v5791
      %5801 = vmatpush.bf16.msra.mxu0 %v5790
      %5802 = vmatpush.bf16.msra.mxu0 %v5789
      %5803 = vmatpush.bf16.msra.mxu0 %v5788
      %5804 = vmatpush.bf16.msra.mxu0 %v5787
      %5805 = vmatpush.bf16.msra.mxu0 %v5786
      %5806 = vmatpush.bf16.msra.mxu0 %v5785
      %5807 = vmatpush.bf16.msra.mxu0 %v5784
      %5808 = vmatmul.bf16.gmra.mxu0 %v5720
      %v5809 = vpop.f32.mrf.mxu0
      %v5810 = vadd.f32 0.0, %v5809
      %v5811 = vpop.f32.mrf.mxu0
      %v5812 = vadd.f32 0.0, %v5811
      %5813 = vmatmul.bf16.gmra.mxu0 %v5721
      %v5814 = vpop.f32.mrf.mxu0
      %v5815 = vadd.f32 0.0, %v5814
      %v5816 = vpop.f32.mrf.mxu0
      %v5817 = vadd.f32 0.0, %v5816
      %5818 = vmatmul.bf16.gmra.mxu0 %v5722
      %v5819 = vpop.f32.mrf.mxu0
      %v5820 = vadd.f32 0.0, %v5819
      %v5821 = vpop.f32.mrf.mxu0
      %v5822 = vadd.f32 0.0, %v5821
      %5823 = vmatmul.bf16.gmra.mxu0 %v5723
      %v5824 = vpop.f32.mrf.mxu0
      %v5825 = vadd.f32 0.0, %v5824
      %v5826 = vpop.f32.mrf.mxu0
      %v5827 = vadd.f32 0.0, %v5826
      %5828 = vmatmul.bf16.gmra.mxu0 %v5724
      %v5829 = vpop.f32.mrf.mxu0
      %v5830 = vadd.f32 0.0, %v5829
      %v5831 = vpop.f32.mrf.mxu0
      %v5832 = vadd.f32 0.0, %v5831
      %5833 = vmatmul.bf16.gmra.mxu0 %v5725
      %v5834 = vpop.f32.mrf.mxu0
      %v5835 = vadd.f32 0.0, %v5834
      %v5836 = vpop.f32.mrf.mxu0
      %v5837 = vadd.f32 0.0, %v5836
      %5838 = vmatmul.bf16.gmra.mxu0 %v5726
      %v5839 = vpop.f32.mrf.mxu0
      %v5840 = vadd.f32 0.0, %v5839
      %v5841 = vpop.f32.mrf.mxu0
      %v5842 = vadd.f32 0.0, %v5841
      %5843 = vmatmul.bf16.gmra.mxu0 %v5727
      %v5844 = vpop.f32.mrf.mxu0
      %v5845 = vadd.f32 0.0, %v5844
      %v5846 = vpop.f32.mrf.mxu0
      %v5847 = vadd.f32 0.0, %v5846
      %5848 = vmatmul.bf16.gmra.mxu0 %v5728
      %v5849 = vpop.f32.mrf.mxu0
      %v5850 = vadd.f32 0.0, %v5849
      %v5851 = vpop.f32.mrf.mxu0
      %v5852 = vadd.f32 0.0, %v5851
      %5853 = vmatmul.bf16.gmra.mxu0 %v5729
      %v5854 = vpop.f32.mrf.mxu0
      %v5855 = vadd.f32 0.0, %v5854
      %v5856 = vpop.f32.mrf.mxu0
      %v5857 = vadd.f32 0.0, %v5856
      %5858 = vmatmul.bf16.gmra.mxu0 %v5730
      %v5859 = vpop.f32.mrf.mxu0
      %v5860 = vadd.f32 0.0, %v5859
      %v5861 = vpop.f32.mrf.mxu0
      %v5862 = vadd.f32 0.0, %v5861
      %5863 = vmatmul.bf16.gmra.mxu0 %v5731
      %v5864 = vpop.f32.mrf.mxu0
      %v5865 = vadd.f32 0.0, %v5864
      %v5866 = vpop.f32.mrf.mxu0
      %v5867 = vadd.f32 0.0, %v5866
      %5868 = vmatmul.bf16.gmra.mxu0 %v5732
      %v5869 = vpop.f32.mrf.mxu0
      %v5870 = vadd.f32 0.0, %v5869
      %v5871 = vpop.f32.mrf.mxu0
      %v5872 = vadd.f32 0.0, %v5871
      %5873 = vmatmul.bf16.gmra.mxu0 %v5733
      %v5874 = vpop.f32.mrf.mxu0
      %v5875 = vadd.f32 0.0, %v5874
      %v5876 = vpop.f32.mrf.mxu0
      %v5877 = vadd.f32 0.0, %v5876
      %5878 = vmatmul.bf16.gmra.mxu0 %v5734
      %v5879 = vpop.f32.mrf.mxu0
      %v5880 = vadd.f32 0.0, %v5879
      %v5881 = vpop.f32.mrf.mxu0
      %v5882 = vadd.f32 0.0, %v5881
      %5883 = vmatmul.bf16.gmra.mxu0 %v5735
      %v5884 = vpop.f32.mrf.mxu0
      %v5885 = vadd.f32 0.0, %v5884
      %v5886 = vpop.f32.mrf.mxu0
      %v5887 = vadd.f32 0.0, %v5886
      %5888 = vdwg.mxu0
      %v5889 = vadd.f32 %v5479, %v5810
      %v5890 = vadd.f32 %v5480, %v5812
      %v5891 = vadd.f32 %v5481, %v5815
      %v5892 = vadd.f32 %v5482, %v5817
      %v5893 = vadd.f32 %v5483, %v5820
      %v5894 = vadd.f32 %v5484, %v5822
      %v5895 = vadd.f32 %v5485, %v5825
      %v5896 = vadd.f32 %v5486, %v5827
      %v5897 = vadd.f32 %v5487, %v5830
      %v5898 = vadd.f32 %v5488, %v5832
      %v5899 = vadd.f32 %v5489, %v5835
      %v5900 = vadd.f32 %v5490, %v5837
      %v5901 = vadd.f32 %v5491, %v5840
      %v5902 = vadd.f32 %v5492, %v5842
      %v5903 = vadd.f32 %v5493, %v5845
      %v5904 = vadd.f32 %v5494, %v5847
      %v5905 = vadd.f32 %v5495, %v5850
      %v5906 = vadd.f32 %v5496, %v5852
      %v5907 = vadd.f32 %v5497, %v5855
      %v5908 = vadd.f32 %v5498, %v5857
      %v5909 = vadd.f32 %v5499, %v5860
      %v5910 = vadd.f32 %v5500, %v5862
      %v5911 = vadd.f32 %v5501, %v5865
      %v5912 = vadd.f32 %v5502, %v5867
      %v5913 = vadd.f32 %v5503, %v5870
      %v5914 = vadd.f32 %v5504, %v5872
      %v5915 = vadd.f32 %v5505, %v5875
      %v5916 = vadd.f32 %v5506, %v5877
      %v5917 = vadd.f32 %v5507, %v5880
      %v5918 = vadd.f32 %v5508, %v5882
      %v5919 = vadd.f32 %v5509, %v5885
      %v5920 = vadd.f32 %v5510, %v5887
      %5921 = vst [vmem:[#allocation3] sm:$0xff] %v5889
      %5922 = vst [vmem:[#allocation3 + $0x8] sm:$0xff] %v5890
      %5923 = vst [vmem:[#allocation3 + $0x10] sm:$0xff] %v5891
      %5924 = vst [vmem:[#allocation3 + $0x18] sm:$0xff] %v5892
      %5925 = vst [vmem:[#allocation3 + $0x20] sm:$0xff] %v5893
      %5926 = vst [vmem:[#allocation3 + $0x28] sm:$0xff] %v5894
      %5927 = vst [vmem:[#allocation3 + $0x30] sm:$0xff] %v5895
      %5928 = vst [vmem:[#allocation3 + $0x38] sm:$0xff] %v5896
      %5929 = vst [vmem:[#allocation3 + $0x40] sm:$0xff] %v5897
      %5930 = vst [vmem:[#allocation3 + $0x48] sm:$0xff] %v5898
      %5931 = vst [vmem:[#allocation3 + $0x50] sm:$0xff] %v5899
      %5932 = vst [vmem:[#allocation3 + $0x58] sm:$0xff] %v5900
      %5933 = vst [vmem:[#allocation3 + $0x60] sm:$0xff] %v5901
      %5934 = vst [vmem:[#allocation3 + $0x68] sm:$0xff] %v5902
      %5935 = vst [vmem:[#allocation3 + $0x70] sm:$0xff] %v5903
      %5936 = vst [vmem:[#allocation3 + $0x78] sm:$0xff] %v5904
      %5937 = vst [vmem:[#allocation3 + $0x80] sm:$0xff] %v5905
      %5938 = vst [vmem:[#allocation3 + $0x88] sm:$0xff] %v5906
      %5939 = vst [vmem:[#allocation3 + $0x90] sm:$0xff] %v5907
      %5940 = vst [vmem:[#allocation3 + $0x98] sm:$0xff] %v5908
      %5941 = vst [vmem:[#allocation3 + $0xa0] sm:$0xff] %v5909
      %5942 = vst [vmem:[#allocation3 + $0xa8] sm:$0xff] %v5910
      %5943 = vst [vmem:[#allocation3 + $0xb0] sm:$0xff] %v5911
      %5944 = vst [vmem:[#allocation3 + $0xb8] sm:$0xff] %v5912
      %5945 = vst [vmem:[#allocation3 + $0xc0] sm:$0xff] %v5913
      %5946 = vst [vmem:[#allocation3 + $0xc8] sm:$0xff] %v5914
      %5947 = vst [vmem:[#allocation3 + $0xd0] sm:$0xff] %v5915
      %5948 = vst [vmem:[#allocation3 + $0xd8] sm:$0xff] %v5916
      %5949 = vst [vmem:[#allocation3 + $0xe0] sm:$0xff] %v5917
      %5950 = vst [vmem:[#allocation3 + $0xe8] sm:$0xff] %v5918
      %5951 = vst [vmem:[#allocation3 + $0xf0] sm:$0xff] %v5919
      %5952 = vst [vmem:[#allocation3 + $0xf8] sm:$0xff] %v5920
      %v5953 = vld [vmem:[#allocation3] sm:$0xff]
      %v5954 = vld [vmem:[#allocation3 + $0x8] sm:$0xff]
      %v5955 = vld [vmem:[#allocation3 + $0x10] sm:$0xff]
      %v5956 = vld [vmem:[#allocation3 + $0x18] sm:$0xff]
      %v5957 = vld [vmem:[#allocation3 + $0x20] sm:$0xff]
      %v5958 = vld [vmem:[#allocation3 + $0x28] sm:$0xff]
      %v5959 = vld [vmem:[#allocation3 + $0x30] sm:$0xff]
      %v5960 = vld [vmem:[#allocation3 + $0x38] sm:$0xff]
      %v5961 = vld [vmem:[#allocation3 + $0x40] sm:$0xff]
      %v5962 = vld [vmem:[#allocation3 + $0x48] sm:$0xff]
      %v5963 = vld [vmem:[#allocation3 + $0x50] sm:$0xff]
      %v5964 = vld [vmem:[#allocation3 + $0x58] sm:$0xff]
      %v5965 = vld [vmem:[#allocation3 + $0x60] sm:$0xff]
      %v5966 = vld [vmem:[#allocation3 + $0x68] sm:$0xff]
      %v5967 = vld [vmem:[#allocation3 + $0x70] sm:$0xff]
      %v5968 = vld [vmem:[#allocation3 + $0x78] sm:$0xff]
      %v5969 = vld [vmem:[#allocation3 + $0x80] sm:$0xff]
      %v5970 = vld [vmem:[#allocation3 + $0x88] sm:$0xff]
      %v5971 = vld [vmem:[#allocation3 + $0x90] sm:$0xff]
      %v5972 = vld [vmem:[#allocation3 + $0x98] sm:$0xff]
      %v5973 = vld [vmem:[#allocation3 + $0xa0] sm:$0xff]
      %v5974 = vld [vmem:[#allocation3 + $0xa8] sm:$0xff]
      %v5975 = vld [vmem:[#allocation3 + $0xb0] sm:$0xff]
      %v5976 = vld [vmem:[#allocation3 + $0xb8] sm:$0xff]
      %v5977 = vld [vmem:[#allocation3 + $0xc0] sm:$0xff]
      %v5978 = vld [vmem:[#allocation3 + $0xc8] sm:$0xff]
      %v5979 = vld [vmem:[#allocation3 + $0xd0] sm:$0xff]
      %v5980 = vld [vmem:[#allocation3 + $0xd8] sm:$0xff]
      %v5981 = vld [vmem:[#allocation3 + $0xe0] sm:$0xff]
      %v5982 = vld [vmem:[#allocation3 + $0xe8] sm:$0xff]
      %v5983 = vld [vmem:[#allocation3 + $0xf0] sm:$0xff]
      %v5984 = vld [vmem:[#allocation3 + $0xf8] sm:$0xff]
      %v5985 = vpack.c.bf16 %v5953, %v5953
      %v5986 = vpack.c.bf16 %v5954, %v5954
      %v5987 = vpack.c.bf16 %v5955, %v5955
      %v5988 = vpack.c.bf16 %v5956, %v5956
      %v5989 = vpack.c.bf16 %v5957, %v5957
      %v5990 = vpack.c.bf16 %v5958, %v5958
      %v5991 = vpack.c.bf16 %v5959, %v5959
      %v5992 = vpack.c.bf16 %v5960, %v5960
      %v5993 = vpack.c.bf16 %v5961, %v5961
      %v5994 = vpack.c.bf16 %v5962, %v5962
      %v5995 = vpack.c.bf16 %v5963, %v5963
      %v5996 = vpack.c.bf16 %v5964, %v5964
      %v5997 = vpack.c.bf16 %v5965, %v5965
      %v5998 = vpack.c.bf16 %v5966, %v5966
      %v5999 = vpack.c.bf16 %v5967, %v5967
      %v6000 = vpack.c.bf16 %v5968, %v5968
      %v6001 = vpack.c.bf16 %v5969, %v5969
      %v6002 = vpack.c.bf16 %v5970, %v5970
      %v6003 = vpack.c.bf16 %v5971, %v5971
      %v6004 = vpack.c.bf16 %v5972, %v5972
      %v6005 = vpack.c.bf16 %v5973, %v5973
      %v6006 = vpack.c.bf16 %v5974, %v5974
      %v6007 = vpack.c.bf16 %v5975, %v5975
      %v6008 = vpack.c.bf16 %v5976, %v5976
      %v6009 = vpack.c.bf16 %v5977, %v5977
      %v6010 = vpack.c.bf16 %v5978, %v5978
      %v6011 = vpack.c.bf16 %v5979, %v5979
      %v6012 = vpack.c.bf16 %v5980, %v5980
      %v6013 = vpack.c.bf16 %v5981, %v5981
      %v6014 = vpack.c.bf16 %v5982, %v5982
      %v6015 = vpack.c.bf16 %v5983, %v5983
      %v6016 = vpack.c.bf16 %v5984, %v5984
      %6017 = vst [vmem:[%s258] sm:$0xf] %v5985
      %6018 = vst [vmem:[%s258 + $0x4] sm:$0xf] %v5986
      %6019 = vst [vmem:[%s258 + $0x8] sm:$0xf] %v5987
      %6020 = vst [vmem:[%s258 + $0xc] sm:$0xf] %v5988
      %6021 = vst [vmem:[%s258 + $0x10] sm:$0xf] %v5989
      %6022 = vst [vmem:[%s258 + $0x14] sm:$0xf] %v5990
      %6023 = vst [vmem:[%s258 + $0x18] sm:$0xf] %v5991
      %6024 = vst [vmem:[%s258 + $0x1c] sm:$0xf] %v5992
      %6025 = vst [vmem:[%s258 + $0x20] sm:$0xf] %v5993
      %6026 = vst [vmem:[%s258 + $0x24] sm:$0xf] %v5994
      %6027 = vst [vmem:[%s258 + $0x28] sm:$0xf] %v5995
      %6028 = vst [vmem:[%s258 + $0x2c] sm:$0xf] %v5996
      %6029 = vst [vmem:[%s258 + $0x30] sm:$0xf] %v5997
      %6030 = vst [vmem:[%s258 + $0x34] sm:$0xf] %v5998
      %6031 = vst [vmem:[%s258 + $0x38] sm:$0xf] %v5999
      %6032 = vst [vmem:[%s258 + $0x3c] sm:$0xf] %v6000
      %6033 = vst [vmem:[%s258 + $0x40] sm:$0xf] %v6001
      %6034 = vst [vmem:[%s258 + $0x44] sm:$0xf] %v6002
      %6035 = vst [vmem:[%s258 + $0x48] sm:$0xf] %v6003
      %6036 = vst [vmem:[%s258 + $0x4c] sm:$0xf] %v6004
      %6037 = vst [vmem:[%s258 + $0x50] sm:$0xf] %v6005
      %6038 = vst [vmem:[%s258 + $0x54] sm:$0xf] %v6006
      %6039 = vst [vmem:[%s258 + $0x58] sm:$0xf] %v6007
      %6040 = vst [vmem:[%s258 + $0x5c] sm:$0xf] %v6008
      %6041 = vst [vmem:[%s258 + $0x60] sm:$0xf] %v6009
      %6042 = vst [vmem:[%s258 + $0x64] sm:$0xf] %v6010
      %6043 = vst [vmem:[%s258 + $0x68] sm:$0xf] %v6011
      %6044 = vst [vmem:[%s258 + $0x6c] sm:$0xf] %v6012
      %6045 = vst [vmem:[%s258 + $0x70] sm:$0xf] %v6013
      %6046 = vst [vmem:[%s258 + $0x74] sm:$0xf] %v6014
      %6047 = vst [vmem:[%s258 + $0x78] sm:$0xf] %v6015
      %6048 = vst [vmem:[%s258 + $0x7c] sm:$0xf] %v6016
      %v6049 = vadd.f32 %v5953, %v5954
      %v6050 = vadd.f32 %v6049, %v5955
      %v6051 = vadd.f32 %v6050, %v5956
      %v6052 = vadd.f32 %v6051, %v5957
      %v6053 = vadd.f32 %v6052, %v5958
      %v6054 = vadd.f32 %v6053, %v5959
      %v6055 = vadd.f32 %v6054, %v5960
      %v6056 = vadd.f32 %v6055, %v5961
      %v6057 = vadd.f32 %v6056, %v5962
      %v6058 = vadd.f32 %v6057, %v5963
      %v6059 = vadd.f32 %v6058, %v5964
      %v6060 = vadd.f32 %v6059, %v5965
      %v6061 = vadd.f32 %v6060, %v5966
      %v6062 = vadd.f32 %v6061, %v5967
      %v6063 = vadd.f32 %v6062, %v5968
      %v6064 = vadd.f32 %v6063, %v5969
      %v6065 = vadd.f32 %v6064, %v5970
      %v6066 = vadd.f32 %v6065, %v5971
      %v6067 = vadd.f32 %v6066, %v5972
      %v6068 = vadd.f32 %v6067, %v5973
      %v6069 = vadd.f32 %v6068, %v5974
      %v6070 = vadd.f32 %v6069, %v5975
      %v6071 = vadd.f32 %v6070, %v5976
      %v6072 = vadd.f32 %v6071, %v5977
      %v6073 = vadd.f32 %v6072, %v5978
      %v6074 = vadd.f32 %v6073, %v5979
      %v6075 = vadd.f32 %v6074, %v5980
      %v6076 = vadd.f32 %v6075, %v5981
      %v6077 = vadd.f32 %v6076, %v5982
      %v6078 = vadd.f32 %v6077, %v5983
      %v6079 = vadd.f32 %v6078, %v5984
      %v6080 = vrot.slane %v6079, 4
      %v6081 = vadd.f32 %v6079, %v6080
      %v6082 = vrot.slane %v6081, 2
      %v6083 = vadd.f32 %v6081, %v6082
      %v6084 = vrot.slane %v6083, 1
      %v6085 = vadd.f32 %v6083, %v6084
      %6086 = vst [vmem:[%s265] sm:$0x1] %v6085
      %v6087 = vmul.f32 %v5953, %v5953
      %v6088 = vmul.f32 %v5954, %v5954
      %v6089 = vmul.f32 %v5955, %v5955
      %v6090 = vmul.f32 %v5956, %v5956
      %v6091 = vmul.f32 %v5957, %v5957
      %v6092 = vmul.f32 %v5958, %v5958
      %v6093 = vmul.f32 %v5959, %v5959
      %v6094 = vmul.f32 %v5960, %v5960
      %v6095 = vmul.f32 %v5961, %v5961
      %v6096 = vmul.f32 %v5962, %v5962
      %v6097 = vmul.f32 %v5963, %v5963
      %v6098 = vmul.f32 %v5964, %v5964
      %v6099 = vmul.f32 %v5965, %v5965
      %v6100 = vmul.f32 %v5966, %v5966
      %v6101 = vmul.f32 %v5967, %v5967
      %v6102 = vmul.f32 %v5968, %v5968
      %v6103 = vmul.f32 %v5969, %v5969
      %v6104 = vmul.f32 %v5970, %v5970
      %v6105 = vmul.f32 %v5971, %v5971
      %v6106 = vmul.f32 %v5972, %v5972
      %v6107 = vmul.f32 %v5973, %v5973
      %v6108 = vmul.f32 %v5974, %v5974
      %v6109 = vmul.f32 %v5975, %v5975
      %v6110 = vmul.f32 %v5976, %v5976
      %v6111 = vmul.f32 %v5977, %v5977
      %v6112 = vmul.f32 %v5978, %v5978
      %v6113 = vmul.f32 %v5979, %v5979
      %v6114 = vmul.f32 %v5980, %v5980
      %v6115 = vmul.f32 %v5981, %v5981
      %v6116 = vmul.f32 %v5982, %v5982
      %v6117 = vmul.f32 %v5983, %v5983
      %v6118 = vmul.f32 %v5984, %v5984
      %v6119 = vadd.f32 %v6087, %v6088
      %v6120 = vadd.f32 %v6119, %v6089
      %v6121 = vadd.f32 %v6120, %v6090
      %v6122 = vadd.f32 %v6121, %v6091
      %v6123 = vadd.f32 %v6122, %v6092
      %v6124 = vadd.f32 %v6123, %v6093
      %v6125 = vadd.f32 %v6124, %v6094
      %v6126 = vadd.f32 %v6125, %v6095
      %v6127 = vadd.f32 %v6126, %v6096
      %v6128 = vadd.f32 %v6127, %v6097
      %v6129 = vadd.f32 %v6128, %v6098
      %v6130 = vadd.f32 %v6129, %v6099
      %v6131 = vadd.f32 %v6130, %v6100
      %v6132 = vadd.f32 %v6131, %v6101
      %v6133 = vadd.f32 %v6132, %v6102
      %v6134 = vadd.f32 %v6133, %v6103
      %v6135 = vadd.f32 %v6134, %v6104
      %v6136 = vadd.f32 %v6135, %v6105
      %v6137 = vadd.f32 %v6136, %v6106
      %v6138 = vadd.f32 %v6137, %v6107
      %v6139 = vadd.f32 %v6138, %v6108
      %v6140 = vadd.f32 %v6139, %v6109
      %v6141 = vadd.f32 %v6140, %v6110
      %v6142 = vadd.f32 %v6141, %v6111
      %v6143 = vadd.f32 %v6142, %v6112
      %v6144 = vadd.f32 %v6143, %v6113
      %v6145 = vadd.f32 %v6144, %v6114
      %v6146 = vadd.f32 %v6145, %v6115
      %v6147 = vadd.f32 %v6146, %v6116
      %v6148 = vadd.f32 %v6147, %v6117
      %v6149 = vadd.f32 %v6148, %v6118
      %v6150 = vrot.slane %v6149, 4
      %v6151 = vadd.f32 %v6149, %v6150
      %v6152 = vrot.slane %v6151, 2
      %v6153 = vadd.f32 %v6151, %v6152
      %v6154 = vrot.slane %v6153, 1
      %v6155 = vadd.f32 %v6153, %v6154
      %6156 = vst [vmem:[%s265 + $0x1] sm:$0x1] %v6155
      %p6157 = scmp.lt.s32.totalorder %s21, 1
      %s6158 = scalar_select %p6157, %s21, 1
      %p6159 = scmp.lt.s32.totalorder %s22, 0
      %s6160 = scalar_select %p6159, %s22, 0
      %s6161 = smul.addr %s6160, 32
      %s6162 = smul.addr %s6158, 32
      %s6163 = sadd.s32 %s6161, %s6162
      %s6164 = smul.addr %s6163, 4
      %s6165 = scalar_lea.vmem %s4, %s6164
      %p6166 = scmp.lt.s32.totalorder %s21, 1
      %s6167 = scalar_select %p6166, %s21, 1
      %p6168 = scmp.lt.s32.totalorder %s22, 0
      %s6169 = scalar_select %p6168, %s22, 0
      %s6170 = sadd.s32 %s6169, %s6167
      %s6171 = smul.addr %s6170, 2
      %s6172 = scalar_lea.vmem %s5, %s6171
      // Predicated region
      $region41: #{residual_block.4} parent=35 // pred_check
        %p6173 = pneg %p138
      $region42: #{residual_block.4} parent=35 // pred_check_branch
        %6175 = sbr.rel (%p6173) target = $region44
      $region43: #{residual_block.4} parent=35 // pred_region
        _
      $region44: #{residual_block.4} parent=35 // pred_fallthru
        _
      // Predicated region
      $region45: #{residual_block.4} parent=35 // pred_check
        %p6176 = pneg %p166
      $region46: #{residual_block.4} parent=35 // pred_check_branch
        %6178 = sbr.rel (%p6176) target = $region48
      $region47: #{residual_block.4} parent=35 // pred_region
        _
      $region48: #{residual_block.4} parent=35 // pred_fallthru
        _
    $region36: #{residual_block.4} parent=5 // pred_fallthru
      _
    %p6179 = scmp.le.s32.totalorder 2, %s12
    // Predicated region
    $region49: #{residual_block.4} parent=5 // pred_check
      %p6180 = pneg %p6179
    $region50: #{residual_block.4} parent=5 // pred_check_branch
      %6182 = sbr.rel (%p6180) target = $region52
    $region51: #{residual_block.4} parent=5 // pred_region
      %s6183 = ssub.s32 %s12, 2
      // Predicated region
      $region53: #{residual_block.4} parent=51 // pred_check
        %p6184 = pneg %p144
      $region54: #{residual_block.4} parent=51 // pred_check_branch
        %6186 = sbr.rel (%p6184) target = $region56
      $region55: #{residual_block.4} parent=51 // pred_region
        %p6187 = scmp.lt.s32.totalorder %s23, 1
        %s6188 = scalar_select %p6187, %s23, 1
        %p6189 = scmp.lt.s32.totalorder %s24, 0
        %s6190 = scalar_select %p6189, %s24, 0
        %s6191 = smul.addr %s6190, 32
        %s6192 = smul.addr %s6188, 32
        %s6193 = sadd.s32 %s6191, %s6192
        %s6194 = smul.addr %s6193, 4
        %s6195 = scalar_lea.vmem %s4, %s6194
      $region56: #{residual_block.4} parent=51 // pred_fallthru
        _
      // Predicated region
      $region57: #{residual_block.4} parent=51 // pred_check
        %p6196 = pneg %p172
      $region58: #{residual_block.4} parent=51 // pred_check_branch
        %6198 = sbr.rel (%p6196) target = $region60
      $region59: #{residual_block.4} parent=51 // pred_region
        %p6199 = scmp.lt.s32.totalorder %s23, 1
        %s6200 = scalar_select %p6199, %s23, 1
        %p6201 = scmp.lt.s32.totalorder %s24, 0
        %s6202 = scalar_select %p6201, %s24, 0
        %s6203 = sadd.s32 %s6202, %s6200
        %s6204 = smul.addr %s6203, 2
        %s6205 = scalar_lea.vmem %s5, %s6204
      $region60: #{residual_block.4} parent=51 // pred_fallthru
        _
    $region52: #{residual_block.4} parent=5 // pred_fallthru
      _
  $region6: #{residual_block.4} parent=0 // loop_footer
    %s16 = sadd.s32 1, %s12
  $region7: #{residual_block.4} parent=0 // loop_footer_branch
    %11 = sbr.rel target = $region3
  $region8: #{residual_block.4} parent=0 // loop_exit
    _

</llo_original>
